<compile_context>
chip_gen: v5e
topology: v5e:2x2
jax: 0.10.0
libtpu: 0.0.40
codegen_flags: <defaults>
</compile_context>

<pallas_src>
import jax
import jax.numpy as jnp
from jax import lax
from jax.experimental import pallas as pl
from jax.experimental.pallas import tpu as pltpu

# ---- concrete hyperparameters of the injected sub-modules ----
C_IN = 4           # input channels per tile
H = W = 16         # tile spatial size
KH = KW = 3        # conv kernel (padding=1, stride=1)
C_CONV = 32        # conv output channels
F_DIM = 64         # feature dim from the feature extractor
D_ATT = 32         # attention hidden dim of the MIL head
N_CLS = 2          # number of classes
LOGIT_PAD = 128    # lane-dense logit store width (sliced back to N_CLS)
HP = H + KH - 1    # padded height (18)
WP = W + KW - 1    # padded width  (18)
T_TILES = 8        # tiles per bag
BB = 8             # bags per grid step (tunable, 8-32)
K_STACK = KH * WP * C_IN      # 216 : fused conv contraction dim
N_CONV = W * C_CONV           # 512 : conv output lanes (x * C_CONV + co)
ROWS_PER_BAG = T_TILES * H    # 128 : valid conv rows per bag


# --------------------------- fused Pallas kernel ---------------------------
def _leap_fused_kernel(xs_ref, wfull_ref, bconv_ref, poolfc_ref, avg_ref,
                       bfc_ref, vatt_ref, watt_ref, wcls_ref, bcls_ref, o_ref):
    """One grid step == BB bags: conv+ReLU+GAP+FC+ReLU -> attention MIL -> logits."""
    # Conv2d(C_IN->C_CONV, 3x3, pad=1): ONE fused K=216 MXU matmul (bf16 in, f32 acc).
    conv = jnp.dot(xs_ref[...], wfull_ref[...],
                   preferred_element_type=jnp.float32)        # (BB*128, 512)
    conv = jnp.maximum(conv + bconv_ref[...], 0.0)            # bias + ReLU

    # GAP over x/channels with the FC weight folded in (pool @ w_fc == tile(w_fc)),
    # then the y-mean as another MXU matmul.  Exact: everything between the two
    # ReLUs is linear.
    cp = jnp.dot(conv, poolfc_ref[...],
                 preferred_element_type=jnp.float32)          # (BB*128, F_DIM)
    feat = jnp.dot(avg_ref[...], cp,
                   preferred_element_type=jnp.float32)        # (BB*T, F_DIM)
    feat = jnp.maximum(feat + bfc_ref[...], 0.0)              # FC bias + ReLU

    # Attention MIL head: tanh projection on the MXU, score = VPU mul + lane reduce.
    a = jnp.tanh(jnp.dot(feat, vatt_ref[...],
                         preferred_element_type=jnp.float32))  # (BB*T, D_ATT)
    scores = jnp.sum(a * watt_ref[...], axis=-1, keepdims=True)  # (BB*T, 1)

    # Per-bag exact softmax + attention pooling (short unrolled loop; slices are
    # static and sublane-aligned since T_TILES == 8).
    pooled = []
    for b in range(BB):
        lo = b * T_TILES
        sc = scores[lo:lo + T_TILES, :]                        # (T, 1)
        fb = feat[lo:lo + T_TILES, :]                          # (T, F_DIM)
        m = jnp.max(sc, axis=0, keepdims=True)
        e = jnp.exp(sc - m)
        alpha = e / jnp.sum(e, axis=0, keepdims=True)          # exact softmax
        pooled.append(jnp.sum(alpha * fb, axis=0, keepdims=True))
    pooled = jnp.concatenate(pooled, axis=0)                   # (BB, F_DIM)

    logits = jnp.dot(pooled, wcls_ref[...],
                     preferred_element_type=jnp.float32) + bcls_ref[...]
    o_ref[...] = logits                                        # (BB, LOGIT_PAD) lane-dense


# ------------------------------ wrapper glue ------------------------------
def _build_full_weight(w_conv):
    """Block-Toeplitz conv weight: (KH*WP*C_IN, W*C_CONV).

    wfull[dy*WP*C_IN + xp*C_IN + ci, x*C_CONV + co] = w_conv[dy, xp-x, ci, co].
    """
    bands = []
    for dy in range(KH):
        band = jnp.zeros((WP * C_IN, W * C_CONV), jnp.float32)
        for dx in range(KW):
            ind = (jnp.arange(WP)[:, None] ==
                   (jnp.arange(W)[None, :] + dx)).astype(jnp.float32)   # (WP, W)
            band = band + jnp.einsum('pq,ij->piqj', ind,
                                     w_conv[dy, dx]).reshape(WP * C_IN, W * C_CONV)
        bands.append(band)
    return jnp.concatenate(bands, axis=0)                       # (216, 512)


def _build_avg_matrix():
    """y-mean matrix over each tile's H rows: (BB*T, BB*T*H), entries 1/(H*W)."""
    rows = jnp.arange(BB * T_TILES)[:, None]
    cols = jnp.arange(BB * T_TILES * H)[None, :]
    return jnp.where(cols // H == rows, 1.0 / (H * W), 0.0).astype(jnp.float32)


def leap_expert_forward(x, params):
    """Mirrors LEAP_Expert.forward: x (B, T, C, H, W) -> logits (B, N_CLS)."""
    B, T = x.shape[0], x.shape[1]
    assert T == T_TILES, "kernel is specialized to T_TILES tiles per bag"

    # TODO(synk): for very large B the NCHW->NHWC transpose + pad + band-stack is an
    # extra HBM pass over x; storing x in NHWC upstream would remove it.
    xt = jnp.transpose(x, (0, 1, 3, 4, 2))                         # (B, T, H, W, C)
    xpad = jnp.pad(xt, ((0, 0), (0, 0), (1, 1), (1, 1), (0, 0)))   # (B, T, HP, WP, C)
    xrow = xpad.reshape(B, T, HP, WP * C_IN)                       # (B, T, 18, 72)
    # Stack the KH=3 y-bands per valid output row -> one K=216 contraction.
    xstack = jnp.concatenate([xrow[:, :, dy:dy + H, :] for dy in range(KH)],
                             axis=-1)                              # (B, T, H, 216)
    xstack = xstack.reshape(B, T * H, K_STACK).astype(jnp.bfloat16)

    # Pad the bag axis to a multiple of BB (zero bags are harmless; sliced off below).
    B_pad = ((B + BB - 1) // BB) * BB
    if B_pad != B:
        xstack = jnp.pad(xstack, ((0, B_pad - B), (0, 0), (0, 0)))
    xstack = xstack.reshape(B_pad * ROWS_PER_BAG, K_STACK)         # (B_pad*128, 216)

    wfull = _build_full_weight(params["w_conv"]).astype(jnp.bfloat16)  # (216, 512)
    bconv_t = jnp.tile(params["b_conv"], (1, W))                       # (1, 512)
    poolfc = jnp.tile(params["w_fc"], (W, 1)).astype(jnp.float32)      # (512, 64)
    avg = _build_avg_matrix()                                          # (BB*T, BB*T*H)
    watt_row = params["w_att"].reshape(1, D_ATT)
    wcls_pad = jnp.pad(params["w_cls"], ((0, 0), (0, LOGIT_PAD - N_CLS)))
    bcls_pad = jnp.pad(params["b_cls"], ((0, 0), (0, LOGIT_PAD - N_CLS)))

    grid_spec = pltpu.PrefetchScalarGridSpec(
        num_scalar_prefetch=0,
        grid=(B_pad // BB,),
        in_specs=[
            pl.BlockSpec((BB * ROWS_PER_BAG, K_STACK), lambda g: (g, 0)),  # stacked tiles
            pl.BlockSpec((K_STACK, N_CONV), lambda g: (0, 0)),             # conv weight slab
            pl.BlockSpec((1, N_CONV), lambda g: (0, 0)),                   # conv bias (tiled)
            pl.BlockSpec((N_CONV, F_DIM), lambda g: (0, 0)),               # pool @ w_fc
            pl.BlockSpec((BB * T_TILES, BB * ROWS_PER_BAG), lambda g: (0, 0)),  # y-mean
            pl.BlockSpec((1, F_DIM), lambda g: (0, 0)),                    # fc bias
            pl.BlockSpec((F_DIM, D_ATT), lambda g: (0, 0)),                # attention V
            pl.BlockSpec((1, D_ATT), lambda g: (0, 0)),                    # attention w (row)
            pl.BlockSpec((F_DIM, LOGIT_PAD), lambda g: (0, 0)),            # classifier W (padded)
            pl.BlockSpec((1, LOGIT_PAD), lambda g: (0, 0)),                # classifier b (padded)
        ],
        out_specs=pl.BlockSpec((BB, LOGIT_PAD), lambda g: (g, 0)),
    )
    out = pl.pallas_call(
        _leap_fused_kernel,
        out_shape=jax.ShapeDtypeStruct((B_pad, LOGIT_PAD), jnp.float32),
        grid_spec=grid_spec,
        compiler_params=pltpu.CompilerParams(
            dimension_semantics=("parallel",)),   # bag blocks split across TCs on v7x
    )(xstack, wfull, bconv_t, poolfc, avg,
      params["b_fc"], params["v_att"], watt_row, wcls_pad, bcls_pad)
    return out[:B, :N_CLS]


# --------------------------- pure-JAX reference ----------------------------
def leap_expert_reference(x, params):
    B, T = x.shape[0], x.shape[1]
    xt = jnp.transpose(x, (0, 1, 3, 4, 2)).reshape(B * T, H, W, C_IN)
    conv = lax.conv_general_dilated(
        xt, params["w_conv"], window_strides=(1, 1), padding="SAME",
        dimension_numbers=("NHWC", "HWIO", "NHWC"))
    conv = jax.nn.relu(conv + params["b_conv"].reshape(1, 1, 1, C_CONV))
    gap = conv.mean(axis=(1, 2))                                   # (B*T, C_CONV)
    feat = jax.nn.relu(gap @ params["w_fc"] + params["b_fc"])      # (B*T, F_DIM)
    feat = feat.reshape(B, T, F_DIM)
    a = jnp.tanh(feat @ params["v_att"])                           # (B, T, D_ATT)
    scores = a @ params["w_att"]                                   # (B, T, 1)
    alpha = jax.nn.softmax(scores, axis=1)
    pooled = jnp.sum(alpha * feat, axis=1)                         # (B, F_DIM)
    return pooled @ params["w_cls"] + params["b_cls"]


def init_params(key):
    ks = jax.random.split(key, 8)
    return {
        "w_conv": jax.random.normal(ks[0], (KH, KW, C_IN, C_CONV), jnp.float32) * 0.1,
        "b_conv": jax.random.normal(ks[1], (1, C_CONV), jnp.float32) * 0.01,
        "w_fc": jax.random.normal(ks[2], (C_CONV, F_DIM), jnp.float32) * 0.1,
        "b_fc": jax.random.normal(ks[3], (1, F_DIM), jnp.float32) * 0.01,
        "v_att": jax.random.normal(ks[4], (F_DIM, D_ATT), jnp.float32) * 0.1,
        "w_att": jax.random.normal(ks[5], (D_ATT, 1), jnp.float32) * 0.1,
        "w_cls": jax.random.normal(ks[6], (F_DIM, N_CLS), jnp.float32) * 0.1,
        "b_cls": jnp.zeros((1, N_CLS), jnp.float32),
    }


if __name__ == "__main__":
    key = jax.random.PRNGKey(0)
    pkey, xkey = jax.random.split(key)
    params = init_params(pkey)

    B, T = 2, T_TILES
    x = jax.random.normal(xkey, (B, T, C_IN, H, W), jnp.float32)

    logits = jax.jit(leap_expert_forward)(x, params)
    jax.block_until_ready(logits)
    assert logits.shape == (B, N_CLS) and logits.dtype == jnp.float32

    ref = leap_expert_reference(x, params)
    err = float(jnp.max(jnp.abs(logits - ref)))
    assert err < 1e-2, f"kernel/reference mismatch: max abs err {err}"
    print("KERNEL_OK")
</pallas_src>

<mosaic_0001>
module attributes {stable_mosaic.version = 11 : i64} {
  func.func @_leap_fused_kernel(%arg0: i32, %arg1: memref<1024x216xbf16, #tpu.memory_space<vmem>>, %arg2: memref<216x512xbf16, #tpu.memory_space<vmem>>, %arg3: memref<1x512xf32, #tpu.memory_space<vmem>>, %arg4: memref<512x64xf32, #tpu.memory_space<vmem>>, %arg5: memref<64x1024xf32, #tpu.memory_space<vmem>>, %arg6: memref<1x64xf32, #tpu.memory_space<vmem>>, %arg7: memref<64x32xf32, #tpu.memory_space<vmem>>, %arg8: memref<1x32xf32, #tpu.memory_space<vmem>>, %arg9: memref<64x128xf32, #tpu.memory_space<vmem>>, %arg10: memref<1x128xf32, #tpu.memory_space<vmem>>, %arg11: memref<8x128xf32, #tpu.memory_space<vmem>>) attributes {dimension_semantics = [#tpu.dimension_semantics<parallel>], iteration_bounds = array<i64: 1>, scalar_prefetch = 0 : i64, scratch_operands = 0 : i64, tpu.core_type = #tpu.core_type<tc>, window_params = [{transform_indices = @transform_0, window_bounds = array<i64: 1024, 216>}, {pipeline_mode = #tpu.pipeline_mode<synchronous>, transform_indices = @transform_1, window_bounds = array<i64: 216, 512>}, {pipeline_mode = #tpu.pipeline_mode<synchronous>, transform_indices = @transform_2, window_bounds = array<i64: 1, 512>}, {pipeline_mode = #tpu.pipeline_mode<synchronous>, transform_indices = @transform_3, window_bounds = array<i64: 512, 64>}, {pipeline_mode = #tpu.pipeline_mode<synchronous>, transform_indices = @transform_4, window_bounds = array<i64: 64, 1024>}, {pipeline_mode = #tpu.pipeline_mode<synchronous>, transform_indices = @transform_5, window_bounds = array<i64: 1, 64>}, {pipeline_mode = #tpu.pipeline_mode<synchronous>, transform_indices = @transform_6, window_bounds = array<i64: 64, 32>}, {pipeline_mode = #tpu.pipeline_mode<synchronous>, transform_indices = @transform_7, window_bounds = array<i64: 1, 32>}, {pipeline_mode = #tpu.pipeline_mode<synchronous>, transform_indices = @transform_8, window_bounds = array<i64: 64, 128>}, {pipeline_mode = #tpu.pipeline_mode<synchronous>, transform_indices = @transform_9, window_bounds = array<i64: 1, 128>}, {transform_indices = @transform_10, window_bounds = array<i64: 8, 128>}]} {
    %c0 = arith.constant 0 : index
    %c0_0 = arith.constant 0 : index
    %0 = vector.load %arg1[%c0, %c0_0] : memref<1024x216xbf16, #tpu.memory_space<vmem>>, vector<1024x216xbf16>
    %c0_1 = arith.constant 0 : index
    %c0_2 = arith.constant 0 : index
    %1 = vector.load %arg2[%c0_1, %c0_2] : memref<216x512xbf16, #tpu.memory_space<vmem>>, vector<216x512xbf16>
    %cst = arith.constant dense<0.000000e+00> : vector<1024x512xf32>
    %2 = tpu.matmul %0, %1, %cst {dimension_numbers = #tpu.dot_dimension_numbers<[1], [0], [0], [1], [0, 0, 1, 1], [], []>} : vector<1024x216xbf16>, vector<216x512xbf16>, vector<1024x512xf32> -> vector<1024x512xf32>
    %c0_3 = arith.constant 0 : index
    %c0_4 = arith.constant 0 : index
    %3 = vector.load %arg3[%c0_3, %c0_4] : memref<1x512xf32, #tpu.memory_space<vmem>>, vector<1x512xf32>
    %4 = vector.broadcast %3 : vector<1x512xf32> to vector<1024x512xf32>
    %5 = arith.addf %2, %4 : vector<1024x512xf32>
    %cst_5 = arith.constant 0.000000e+00 : f32
    %6 = vector.broadcast %cst_5 : f32 to vector<1024x512xf32>
    %7 = arith.maximumf %5, %6 : vector<1024x512xf32>
    %c0_6 = arith.constant 0 : index
    %c0_7 = arith.constant 0 : index
    %8 = vector.load %arg4[%c0_6, %c0_7] : memref<512x64xf32, #tpu.memory_space<vmem>>, vector<512x64xf32>
    %cst_8 = arith.constant dense<0.000000e+00> : vector<1024x64xf32>
    %9 = tpu.matmul %7, %8, %cst_8 {dimension_numbers = #tpu.dot_dimension_numbers<[1], [0], [0], [1], [0, 0, 1, 1], [], []>} : vector<1024x512xf32>, vector<512x64xf32>, vector<1024x64xf32> -> vector<1024x64xf32>
    %c0_9 = arith.constant 0 : index
    %c0_10 = arith.constant 0 : index
    %10 = vector.load %arg5[%c0_9, %c0_10] : memref<64x1024xf32, #tpu.memory_space<vmem>>, vector<64x1024xf32>
    %cst_11 = arith.constant dense<0.000000e+00> : vector<64x64xf32>
    %11 = tpu.matmul %10, %9, %cst_11 {dimension_numbers = #tpu.dot_dimension_numbers<[1], [0], [0], [1], [0, 0, 1, 1], [], []>} : vector<64x1024xf32>, vector<1024x64xf32>, vector<64x64xf32> -> vector<64x64xf32>
    %c0_12 = arith.constant 0 : index
    %c0_13 = arith.constant 0 : index
    %12 = vector.load %arg6[%c0_12, %c0_13] : memref<1x64xf32, #tpu.memory_space<vmem>>, vector<1x64xf32>
    %13 = vector.broadcast %12 : vector<1x64xf32> to vector<64x64xf32>
    %14 = arith.addf %11, %13 : vector<64x64xf32>
    %cst_14 = arith.constant 0.000000e+00 : f32
    %15 = vector.broadcast %cst_14 : f32 to vector<64x64xf32>
    %16 = arith.maximumf %14, %15 : vector<64x64xf32>
    %c0_15 = arith.constant 0 : index
    %c0_16 = arith.constant 0 : index
    %17 = vector.load %arg7[%c0_15, %c0_16] : memref<64x32xf32, #tpu.memory_space<vmem>>, vector<64x32xf32>
    %cst_17 = arith.constant dense<0.000000e+00> : vector<64x32xf32>
    %18 = tpu.matmul %16, %17, %cst_17 {dimension_numbers = #tpu.dot_dimension_numbers<[1], [0], [0], [1], [0, 0, 1, 1], [], []>} : vector<64x64xf32>, vector<64x32xf32>, vector<64x32xf32> -> vector<64x32xf32>
    %19 = math.tanh %18 : vector<64x32xf32>
    %c0_18 = arith.constant 0 : index
    %c0_19 = arith.constant 0 : index
    %20 = vector.load %arg8[%c0_18, %c0_19] : memref<1x32xf32, #tpu.memory_space<vmem>>, vector<1x32xf32>
    %21 = vector.broadcast %20 : vector<1x32xf32> to vector<64x32xf32>
    %22 = arith.mulf %19, %21 : vector<64x32xf32>
    %cst_20 = arith.constant dense<0.000000e+00> : vector<64xf32>
    %23 = vector.multi_reduction <add>, %22, %cst_20 [1] : vector<64x32xf32> to vector<64xf32>
    %24 = vector.shape_cast %23 : vector<64xf32> to vector<64x1xf32>
    %25 = vector.extract_strided_slice %24 {offsets = [0, 0], sizes = [8, 1], strides = [1, 1]} : vector<64x1xf32> to vector<8x1xf32>
    %26 = vector.extract_strided_slice %16 {offsets = [0, 0], sizes = [8, 64], strides = [1, 1]} : vector<64x64xf32> to vector<8x64xf32>
    %cst_21 = arith.constant dense<0xFF800000> : vector<1xf32>
    %27 = vector.multi_reduction <maximumf>, %25, %cst_21 [0] : vector<8x1xf32> to vector<1xf32>
    %28 = vector.shape_cast %27 : vector<1xf32> to vector<1x1xf32>
    %29 = vector.broadcast %28 : vector<1x1xf32> to vector<8x1xf32>
    %30 = arith.subf %25, %29 : vector<8x1xf32>
    %31 = math.exp %30 : vector<8x1xf32>
    %cst_22 = arith.constant dense<0.000000e+00> : vector<1xf32>
    %32 = vector.multi_reduction <add>, %31, %cst_22 [0] : vector<8x1xf32> to vector<1xf32>
    %33 = vector.shape_cast %32 : vector<1xf32> to vector<1x1xf32>
    %34 = vector.broadcast %33 : vector<1x1xf32> to vector<8x1xf32>
    %35 = arith.divf %31, %34 : vector<8x1xf32>
    %36 = vector.broadcast %35 : vector<8x1xf32> to vector<8x64xf32>
    %37 = arith.mulf %36, %26 : vector<8x64xf32>
    %cst_23 = arith.constant dense<0.000000e+00> : vector<64xf32>
    %38 = vector.multi_reduction <add>, %37, %cst_23 [0] : vector<8x64xf32> to vector<64xf32>
    %39 = vector.shape_cast %38 : vector<64xf32> to vector<1x64xf32>
    %40 = vector.extract_strided_slice %24 {offsets = [8, 0], sizes = [8, 1], strides = [1, 1]} : vector<64x1xf32> to vector<8x1xf32>
    %41 = vector.extract_strided_slice %16 {offsets = [8, 0], sizes = [8, 64], strides = [1, 1]} : vector<64x64xf32> to vector<8x64xf32>
    %cst_24 = arith.constant dense<0xFF800000> : vector<1xf32>
    %42 = vector.multi_reduction <maximumf>, %40, %cst_24 [0] : vector<8x1xf32> to vector<1xf32>
    %43 = vector.shape_cast %42 : vector<1xf32> to vector<1x1xf32>
    %44 = vector.broadcast %43 : vector<1x1xf32> to vector<8x1xf32>
    %45 = arith.subf %40, %44 : vector<8x1xf32>
    %46 = math.exp %45 : vector<8x1xf32>
    %cst_25 = arith.constant dense<0.000000e+00> : vector<1xf32>
    %47 = vector.multi_reduction <add>, %46, %cst_25 [0] : vector<8x1xf32> to vector<1xf32>
    %48 = vector.shape_cast %47 : vector<1xf32> to vector<1x1xf32>
    %49 = vector.broadcast %48 : vector<1x1xf32> to vector<8x1xf32>
    %50 = arith.divf %46, %49 : vector<8x1xf32>
    %51 = vector.broadcast %50 : vector<8x1xf32> to vector<8x64xf32>
    %52 = arith.mulf %51, %41 : vector<8x64xf32>
    %cst_26 = arith.constant dense<0.000000e+00> : vector<64xf32>
    %53 = vector.multi_reduction <add>, %52, %cst_26 [0] : vector<8x64xf32> to vector<64xf32>
    %54 = vector.shape_cast %53 : vector<64xf32> to vector<1x64xf32>
    %55 = vector.extract_strided_slice %24 {offsets = [16, 0], sizes = [8, 1], strides = [1, 1]} : vector<64x1xf32> to vector<8x1xf32>
    %56 = vector.extract_strided_slice %16 {offsets = [16, 0], sizes = [8, 64], strides = [1, 1]} : vector<64x64xf32> to vector<8x64xf32>
    %cst_27 = arith.constant dense<0xFF800000> : vector<1xf32>
    %57 = vector.multi_reduction <maximumf>, %55, %cst_27 [0] : vector<8x1xf32> to vector<1xf32>
    %58 = vector.shape_cast %57 : vector<1xf32> to vector<1x1xf32>
    %59 = vector.broadcast %58 : vector<1x1xf32> to vector<8x1xf32>
    %60 = arith.subf %55, %59 : vector<8x1xf32>
    %61 = math.exp %60 : vector<8x1xf32>
    %cst_28 = arith.constant dense<0.000000e+00> : vector<1xf32>
    %62 = vector.multi_reduction <add>, %61, %cst_28 [0] : vector<8x1xf32> to vector<1xf32>
    %63 = vector.shape_cast %62 : vector<1xf32> to vector<1x1xf32>
    %64 = vector.broadcast %63 : vector<1x1xf32> to vector<8x1xf32>
    %65 = arith.divf %61, %64 : vector<8x1xf32>
    %66 = vector.broadcast %65 : vector<8x1xf32> to vector<8x64xf32>
    %67 = arith.mulf %66, %56 : vector<8x64xf32>
    %cst_29 = arith.constant dense<0.000000e+00> : vector<64xf32>
    %68 = vector.multi_reduction <add>, %67, %cst_29 [0] : vector<8x64xf32> to vector<64xf32>
    %69 = vector.shape_cast %68 : vector<64xf32> to vector<1x64xf32>
    %70 = vector.extract_strided_slice %24 {offsets = [24, 0], sizes = [8, 1], strides = [1, 1]} : vector<64x1xf32> to vector<8x1xf32>
    %71 = vector.extract_strided_slice %16 {offsets = [24, 0], sizes = [8, 64], strides = [1, 1]} : vector<64x64xf32> to vector<8x64xf32>
    %cst_30 = arith.constant dense<0xFF800000> : vector<1xf32>
    %72 = vector.multi_reduction <maximumf>, %70, %cst_30 [0] : vector<8x1xf32> to vector<1xf32>
    %73 = vector.shape_cast %72 : vector<1xf32> to vector<1x1xf32>
    %74 = vector.broadcast %73 : vector<1x1xf32> to vector<8x1xf32>
    %75 = arith.subf %70, %74 : vector<8x1xf32>
    %76 = math.exp %75 : vector<8x1xf32>
    %cst_31 = arith.constant dense<0.000000e+00> : vector<1xf32>
    %77 = vector.multi_reduction <add>, %76, %cst_31 [0] : vector<8x1xf32> to vector<1xf32>
    %78 = vector.shape_cast %77 : vector<1xf32> to vector<1x1xf32>
    %79 = vector.broadcast %78 : vector<1x1xf32> to vector<8x1xf32>
    %80 = arith.divf %76, %79 : vector<8x1xf32>
    %81 = vector.broadcast %80 : vector<8x1xf32> to vector<8x64xf32>
    %82 = arith.mulf %81, %71 : vector<8x64xf32>
    %cst_32 = arith.constant dense<0.000000e+00> : vector<64xf32>
    %83 = vector.multi_reduction <add>, %82, %cst_32 [0] : vector<8x64xf32> to vector<64xf32>
    %84 = vector.shape_cast %83 : vector<64xf32> to vector<1x64xf32>
    %85 = vector.extract_strided_slice %24 {offsets = [32, 0], sizes = [8, 1], strides = [1, 1]} : vector<64x1xf32> to vector<8x1xf32>
    %86 = vector.extract_strided_slice %16 {offsets = [32, 0], sizes = [8, 64], strides = [1, 1]} : vector<64x64xf32> to vector<8x64xf32>
    %cst_33 = arith.constant dense<0xFF800000> : vector<1xf32>
    %87 = vector.multi_reduction <maximumf>, %85, %cst_33 [0] : vector<8x1xf32> to vector<1xf32>
    %88 = vector.shape_cast %87 : vector<1xf32> to vector<1x1xf32>
    %89 = vector.broadcast %88 : vector<1x1xf32> to vector<8x1xf32>
    %90 = arith.subf %85, %89 : vector<8x1xf32>
    %91 = math.exp %90 : vector<8x1xf32>
    %cst_34 = arith.constant dense<0.000000e+00> : vector<1xf32>
    %92 = vector.multi_reduction <add>, %91, %cst_34 [0] : vector<8x1xf32> to vector<1xf32>
    %93 = vector.shape_cast %92 : vector<1xf32> to vector<1x1xf32>
    %94 = vector.broadcast %93 : vector<1x1xf32> to vector<8x1xf32>
    %95 = arith.divf %91, %94 : vector<8x1xf32>
    %96 = vector.broadcast %95 : vector<8x1xf32> to vector<8x64xf32>
    %97 = arith.mulf %96, %86 : vector<8x64xf32>
    %cst_35 = arith.constant dense<0.000000e+00> : vector<64xf32>
    %98 = vector.multi_reduction <add>, %97, %cst_35 [0] : vector<8x64xf32> to vector<64xf32>
    %99 = vector.shape_cast %98 : vector<64xf32> to vector<1x64xf32>
    %100 = vector.extract_strided_slice %24 {offsets = [40, 0], sizes = [8, 1], strides = [1, 1]} : vector<64x1xf32> to vector<8x1xf32>
    %101 = vector.extract_strided_slice %16 {offsets = [40, 0], sizes = [8, 64], strides = [1, 1]} : vector<64x64xf32> to vector<8x64xf32>
    %cst_36 = arith.constant dense<0xFF800000> : vector<1xf32>
    %102 = vector.multi_reduction <maximumf>, %100, %cst_36 [0] : vector<8x1xf32> to vector<1xf32>
    %103 = vector.shape_cast %102 : vector<1xf32> to vector<1x1xf32>
    %104 = vector.broadcast %103 : vector<1x1xf32> to vector<8x1xf32>
    %105 = arith.subf %100, %104 : vector<8x1xf32>
    %106 = math.exp %105 : vector<8x1xf32>
    %cst_37 = arith.constant dense<0.000000e+00> : vector<1xf32>
    %107 = vector.multi_reduction <add>, %106, %cst_37 [0] : vector<8x1xf32> to vector<1xf32>
    %108 = vector.shape_cast %107 : vector<1xf32> to vector<1x1xf32>
    %109 = vector.broadcast %108 : vector<1x1xf32> to vector<8x1xf32>
    %110 = arith.divf %106, %109 : vector<8x1xf32>
    %111 = vector.broadcast %110 : vector<8x1xf32> to vector<8x64xf32>
    %112 = arith.mulf %111, %101 : vector<8x64xf32>
    %cst_38 = arith.constant dense<0.000000e+00> : vector<64xf32>
    %113 = vector.multi_reduction <add>, %112, %cst_38 [0] : vector<8x64xf32> to vector<64xf32>
    %114 = vector.shape_cast %113 : vector<64xf32> to vector<1x64xf32>
    %115 = vector.extract_strided_slice %24 {offsets = [48, 0], sizes = [8, 1], strides = [1, 1]} : vector<64x1xf32> to vector<8x1xf32>
    %116 = vector.extract_strided_slice %16 {offsets = [48, 0], sizes = [8, 64], strides = [1, 1]} : vector<64x64xf32> to vector<8x64xf32>
    %cst_39 = arith.constant dense<0xFF800000> : vector<1xf32>
    %117 = vector.multi_reduction <maximumf>, %115, %cst_39 [0] : vector<8x1xf32> to vector<1xf32>
    %118 = vector.shape_cast %117 : vector<1xf32> to vector<1x1xf32>
    %119 = vector.broadcast %118 : vector<1x1xf32> to vector<8x1xf32>
    %120 = arith.subf %115, %119 : vector<8x1xf32>
    %121 = math.exp %120 : vector<8x1xf32>
    %cst_40 = arith.constant dense<0.000000e+00> : vector<1xf32>
    %122 = vector.multi_reduction <add>, %121, %cst_40 [0] : vector<8x1xf32> to vector<1xf32>
    %123 = vector.shape_cast %122 : vector<1xf32> to vector<1x1xf32>
    %124 = vector.broadcast %123 : vector<1x1xf32> to vector<8x1xf32>
    %125 = arith.divf %121, %124 : vector<8x1xf32>
    %126 = vector.broadcast %125 : vector<8x1xf32> to vector<8x64xf32>
    %127 = arith.mulf %126, %116 : vector<8x64xf32>
    %cst_41 = arith.constant dense<0.000000e+00> : vector<64xf32>
    %128 = vector.multi_reduction <add>, %127, %cst_41 [0] : vector<8x64xf32> to vector<64xf32>
    %129 = vector.shape_cast %128 : vector<64xf32> to vector<1x64xf32>
    %130 = vector.extract_strided_slice %24 {offsets = [56, 0], sizes = [8, 1], strides = [1, 1]} : vector<64x1xf32> to vector<8x1xf32>
    %131 = vector.extract_strided_slice %16 {offsets = [56, 0], sizes = [8, 64], strides = [1, 1]} : vector<64x64xf32> to vector<8x64xf32>
    %cst_42 = arith.constant dense<0xFF800000> : vector<1xf32>
    %132 = vector.multi_reduction <maximumf>, %130, %cst_42 [0] : vector<8x1xf32> to vector<1xf32>
    %133 = vector.shape_cast %132 : vector<1xf32> to vector<1x1xf32>
    %134 = vector.broadcast %133 : vector<1x1xf32> to vector<8x1xf32>
    %135 = arith.subf %130, %134 : vector<8x1xf32>
    %136 = math.exp %135 : vector<8x1xf32>
    %cst_43 = arith.constant dense<0.000000e+00> : vector<1xf32>
    %137 = vector.multi_reduction <add>, %136, %cst_43 [0] : vector<8x1xf32> to vector<1xf32>
    %138 = vector.shape_cast %137 : vector<1xf32> to vector<1x1xf32>
    %139 = vector.broadcast %138 : vector<1x1xf32> to vector<8x1xf32>
    %140 = arith.divf %136, %139 : vector<8x1xf32>
    %141 = vector.broadcast %140 : vector<8x1xf32> to vector<8x64xf32>
    %142 = arith.mulf %141, %131 : vector<8x64xf32>
    %cst_44 = arith.constant dense<0.000000e+00> : vector<64xf32>
    %143 = vector.multi_reduction <add>, %142, %cst_44 [0] : vector<8x64xf32> to vector<64xf32>
    %144 = vector.shape_cast %143 : vector<64xf32> to vector<1x64xf32>
    %145 = tpu.concatenate %39, %54, %69, %84, %99, %114, %129, %144 in 0 : vector<1x64xf32>, vector<1x64xf32>, vector<1x64xf32>, vector<1x64xf32>, vector<1x64xf32>, vector<1x64xf32>, vector<1x64xf32>, vector<1x64xf32> -> vector<8x64xf32>
    %c0_45 = arith.constant 0 : index
    %c0_46 = arith.constant 0 : index
    %146 = vector.load %arg9[%c0_45, %c0_46] : memref<64x128xf32, #tpu.memory_space<vmem>>, vector<64x128xf32>
    %cst_47 = arith.constant dense<0.000000e+00> : vector<8x128xf32>
    %147 = tpu.matmul %145, %146, %cst_47 {dimension_numbers = #tpu.dot_dimension_numbers<[1], [0], [0], [1], [0, 0, 1, 1], [], []>} : vector<8x64xf32>, vector<64x128xf32>, vector<8x128xf32> -> vector<8x128xf32>
    %c0_48 = arith.constant 0 : index
    %c0_49 = arith.constant 0 : index
    %148 = vector.load %arg10[%c0_48, %c0_49] : memref<1x128xf32, #tpu.memory_space<vmem>>, vector<1x128xf32>
    %149 = vector.broadcast %148 : vector<1x128xf32> to vector<8x128xf32>
    %150 = arith.addf %147, %149 : vector<8x128xf32>
    %c0_50 = arith.constant 0 : index
    %c0_51 = arith.constant 0 : index
    %151 = vector.load %arg11[%c0_50, %c0_51] : memref<8x128xf32, #tpu.memory_space<vmem>>, vector<8x128xf32>
    tpu.vector_store %arg11[%c0_50, %c0_51], %150 {strides = array<i32>} : memref<8x128xf32, #tpu.memory_space<vmem>>, vector<8x128xf32>,
    return
  }
  func.func @transform_0(%arg0: i32) -> (i32, i32) {
    %c0_i32 = arith.constant 0 : i32
    %c0_i32_0 = arith.constant 0 : i32
    return %arg0, %c0_i32 : i32, i32
  }
  func.func @transform_1(%arg0: i32) -> (i32, i32) {
    %c0_i32 = arith.constant 0 : i32
    %c0_i32_0 = arith.constant 0 : i32
    %c0_i32_1 = arith.constant 0 : i32
    return %c0_i32, %c0_i32_0 : i32, i32
  }
  func.func @transform_2(%arg0: i32) -> (i32, i32) {
    %c0_i32 = arith.constant 0 : i32
    %c0_i32_0 = arith.constant 0 : i32
    %c0_i32_1 = arith.constant 0 : i32
    return %c0_i32, %c0_i32_0 : i32, i32
  }
  func.func @transform_3(%arg0: i32) -> (i32, i32) {
    %c0_i32 = arith.constant 0 : i32
    %c0_i32_0 = arith.constant 0 : i32
    %c0_i32_1 = arith.constant 0 : i32
    return %c0_i32, %c0_i32_0 : i32, i32
  }
  func.func @transform_4(%arg0: i32) -> (i32, i32) {
    %c0_i32 = arith.constant 0 : i32
    %c0_i32_0 = arith.constant 0 : i32
    %c0_i32_1 = arith.constant 0 : i32
    return %c0_i32, %c0_i32_0 : i32, i32
  }
  func.func @transform_5(%arg0: i32) -> (i32, i32) {
    %c0_i32 = arith.constant 0 : i32
    %c0_i32_0 = arith.constant 0 : i32
    %c0_i32_1 = arith.constant 0 : i32
    return %c0_i32, %c0_i32_0 : i32, i32
  }
  func.func @transform_6(%arg0: i32) -> (i32, i32) {
    %c0_i32 = arith.constant 0 : i32
    %c0_i32_0 = arith.constant 0 : i32
    %c0_i32_1 = arith.constant 0 : i32
    return %c0_i32, %c0_i32_0 : i32, i32
  }
  func.func @transform_7(%arg0: i32) -> (i32, i32) {
    %c0_i32 = arith.constant 0 : i32
    %c0_i32_0 = arith.constant 0 : i32
    %c0_i32_1 = arith.constant 0 : i32
    return %c0_i32, %c0_i32_0 : i32, i32
  }
  func.func @transform_8(%arg0: i32) -> (i32, i32) {
    %c0_i32 = arith.constant 0 : i32
    %c0_i32_0 = arith.constant 0 : i32
    %c0_i32_1 = arith.constant 0 : i32
    return %c0_i32, %c0_i32_0 : i32, i32
  }
  func.func @transform_9(%arg0: i32) -> (i32, i32) {
    %c0_i32 = arith.constant 0 : i32
    %c0_i32_0 = arith.constant 0 : i32
    %c0_i32_1 = arith.constant 0 : i32
    return %c0_i32, %c0_i32_0 : i32, i32
  }
  func.func @transform_10(%arg0: i32) -> (i32, i32) {
    %c0_i32 = arith.constant 0 : i32
    %c0_i32_0 = arith.constant 0 : i32
    return %arg0, %c0_i32 : i32, i32
  }
}

</mosaic_0001>

<llo_original>
// kernel: leap_expert_forward.1
$region0: #{leap_expert_forward.1}
  #allocation0 [shape = 'u32[]', space=smem, size = 0x4, offset = 0x4, fixed_abs, tag = 'smem constant byte address 0x4 - core index']
  #allocation1 [shape = 'u32[72,128]{1,0:T(1,128)}', space=vmem, size = 0x9000, scoped, tag = 'internal scratch']
  %s0 = inlined_call_operand.vmem [shape: bf16[1024,216], index: 0, kind: input, shape index: {}]
  %s1 = inlined_call_operand.vmem [shape: bf16[216,512], index: 1, kind: input, shape index: {}]
  %s2 = inlined_call_operand.vmem [shape: f32[1,512], index: 2, kind: input, shape index: {}]
  %s3 = inlined_call_operand.vmem [shape: f32[512,64], index: 3, kind: input, shape index: {}]
  %s4 = inlined_call_operand.vmem [shape: f32[64,1024], index: 4, kind: input, shape index: {}]
  %s5 = inlined_call_operand.vmem [shape: f32[1,64], index: 5, kind: input, shape index: {}]
  %s6 = inlined_call_operand.vmem [shape: f32[64,32], index: 6, kind: input, shape index: {}]
  %s7 = inlined_call_operand.vmem [shape: f32[1,32], index: 7, kind: input, shape index: {}]
  %s8 = inlined_call_operand.vmem [shape: f32[64,128], index: 8, kind: input, shape index: {}]
  %s9 = inlined_call_operand.vmem [shape: f32[1,128], index: 9, kind: input, shape index: {}]
  %s10 = inlined_call_operand.vmem [shape: f32[8,128], index: 10, kind: output, shape index: {}]
  %s11 = sld [smem:[#allocation0]]
  $region50: #{leap_expert_forward.1} parent=0
    _
  %s13 = ssub.s32 1, %s11
  %s14 = scalar_select 0, %s13, %s11
  // Predicated region
  $region2: #{leap_expert_forward.1} parent=0 // pred_check
    _
  $region3: #{leap_expert_forward.1} parent=0 // pred_check_branch
    %16 = sbr.rel (0) target = $region5
  $region4: #{leap_expert_forward.1} parent=0 // pred_region
    _
  $region5: #{leap_expert_forward.1} parent=0 // pred_fallthru
    _
  // Predicated region
  $region6: #{leap_expert_forward.1} parent=0 // pred_check
    _
  $region7: #{leap_expert_forward.1} parent=0 // pred_check_branch
    %18 = sbr.rel (0) target = $region9
  $region8: #{leap_expert_forward.1} parent=0 // pred_region
    _
  $region9: #{leap_expert_forward.1} parent=0 // pred_fallthru
    _
  // Predicated region
  $region10: #{leap_expert_forward.1} parent=0 // pred_check
    _
  $region11: #{leap_expert_forward.1} parent=0 // pred_check_branch
    %20 = sbr.rel (0) target = $region13
  $region12: #{leap_expert_forward.1} parent=0 // pred_region
    _
  $region13: #{leap_expert_forward.1} parent=0 // pred_fallthru
    _
  // Predicated region
  $region14: #{leap_expert_forward.1} parent=0 // pred_check
    _
  $region15: #{leap_expert_forward.1} parent=0 // pred_check_branch
    %22 = sbr.rel (0) target = $region17
  $region16: #{leap_expert_forward.1} parent=0 // pred_region
    _
  $region17: #{leap_expert_forward.1} parent=0 // pred_fallthru
    _
  // Predicated region
  $region18: #{leap_expert_forward.1} parent=0 // pred_check
    _
  $region19: #{leap_expert_forward.1} parent=0 // pred_check_branch
    %24 = sbr.rel (0) target = $region21
  $region20: #{leap_expert_forward.1} parent=0 // pred_region
    _
  $region21: #{leap_expert_forward.1} parent=0 // pred_fallthru
    _
  // Predicated region
  $region22: #{leap_expert_forward.1} parent=0 // pred_check
    _
  $region23: #{leap_expert_forward.1} parent=0 // pred_check_branch
    %26 = sbr.rel (0) target = $region25
  $region24: #{leap_expert_forward.1} parent=0 // pred_region
    _
  $region25: #{leap_expert_forward.1} parent=0 // pred_fallthru
    _
  // Predicated region
  $region26: #{leap_expert_forward.1} parent=0 // pred_check
    _
  $region27: #{leap_expert_forward.1} parent=0 // pred_check_branch
    %28 = sbr.rel (0) target = $region29
  $region28: #{leap_expert_forward.1} parent=0 // pred_region
    _
  $region29: #{leap_expert_forward.1} parent=0 // pred_fallthru
    _
  // Predicated region
  $region30: #{leap_expert_forward.1} parent=0 // pred_check
    _
  $region31: #{leap_expert_forward.1} parent=0 // pred_check_branch
    %30 = sbr.rel (0) target = $region33
  $region32: #{leap_expert_forward.1} parent=0 // pred_region
    _
  $region33: #{leap_expert_forward.1} parent=0 // pred_fallthru
    _
  // Predicated region
  $region34: #{leap_expert_forward.1} parent=0 // pred_check
    _
  $region35: #{leap_expert_forward.1} parent=0 // pred_check_branch
    %32 = sbr.rel (0) target = $region37
  $region36: #{leap_expert_forward.1} parent=0 // pred_region
    _
  $region37: #{leap_expert_forward.1} parent=0 // pred_fallthru
    _
  // Predicated region
  $region38: #{leap_expert_forward.1} parent=0 // pred_check
    _
  $region39: #{leap_expert_forward.1} parent=0 // pred_check_branch
    %34 = sbr.rel (0) target = $region41
  $region40: #{leap_expert_forward.1} parent=0 // pred_region
    _
  $region41: #{leap_expert_forward.1} parent=0 // pred_fallthru
    _
  %v36 = vld [vmem:[%s0] sm:$0xff]
  %v37 = vld [vmem:[%s0 + $0x8] sm:$0xff]
  %v38 = vld [vmem:[%s0 + $0x10] sm:$0xff]
  %v39 = vld [vmem:[%s0 + $0x18] sm:$0xff]
  %v40 = vld [vmem:[%s0 + $0x20] sm:$0xff]
  %v41 = vld [vmem:[%s0 + $0x28] sm:$0xff]
  %v42 = vld [vmem:[%s0 + $0x30] sm:$0xff]
  %v43 = vld [vmem:[%s0 + $0x38] sm:$0xff]
  %v44 = vld [vmem:[%s0 + $0x40] sm:$0xff]
  %v45 = vld [vmem:[%s0 + $0x48] sm:$0xff]
  %v46 = vld [vmem:[%s0 + $0x50] sm:$0xff]
  %v47 = vld [vmem:[%s0 + $0x58] sm:$0xff]
  %v48 = vld [vmem:[%s0 + $0x60] sm:$0xff]
  %v49 = vld [vmem:[%s0 + $0x68] sm:$0xff]
  %v50 = vld [vmem:[%s0 + $0x70] sm:$0xff]
  %v51 = vld [vmem:[%s0 + $0x78] sm:$0xff]
  %v52 = vld [vmem:[%s0 + $0x80] sm:$0xff]
  %v53 = vld [vmem:[%s0 + $0x88] sm:$0xff]
  %v54 = vld [vmem:[%s0 + $0x90] sm:$0xff]
  %v55 = vld [vmem:[%s0 + $0x98] sm:$0xff]
  %v56 = vld [vmem:[%s0 + $0xa0] sm:$0xff]
  %v57 = vld [vmem:[%s0 + $0xa8] sm:$0xff]
  %v58 = vld [vmem:[%s0 + $0xb0] sm:$0xff]
  %v59 = vld [vmem:[%s0 + $0xb8] sm:$0xff]
  %v60 = vld [vmem:[%s0 + $0xc0] sm:$0xff]
  %v61 = vld [vmem:[%s0 + $0xc8] sm:$0xff]
  %v62 = vld [vmem:[%s0 + $0xd0] sm:$0xff]
  %v63 = vld [vmem:[%s0 + $0xd8] sm:$0xff]
  %v64 = vld [vmem:[%s0 + $0xe0] sm:$0xff]
  %v65 = vld [vmem:[%s0 + $0xe8] sm:$0xff]
  %v66 = vld [vmem:[%s0 + $0xf0] sm:$0xff]
  %v67 = vld [vmem:[%s0 + $0xf8] sm:$0xff]
  %v68 = vld [vmem:[%s0 + $0x100] sm:$0xff]
  %v69 = vld [vmem:[%s0 + $0x108] sm:$0xff]
  %v70 = vld [vmem:[%s0 + $0x110] sm:$0xff]
  %v71 = vld [vmem:[%s0 + $0x118] sm:$0xff]
  %v72 = vld [vmem:[%s0 + $0x120] sm:$0xff]
  %v73 = vld [vmem:[%s0 + $0x128] sm:$0xff]
  %v74 = vld [vmem:[%s0 + $0x130] sm:$0xff]
  %v75 = vld [vmem:[%s0 + $0x138] sm:$0xff]
  %v76 = vld [vmem:[%s0 + $0x140] sm:$0xff]
  %v77 = vld [vmem:[%s0 + $0x148] sm:$0xff]
  %v78 = vld [vmem:[%s0 + $0x150] sm:$0xff]
  %v79 = vld [vmem:[%s0 + $0x158] sm:$0xff]
  %v80 = vld [vmem:[%s0 + $0x160] sm:$0xff]
  %v81 = vld [vmem:[%s0 + $0x168] sm:$0xff]
  %v82 = vld [vmem:[%s0 + $0x170] sm:$0xff]
  %v83 = vld [vmem:[%s0 + $0x178] sm:$0xff]
  %v84 = vld [vmem:[%s0 + $0x180] sm:$0xff]
  %v85 = vld [vmem:[%s0 + $0x188] sm:$0xff]
  %v86 = vld [vmem:[%s0 + $0x190] sm:$0xff]
  %v87 = vld [vmem:[%s0 + $0x198] sm:$0xff]
  %v88 = vld [vmem:[%s0 + $0x1a0] sm:$0xff]
  %v89 = vld [vmem:[%s0 + $0x1a8] sm:$0xff]
  %v90 = vld [vmem:[%s0 + $0x1b0] sm:$0xff]
  %v91 = vld [vmem:[%s0 + $0x1b8] sm:$0xff]
  %v92 = vld [vmem:[%s0 + $0x1c0] sm:$0xff]
  %v93 = vld [vmem:[%s0 + $0x1c8] sm:$0xff]
  %v94 = vld [vmem:[%s0 + $0x1d0] sm:$0xff]
  %v95 = vld [vmem:[%s0 + $0x1d8] sm:$0xff]
  %v96 = vld [vmem:[%s0 + $0x1e0] sm:$0xff]
  %v97 = vld [vmem:[%s0 + $0x1e8] sm:$0xff]
  %v98 = vld [vmem:[%s0 + $0x1f0] sm:$0xff]
  %v99 = vld [vmem:[%s0 + $0x1f8] sm:$0xff]
  %v100 = vld [vmem:[%s0 + $0x200] sm:$0xff]
  %v101 = vld [vmem:[%s0 + $0x208] sm:$0xff]
  %v102 = vld [vmem:[%s0 + $0x210] sm:$0xff]
  %v103 = vld [vmem:[%s0 + $0x218] sm:$0xff]
  %v104 = vld [vmem:[%s0 + $0x220] sm:$0xff]
  %v105 = vld [vmem:[%s0 + $0x228] sm:$0xff]
  %v106 = vld [vmem:[%s0 + $0x230] sm:$0xff]
  %v107 = vld [vmem:[%s0 + $0x238] sm:$0xff]
  %v108 = vld [vmem:[%s0 + $0x240] sm:$0xff]
  %v109 = vld [vmem:[%s0 + $0x248] sm:$0xff]
  %v110 = vld [vmem:[%s0 + $0x250] sm:$0xff]
  %v111 = vld [vmem:[%s0 + $0x258] sm:$0xff]
  %v112 = vld [vmem:[%s0 + $0x260] sm:$0xff]
  %v113 = vld [vmem:[%s0 + $0x268] sm:$0xff]
  %v114 = vld [vmem:[%s0 + $0x270] sm:$0xff]
  %v115 = vld [vmem:[%s0 + $0x278] sm:$0xff]
  %v116 = vld [vmem:[%s0 + $0x280] sm:$0xff]
  %v117 = vld [vmem:[%s0 + $0x288] sm:$0xff]
  %v118 = vld [vmem:[%s0 + $0x290] sm:$0xff]
  %v119 = vld [vmem:[%s0 + $0x298] sm:$0xff]
  %v120 = vld [vmem:[%s0 + $0x2a0] sm:$0xff]
  %v121 = vld [vmem:[%s0 + $0x2a8] sm:$0xff]
  %v122 = vld [vmem:[%s0 + $0x2b0] sm:$0xff]
  %v123 = vld [vmem:[%s0 + $0x2b8] sm:$0xff]
  %v124 = vld [vmem:[%s0 + $0x2c0] sm:$0xff]
  %v125 = vld [vmem:[%s0 + $0x2c8] sm:$0xff]
  %v126 = vld [vmem:[%s0 + $0x2d0] sm:$0xff]
  %v127 = vld [vmem:[%s0 + $0x2d8] sm:$0xff]
  %v128 = vld [vmem:[%s0 + $0x2e0] sm:$0xff]
  %v129 = vld [vmem:[%s0 + $0x2e8] sm:$0xff]
  %v130 = vld [vmem:[%s0 + $0x2f0] sm:$0xff]
  %v131 = vld [vmem:[%s0 + $0x2f8] sm:$0xff]
  %v132 = vld [vmem:[%s0 + $0x300] sm:$0xff]
  %v133 = vld [vmem:[%s0 + $0x308] sm:$0xff]
  %v134 = vld [vmem:[%s0 + $0x310] sm:$0xff]
  %v135 = vld [vmem:[%s0 + $0x318] sm:$0xff]
  %v136 = vld [vmem:[%s0 + $0x320] sm:$0xff]
  %v137 = vld [vmem:[%s0 + $0x328] sm:$0xff]
  %v138 = vld [vmem:[%s0 + $0x330] sm:$0xff]
  %v139 = vld [vmem:[%s0 + $0x338] sm:$0xff]
  %v140 = vld [vmem:[%s0 + $0x340] sm:$0xff]
  %v141 = vld [vmem:[%s0 + $0x348] sm:$0xff]
  %v142 = vld [vmem:[%s0 + $0x350] sm:$0xff]
  %v143 = vld [vmem:[%s0 + $0x358] sm:$0xff]
  %v144 = vld [vmem:[%s0 + $0x360] sm:$0xff]
  %v145 = vld [vmem:[%s0 + $0x368] sm:$0xff]
  %v146 = vld [vmem:[%s0 + $0x370] sm:$0xff]
  %v147 = vld [vmem:[%s0 + $0x378] sm:$0xff]
  %v148 = vld [vmem:[%s0 + $0x380] sm:$0xff]
  %v149 = vld [vmem:[%s0 + $0x388] sm:$0xff]
  %v150 = vld [vmem:[%s0 + $0x390] sm:$0xff]
  %v151 = vld [vmem:[%s0 + $0x398] sm:$0xff]
  %v152 = vld [vmem:[%s0 + $0x3a0] sm:$0xff]
  %v153 = vld [vmem:[%s0 + $0x3a8] sm:$0xff]
  %v154 = vld [vmem:[%s0 + $0x3b0] sm:$0xff]
  %v155 = vld [vmem:[%s0 + $0x3b8] sm:$0xff]
  %v156 = vld [vmem:[%s0 + $0x3c0] sm:$0xff]
  %v157 = vld [vmem:[%s0 + $0x3c8] sm:$0xff]
  %v158 = vld [vmem:[%s0 + $0x3d0] sm:$0xff]
  %v159 = vld [vmem:[%s0 + $0x3d8] sm:$0xff]
  %v160 = vld [vmem:[%s0 + $0x3e0] sm:$0xff]
  %v161 = vld [vmem:[%s0 + $0x3e8] sm:$0xff]
  %v162 = vld [vmem:[%s0 + $0x3f0] sm:$0xff]
  %v163 = vld [vmem:[%s0 + $0x3f8] sm:$0xff]
  %v164 = vld [vmem:[%s1] sm:$0xff]
  %v165 = vld [vmem:[%s1 + $0x8] sm:$0xff]
  %v166 = vld [vmem:[%s1 + $0x10] sm:$0xff]
  %v167 = vld [vmem:[%s1 + $0x18] sm:$0xff]
  %v168 = vld [vmem:[%s1 + $0x20] sm:$0xff]
  %v169 = vld [vmem:[%s1 + $0x28] sm:$0xff]
  %v170 = vld [vmem:[%s1 + $0x30] sm:$0xff]
  %v171 = vld [vmem:[%s1 + $0x38] sm:$0xff]
  %v172 = vld [vmem:[%s1 + $0x40] sm:$0xff]
  %v173 = vld [vmem:[%s1 + $0x48] sm:$0xff]
  %v174 = vld [vmem:[%s1 + $0x50] sm:$0xff]
  %v175 = vld [vmem:[%s1 + $0x58] sm:$0xff]
  %v176 = vld [vmem:[%s1 + $0x60] sm:$0xff]
  %v177 = vld [vmem:[%s1 + $0x68] sm:$0xff]
  %v178 = vld [vmem:[%s1 + $0x70] sm:$0xff]
  %v179 = vld [vmem:[%s1 + $0x78] sm:$0xff]
  %v180 = vld [vmem:[%s1 + $0x80] sm:$0xff]
  %v181 = vld [vmem:[%s1 + $0x88] sm:$0xff]
  %v182 = vld [vmem:[%s1 + $0x90] sm:$0xff]
  %v183 = vld [vmem:[%s1 + $0x98] sm:$0xff]
  %v184 = vld [vmem:[%s1 + $0xa0] sm:$0xff]
  %v185 = vld [vmem:[%s1 + $0xa8] sm:$0xff]
  %v186 = vld [vmem:[%s1 + $0xb0] sm:$0xff]
  %v187 = vld [vmem:[%s1 + $0xb8] sm:$0xff]
  %v188 = vld [vmem:[%s1 + $0xc0] sm:$0xff]
  %v189 = vld [vmem:[%s1 + $0xc8] sm:$0xff]
  %v190 = vld [vmem:[%s1 + $0xd0] sm:$0xff]
  %v191 = vld [vmem:[%s1 + $0xd8] sm:$0xff]
  %v192 = vld [vmem:[%s1 + $0xe0] sm:$0xff]
  %v193 = vld [vmem:[%s1 + $0xe8] sm:$0xff]
  %v194 = vld [vmem:[%s1 + $0xf0] sm:$0xff]
  %v195 = vld [vmem:[%s1 + $0xf8] sm:$0xff]
  %v196 = vld [vmem:[%s1 + $0x100] sm:$0xff]
  %v197 = vld [vmem:[%s1 + $0x108] sm:$0xff]
  %v198 = vld [vmem:[%s1 + $0x110] sm:$0xff]
  %v199 = vld [vmem:[%s1 + $0x118] sm:$0xff]
  %v200 = vld [vmem:[%s1 + $0x120] sm:$0xff]
  %v201 = vld [vmem:[%s1 + $0x128] sm:$0xff]
  %v202 = vld [vmem:[%s1 + $0x130] sm:$0xff]
  %v203 = vld [vmem:[%s1 + $0x138] sm:$0xff]
  %v204 = vld [vmem:[%s1 + $0x140] sm:$0xff]
  %v205 = vld [vmem:[%s1 + $0x148] sm:$0xff]
  %v206 = vld [vmem:[%s1 + $0x150] sm:$0xff]
  %v207 = vld [vmem:[%s1 + $0x158] sm:$0xff]
  %v208 = vld [vmem:[%s1 + $0x160] sm:$0xff]
  %v209 = vld [vmem:[%s1 + $0x168] sm:$0xff]
  %v210 = vld [vmem:[%s1 + $0x170] sm:$0xff]
  %v211 = vld [vmem:[%s1 + $0x178] sm:$0xff]
  %v212 = vld [vmem:[%s1 + $0x180] sm:$0xff]
  %v213 = vld [vmem:[%s1 + $0x188] sm:$0xff]
  %v214 = vld [vmem:[%s1 + $0x190] sm:$0xff]
  %v215 = vld [vmem:[%s1 + $0x198] sm:$0xff]
  %v216 = vld [vmem:[%s1 + $0x1a0] sm:$0xff]
  %v217 = vld [vmem:[%s1 + $0x1a8] sm:$0xff]
  %v218 = vld [vmem:[%s2] sm:$0xf]
  %v220 = vperm.slane %v218, 0
  %v221 = vperm.slane %v218, 1
  %v222 = vperm.slane %v218, 2
  %v223 = vperm.slane %v218, 3
  %v356 = vunpack.c.l.b16 %v36
  %v357 = vunpack.c.h.b16 %v36
  %v358 = vunpack.c.l.b16 %v37
  %v359 = vunpack.c.h.b16 %v37
  %v360 = vunpack.c.l.b16 %v38
  %v361 = vunpack.c.h.b16 %v38
  %v362 = vunpack.c.l.b16 %v39
  %v363 = vunpack.c.h.b16 %v39
  %v364 = vunpack.c.l.b16 %v40
  %v365 = vunpack.c.h.b16 %v40
  %v366 = vunpack.c.l.b16 %v41
  %v367 = vunpack.c.h.b16 %v41
  %v368 = vunpack.c.l.b16 %v42
  %v369 = vunpack.c.h.b16 %v42
  %v370 = vunpack.c.l.b16 %v43
  %v371 = vunpack.c.h.b16 %v43
  %v372 = vunpack.c.l.b16 %v44
  %v373 = vunpack.c.h.b16 %v44
  %v374 = vunpack.c.l.b16 %v45
  %v375 = vunpack.c.h.b16 %v45
  %v376 = vunpack.c.l.b16 %v46
  %v377 = vunpack.c.h.b16 %v46
  %v378 = vunpack.c.l.b16 %v47
  %v379 = vunpack.c.h.b16 %v47
  %v380 = vunpack.c.l.b16 %v48
  %v381 = vunpack.c.h.b16 %v48
  %v382 = vunpack.c.l.b16 %v49
  %v383 = vunpack.c.h.b16 %v49
  %v384 = vunpack.c.l.b16 %v50
  %v385 = vunpack.c.h.b16 %v50
  %v386 = vunpack.c.l.b16 %v51
  %v387 = vunpack.c.h.b16 %v51
  %v388 = vunpack.c.l.b16 %v52
  %v389 = vunpack.c.h.b16 %v52
  %v390 = vunpack.c.l.b16 %v53
  %v391 = vunpack.c.h.b16 %v53
  %v392 = vunpack.c.l.b16 %v54
  %v393 = vunpack.c.h.b16 %v54
  %v394 = vunpack.c.l.b16 %v55
  %v395 = vunpack.c.h.b16 %v55
  %v396 = vunpack.c.l.b16 %v56
  %v397 = vunpack.c.h.b16 %v56
  %v398 = vunpack.c.l.b16 %v57
  %v399 = vunpack.c.h.b16 %v57
  %v400 = vunpack.c.l.b16 %v58
  %v401 = vunpack.c.h.b16 %v58
  %v402 = vunpack.c.l.b16 %v59
  %v403 = vunpack.c.h.b16 %v59
  %v404 = vunpack.c.l.b16 %v60
  %v405 = vunpack.c.h.b16 %v60
  %v406 = vunpack.c.l.b16 %v61
  %v407 = vunpack.c.h.b16 %v61
  %v408 = vunpack.c.l.b16 %v62
  %v409 = vunpack.c.h.b16 %v62
  %v410 = vunpack.c.l.b16 %v63
  %v411 = vunpack.c.h.b16 %v63
  %v412 = vunpack.c.l.b16 %v64
  %v413 = vunpack.c.h.b16 %v64
  %v414 = vunpack.c.l.b16 %v65
  %v415 = vunpack.c.h.b16 %v65
  %v416 = vunpack.c.l.b16 %v66
  %v417 = vunpack.c.h.b16 %v66
  %v418 = vunpack.c.l.b16 %v67
  %v419 = vunpack.c.h.b16 %v67
  %v420 = vunpack.c.l.b16 %v68
  %v421 = vunpack.c.h.b16 %v68
  %v422 = vunpack.c.l.b16 %v69
  %v423 = vunpack.c.h.b16 %v69
  %v424 = vunpack.c.l.b16 %v70
  %v425 = vunpack.c.h.b16 %v70
  %v426 = vunpack.c.l.b16 %v71
  %v427 = vunpack.c.h.b16 %v71
  %v428 = vunpack.c.l.b16 %v72
  %v429 = vunpack.c.h.b16 %v72
  %v430 = vunpack.c.l.b16 %v73
  %v431 = vunpack.c.h.b16 %v73
  %v432 = vunpack.c.l.b16 %v74
  %v433 = vunpack.c.h.b16 %v74
  %v434 = vunpack.c.l.b16 %v75
  %v435 = vunpack.c.h.b16 %v75
  %v436 = vunpack.c.l.b16 %v76
  %v437 = vunpack.c.h.b16 %v76
  %v438 = vunpack.c.l.b16 %v77
  %v439 = vunpack.c.h.b16 %v77
  %v440 = vunpack.c.l.b16 %v78
  %v441 = vunpack.c.h.b16 %v78
  %v442 = vunpack.c.l.b16 %v79
  %v443 = vunpack.c.h.b16 %v79
  %v444 = vunpack.c.l.b16 %v80
  %v445 = vunpack.c.h.b16 %v80
  %v446 = vunpack.c.l.b16 %v81
  %v447 = vunpack.c.h.b16 %v81
  %v448 = vunpack.c.l.b16 %v82
  %v449 = vunpack.c.h.b16 %v82
  %v450 = vunpack.c.l.b16 %v83
  %v451 = vunpack.c.h.b16 %v83
  %v452 = vunpack.c.l.b16 %v84
  %v453 = vunpack.c.h.b16 %v84
  %v454 = vunpack.c.l.b16 %v85
  %v455 = vunpack.c.h.b16 %v85
  %v456 = vunpack.c.l.b16 %v86
  %v457 = vunpack.c.h.b16 %v86
  %v458 = vunpack.c.l.b16 %v87
  %v459 = vunpack.c.h.b16 %v87
  %v460 = vunpack.c.l.b16 %v88
  %v461 = vunpack.c.h.b16 %v88
  %v462 = vunpack.c.l.b16 %v89
  %v463 = vunpack.c.h.b16 %v89
  %v464 = vunpack.c.l.b16 %v90
  %v465 = vunpack.c.h.b16 %v90
  %v466 = vunpack.c.l.b16 %v91
  %v467 = vunpack.c.h.b16 %v91
  %v468 = vunpack.c.l.b16 %v92
  %v469 = vunpack.c.h.b16 %v92
  %v470 = vunpack.c.l.b16 %v93
  %v471 = vunpack.c.h.b16 %v93
  %v472 = vunpack.c.l.b16 %v94
  %v473 = vunpack.c.h.b16 %v94
  %v474 = vunpack.c.l.b16 %v95
  %v475 = vunpack.c.h.b16 %v95
  %v476 = vunpack.c.l.b16 %v96
  %v477 = vunpack.c.h.b16 %v96
  %v478 = vunpack.c.l.b16 %v97
  %v479 = vunpack.c.h.b16 %v97
  %v480 = vunpack.c.l.b16 %v98
  %v481 = vunpack.c.h.b16 %v98
  %v482 = vunpack.c.l.b16 %v99
  %v483 = vunpack.c.h.b16 %v99
  %v484 = vunpack.c.l.b16 %v100
  %v485 = vunpack.c.h.b16 %v100
  %v486 = vunpack.c.l.b16 %v101
  %v487 = vunpack.c.h.b16 %v101
  %v488 = vunpack.c.l.b16 %v102
  %v489 = vunpack.c.h.b16 %v102
  %v490 = vunpack.c.l.b16 %v103
  %v491 = vunpack.c.h.b16 %v103
  %v492 = vunpack.c.l.b16 %v104
  %v493 = vunpack.c.h.b16 %v104
  %v494 = vunpack.c.l.b16 %v105
  %v495 = vunpack.c.h.b16 %v105
  %v496 = vunpack.c.l.b16 %v106
  %v497 = vunpack.c.h.b16 %v106
  %v498 = vunpack.c.l.b16 %v107
  %v499 = vunpack.c.h.b16 %v107
  %v500 = vunpack.c.l.b16 %v108
  %v501 = vunpack.c.h.b16 %v108
  %v502 = vunpack.c.l.b16 %v109
  %v503 = vunpack.c.h.b16 %v109
  %v504 = vunpack.c.l.b16 %v110
  %v505 = vunpack.c.h.b16 %v110
  %v506 = vunpack.c.l.b16 %v111
  %v507 = vunpack.c.h.b16 %v111
  %v508 = vunpack.c.l.b16 %v112
  %v509 = vunpack.c.h.b16 %v112
  %v510 = vunpack.c.l.b16 %v113
  %v511 = vunpack.c.h.b16 %v113
  %v512 = vunpack.c.l.b16 %v114
  %v513 = vunpack.c.h.b16 %v114
  %v514 = vunpack.c.l.b16 %v115
  %v515 = vunpack.c.h.b16 %v115
  %v516 = vunpack.c.l.b16 %v116
  %v517 = vunpack.c.h.b16 %v116
  %v518 = vunpack.c.l.b16 %v117
  %v519 = vunpack.c.h.b16 %v117
  %v520 = vunpack.c.l.b16 %v118
  %v521 = vunpack.c.h.b16 %v118
  %v522 = vunpack.c.l.b16 %v119
  %v523 = vunpack.c.h.b16 %v119
  %v524 = vunpack.c.l.b16 %v120
  %v525 = vunpack.c.h.b16 %v120
  %v526 = vunpack.c.l.b16 %v121
  %v527 = vunpack.c.h.b16 %v121
  %v528 = vunpack.c.l.b16 %v122
  %v529 = vunpack.c.h.b16 %v122
  %v530 = vunpack.c.l.b16 %v123
  %v531 = vunpack.c.h.b16 %v123
  %v532 = vunpack.c.l.b16 %v124
  %v533 = vunpack.c.h.b16 %v124
  %v534 = vunpack.c.l.b16 %v125
  %v535 = vunpack.c.h.b16 %v125
  %v536 = vunpack.c.l.b16 %v126
  %v537 = vunpack.c.h.b16 %v126
  %v538 = vunpack.c.l.b16 %v127
  %v539 = vunpack.c.h.b16 %v127
  %v540 = vunpack.c.l.b16 %v128
  %v541 = vunpack.c.h.b16 %v128
  %v542 = vunpack.c.l.b16 %v129
  %v543 = vunpack.c.h.b16 %v129
  %v544 = vunpack.c.l.b16 %v130
  %v545 = vunpack.c.h.b16 %v130
  %v546 = vunpack.c.l.b16 %v131
  %v547 = vunpack.c.h.b16 %v131
  %v548 = vunpack.c.l.b16 %v132
  %v549 = vunpack.c.h.b16 %v132
  %v550 = vunpack.c.l.b16 %v133
  %v551 = vunpack.c.h.b16 %v133
  %v552 = vunpack.c.l.b16 %v134
  %v553 = vunpack.c.h.b16 %v134
  %v554 = vunpack.c.l.b16 %v135
  %v555 = vunpack.c.h.b16 %v135
  %v556 = vunpack.c.l.b16 %v136
  %v557 = vunpack.c.h.b16 %v136
  %v558 = vunpack.c.l.b16 %v137
  %v559 = vunpack.c.h.b16 %v137
  %v560 = vunpack.c.l.b16 %v138
  %v561 = vunpack.c.h.b16 %v138
  %v562 = vunpack.c.l.b16 %v139
  %v563 = vunpack.c.h.b16 %v139
  %v564 = vunpack.c.l.b16 %v140
  %v565 = vunpack.c.h.b16 %v140
  %v566 = vunpack.c.l.b16 %v141
  %v567 = vunpack.c.h.b16 %v141
  %v568 = vunpack.c.l.b16 %v142
  %v569 = vunpack.c.h.b16 %v142
  %v570 = vunpack.c.l.b16 %v143
  %v571 = vunpack.c.h.b16 %v143
  %v572 = vunpack.c.l.b16 %v144
  %v573 = vunpack.c.h.b16 %v144
  %v574 = vunpack.c.l.b16 %v145
  %v575 = vunpack.c.h.b16 %v145
  %v576 = vunpack.c.l.b16 %v146
  %v577 = vunpack.c.h.b16 %v146
  %v578 = vunpack.c.l.b16 %v147
  %v579 = vunpack.c.h.b16 %v147
  %v580 = vunpack.c.l.b16 %v148
  %v581 = vunpack.c.h.b16 %v148
  %v582 = vunpack.c.l.b16 %v149
  %v583 = vunpack.c.h.b16 %v149
  %v584 = vunpack.c.l.b16 %v150
  %v585 = vunpack.c.h.b16 %v150
  %v586 = vunpack.c.l.b16 %v151
  %v587 = vunpack.c.h.b16 %v151
  %v588 = vunpack.c.l.b16 %v152
  %v589 = vunpack.c.h.b16 %v152
  %v590 = vunpack.c.l.b16 %v153
  %v591 = vunpack.c.h.b16 %v153
  %v592 = vunpack.c.l.b16 %v154
  %v593 = vunpack.c.h.b16 %v154
  %v594 = vunpack.c.l.b16 %v155
  %v595 = vunpack.c.h.b16 %v155
  %v596 = vunpack.c.l.b16 %v156
  %v597 = vunpack.c.h.b16 %v156
  %v598 = vunpack.c.l.b16 %v157
  %v599 = vunpack.c.h.b16 %v157
  %v600 = vunpack.c.l.b16 %v158
  %v601 = vunpack.c.h.b16 %v158
  %v602 = vunpack.c.l.b16 %v159
  %v603 = vunpack.c.h.b16 %v159
  %v604 = vunpack.c.l.b16 %v160
  %v605 = vunpack.c.h.b16 %v160
  %v606 = vunpack.c.l.b16 %v161
  %v607 = vunpack.c.h.b16 %v161
  %v608 = vunpack.c.l.b16 %v162
  %v609 = vunpack.c.h.b16 %v162
  %v610 = vunpack.c.l.b16 %v163
  %v611 = vunpack.c.h.b16 %v163
  %v612 = vpack.c.b16 %v358, %v356
  %v613 = vpack.c.b16 %v359, %v357
  %v614 = vpack.c.b16 %v362, %v360
  %v615 = vpack.c.b16 %v363, %v361
  %v616 = vpack.c.b16 %v366, %v364
  %v617 = vpack.c.b16 %v367, %v365
  %v618 = vpack.c.b16 %v370, %v368
  %v619 = vpack.c.b16 %v371, %v369
  %v620 = vpack.c.b16 %v374, %v372
  %v621 = vpack.c.b16 %v375, %v373
  %v622 = vpack.c.b16 %v378, %v376
  %v623 = vpack.c.b16 %v379, %v377
  %v624 = vpack.c.b16 %v382, %v380
  %v625 = vpack.c.b16 %v383, %v381
  %v626 = vpack.c.b16 %v386, %v384
  %v627 = vpack.c.b16 %v387, %v385
  %v628 = vpack.c.b16 %v390, %v388
  %v629 = vpack.c.b16 %v391, %v389
  %v630 = vpack.c.b16 %v394, %v392
  %v631 = vpack.c.b16 %v395, %v393
  %v632 = vpack.c.b16 %v398, %v396
  %v633 = vpack.c.b16 %v399, %v397
  %v634 = vpack.c.b16 %v402, %v400
  %v635 = vpack.c.b16 %v403, %v401
  %v636 = vpack.c.b16 %v406, %v404
  %v637 = vpack.c.b16 %v407, %v405
  %v638 = vpack.c.b16 %v410, %v408
  %v639 = vpack.c.b16 %v411, %v409
  %v640 = vpack.c.b16 %v414, %v412
  %v641 = vpack.c.b16 %v415, %v413
  %v642 = vpack.c.b16 %v418, %v416
  %v643 = vpack.c.b16 %v419, %v417
  %v644 = vpack.c.b16 %v422, %v420
  %v645 = vpack.c.b16 %v423, %v421
  %v646 = vpack.c.b16 %v426, %v424
  %v647 = vpack.c.b16 %v427, %v425
  %v648 = vpack.c.b16 %v430, %v428
  %v649 = vpack.c.b16 %v431, %v429
  %v650 = vpack.c.b16 %v434, %v432
  %v651 = vpack.c.b16 %v435, %v433
  %v652 = vpack.c.b16 %v438, %v436
  %v653 = vpack.c.b16 %v439, %v437
  %v654 = vpack.c.b16 %v442, %v440
  %v655 = vpack.c.b16 %v443, %v441
  %v656 = vpack.c.b16 %v446, %v444
  %v657 = vpack.c.b16 %v447, %v445
  %v658 = vpack.c.b16 %v450, %v448
  %v659 = vpack.c.b16 %v451, %v449
  %v660 = vpack.c.b16 %v454, %v452
  %v661 = vpack.c.b16 %v455, %v453
  %v662 = vpack.c.b16 %v458, %v456
  %v663 = vpack.c.b16 %v459, %v457
  %v664 = vpack.c.b16 %v462, %v460
  %v665 = vpack.c.b16 %v463, %v461
  %v666 = vpack.c.b16 %v466, %v464
  %v667 = vpack.c.b16 %v467, %v465
  %v668 = vpack.c.b16 %v470, %v468
  %v669 = vpack.c.b16 %v471, %v469
  %v670 = vpack.c.b16 %v474, %v472
  %v671 = vpack.c.b16 %v475, %v473
  %v672 = vpack.c.b16 %v478, %v476
  %v673 = vpack.c.b16 %v479, %v477
  %v674 = vpack.c.b16 %v482, %v480
  %v675 = vpack.c.b16 %v483, %v481
  %v676 = vpack.c.b16 %v486, %v484
  %v677 = vpack.c.b16 %v487, %v485
  %v678 = vpack.c.b16 %v490, %v488
  %v679 = vpack.c.b16 %v491, %v489
  %v680 = vpack.c.b16 %v494, %v492
  %v681 = vpack.c.b16 %v495, %v493
  %v682 = vpack.c.b16 %v498, %v496
  %v683 = vpack.c.b16 %v499, %v497
  %v684 = vpack.c.b16 %v502, %v500
  %v685 = vpack.c.b16 %v503, %v501
  %v686 = vpack.c.b16 %v506, %v504
  %v687 = vpack.c.b16 %v507, %v505
  %v688 = vpack.c.b16 %v510, %v508
  %v689 = vpack.c.b16 %v511, %v509
  %v690 = vpack.c.b16 %v514, %v512
  %v691 = vpack.c.b16 %v515, %v513
  %v692 = vpack.c.b16 %v518, %v516
  %v693 = vpack.c.b16 %v519, %v517
  %v694 = vpack.c.b16 %v522, %v520
  %v695 = vpack.c.b16 %v523, %v521
  %v696 = vpack.c.b16 %v526, %v524
  %v697 = vpack.c.b16 %v527, %v525
  %v698 = vpack.c.b16 %v530, %v528
  %v699 = vpack.c.b16 %v531, %v529
  %v700 = vpack.c.b16 %v534, %v532
  %v701 = vpack.c.b16 %v535, %v533
  %v702 = vpack.c.b16 %v538, %v536
  %v703 = vpack.c.b16 %v539, %v537
  %v704 = vpack.c.b16 %v542, %v540
  %v705 = vpack.c.b16 %v543, %v541
  %v706 = vpack.c.b16 %v546, %v544
  %v707 = vpack.c.b16 %v547, %v545
  %v708 = vpack.c.b16 %v550, %v548
  %v709 = vpack.c.b16 %v551, %v549
  %v710 = vpack.c.b16 %v554, %v552
  %v711 = vpack.c.b16 %v555, %v553
  %v712 = vpack.c.b16 %v558, %v556
  %v713 = vpack.c.b16 %v559, %v557
  %v714 = vpack.c.b16 %v562, %v560
  %v715 = vpack.c.b16 %v563, %v561
  %v716 = vpack.c.b16 %v566, %v564
  %v717 = vpack.c.b16 %v567, %v565
  %v718 = vpack.c.b16 %v570, %v568
  %v719 = vpack.c.b16 %v571, %v569
  %v720 = vpack.c.b16 %v574, %v572
  %v721 = vpack.c.b16 %v575, %v573
  %v722 = vpack.c.b16 %v578, %v576
  %v723 = vpack.c.b16 %v579, %v577
  %v724 = vpack.c.b16 %v582, %v580
  %v725 = vpack.c.b16 %v583, %v581
  %v726 = vpack.c.b16 %v586, %v584
  %v727 = vpack.c.b16 %v587, %v585
  %v728 = vpack.c.b16 %v590, %v588
  %v729 = vpack.c.b16 %v591, %v589
  %v730 = vpack.c.b16 %v594, %v592
  %v731 = vpack.c.b16 %v595, %v593
  %v732 = vpack.c.b16 %v598, %v596
  %v733 = vpack.c.b16 %v599, %v597
  %v734 = vpack.c.b16 %v602, %v600
  %v735 = vpack.c.b16 %v603, %v601
  %v736 = vpack.c.b16 %v606, %v604
  %v737 = vpack.c.b16 %v607, %v605
  %v738 = vpack.c.b16 %v610, %v608
  %v739 = vpack.c.b16 %v611, %v609
  %v858 = vunpack.c.l.b16 %v164
  %v859 = vunpack.c.h.b16 %v164
  %v860 = vunpack.c.l.b16 %v165
  %v861 = vunpack.c.h.b16 %v165
  %v862 = vunpack.c.l.b16 %v166
  %v863 = vunpack.c.h.b16 %v166
  %v864 = vunpack.c.l.b16 %v167
  %v865 = vunpack.c.h.b16 %v167
  %v866 = vunpack.c.l.b16 %v168
  %v867 = vunpack.c.h.b16 %v168
  %v868 = vunpack.c.l.b16 %v169
  %v869 = vunpack.c.h.b16 %v169
  %v870 = vunpack.c.l.b16 %v170
  %v871 = vunpack.c.h.b16 %v170
  %v872 = vunpack.c.l.b16 %v171
  %v873 = vunpack.c.h.b16 %v171
  %v874 = vunpack.c.l.b16 %v172
  %v875 = vunpack.c.h.b16 %v172
  %v876 = vunpack.c.l.b16 %v173
  %v877 = vunpack.c.h.b16 %v173
  %v878 = vunpack.c.l.b16 %v174
  %v879 = vunpack.c.h.b16 %v174
  %v880 = vunpack.c.l.b16 %v175
  %v881 = vunpack.c.h.b16 %v175
  %v882 = vunpack.c.l.b16 %v176
  %v883 = vunpack.c.h.b16 %v176
  %v884 = vunpack.c.l.b16 %v177
  %v885 = vunpack.c.h.b16 %v177
  %v886 = vunpack.c.l.b16 %v178
  %v887 = vunpack.c.h.b16 %v178
  %v888 = vunpack.c.l.b16 %v179
  %v889 = vunpack.c.h.b16 %v179
  %v890 = vunpack.c.l.b16 %v180
  %v891 = vunpack.c.h.b16 %v180
  %v892 = vunpack.c.l.b16 %v181
  %v893 = vunpack.c.h.b16 %v181
  %v894 = vunpack.c.l.b16 %v182
  %v895 = vunpack.c.h.b16 %v182
  %v896 = vunpack.c.l.b16 %v183
  %v897 = vunpack.c.h.b16 %v183
  %v898 = vunpack.c.l.b16 %v184
  %v899 = vunpack.c.h.b16 %v184
  %v900 = vunpack.c.l.b16 %v185
  %v901 = vunpack.c.h.b16 %v185
  %v902 = vunpack.c.l.b16 %v186
  %v903 = vunpack.c.h.b16 %v186
  %v904 = vunpack.c.l.b16 %v187
  %v905 = vunpack.c.h.b16 %v187
  %v906 = vunpack.c.l.b16 %v188
  %v907 = vunpack.c.h.b16 %v188
  %v908 = vunpack.c.l.b16 %v189
  %v909 = vunpack.c.h.b16 %v189
  %v910 = vunpack.c.l.b16 %v190
  %v911 = vunpack.c.h.b16 %v190
  %v912 = vunpack.c.l.b16 %v191
  %v913 = vunpack.c.h.b16 %v191
  %v914 = vunpack.c.l.b16 %v192
  %v915 = vunpack.c.h.b16 %v192
  %v916 = vunpack.c.l.b16 %v193
  %v917 = vunpack.c.h.b16 %v193
  %v918 = vunpack.c.l.b16 %v194
  %v919 = vunpack.c.h.b16 %v194
  %v920 = vunpack.c.l.b16 %v195
  %v921 = vunpack.c.h.b16 %v195
  %v922 = vunpack.c.l.b16 %v196
  %v923 = vunpack.c.h.b16 %v196
  %v924 = vunpack.c.l.b16 %v197
  %v925 = vunpack.c.h.b16 %v197
  %v926 = vunpack.c.l.b16 %v198
  %v927 = vunpack.c.h.b16 %v198
  %v928 = vunpack.c.l.b16 %v199
  %v929 = vunpack.c.h.b16 %v199
  %v930 = vunpack.c.l.b16 %v200
  %v931 = vunpack.c.h.b16 %v200
  %v932 = vunpack.c.l.b16 %v201
  %v933 = vunpack.c.h.b16 %v201
  %v934 = vunpack.c.l.b16 %v202
  %v935 = vunpack.c.h.b16 %v202
  %v936 = vunpack.c.l.b16 %v203
  %v937 = vunpack.c.h.b16 %v203
  %v938 = vunpack.c.l.b16 %v204
  %v939 = vunpack.c.h.b16 %v204
  %v940 = vunpack.c.l.b16 %v205
  %v941 = vunpack.c.h.b16 %v205
  %v942 = vunpack.c.l.b16 %v206
  %v943 = vunpack.c.h.b16 %v206
  %v944 = vunpack.c.l.b16 %v207
  %v945 = vunpack.c.h.b16 %v207
  %v946 = vunpack.c.l.b16 %v208
  %v947 = vunpack.c.h.b16 %v208
  %v948 = vunpack.c.l.b16 %v209
  %v949 = vunpack.c.h.b16 %v209
  %v950 = vunpack.c.l.b16 %v210
  %v951 = vunpack.c.h.b16 %v210
  %v952 = vunpack.c.l.b16 %v211
  %v953 = vunpack.c.h.b16 %v211
  %v954 = vunpack.c.l.b16 %v212
  %v955 = vunpack.c.h.b16 %v212
  %v956 = vunpack.c.l.b16 %v213
  %v957 = vunpack.c.h.b16 %v213
  %v958 = vunpack.c.l.b16 %v214
  %v959 = vunpack.c.h.b16 %v214
  %v960 = vunpack.c.l.b16 %v215
  %v961 = vunpack.c.h.b16 %v215
  %v962 = vunpack.c.l.b16 %v216
  %v963 = vunpack.c.h.b16 %v216
  %v964 = vunpack.c.l.b16 %v217
  %v965 = vunpack.c.h.b16 %v217
  %v966 = vpack.c.b16 %v862, %v858
  %v967 = vpack.c.b16 %v863, %v859
  %v968 = vpack.c.b16 %v864, %v860
  %v969 = vpack.c.b16 %v865, %v861
  %v970 = vpack.c.b16 %v870, %v866
  %v971 = vpack.c.b16 %v871, %v867
  %v972 = vpack.c.b16 %v872, %v868
  %v973 = vpack.c.b16 %v873, %v869
  %v974 = vpack.c.b16 %v878, %v874
  %v975 = vpack.c.b16 %v879, %v875
  %v976 = vpack.c.b16 %v880, %v876
  %v977 = vpack.c.b16 %v881, %v877
  %v978 = vpack.c.b16 %v886, %v882
  %v979 = vpack.c.b16 %v887, %v883
  %v980 = vpack.c.b16 %v888, %v884
  %v981 = vpack.c.b16 %v889, %v885
  %v982 = vpack.c.b16 %v894, %v890
  %v983 = vpack.c.b16 %v895, %v891
  %v984 = vpack.c.b16 %v896, %v892
  %v985 = vpack.c.b16 %v897, %v893
  %v986 = vpack.c.b16 %v902, %v898
  %v987 = vpack.c.b16 %v903, %v899
  %v988 = vpack.c.b16 %v904, %v900
  %v989 = vpack.c.b16 %v905, %v901
  %v990 = vpack.c.b16 %v910, %v906
  %v991 = vpack.c.b16 %v911, %v907
  %v992 = vpack.c.b16 %v912, %v908
  %v993 = vpack.c.b16 %v913, %v909
  %v994 = vpack.c.b16 %v918, %v914
  %v995 = vpack.c.b16 %v919, %v915
  %v996 = vpack.c.b16 %v920, %v916
  %v997 = vpack.c.b16 %v921, %v917
  %v998 = vpack.c.b16 %v926, %v922
  %v999 = vpack.c.b16 %v927, %v923
  %v1000 = vpack.c.b16 %v928, %v924
  %v1001 = vpack.c.b16 %v929, %v925
  %v1002 = vpack.c.b16 %v934, %v930
  %v1003 = vpack.c.b16 %v935, %v931
  %v1004 = vpack.c.b16 %v936, %v932
  %v1005 = vpack.c.b16 %v937, %v933
  %v1006 = vpack.c.b16 %v942, %v938
  %v1007 = vpack.c.b16 %v943, %v939
  %v1008 = vpack.c.b16 %v944, %v940
  %v1009 = vpack.c.b16 %v945, %v941
  %v1010 = vpack.c.b16 %v950, %v946
  %v1011 = vpack.c.b16 %v951, %v947
  %v1012 = vpack.c.b16 %v952, %v948
  %v1013 = vpack.c.b16 %v953, %v949
  %v1014 = vpack.c.b16 %v958, %v954
  %v1015 = vpack.c.b16 %v959, %v955
  %v1016 = vpack.c.b16 %v960, %v956
  %v1017 = vpack.c.b16 %v961, %v957
  %v1018 = vpack.c.b16 %v962, %v962
  %v1019 = vpack.c.b16 %v963, %v963
  %v1020 = vpack.c.b16 %v964, %v964
  %v1021 = vpack.c.b16 %v965, %v965
  %vm1074 = vcmask 719872
  %v1076 = vsel %vm1074, %v613, 0
  %v1079 = vsel %vm1074, %v615, 0
  %v1082 = vsel %vm1074, %v617, 0
  %v1085 = vsel %vm1074, %v619, 0
  %v1088 = vsel %vm1074, %v621, 0
  %v1091 = vsel %vm1074, %v623, 0
  %v1094 = vsel %vm1074, %v625, 0
  %v1097 = vsel %vm1074, %v627, 0
  %v1100 = vsel %vm1074, %v629, 0
  %v1103 = vsel %vm1074, %v631, 0
  %v1106 = vsel %vm1074, %v633, 0
  %v1109 = vsel %vm1074, %v635, 0
  %v1112 = vsel %vm1074, %v637, 0
  %v1115 = vsel %vm1074, %v639, 0
  %v1118 = vsel %vm1074, %v641, 0
  %v1121 = vsel %vm1074, %v643, 0
  %v1124 = vsel %vm1074, %v645, 0
  %v1127 = vsel %vm1074, %v647, 0
  %v1130 = vsel %vm1074, %v649, 0
  %v1133 = vsel %vm1074, %v651, 0
  %v1136 = vsel %vm1074, %v653, 0
  %v1139 = vsel %vm1074, %v655, 0
  %v1142 = vsel %vm1074, %v657, 0
  %v1145 = vsel %vm1074, %v659, 0
  %v1148 = vsel %vm1074, %v661, 0
  %v1151 = vsel %vm1074, %v663, 0
  %v1154 = vsel %vm1074, %v665, 0
  %v1157 = vsel %vm1074, %v667, 0
  %v1160 = vsel %vm1074, %v669, 0
  %v1163 = vsel %vm1074, %v671, 0
  %v1166 = vsel %vm1074, %v673, 0
  %v1169 = vsel %vm1074, %v675, 0
  %v1172 = vsel %vm1074, %v677, 0
  %v1175 = vsel %vm1074, %v679, 0
  %v1178 = vsel %vm1074, %v681, 0
  %v1181 = vsel %vm1074, %v683, 0
  %v1184 = vsel %vm1074, %v685, 0
  %v1187 = vsel %vm1074, %v687, 0
  %v1190 = vsel %vm1074, %v689, 0
  %v1193 = vsel %vm1074, %v691, 0
  %v1196 = vsel %vm1074, %v693, 0
  %v1199 = vsel %vm1074, %v695, 0
  %v1202 = vsel %vm1074, %v697, 0
  %v1205 = vsel %vm1074, %v699, 0
  %v1208 = vsel %vm1074, %v701, 0
  %v1211 = vsel %vm1074, %v703, 0
  %v1214 = vsel %vm1074, %v705, 0
  %v1217 = vsel %vm1074, %v707, 0
  %v1220 = vsel %vm1074, %v709, 0
  %v1223 = vsel %vm1074, %v711, 0
  %v1226 = vsel %vm1074, %v713, 0
  %v1229 = vsel %vm1074, %v715, 0
  %v1232 = vsel %vm1074, %v717, 0
  %v1235 = vsel %vm1074, %v719, 0
  %v1238 = vsel %vm1074, %v721, 0
  %v1241 = vsel %vm1074, %v723, 0
  %v1244 = vsel %vm1074, %v725, 0
  %v1247 = vsel %vm1074, %v727, 0
  %v1250 = vsel %vm1074, %v729, 0
  %v1253 = vsel %vm1074, %v731, 0
  %v1256 = vsel %vm1074, %v733, 0
  %v1259 = vsel %vm1074, %v735, 0
  %v1262 = vsel %vm1074, %v737, 0
  %v1265 = vsel %vm1074, %v739, 0
  %vm1267 = vcmask 1043456
  %v1269 = vsel %vm1267, %v1018, 0
  %v1272 = vsel %vm1267, %v1019, 0
  %v1275 = vsel %vm1267, %v1020, 0
  %v1278 = vsel %vm1267, %v1021, 0
  %1280 = vmatpush.bf16.msra.mxu0 %v994
  %1281 = vmatpush.bf16.msra.mxu0 %v990
  %1282 = vmatpush.bf16.msra.mxu0 %v986
  %1283 = vmatpush.bf16.msra.mxu0 %v982
  %1284 = vmatpush.bf16.msra.mxu0 %v978
  %1285 = vmatpush.bf16.msra.mxu0 %v974
  %1286 = vmatpush.bf16.msra.mxu0 %v970
  %1287 = vmatpush.bf16.msra.mxu0 %v966
  %1288 = vmatmul.bf16.gmra.mxu0 %v612
  %v1289 = vpop.f32.mrf.mxu0
  %v1290 = vadd.f32 %v220, %v1289
  %v1291 = vpop.f32.mrf.mxu0
  %v1292 = vadd.f32 %v220, %v1291
  %1293 = vmatmul.bf16.gmra.mxu0 %v614
  %v1294 = vpop.f32.mrf.mxu0
  %v1295 = vadd.f32 %v220, %v1294
  %v1296 = vpop.f32.mrf.mxu0
  %v1297 = vadd.f32 %v220, %v1296
  %1298 = vmatmul.bf16.gmra.mxu0 %v616
  %v1299 = vpop.f32.mrf.mxu0
  %v1300 = vadd.f32 %v220, %v1299
  %v1301 = vpop.f32.mrf.mxu0
  %v1302 = vadd.f32 %v220, %v1301
  %1303 = vmatmul.bf16.gmra.mxu0 %v618
  %v1304 = vpop.f32.mrf.mxu0
  %v1305 = vadd.f32 %v220, %v1304
  %v1306 = vpop.f32.mrf.mxu0
  %v1307 = vadd.f32 %v220, %v1306
  %1308 = vmatmul.bf16.gmra.mxu0 %v620
  %v1309 = vpop.f32.mrf.mxu0
  %v1310 = vadd.f32 %v220, %v1309
  %v1311 = vpop.f32.mrf.mxu0
  %v1312 = vadd.f32 %v220, %v1311
  %1313 = vmatmul.bf16.gmra.mxu0 %v622
  %v1314 = vpop.f32.mrf.mxu0
  %v1315 = vadd.f32 %v220, %v1314
  %v1316 = vpop.f32.mrf.mxu0
  %v1317 = vadd.f32 %v220, %v1316
  %1318 = vmatmul.bf16.gmra.mxu0 %v624
  %v1319 = vpop.f32.mrf.mxu0
  %v1320 = vadd.f32 %v220, %v1319
  %v1321 = vpop.f32.mrf.mxu0
  %v1322 = vadd.f32 %v220, %v1321
  %1323 = vmatmul.bf16.gmra.mxu0 %v626
  %v1324 = vpop.f32.mrf.mxu0
  %v1325 = vadd.f32 %v220, %v1324
  %v1326 = vpop.f32.mrf.mxu0
  %v1327 = vadd.f32 %v220, %v1326
  %1328 = vmatmul.bf16.gmra.mxu0 %v628
  %v1329 = vpop.f32.mrf.mxu0
  %v1330 = vadd.f32 %v220, %v1329
  %v1331 = vpop.f32.mrf.mxu0
  %v1332 = vadd.f32 %v220, %v1331
  %1333 = vmatmul.bf16.gmra.mxu0 %v630
  %v1334 = vpop.f32.mrf.mxu0
  %v1335 = vadd.f32 %v220, %v1334
  %v1336 = vpop.f32.mrf.mxu0
  %v1337 = vadd.f32 %v220, %v1336
  %1338 = vmatmul.bf16.gmra.mxu0 %v632
  %v1339 = vpop.f32.mrf.mxu0
  %v1340 = vadd.f32 %v220, %v1339
  %v1341 = vpop.f32.mrf.mxu0
  %v1342 = vadd.f32 %v220, %v1341
  %1343 = vmatmul.bf16.gmra.mxu0 %v634
  %v1344 = vpop.f32.mrf.mxu0
  %v1345 = vadd.f32 %v220, %v1344
  %v1346 = vpop.f32.mrf.mxu0
  %v1347 = vadd.f32 %v220, %v1346
  %1348 = vmatmul.bf16.gmra.mxu0 %v636
  %v1349 = vpop.f32.mrf.mxu0
  %v1350 = vadd.f32 %v220, %v1349
  %v1351 = vpop.f32.mrf.mxu0
  %v1352 = vadd.f32 %v220, %v1351
  %1353 = vmatmul.bf16.gmra.mxu0 %v638
  %v1354 = vpop.f32.mrf.mxu0
  %v1355 = vadd.f32 %v220, %v1354
  %v1356 = vpop.f32.mrf.mxu0
  %v1357 = vadd.f32 %v220, %v1356
  %1358 = vmatmul.bf16.gmra.mxu0 %v640
  %v1359 = vpop.f32.mrf.mxu0
  %v1360 = vadd.f32 %v220, %v1359
  %v1361 = vpop.f32.mrf.mxu0
  %v1362 = vadd.f32 %v220, %v1361
  %1363 = vmatmul.bf16.gmra.mxu0 %v642
  %v1364 = vpop.f32.mrf.mxu0
  %v1365 = vadd.f32 %v220, %v1364
  %v1366 = vpop.f32.mrf.mxu0
  %v1367 = vadd.f32 %v220, %v1366
  %1368 = vmatmul.bf16.gmra.mxu0 %v644
  %v1369 = vpop.f32.mrf.mxu0
  %v1370 = vadd.f32 %v220, %v1369
  %v1371 = vpop.f32.mrf.mxu0
  %v1372 = vadd.f32 %v220, %v1371
  %1373 = vmatmul.bf16.gmra.mxu0 %v646
  %v1374 = vpop.f32.mrf.mxu0
  %v1375 = vadd.f32 %v220, %v1374
  %v1376 = vpop.f32.mrf.mxu0
  %v1377 = vadd.f32 %v220, %v1376
  %1378 = vmatmul.bf16.gmra.mxu0 %v648
  %v1379 = vpop.f32.mrf.mxu0
  %v1380 = vadd.f32 %v220, %v1379
  %v1381 = vpop.f32.mrf.mxu0
  %v1382 = vadd.f32 %v220, %v1381
  %1383 = vmatmul.bf16.gmra.mxu0 %v650
  %v1384 = vpop.f32.mrf.mxu0
  %v1385 = vadd.f32 %v220, %v1384
  %v1386 = vpop.f32.mrf.mxu0
  %v1387 = vadd.f32 %v220, %v1386
  %1388 = vmatmul.bf16.gmra.mxu0 %v652
  %v1389 = vpop.f32.mrf.mxu0
  %v1390 = vadd.f32 %v220, %v1389
  %v1391 = vpop.f32.mrf.mxu0
  %v1392 = vadd.f32 %v220, %v1391
  %1393 = vmatmul.bf16.gmra.mxu0 %v654
  %v1394 = vpop.f32.mrf.mxu0
  %v1395 = vadd.f32 %v220, %v1394
  %v1396 = vpop.f32.mrf.mxu0
  %v1397 = vadd.f32 %v220, %v1396
  %1398 = vmatmul.bf16.gmra.mxu0 %v656
  %v1399 = vpop.f32.mrf.mxu0
  %v1400 = vadd.f32 %v220, %v1399
  %v1401 = vpop.f32.mrf.mxu0
  %v1402 = vadd.f32 %v220, %v1401
  %1403 = vmatmul.bf16.gmra.mxu0 %v658
  %v1404 = vpop.f32.mrf.mxu0
  %v1405 = vadd.f32 %v220, %v1404
  %v1406 = vpop.f32.mrf.mxu0
  %v1407 = vadd.f32 %v220, %v1406
  %1408 = vmatmul.bf16.gmra.mxu0 %v660
  %v1409 = vpop.f32.mrf.mxu0
  %v1410 = vadd.f32 %v220, %v1409
  %v1411 = vpop.f32.mrf.mxu0
  %v1412 = vadd.f32 %v220, %v1411
  %1413 = vmatmul.bf16.gmra.mxu0 %v662
  %v1414 = vpop.f32.mrf.mxu0
  %v1415 = vadd.f32 %v220, %v1414
  %v1416 = vpop.f32.mrf.mxu0
  %v1417 = vadd.f32 %v220, %v1416
  %1418 = vmatmul.bf16.gmra.mxu0 %v664
  %v1419 = vpop.f32.mrf.mxu0
  %v1420 = vadd.f32 %v220, %v1419
  %v1421 = vpop.f32.mrf.mxu0
  %v1422 = vadd.f32 %v220, %v1421
  %1423 = vmatmul.bf16.gmra.mxu0 %v666
  %v1424 = vpop.f32.mrf.mxu0
  %v1425 = vadd.f32 %v220, %v1424
  %v1426 = vpop.f32.mrf.mxu0
  %v1427 = vadd.f32 %v220, %v1426
  %1428 = vmatmul.bf16.gmra.mxu0 %v668
  %v1429 = vpop.f32.mrf.mxu0
  %v1430 = vadd.f32 %v220, %v1429
  %v1431 = vpop.f32.mrf.mxu0
  %v1432 = vadd.f32 %v220, %v1431
  %1433 = vmatmul.bf16.gmra.mxu0 %v670
  %v1434 = vpop.f32.mrf.mxu0
  %v1435 = vadd.f32 %v220, %v1434
  %v1436 = vpop.f32.mrf.mxu0
  %v1437 = vadd.f32 %v220, %v1436
  %1438 = vmatmul.bf16.gmra.mxu0 %v672
  %v1439 = vpop.f32.mrf.mxu0
  %v1440 = vadd.f32 %v220, %v1439
  %v1441 = vpop.f32.mrf.mxu0
  %v1442 = vadd.f32 %v220, %v1441
  %1443 = vmatmul.bf16.gmra.mxu0 %v674
  %v1444 = vpop.f32.mrf.mxu0
  %v1445 = vadd.f32 %v220, %v1444
  %v1446 = vpop.f32.mrf.mxu0
  %v1447 = vadd.f32 %v220, %v1446
  %1448 = vmatmul.bf16.gmra.mxu0 %v676
  %v1449 = vpop.f32.mrf.mxu0
  %v1450 = vadd.f32 %v220, %v1449
  %v1451 = vpop.f32.mrf.mxu0
  %v1452 = vadd.f32 %v220, %v1451
  %1453 = vmatmul.bf16.gmra.mxu0 %v678
  %v1454 = vpop.f32.mrf.mxu0
  %v1455 = vadd.f32 %v220, %v1454
  %v1456 = vpop.f32.mrf.mxu0
  %v1457 = vadd.f32 %v220, %v1456
  %1458 = vmatmul.bf16.gmra.mxu0 %v680
  %v1459 = vpop.f32.mrf.mxu0
  %v1460 = vadd.f32 %v220, %v1459
  %v1461 = vpop.f32.mrf.mxu0
  %v1462 = vadd.f32 %v220, %v1461
  %1463 = vmatmul.bf16.gmra.mxu0 %v682
  %v1464 = vpop.f32.mrf.mxu0
  %v1465 = vadd.f32 %v220, %v1464
  %v1466 = vpop.f32.mrf.mxu0
  %v1467 = vadd.f32 %v220, %v1466
  %1468 = vmatmul.bf16.gmra.mxu0 %v684
  %v1469 = vpop.f32.mrf.mxu0
  %v1470 = vadd.f32 %v220, %v1469
  %v1471 = vpop.f32.mrf.mxu0
  %v1472 = vadd.f32 %v220, %v1471
  %1473 = vmatmul.bf16.gmra.mxu0 %v686
  %v1474 = vpop.f32.mrf.mxu0
  %v1475 = vadd.f32 %v220, %v1474
  %v1476 = vpop.f32.mrf.mxu0
  %v1477 = vadd.f32 %v220, %v1476
  %1478 = vmatmul.bf16.gmra.mxu0 %v688
  %v1479 = vpop.f32.mrf.mxu0
  %v1480 = vadd.f32 %v220, %v1479
  %v1481 = vpop.f32.mrf.mxu0
  %v1482 = vadd.f32 %v220, %v1481
  %1483 = vmatmul.bf16.gmra.mxu0 %v690
  %v1484 = vpop.f32.mrf.mxu0
  %v1485 = vadd.f32 %v220, %v1484
  %v1486 = vpop.f32.mrf.mxu0
  %v1487 = vadd.f32 %v220, %v1486
  %1488 = vmatmul.bf16.gmra.mxu0 %v692
  %v1489 = vpop.f32.mrf.mxu0
  %v1490 = vadd.f32 %v220, %v1489
  %v1491 = vpop.f32.mrf.mxu0
  %v1492 = vadd.f32 %v220, %v1491
  %1493 = vmatmul.bf16.gmra.mxu0 %v694
  %v1494 = vpop.f32.mrf.mxu0
  %v1495 = vadd.f32 %v220, %v1494
  %v1496 = vpop.f32.mrf.mxu0
  %v1497 = vadd.f32 %v220, %v1496
  %1498 = vmatmul.bf16.gmra.mxu0 %v696
  %v1499 = vpop.f32.mrf.mxu0
  %v1500 = vadd.f32 %v220, %v1499
  %v1501 = vpop.f32.mrf.mxu0
  %v1502 = vadd.f32 %v220, %v1501
  %1503 = vmatmul.bf16.gmra.mxu0 %v698
  %v1504 = vpop.f32.mrf.mxu0
  %v1505 = vadd.f32 %v220, %v1504
  %v1506 = vpop.f32.mrf.mxu0
  %v1507 = vadd.f32 %v220, %v1506
  %1508 = vmatmul.bf16.gmra.mxu0 %v700
  %v1509 = vpop.f32.mrf.mxu0
  %v1510 = vadd.f32 %v220, %v1509
  %v1511 = vpop.f32.mrf.mxu0
  %v1512 = vadd.f32 %v220, %v1511
  %1513 = vmatmul.bf16.gmra.mxu0 %v702
  %v1514 = vpop.f32.mrf.mxu0
  %v1515 = vadd.f32 %v220, %v1514
  %v1516 = vpop.f32.mrf.mxu0
  %v1517 = vadd.f32 %v220, %v1516
  %1518 = vmatmul.bf16.gmra.mxu0 %v704
  %v1519 = vpop.f32.mrf.mxu0
  %v1520 = vadd.f32 %v220, %v1519
  %v1521 = vpop.f32.mrf.mxu0
  %v1522 = vadd.f32 %v220, %v1521
  %1523 = vmatmul.bf16.gmra.mxu0 %v706
  %v1524 = vpop.f32.mrf.mxu0
  %v1525 = vadd.f32 %v220, %v1524
  %v1526 = vpop.f32.mrf.mxu0
  %v1527 = vadd.f32 %v220, %v1526
  %1528 = vmatmul.bf16.gmra.mxu0 %v708
  %v1529 = vpop.f32.mrf.mxu0
  %v1530 = vadd.f32 %v220, %v1529
  %v1531 = vpop.f32.mrf.mxu0
  %v1532 = vadd.f32 %v220, %v1531
  %1533 = vmatmul.bf16.gmra.mxu0 %v710
  %v1534 = vpop.f32.mrf.mxu0
  %v1535 = vadd.f32 %v220, %v1534
  %v1536 = vpop.f32.mrf.mxu0
  %v1537 = vadd.f32 %v220, %v1536
  %1538 = vmatmul.bf16.gmra.mxu0 %v712
  %v1539 = vpop.f32.mrf.mxu0
  %v1540 = vadd.f32 %v220, %v1539
  %v1541 = vpop.f32.mrf.mxu0
  %v1542 = vadd.f32 %v220, %v1541
  %1543 = vmatmul.bf16.gmra.mxu0 %v714
  %v1544 = vpop.f32.mrf.mxu0
  %v1545 = vadd.f32 %v220, %v1544
  %v1546 = vpop.f32.mrf.mxu0
  %v1547 = vadd.f32 %v220, %v1546
  %1548 = vmatmul.bf16.gmra.mxu0 %v716
  %v1549 = vpop.f32.mrf.mxu0
  %v1550 = vadd.f32 %v220, %v1549
  %v1551 = vpop.f32.mrf.mxu0
  %v1552 = vadd.f32 %v220, %v1551
  %1553 = vmatmul.bf16.gmra.mxu0 %v718
  %v1554 = vpop.f32.mrf.mxu0
  %v1555 = vadd.f32 %v220, %v1554
  %v1556 = vpop.f32.mrf.mxu0
  %v1557 = vadd.f32 %v220, %v1556
  %1558 = vmatmul.bf16.gmra.mxu0 %v720
  %v1559 = vpop.f32.mrf.mxu0
  %v1560 = vadd.f32 %v220, %v1559
  %v1561 = vpop.f32.mrf.mxu0
  %v1562 = vadd.f32 %v220, %v1561
  %1563 = vmatmul.bf16.gmra.mxu0 %v722
  %v1564 = vpop.f32.mrf.mxu0
  %v1565 = vadd.f32 %v220, %v1564
  %v1566 = vpop.f32.mrf.mxu0
  %v1567 = vadd.f32 %v220, %v1566
  %1568 = vmatmul.bf16.gmra.mxu0 %v724
  %v1569 = vpop.f32.mrf.mxu0
  %v1570 = vadd.f32 %v220, %v1569
  %v1571 = vpop.f32.mrf.mxu0
  %v1572 = vadd.f32 %v220, %v1571
  %1573 = vmatmul.bf16.gmra.mxu0 %v726
  %v1574 = vpop.f32.mrf.mxu0
  %v1575 = vadd.f32 %v220, %v1574
  %v1576 = vpop.f32.mrf.mxu0
  %v1577 = vadd.f32 %v220, %v1576
  %1578 = vmatmul.bf16.gmra.mxu0 %v728
  %v1579 = vpop.f32.mrf.mxu0
  %v1580 = vadd.f32 %v220, %v1579
  %v1581 = vpop.f32.mrf.mxu0
  %v1582 = vadd.f32 %v220, %v1581
  %1583 = vmatmul.bf16.gmra.mxu0 %v730
  %v1584 = vpop.f32.mrf.mxu0
  %v1585 = vadd.f32 %v220, %v1584
  %v1586 = vpop.f32.mrf.mxu0
  %v1587 = vadd.f32 %v220, %v1586
  %1588 = vmatmul.bf16.gmra.mxu0 %v732
  %v1589 = vpop.f32.mrf.mxu0
  %v1590 = vadd.f32 %v220, %v1589
  %v1591 = vpop.f32.mrf.mxu0
  %v1592 = vadd.f32 %v220, %v1591
  %1593 = vmatmul.bf16.gmra.mxu0 %v734
  %v1594 = vpop.f32.mrf.mxu0
  %v1595 = vadd.f32 %v220, %v1594
  %v1596 = vpop.f32.mrf.mxu0
  %v1597 = vadd.f32 %v220, %v1596
  %1598 = vmatmul.bf16.gmra.mxu0 %v736
  %v1599 = vpop.f32.mrf.mxu0
  %v1600 = vadd.f32 %v220, %v1599
  %v1601 = vpop.f32.mrf.mxu0
  %v1602 = vadd.f32 %v220, %v1601
  %1603 = vmatmul.bf16.gmra.mxu0 %v738
  %v1604 = vpop.f32.mrf.mxu0
  %v1605 = vadd.f32 %v220, %v1604
  %v1606 = vpop.f32.mrf.mxu0
  %v1607 = vadd.f32 %v220, %v1606
  %1608 = vdwg.mxu0
  %1609 = vmatpush.bf16.msra.mxu0 0
  %1610 = vmatpush.bf16.msra.mxu0 0
  %1611 = vmatpush.bf16.msra.mxu0 %v1269
  %1612 = vmatpush.bf16.msra.mxu0 %v1014
  %1613 = vmatpush.bf16.msra.mxu0 %v1010
  %1614 = vmatpush.bf16.msra.mxu0 %v1006
  %1615 = vmatpush.bf16.msra.mxu0 %v1002
  %1616 = vmatpush.bf16.msra.mxu0 %v998
  %1617 = vmatmul.bf16.gmra.mxu0 %v1076
  %v1618 = vpop.f32.mrf.mxu0
  %v1619 = vadd.f32 %v1290, %v1618
  %v1620 = vpop.f32.mrf.mxu0
  %v1621 = vadd.f32 %v1292, %v1620
  %1622 = vmatmul.bf16.gmra.mxu0 %v1079
  %v1623 = vpop.f32.mrf.mxu0
  %v1624 = vadd.f32 %v1295, %v1623
  %v1625 = vpop.f32.mrf.mxu0
  %v1626 = vadd.f32 %v1297, %v1625
  %1627 = vmatmul.bf16.gmra.mxu0 %v1082
  %v1628 = vpop.f32.mrf.mxu0
  %v1629 = vadd.f32 %v1300, %v1628
  %v1630 = vpop.f32.mrf.mxu0
  %v1631 = vadd.f32 %v1302, %v1630
  %1632 = vmatmul.bf16.gmra.mxu0 %v1085
  %v1633 = vpop.f32.mrf.mxu0
  %v1634 = vadd.f32 %v1305, %v1633
  %v1635 = vpop.f32.mrf.mxu0
  %v1636 = vadd.f32 %v1307, %v1635
  %1637 = vmatmul.bf16.gmra.mxu0 %v1088
  %v1638 = vpop.f32.mrf.mxu0
  %v1639 = vadd.f32 %v1310, %v1638
  %v1640 = vpop.f32.mrf.mxu0
  %v1641 = vadd.f32 %v1312, %v1640
  %1642 = vmatmul.bf16.gmra.mxu0 %v1091
  %v1643 = vpop.f32.mrf.mxu0
  %v1644 = vadd.f32 %v1315, %v1643
  %v1645 = vpop.f32.mrf.mxu0
  %v1646 = vadd.f32 %v1317, %v1645
  %1647 = vmatmul.bf16.gmra.mxu0 %v1094
  %v1648 = vpop.f32.mrf.mxu0
  %v1649 = vadd.f32 %v1320, %v1648
  %v1650 = vpop.f32.mrf.mxu0
  %v1651 = vadd.f32 %v1322, %v1650
  %1652 = vmatmul.bf16.gmra.mxu0 %v1097
  %v1653 = vpop.f32.mrf.mxu0
  %v1654 = vadd.f32 %v1325, %v1653
  %v1655 = vpop.f32.mrf.mxu0
  %v1656 = vadd.f32 %v1327, %v1655
  %1657 = vmatmul.bf16.gmra.mxu0 %v1100
  %v1658 = vpop.f32.mrf.mxu0
  %v1659 = vadd.f32 %v1330, %v1658
  %v1660 = vpop.f32.mrf.mxu0
  %v1661 = vadd.f32 %v1332, %v1660
  %1662 = vmatmul.bf16.gmra.mxu0 %v1103
  %v1663 = vpop.f32.mrf.mxu0
  %v1664 = vadd.f32 %v1335, %v1663
  %v1665 = vpop.f32.mrf.mxu0
  %v1666 = vadd.f32 %v1337, %v1665
  %1667 = vmatmul.bf16.gmra.mxu0 %v1106
  %v1668 = vpop.f32.mrf.mxu0
  %v1669 = vadd.f32 %v1340, %v1668
  %v1670 = vpop.f32.mrf.mxu0
  %v1671 = vadd.f32 %v1342, %v1670
  %1672 = vmatmul.bf16.gmra.mxu0 %v1109
  %v1673 = vpop.f32.mrf.mxu0
  %v1674 = vadd.f32 %v1345, %v1673
  %v1675 = vpop.f32.mrf.mxu0
  %v1676 = vadd.f32 %v1347, %v1675
  %1677 = vmatmul.bf16.gmra.mxu0 %v1112
  %v1678 = vpop.f32.mrf.mxu0
  %v1679 = vadd.f32 %v1350, %v1678
  %v1680 = vpop.f32.mrf.mxu0
  %v1681 = vadd.f32 %v1352, %v1680
  %1682 = vmatmul.bf16.gmra.mxu0 %v1115
  %v1683 = vpop.f32.mrf.mxu0
  %v1684 = vadd.f32 %v1355, %v1683
  %v1685 = vpop.f32.mrf.mxu0
  %v1686 = vadd.f32 %v1357, %v1685
  %1687 = vmatmul.bf16.gmra.mxu0 %v1118
  %v1688 = vpop.f32.mrf.mxu0
  %v1689 = vadd.f32 %v1360, %v1688
  %v1690 = vpop.f32.mrf.mxu0
  %v1691 = vadd.f32 %v1362, %v1690
  %1692 = vmatmul.bf16.gmra.mxu0 %v1121
  %v1693 = vpop.f32.mrf.mxu0
  %v1694 = vadd.f32 %v1365, %v1693
  %v1695 = vpop.f32.mrf.mxu0
  %v1696 = vadd.f32 %v1367, %v1695
  %1697 = vmatmul.bf16.gmra.mxu0 %v1124
  %v1698 = vpop.f32.mrf.mxu0
  %v1699 = vadd.f32 %v1370, %v1698
  %v1700 = vpop.f32.mrf.mxu0
  %v1701 = vadd.f32 %v1372, %v1700
  %1702 = vmatmul.bf16.gmra.mxu0 %v1127
  %v1703 = vpop.f32.mrf.mxu0
  %v1704 = vadd.f32 %v1375, %v1703
  %v1705 = vpop.f32.mrf.mxu0
  %v1706 = vadd.f32 %v1377, %v1705
  %1707 = vmatmul.bf16.gmra.mxu0 %v1130
  %v1708 = vpop.f32.mrf.mxu0
  %v1709 = vadd.f32 %v1380, %v1708
  %v1710 = vpop.f32.mrf.mxu0
  %v1711 = vadd.f32 %v1382, %v1710
  %1712 = vmatmul.bf16.gmra.mxu0 %v1133
  %v1713 = vpop.f32.mrf.mxu0
  %v1714 = vadd.f32 %v1385, %v1713
  %v1715 = vpop.f32.mrf.mxu0
  %v1716 = vadd.f32 %v1387, %v1715
  %1717 = vmatmul.bf16.gmra.mxu0 %v1136
  %v1718 = vpop.f32.mrf.mxu0
  %v1719 = vadd.f32 %v1390, %v1718
  %v1720 = vpop.f32.mrf.mxu0
  %v1721 = vadd.f32 %v1392, %v1720
  %1722 = vmatmul.bf16.gmra.mxu0 %v1139
  %v1723 = vpop.f32.mrf.mxu0
  %v1724 = vadd.f32 %v1395, %v1723
  %v1725 = vpop.f32.mrf.mxu0
  %v1726 = vadd.f32 %v1397, %v1725
  %1727 = vmatmul.bf16.gmra.mxu0 %v1142
  %v1728 = vpop.f32.mrf.mxu0
  %v1729 = vadd.f32 %v1400, %v1728
  %v1730 = vpop.f32.mrf.mxu0
  %v1731 = vadd.f32 %v1402, %v1730
  %1732 = vmatmul.bf16.gmra.mxu0 %v1145
  %v1733 = vpop.f32.mrf.mxu0
  %v1734 = vadd.f32 %v1405, %v1733
  %v1735 = vpop.f32.mrf.mxu0
  %v1736 = vadd.f32 %v1407, %v1735
  %1737 = vmatmul.bf16.gmra.mxu0 %v1148
  %v1738 = vpop.f32.mrf.mxu0
  %v1739 = vadd.f32 %v1410, %v1738
  %v1740 = vpop.f32.mrf.mxu0
  %v1741 = vadd.f32 %v1412, %v1740
  %1742 = vmatmul.bf16.gmra.mxu0 %v1151
  %v1743 = vpop.f32.mrf.mxu0
  %v1744 = vadd.f32 %v1415, %v1743
  %v1745 = vpop.f32.mrf.mxu0
  %v1746 = vadd.f32 %v1417, %v1745
  %1747 = vmatmul.bf16.gmra.mxu0 %v1154
  %v1748 = vpop.f32.mrf.mxu0
  %v1749 = vadd.f32 %v1420, %v1748
  %v1750 = vpop.f32.mrf.mxu0
  %v1751 = vadd.f32 %v1422, %v1750
  %1752 = vmatmul.bf16.gmra.mxu0 %v1157
  %v1753 = vpop.f32.mrf.mxu0
  %v1754 = vadd.f32 %v1425, %v1753
  %v1755 = vpop.f32.mrf.mxu0
  %v1756 = vadd.f32 %v1427, %v1755
  %1757 = vmatmul.bf16.gmra.mxu0 %v1160
  %v1758 = vpop.f32.mrf.mxu0
  %v1759 = vadd.f32 %v1430, %v1758
  %v1760 = vpop.f32.mrf.mxu0
  %v1761 = vadd.f32 %v1432, %v1760
  %1762 = vmatmul.bf16.gmra.mxu0 %v1163
  %v1763 = vpop.f32.mrf.mxu0
  %v1764 = vadd.f32 %v1435, %v1763
  %v1765 = vpop.f32.mrf.mxu0
  %v1766 = vadd.f32 %v1437, %v1765
  %1767 = vmatmul.bf16.gmra.mxu0 %v1166
  %v1768 = vpop.f32.mrf.mxu0
  %v1769 = vadd.f32 %v1440, %v1768
  %v1770 = vpop.f32.mrf.mxu0
  %v1771 = vadd.f32 %v1442, %v1770
  %1772 = vmatmul.bf16.gmra.mxu0 %v1169
  %v1773 = vpop.f32.mrf.mxu0
  %v1774 = vadd.f32 %v1445, %v1773
  %v1775 = vpop.f32.mrf.mxu0
  %v1776 = vadd.f32 %v1447, %v1775
  %1777 = vmatmul.bf16.gmra.mxu0 %v1172
  %v1778 = vpop.f32.mrf.mxu0
  %v1779 = vadd.f32 %v1450, %v1778
  %v1780 = vpop.f32.mrf.mxu0
  %v1781 = vadd.f32 %v1452, %v1780
  %1782 = vmatmul.bf16.gmra.mxu0 %v1175
  %v1783 = vpop.f32.mrf.mxu0
  %v1784 = vadd.f32 %v1455, %v1783
  %v1785 = vpop.f32.mrf.mxu0
  %v1786 = vadd.f32 %v1457, %v1785
  %1787 = vmatmul.bf16.gmra.mxu0 %v1178
  %v1788 = vpop.f32.mrf.mxu0
  %v1789 = vadd.f32 %v1460, %v1788
  %v1790 = vpop.f32.mrf.mxu0
  %v1791 = vadd.f32 %v1462, %v1790
  %1792 = vmatmul.bf16.gmra.mxu0 %v1181
  %v1793 = vpop.f32.mrf.mxu0
  %v1794 = vadd.f32 %v1465, %v1793
  %v1795 = vpop.f32.mrf.mxu0
  %v1796 = vadd.f32 %v1467, %v1795
  %1797 = vmatmul.bf16.gmra.mxu0 %v1184
  %v1798 = vpop.f32.mrf.mxu0
  %v1799 = vadd.f32 %v1470, %v1798
  %v1800 = vpop.f32.mrf.mxu0
  %v1801 = vadd.f32 %v1472, %v1800
  %1802 = vmatmul.bf16.gmra.mxu0 %v1187
  %v1803 = vpop.f32.mrf.mxu0
  %v1804 = vadd.f32 %v1475, %v1803
  %v1805 = vpop.f32.mrf.mxu0
  %v1806 = vadd.f32 %v1477, %v1805
  %1807 = vmatmul.bf16.gmra.mxu0 %v1190
  %v1808 = vpop.f32.mrf.mxu0
  %v1809 = vadd.f32 %v1480, %v1808
  %v1810 = vpop.f32.mrf.mxu0
  %v1811 = vadd.f32 %v1482, %v1810
  %1812 = vmatmul.bf16.gmra.mxu0 %v1193
  %v1813 = vpop.f32.mrf.mxu0
  %v1814 = vadd.f32 %v1485, %v1813
  %v1815 = vpop.f32.mrf.mxu0
  %v1816 = vadd.f32 %v1487, %v1815
  %1817 = vmatmul.bf16.gmra.mxu0 %v1196
  %v1818 = vpop.f32.mrf.mxu0
  %v1819 = vadd.f32 %v1490, %v1818
  %v1820 = vpop.f32.mrf.mxu0
  %v1821 = vadd.f32 %v1492, %v1820
  %1822 = vmatmul.bf16.gmra.mxu0 %v1199
  %v1823 = vpop.f32.mrf.mxu0
  %v1824 = vadd.f32 %v1495, %v1823
  %v1825 = vpop.f32.mrf.mxu0
  %v1826 = vadd.f32 %v1497, %v1825
  %1827 = vmatmul.bf16.gmra.mxu0 %v1202
  %v1828 = vpop.f32.mrf.mxu0
  %v1829 = vadd.f32 %v1500, %v1828
  %v1830 = vpop.f32.mrf.mxu0
  %v1831 = vadd.f32 %v1502, %v1830
  %1832 = vmatmul.bf16.gmra.mxu0 %v1205
  %v1833 = vpop.f32.mrf.mxu0
  %v1834 = vadd.f32 %v1505, %v1833
  %v1835 = vpop.f32.mrf.mxu0
  %v1836 = vadd.f32 %v1507, %v1835
  %1837 = vmatmul.bf16.gmra.mxu0 %v1208
  %v1838 = vpop.f32.mrf.mxu0
  %v1839 = vadd.f32 %v1510, %v1838
  %v1840 = vpop.f32.mrf.mxu0
  %v1841 = vadd.f32 %v1512, %v1840
  %1842 = vmatmul.bf16.gmra.mxu0 %v1211
  %v1843 = vpop.f32.mrf.mxu0
  %v1844 = vadd.f32 %v1515, %v1843
  %v1845 = vpop.f32.mrf.mxu0
  %v1846 = vadd.f32 %v1517, %v1845
  %1847 = vmatmul.bf16.gmra.mxu0 %v1214
  %v1848 = vpop.f32.mrf.mxu0
  %v1849 = vadd.f32 %v1520, %v1848
  %v1850 = vpop.f32.mrf.mxu0
  %v1851 = vadd.f32 %v1522, %v1850
  %1852 = vmatmul.bf16.gmra.mxu0 %v1217
  %v1853 = vpop.f32.mrf.mxu0
  %v1854 = vadd.f32 %v1525, %v1853
  %v1855 = vpop.f32.mrf.mxu0
  %v1856 = vadd.f32 %v1527, %v1855
  %1857 = vmatmul.bf16.gmra.mxu0 %v1220
  %v1858 = vpop.f32.mrf.mxu0
  %v1859 = vadd.f32 %v1530, %v1858
  %v1860 = vpop.f32.mrf.mxu0
  %v1861 = vadd.f32 %v1532, %v1860
  %1862 = vmatmul.bf16.gmra.mxu0 %v1223
  %v1863 = vpop.f32.mrf.mxu0
  %v1864 = vadd.f32 %v1535, %v1863
  %v1865 = vpop.f32.mrf.mxu0
  %v1866 = vadd.f32 %v1537, %v1865
  %1867 = vmatmul.bf16.gmra.mxu0 %v1226
  %v1868 = vpop.f32.mrf.mxu0
  %v1869 = vadd.f32 %v1540, %v1868
  %v1870 = vpop.f32.mrf.mxu0
  %v1871 = vadd.f32 %v1542, %v1870
  %1872 = vmatmul.bf16.gmra.mxu0 %v1229
  %v1873 = vpop.f32.mrf.mxu0
  %v1874 = vadd.f32 %v1545, %v1873
  %v1875 = vpop.f32.mrf.mxu0
  %v1876 = vadd.f32 %v1547, %v1875
  %1877 = vmatmul.bf16.gmra.mxu0 %v1232
  %v1878 = vpop.f32.mrf.mxu0
  %v1879 = vadd.f32 %v1550, %v1878
  %v1880 = vpop.f32.mrf.mxu0
  %v1881 = vadd.f32 %v1552, %v1880
  %1882 = vmatmul.bf16.gmra.mxu0 %v1235
  %v1883 = vpop.f32.mrf.mxu0
  %v1884 = vadd.f32 %v1555, %v1883
  %v1885 = vpop.f32.mrf.mxu0
  %v1886 = vadd.f32 %v1557, %v1885
  %1887 = vmatmul.bf16.gmra.mxu0 %v1238
  %v1888 = vpop.f32.mrf.mxu0
  %v1889 = vadd.f32 %v1560, %v1888
  %v1890 = vpop.f32.mrf.mxu0
  %v1891 = vadd.f32 %v1562, %v1890
  %1892 = vmatmul.bf16.gmra.mxu0 %v1241
  %v1893 = vpop.f32.mrf.mxu0
  %v1894 = vadd.f32 %v1565, %v1893
  %v1895 = vpop.f32.mrf.mxu0
  %v1896 = vadd.f32 %v1567, %v1895
  %1897 = vmatmul.bf16.gmra.mxu0 %v1244
  %v1898 = vpop.f32.mrf.mxu0
  %v1899 = vadd.f32 %v1570, %v1898
  %v1900 = vpop.f32.mrf.mxu0
  %v1901 = vadd.f32 %v1572, %v1900
  %1902 = vmatmul.bf16.gmra.mxu0 %v1247
  %v1903 = vpop.f32.mrf.mxu0
  %v1904 = vadd.f32 %v1575, %v1903
  %v1905 = vpop.f32.mrf.mxu0
  %v1906 = vadd.f32 %v1577, %v1905
  %1907 = vmatmul.bf16.gmra.mxu0 %v1250
  %v1908 = vpop.f32.mrf.mxu0
  %v1909 = vadd.f32 %v1580, %v1908
  %v1910 = vpop.f32.mrf.mxu0
  %v1911 = vadd.f32 %v1582, %v1910
  %1912 = vmatmul.bf16.gmra.mxu0 %v1253
  %v1913 = vpop.f32.mrf.mxu0
  %v1914 = vadd.f32 %v1585, %v1913
  %v1915 = vpop.f32.mrf.mxu0
  %v1916 = vadd.f32 %v1587, %v1915
  %1917 = vmatmul.bf16.gmra.mxu0 %v1256
  %v1918 = vpop.f32.mrf.mxu0
  %v1919 = vadd.f32 %v1590, %v1918
  %v1920 = vpop.f32.mrf.mxu0
  %v1921 = vadd.f32 %v1592, %v1920
  %1922 = vmatmul.bf16.gmra.mxu0 %v1259
  %v1923 = vpop.f32.mrf.mxu0
  %v1924 = vadd.f32 %v1595, %v1923
  %v1925 = vpop.f32.mrf.mxu0
  %v1926 = vadd.f32 %v1597, %v1925
  %1927 = vmatmul.bf16.gmra.mxu0 %v1262
  %v1928 = vpop.f32.mrf.mxu0
  %v1929 = vadd.f32 %v1600, %v1928
  %v1930 = vpop.f32.mrf.mxu0
  %v1931 = vadd.f32 %v1602, %v1930
  %1932 = vmatmul.bf16.gmra.mxu0 %v1265
  %v1933 = vpop.f32.mrf.mxu0
  %v1934 = vadd.f32 %v1605, %v1933
  %v1935 = vpop.f32.mrf.mxu0
  %v1936 = vadd.f32 %v1607, %v1935
  %1937 = vdwg.mxu0
  %1938 = vmatpush.bf16.msra.mxu0 %v995
  %1939 = vmatpush.bf16.msra.mxu0 %v991
  %1940 = vmatpush.bf16.msra.mxu0 %v987
  %1941 = vmatpush.bf16.msra.mxu0 %v983
  %1942 = vmatpush.bf16.msra.mxu0 %v979
  %1943 = vmatpush.bf16.msra.mxu0 %v975
  %1944 = vmatpush.bf16.msra.mxu0 %v971
  %1945 = vmatpush.bf16.msra.mxu0 %v967
  %1946 = vmatmul.bf16.gmra.mxu0 %v612
  %v1947 = vpop.f32.mrf.mxu0
  %v1948 = vadd.f32 %v221, %v1947
  %v1949 = vpop.f32.mrf.mxu0
  %v1950 = vadd.f32 %v221, %v1949
  %1951 = vmatmul.bf16.gmra.mxu0 %v614
  %v1952 = vpop.f32.mrf.mxu0
  %v1953 = vadd.f32 %v221, %v1952
  %v1954 = vpop.f32.mrf.mxu0
  %v1955 = vadd.f32 %v221, %v1954
  %1956 = vmatmul.bf16.gmra.mxu0 %v616
  %v1957 = vpop.f32.mrf.mxu0
  %v1958 = vadd.f32 %v221, %v1957
  %v1959 = vpop.f32.mrf.mxu0
  %v1960 = vadd.f32 %v221, %v1959
  %1961 = vmatmul.bf16.gmra.mxu0 %v618
  %v1962 = vpop.f32.mrf.mxu0
  %v1963 = vadd.f32 %v221, %v1962
  %v1964 = vpop.f32.mrf.mxu0
  %v1965 = vadd.f32 %v221, %v1964
  %1966 = vmatmul.bf16.gmra.mxu0 %v620
  %v1967 = vpop.f32.mrf.mxu0
  %v1968 = vadd.f32 %v221, %v1967
  %v1969 = vpop.f32.mrf.mxu0
  %v1970 = vadd.f32 %v221, %v1969
  %1971 = vmatmul.bf16.gmra.mxu0 %v622
  %v1972 = vpop.f32.mrf.mxu0
  %v1973 = vadd.f32 %v221, %v1972
  %v1974 = vpop.f32.mrf.mxu0
  %v1975 = vadd.f32 %v221, %v1974
  %1976 = vmatmul.bf16.gmra.mxu0 %v624
  %v1977 = vpop.f32.mrf.mxu0
  %v1978 = vadd.f32 %v221, %v1977
  %v1979 = vpop.f32.mrf.mxu0
  %v1980 = vadd.f32 %v221, %v1979
  %1981 = vmatmul.bf16.gmra.mxu0 %v626
  %v1982 = vpop.f32.mrf.mxu0
  %v1983 = vadd.f32 %v221, %v1982
  %v1984 = vpop.f32.mrf.mxu0
  %v1985 = vadd.f32 %v221, %v1984
  %1986 = vmatmul.bf16.gmra.mxu0 %v628
  %v1987 = vpop.f32.mrf.mxu0
  %v1988 = vadd.f32 %v221, %v1987
  %v1989 = vpop.f32.mrf.mxu0
  %v1990 = vadd.f32 %v221, %v1989
  %1991 = vmatmul.bf16.gmra.mxu0 %v630
  %v1992 = vpop.f32.mrf.mxu0
  %v1993 = vadd.f32 %v221, %v1992
  %v1994 = vpop.f32.mrf.mxu0
  %v1995 = vadd.f32 %v221, %v1994
  %1996 = vmatmul.bf16.gmra.mxu0 %v632
  %v1997 = vpop.f32.mrf.mxu0
  %v1998 = vadd.f32 %v221, %v1997
  %v1999 = vpop.f32.mrf.mxu0
  %v2000 = vadd.f32 %v221, %v1999
  %2001 = vmatmul.bf16.gmra.mxu0 %v634
  %v2002 = vpop.f32.mrf.mxu0
  %v2003 = vadd.f32 %v221, %v2002
  %v2004 = vpop.f32.mrf.mxu0
  %v2005 = vadd.f32 %v221, %v2004
  %2006 = vmatmul.bf16.gmra.mxu0 %v636
  %v2007 = vpop.f32.mrf.mxu0
  %v2008 = vadd.f32 %v221, %v2007
  %v2009 = vpop.f32.mrf.mxu0
  %v2010 = vadd.f32 %v221, %v2009
  %2011 = vmatmul.bf16.gmra.mxu0 %v638
  %v2012 = vpop.f32.mrf.mxu0
  %v2013 = vadd.f32 %v221, %v2012
  %v2014 = vpop.f32.mrf.mxu0
  %v2015 = vadd.f32 %v221, %v2014
  %2016 = vmatmul.bf16.gmra.mxu0 %v640
  %v2017 = vpop.f32.mrf.mxu0
  %v2018 = vadd.f32 %v221, %v2017
  %v2019 = vpop.f32.mrf.mxu0
  %v2020 = vadd.f32 %v221, %v2019
  %2021 = vmatmul.bf16.gmra.mxu0 %v642
  %v2022 = vpop.f32.mrf.mxu0
  %v2023 = vadd.f32 %v221, %v2022
  %v2024 = vpop.f32.mrf.mxu0
  %v2025 = vadd.f32 %v221, %v2024
  %2026 = vmatmul.bf16.gmra.mxu0 %v644
  %v2027 = vpop.f32.mrf.mxu0
  %v2028 = vadd.f32 %v221, %v2027
  %v2029 = vpop.f32.mrf.mxu0
  %v2030 = vadd.f32 %v221, %v2029
  %2031 = vmatmul.bf16.gmra.mxu0 %v646
  %v2032 = vpop.f32.mrf.mxu0
  %v2033 = vadd.f32 %v221, %v2032
  %v2034 = vpop.f32.mrf.mxu0
  %v2035 = vadd.f32 %v221, %v2034
  %2036 = vmatmul.bf16.gmra.mxu0 %v648
  %v2037 = vpop.f32.mrf.mxu0
  %v2038 = vadd.f32 %v221, %v2037
  %v2039 = vpop.f32.mrf.mxu0
  %v2040 = vadd.f32 %v221, %v2039
  %2041 = vmatmul.bf16.gmra.mxu0 %v650
  %v2042 = vpop.f32.mrf.mxu0
  %v2043 = vadd.f32 %v221, %v2042
  %v2044 = vpop.f32.mrf.mxu0
  %v2045 = vadd.f32 %v221, %v2044
  %2046 = vmatmul.bf16.gmra.mxu0 %v652
  %v2047 = vpop.f32.mrf.mxu0
  %v2048 = vadd.f32 %v221, %v2047
  %v2049 = vpop.f32.mrf.mxu0
  %v2050 = vadd.f32 %v221, %v2049
  %2051 = vmatmul.bf16.gmra.mxu0 %v654
  %v2052 = vpop.f32.mrf.mxu0
  %v2053 = vadd.f32 %v221, %v2052
  %v2054 = vpop.f32.mrf.mxu0
  %v2055 = vadd.f32 %v221, %v2054
  %2056 = vmatmul.bf16.gmra.mxu0 %v656
  %v2057 = vpop.f32.mrf.mxu0
  %v2058 = vadd.f32 %v221, %v2057
  %v2059 = vpop.f32.mrf.mxu0
  %v2060 = vadd.f32 %v221, %v2059
  %2061 = vmatmul.bf16.gmra.mxu0 %v658
  %v2062 = vpop.f32.mrf.mxu0
  %v2063 = vadd.f32 %v221, %v2062
  %v2064 = vpop.f32.mrf.mxu0
  %v2065 = vadd.f32 %v221, %v2064
  %2066 = vmatmul.bf16.gmra.mxu0 %v660
  %v2067 = vpop.f32.mrf.mxu0
  %v2068 = vadd.f32 %v221, %v2067
  %v2069 = vpop.f32.mrf.mxu0
  %v2070 = vadd.f32 %v221, %v2069
  %2071 = vmatmul.bf16.gmra.mxu0 %v662
  %v2072 = vpop.f32.mrf.mxu0
  %v2073 = vadd.f32 %v221, %v2072
  %v2074 = vpop.f32.mrf.mxu0
  %v2075 = vadd.f32 %v221, %v2074
  %2076 = vmatmul.bf16.gmra.mxu0 %v664
  %v2077 = vpop.f32.mrf.mxu0
  %v2078 = vadd.f32 %v221, %v2077
  %v2079 = vpop.f32.mrf.mxu0
  %v2080 = vadd.f32 %v221, %v2079
  %2081 = vmatmul.bf16.gmra.mxu0 %v666
  %v2082 = vpop.f32.mrf.mxu0
  %v2083 = vadd.f32 %v221, %v2082
  %v2084 = vpop.f32.mrf.mxu0
  %v2085 = vadd.f32 %v221, %v2084
  %2086 = vmatmul.bf16.gmra.mxu0 %v668
  %v2087 = vpop.f32.mrf.mxu0
  %v2088 = vadd.f32 %v221, %v2087
  %v2089 = vpop.f32.mrf.mxu0
  %v2090 = vadd.f32 %v221, %v2089
  %2091 = vmatmul.bf16.gmra.mxu0 %v670
  %v2092 = vpop.f32.mrf.mxu0
  %v2093 = vadd.f32 %v221, %v2092
  %v2094 = vpop.f32.mrf.mxu0
  %v2095 = vadd.f32 %v221, %v2094
  %2096 = vmatmul.bf16.gmra.mxu0 %v672
  %v2097 = vpop.f32.mrf.mxu0
  %v2098 = vadd.f32 %v221, %v2097
  %v2099 = vpop.f32.mrf.mxu0
  %v2100 = vadd.f32 %v221, %v2099
  %2101 = vmatmul.bf16.gmra.mxu0 %v674
  %v2102 = vpop.f32.mrf.mxu0
  %v2103 = vadd.f32 %v221, %v2102
  %v2104 = vpop.f32.mrf.mxu0
  %v2105 = vadd.f32 %v221, %v2104
  %2106 = vmatmul.bf16.gmra.mxu0 %v676
  %v2107 = vpop.f32.mrf.mxu0
  %v2108 = vadd.f32 %v221, %v2107
  %v2109 = vpop.f32.mrf.mxu0
  %v2110 = vadd.f32 %v221, %v2109
  %2111 = vmatmul.bf16.gmra.mxu0 %v678
  %v2112 = vpop.f32.mrf.mxu0
  %v2113 = vadd.f32 %v221, %v2112
  %v2114 = vpop.f32.mrf.mxu0
  %v2115 = vadd.f32 %v221, %v2114
  %2116 = vmatmul.bf16.gmra.mxu0 %v680
  %v2117 = vpop.f32.mrf.mxu0
  %v2118 = vadd.f32 %v221, %v2117
  %v2119 = vpop.f32.mrf.mxu0
  %v2120 = vadd.f32 %v221, %v2119
  %2121 = vmatmul.bf16.gmra.mxu0 %v682
  %v2122 = vpop.f32.mrf.mxu0
  %v2123 = vadd.f32 %v221, %v2122
  %v2124 = vpop.f32.mrf.mxu0
  %v2125 = vadd.f32 %v221, %v2124
  %2126 = vmatmul.bf16.gmra.mxu0 %v684
  %v2127 = vpop.f32.mrf.mxu0
  %v2128 = vadd.f32 %v221, %v2127
  %v2129 = vpop.f32.mrf.mxu0
  %v2130 = vadd.f32 %v221, %v2129
  %2131 = vmatmul.bf16.gmra.mxu0 %v686
  %v2132 = vpop.f32.mrf.mxu0
  %v2133 = vadd.f32 %v221, %v2132
  %v2134 = vpop.f32.mrf.mxu0
  %v2135 = vadd.f32 %v221, %v2134
  %2136 = vmatmul.bf16.gmra.mxu0 %v688
  %v2137 = vpop.f32.mrf.mxu0
  %v2138 = vadd.f32 %v221, %v2137
  %v2139 = vpop.f32.mrf.mxu0
  %v2140 = vadd.f32 %v221, %v2139
  %2141 = vmatmul.bf16.gmra.mxu0 %v690
  %v2142 = vpop.f32.mrf.mxu0
  %v2143 = vadd.f32 %v221, %v2142
  %v2144 = vpop.f32.mrf.mxu0
  %v2145 = vadd.f32 %v221, %v2144
  %2146 = vmatmul.bf16.gmra.mxu0 %v692
  %v2147 = vpop.f32.mrf.mxu0
  %v2148 = vadd.f32 %v221, %v2147
  %v2149 = vpop.f32.mrf.mxu0
  %v2150 = vadd.f32 %v221, %v2149
  %2151 = vmatmul.bf16.gmra.mxu0 %v694
  %v2152 = vpop.f32.mrf.mxu0
  %v2153 = vadd.f32 %v221, %v2152
  %v2154 = vpop.f32.mrf.mxu0
  %v2155 = vadd.f32 %v221, %v2154
  %2156 = vmatmul.bf16.gmra.mxu0 %v696
  %v2157 = vpop.f32.mrf.mxu0
  %v2158 = vadd.f32 %v221, %v2157
  %v2159 = vpop.f32.mrf.mxu0
  %v2160 = vadd.f32 %v221, %v2159
  %2161 = vmatmul.bf16.gmra.mxu0 %v698
  %v2162 = vpop.f32.mrf.mxu0
  %v2163 = vadd.f32 %v221, %v2162
  %v2164 = vpop.f32.mrf.mxu0
  %v2165 = vadd.f32 %v221, %v2164
  %2166 = vmatmul.bf16.gmra.mxu0 %v700
  %v2167 = vpop.f32.mrf.mxu0
  %v2168 = vadd.f32 %v221, %v2167
  %v2169 = vpop.f32.mrf.mxu0
  %v2170 = vadd.f32 %v221, %v2169
  %2171 = vmatmul.bf16.gmra.mxu0 %v702
  %v2172 = vpop.f32.mrf.mxu0
  %v2173 = vadd.f32 %v221, %v2172
  %v2174 = vpop.f32.mrf.mxu0
  %v2175 = vadd.f32 %v221, %v2174
  %2176 = vmatmul.bf16.gmra.mxu0 %v704
  %v2177 = vpop.f32.mrf.mxu0
  %v2178 = vadd.f32 %v221, %v2177
  %v2179 = vpop.f32.mrf.mxu0
  %v2180 = vadd.f32 %v221, %v2179
  %2181 = vmatmul.bf16.gmra.mxu0 %v706
  %v2182 = vpop.f32.mrf.mxu0
  %v2183 = vadd.f32 %v221, %v2182
  %v2184 = vpop.f32.mrf.mxu0
  %v2185 = vadd.f32 %v221, %v2184
  %2186 = vmatmul.bf16.gmra.mxu0 %v708
  %v2187 = vpop.f32.mrf.mxu0
  %v2188 = vadd.f32 %v221, %v2187
  %v2189 = vpop.f32.mrf.mxu0
  %v2190 = vadd.f32 %v221, %v2189
  %2191 = vmatmul.bf16.gmra.mxu0 %v710
  %v2192 = vpop.f32.mrf.mxu0
  %v2193 = vadd.f32 %v221, %v2192
  %v2194 = vpop.f32.mrf.mxu0
  %v2195 = vadd.f32 %v221, %v2194
  %2196 = vmatmul.bf16.gmra.mxu0 %v712
  %v2197 = vpop.f32.mrf.mxu0
  %v2198 = vadd.f32 %v221, %v2197
  %v2199 = vpop.f32.mrf.mxu0
  %v2200 = vadd.f32 %v221, %v2199
  %2201 = vmatmul.bf16.gmra.mxu0 %v714
  %v2202 = vpop.f32.mrf.mxu0
  %v2203 = vadd.f32 %v221, %v2202
  %v2204 = vpop.f32.mrf.mxu0
  %v2205 = vadd.f32 %v221, %v2204
  %2206 = vmatmul.bf16.gmra.mxu0 %v716
  %v2207 = vpop.f32.mrf.mxu0
  %v2208 = vadd.f32 %v221, %v2207
  %v2209 = vpop.f32.mrf.mxu0
  %v2210 = vadd.f32 %v221, %v2209
  %2211 = vmatmul.bf16.gmra.mxu0 %v718
  %v2212 = vpop.f32.mrf.mxu0
  %v2213 = vadd.f32 %v221, %v2212
  %v2214 = vpop.f32.mrf.mxu0
  %v2215 = vadd.f32 %v221, %v2214
  %2216 = vmatmul.bf16.gmra.mxu0 %v720
  %v2217 = vpop.f32.mrf.mxu0
  %v2218 = vadd.f32 %v221, %v2217
  %v2219 = vpop.f32.mrf.mxu0
  %v2220 = vadd.f32 %v221, %v2219
  %2221 = vmatmul.bf16.gmra.mxu0 %v722
  %v2222 = vpop.f32.mrf.mxu0
  %v2223 = vadd.f32 %v221, %v2222
  %v2224 = vpop.f32.mrf.mxu0
  %v2225 = vadd.f32 %v221, %v2224
  %2226 = vmatmul.bf16.gmra.mxu0 %v724
  %v2227 = vpop.f32.mrf.mxu0
  %v2228 = vadd.f32 %v221, %v2227
  %v2229 = vpop.f32.mrf.mxu0
  %v2230 = vadd.f32 %v221, %v2229
  %2231 = vmatmul.bf16.gmra.mxu0 %v726
  %v2232 = vpop.f32.mrf.mxu0
  %v2233 = vadd.f32 %v221, %v2232
  %v2234 = vpop.f32.mrf.mxu0
  %v2235 = vadd.f32 %v221, %v2234
  %2236 = vmatmul.bf16.gmra.mxu0 %v728
  %v2237 = vpop.f32.mrf.mxu0
  %v2238 = vadd.f32 %v221, %v2237
  %v2239 = vpop.f32.mrf.mxu0
  %v2240 = vadd.f32 %v221, %v2239
  %2241 = vmatmul.bf16.gmra.mxu0 %v730
  %v2242 = vpop.f32.mrf.mxu0
  %v2243 = vadd.f32 %v221, %v2242
  %v2244 = vpop.f32.mrf.mxu0
  %v2245 = vadd.f32 %v221, %v2244
  %2246 = vmatmul.bf16.gmra.mxu0 %v732
  %v2247 = vpop.f32.mrf.mxu0
  %v2248 = vadd.f32 %v221, %v2247
  %v2249 = vpop.f32.mrf.mxu0
  %v2250 = vadd.f32 %v221, %v2249
  %2251 = vmatmul.bf16.gmra.mxu0 %v734
  %v2252 = vpop.f32.mrf.mxu0
  %v2253 = vadd.f32 %v221, %v2252
  %v2254 = vpop.f32.mrf.mxu0
  %v2255 = vadd.f32 %v221, %v2254
  %2256 = vmatmul.bf16.gmra.mxu0 %v736
  %v2257 = vpop.f32.mrf.mxu0
  %v2258 = vadd.f32 %v221, %v2257
  %v2259 = vpop.f32.mrf.mxu0
  %v2260 = vadd.f32 %v221, %v2259
  %2261 = vmatmul.bf16.gmra.mxu0 %v738
  %v2262 = vpop.f32.mrf.mxu0
  %v2263 = vadd.f32 %v221, %v2262
  %v2264 = vpop.f32.mrf.mxu0
  %v2265 = vadd.f32 %v221, %v2264
  %2266 = vdwg.mxu0
  %2267 = vmatpush.bf16.msra.mxu0 0
  %2268 = vmatpush.bf16.msra.mxu0 0
  %2269 = vmatpush.bf16.msra.mxu0 %v1272
  %2270 = vmatpush.bf16.msra.mxu0 %v1015
  %2271 = vmatpush.bf16.msra.mxu0 %v1011
  %2272 = vmatpush.bf16.msra.mxu0 %v1007
  %2273 = vmatpush.bf16.msra.mxu0 %v1003
  %2274 = vmatpush.bf16.msra.mxu0 %v999
  %2275 = vmatmul.bf16.gmra.mxu0 %v1076
  %v2276 = vpop.f32.mrf.mxu0
  %v2277 = vadd.f32 %v1948, %v2276
  %v2278 = vpop.f32.mrf.mxu0
  %v2279 = vadd.f32 %v1950, %v2278
  %2280 = vmatmul.bf16.gmra.mxu0 %v1079
  %v2281 = vpop.f32.mrf.mxu0
  %v2282 = vadd.f32 %v1953, %v2281
  %v2283 = vpop.f32.mrf.mxu0
  %v2284 = vadd.f32 %v1955, %v2283
  %2285 = vmatmul.bf16.gmra.mxu0 %v1082
  %v2286 = vpop.f32.mrf.mxu0
  %v2287 = vadd.f32 %v1958, %v2286
  %v2288 = vpop.f32.mrf.mxu0
  %v2289 = vadd.f32 %v1960, %v2288
  %2290 = vmatmul.bf16.gmra.mxu0 %v1085
  %v2291 = vpop.f32.mrf.mxu0
  %v2292 = vadd.f32 %v1963, %v2291
  %v2293 = vpop.f32.mrf.mxu0
  %v2294 = vadd.f32 %v1965, %v2293
  %2295 = vmatmul.bf16.gmra.mxu0 %v1088
  %v2296 = vpop.f32.mrf.mxu0
  %v2297 = vadd.f32 %v1968, %v2296
  %v2298 = vpop.f32.mrf.mxu0
  %v2299 = vadd.f32 %v1970, %v2298
  %2300 = vmatmul.bf16.gmra.mxu0 %v1091
  %v2301 = vpop.f32.mrf.mxu0
  %v2302 = vadd.f32 %v1973, %v2301
  %v2303 = vpop.f32.mrf.mxu0
  %v2304 = vadd.f32 %v1975, %v2303
  %2305 = vmatmul.bf16.gmra.mxu0 %v1094
  %v2306 = vpop.f32.mrf.mxu0
  %v2307 = vadd.f32 %v1978, %v2306
  %v2308 = vpop.f32.mrf.mxu0
  %v2309 = vadd.f32 %v1980, %v2308
  %2310 = vmatmul.bf16.gmra.mxu0 %v1097
  %v2311 = vpop.f32.mrf.mxu0
  %v2312 = vadd.f32 %v1983, %v2311
  %v2313 = vpop.f32.mrf.mxu0
  %v2314 = vadd.f32 %v1985, %v2313
  %2315 = vmatmul.bf16.gmra.mxu0 %v1100
  %v2316 = vpop.f32.mrf.mxu0
  %v2317 = vadd.f32 %v1988, %v2316
  %v2318 = vpop.f32.mrf.mxu0
  %v2319 = vadd.f32 %v1990, %v2318
  %2320 = vmatmul.bf16.gmra.mxu0 %v1103
  %v2321 = vpop.f32.mrf.mxu0
  %v2322 = vadd.f32 %v1993, %v2321
  %v2323 = vpop.f32.mrf.mxu0
  %v2324 = vadd.f32 %v1995, %v2323
  %2325 = vmatmul.bf16.gmra.mxu0 %v1106
  %v2326 = vpop.f32.mrf.mxu0
  %v2327 = vadd.f32 %v1998, %v2326
  %v2328 = vpop.f32.mrf.mxu0
  %v2329 = vadd.f32 %v2000, %v2328
  %2330 = vmatmul.bf16.gmra.mxu0 %v1109
  %v2331 = vpop.f32.mrf.mxu0
  %v2332 = vadd.f32 %v2003, %v2331
  %v2333 = vpop.f32.mrf.mxu0
  %v2334 = vadd.f32 %v2005, %v2333
  %2335 = vmatmul.bf16.gmra.mxu0 %v1112
  %v2336 = vpop.f32.mrf.mxu0
  %v2337 = vadd.f32 %v2008, %v2336
  %v2338 = vpop.f32.mrf.mxu0
  %v2339 = vadd.f32 %v2010, %v2338
  %2340 = vmatmul.bf16.gmra.mxu0 %v1115
  %v2341 = vpop.f32.mrf.mxu0
  %v2342 = vadd.f32 %v2013, %v2341
  %v2343 = vpop.f32.mrf.mxu0
  %v2344 = vadd.f32 %v2015, %v2343
  %2345 = vmatmul.bf16.gmra.mxu0 %v1118
  %v2346 = vpop.f32.mrf.mxu0
  %v2347 = vadd.f32 %v2018, %v2346
  %v2348 = vpop.f32.mrf.mxu0
  %v2349 = vadd.f32 %v2020, %v2348
  %2350 = vmatmul.bf16.gmra.mxu0 %v1121
  %v2351 = vpop.f32.mrf.mxu0
  %v2352 = vadd.f32 %v2023, %v2351
  %v2353 = vpop.f32.mrf.mxu0
  %v2354 = vadd.f32 %v2025, %v2353
  %2355 = vmatmul.bf16.gmra.mxu0 %v1124
  %v2356 = vpop.f32.mrf.mxu0
  %v2357 = vadd.f32 %v2028, %v2356
  %v2358 = vpop.f32.mrf.mxu0
  %v2359 = vadd.f32 %v2030, %v2358
  %2360 = vmatmul.bf16.gmra.mxu0 %v1127
  %v2361 = vpop.f32.mrf.mxu0
  %v2362 = vadd.f32 %v2033, %v2361
  %v2363 = vpop.f32.mrf.mxu0
  %v2364 = vadd.f32 %v2035, %v2363
  %2365 = vmatmul.bf16.gmra.mxu0 %v1130
  %v2366 = vpop.f32.mrf.mxu0
  %v2367 = vadd.f32 %v2038, %v2366
  %v2368 = vpop.f32.mrf.mxu0
  %v2369 = vadd.f32 %v2040, %v2368
  %2370 = vmatmul.bf16.gmra.mxu0 %v1133
  %v2371 = vpop.f32.mrf.mxu0
  %v2372 = vadd.f32 %v2043, %v2371
  %v2373 = vpop.f32.mrf.mxu0
  %v2374 = vadd.f32 %v2045, %v2373
  %2375 = vmatmul.bf16.gmra.mxu0 %v1136
  %v2376 = vpop.f32.mrf.mxu0
  %v2377 = vadd.f32 %v2048, %v2376
  %v2378 = vpop.f32.mrf.mxu0
  %v2379 = vadd.f32 %v2050, %v2378
  %2380 = vmatmul.bf16.gmra.mxu0 %v1139
  %v2381 = vpop.f32.mrf.mxu0
  %v2382 = vadd.f32 %v2053, %v2381
  %v2383 = vpop.f32.mrf.mxu0
  %v2384 = vadd.f32 %v2055, %v2383
  %2385 = vmatmul.bf16.gmra.mxu0 %v1142
  %v2386 = vpop.f32.mrf.mxu0
  %v2387 = vadd.f32 %v2058, %v2386
  %v2388 = vpop.f32.mrf.mxu0
  %v2389 = vadd.f32 %v2060, %v2388
  %2390 = vmatmul.bf16.gmra.mxu0 %v1145
  %v2391 = vpop.f32.mrf.mxu0
  %v2392 = vadd.f32 %v2063, %v2391
  %v2393 = vpop.f32.mrf.mxu0
  %v2394 = vadd.f32 %v2065, %v2393
  %2395 = vmatmul.bf16.gmra.mxu0 %v1148
  %v2396 = vpop.f32.mrf.mxu0
  %v2397 = vadd.f32 %v2068, %v2396
  %v2398 = vpop.f32.mrf.mxu0
  %v2399 = vadd.f32 %v2070, %v2398
  %2400 = vmatmul.bf16.gmra.mxu0 %v1151
  %v2401 = vpop.f32.mrf.mxu0
  %v2402 = vadd.f32 %v2073, %v2401
  %v2403 = vpop.f32.mrf.mxu0
  %v2404 = vadd.f32 %v2075, %v2403
  %2405 = vmatmul.bf16.gmra.mxu0 %v1154
  %v2406 = vpop.f32.mrf.mxu0
  %v2407 = vadd.f32 %v2078, %v2406
  %v2408 = vpop.f32.mrf.mxu0
  %v2409 = vadd.f32 %v2080, %v2408
  %2410 = vmatmul.bf16.gmra.mxu0 %v1157
  %v2411 = vpop.f32.mrf.mxu0
  %v2412 = vadd.f32 %v2083, %v2411
  %v2413 = vpop.f32.mrf.mxu0
  %v2414 = vadd.f32 %v2085, %v2413
  %2415 = vmatmul.bf16.gmra.mxu0 %v1160
  %v2416 = vpop.f32.mrf.mxu0
  %v2417 = vadd.f32 %v2088, %v2416
  %v2418 = vpop.f32.mrf.mxu0
  %v2419 = vadd.f32 %v2090, %v2418
  %2420 = vmatmul.bf16.gmra.mxu0 %v1163
  %v2421 = vpop.f32.mrf.mxu0
  %v2422 = vadd.f32 %v2093, %v2421
  %v2423 = vpop.f32.mrf.mxu0
  %v2424 = vadd.f32 %v2095, %v2423
  %2425 = vmatmul.bf16.gmra.mxu0 %v1166
  %v2426 = vpop.f32.mrf.mxu0
  %v2427 = vadd.f32 %v2098, %v2426
  %v2428 = vpop.f32.mrf.mxu0
  %v2429 = vadd.f32 %v2100, %v2428
  %2430 = vmatmul.bf16.gmra.mxu0 %v1169
  %v2431 = vpop.f32.mrf.mxu0
  %v2432 = vadd.f32 %v2103, %v2431
  %v2433 = vpop.f32.mrf.mxu0
  %v2434 = vadd.f32 %v2105, %v2433
  %2435 = vmatmul.bf16.gmra.mxu0 %v1172
  %v2436 = vpop.f32.mrf.mxu0
  %v2437 = vadd.f32 %v2108, %v2436
  %v2438 = vpop.f32.mrf.mxu0
  %v2439 = vadd.f32 %v2110, %v2438
  %2440 = vmatmul.bf16.gmra.mxu0 %v1175
  %v2441 = vpop.f32.mrf.mxu0
  %v2442 = vadd.f32 %v2113, %v2441
  %v2443 = vpop.f32.mrf.mxu0
  %v2444 = vadd.f32 %v2115, %v2443
  %2445 = vmatmul.bf16.gmra.mxu0 %v1178
  %v2446 = vpop.f32.mrf.mxu0
  %v2447 = vadd.f32 %v2118, %v2446
  %v2448 = vpop.f32.mrf.mxu0
  %v2449 = vadd.f32 %v2120, %v2448
  %2450 = vmatmul.bf16.gmra.mxu0 %v1181
  %v2451 = vpop.f32.mrf.mxu0
  %v2452 = vadd.f32 %v2123, %v2451
  %v2453 = vpop.f32.mrf.mxu0
  %v2454 = vadd.f32 %v2125, %v2453
  %2455 = vmatmul.bf16.gmra.mxu0 %v1184
  %v2456 = vpop.f32.mrf.mxu0
  %v2457 = vadd.f32 %v2128, %v2456
  %v2458 = vpop.f32.mrf.mxu0
  %v2459 = vadd.f32 %v2130, %v2458
  %2460 = vmatmul.bf16.gmra.mxu0 %v1187
  %v2461 = vpop.f32.mrf.mxu0
  %v2462 = vadd.f32 %v2133, %v2461
  %v2463 = vpop.f32.mrf.mxu0
  %v2464 = vadd.f32 %v2135, %v2463
  %2465 = vmatmul.bf16.gmra.mxu0 %v1190
  %v2466 = vpop.f32.mrf.mxu0
  %v2467 = vadd.f32 %v2138, %v2466
  %v2468 = vpop.f32.mrf.mxu0
  %v2469 = vadd.f32 %v2140, %v2468
  %2470 = vmatmul.bf16.gmra.mxu0 %v1193
  %v2471 = vpop.f32.mrf.mxu0
  %v2472 = vadd.f32 %v2143, %v2471
  %v2473 = vpop.f32.mrf.mxu0
  %v2474 = vadd.f32 %v2145, %v2473
  %2475 = vmatmul.bf16.gmra.mxu0 %v1196
  %v2476 = vpop.f32.mrf.mxu0
  %v2477 = vadd.f32 %v2148, %v2476
  %v2478 = vpop.f32.mrf.mxu0
  %v2479 = vadd.f32 %v2150, %v2478
  %2480 = vmatmul.bf16.gmra.mxu0 %v1199
  %v2481 = vpop.f32.mrf.mxu0
  %v2482 = vadd.f32 %v2153, %v2481
  %v2483 = vpop.f32.mrf.mxu0
  %v2484 = vadd.f32 %v2155, %v2483
  %2485 = vmatmul.bf16.gmra.mxu0 %v1202
  %v2486 = vpop.f32.mrf.mxu0
  %v2487 = vadd.f32 %v2158, %v2486
  %v2488 = vpop.f32.mrf.mxu0
  %v2489 = vadd.f32 %v2160, %v2488
  %2490 = vmatmul.bf16.gmra.mxu0 %v1205
  %v2491 = vpop.f32.mrf.mxu0
  %v2492 = vadd.f32 %v2163, %v2491
  %v2493 = vpop.f32.mrf.mxu0
  %v2494 = vadd.f32 %v2165, %v2493
  %2495 = vmatmul.bf16.gmra.mxu0 %v1208
  %v2496 = vpop.f32.mrf.mxu0
  %v2497 = vadd.f32 %v2168, %v2496
  %v2498 = vpop.f32.mrf.mxu0
  %v2499 = vadd.f32 %v2170, %v2498
  %2500 = vmatmul.bf16.gmra.mxu0 %v1211
  %v2501 = vpop.f32.mrf.mxu0
  %v2502 = vadd.f32 %v2173, %v2501
  %v2503 = vpop.f32.mrf.mxu0
  %v2504 = vadd.f32 %v2175, %v2503
  %2505 = vmatmul.bf16.gmra.mxu0 %v1214
  %v2506 = vpop.f32.mrf.mxu0
  %v2507 = vadd.f32 %v2178, %v2506
  %v2508 = vpop.f32.mrf.mxu0
  %v2509 = vadd.f32 %v2180, %v2508
  %2510 = vmatmul.bf16.gmra.mxu0 %v1217
  %v2511 = vpop.f32.mrf.mxu0
  %v2512 = vadd.f32 %v2183, %v2511
  %v2513 = vpop.f32.mrf.mxu0
  %v2514 = vadd.f32 %v2185, %v2513
  %2515 = vmatmul.bf16.gmra.mxu0 %v1220
  %v2516 = vpop.f32.mrf.mxu0
  %v2517 = vadd.f32 %v2188, %v2516
  %v2518 = vpop.f32.mrf.mxu0
  %v2519 = vadd.f32 %v2190, %v2518
  %2520 = vmatmul.bf16.gmra.mxu0 %v1223
  %v2521 = vpop.f32.mrf.mxu0
  %v2522 = vadd.f32 %v2193, %v2521
  %v2523 = vpop.f32.mrf.mxu0
  %v2524 = vadd.f32 %v2195, %v2523
  %2525 = vmatmul.bf16.gmra.mxu0 %v1226
  %v2526 = vpop.f32.mrf.mxu0
  %v2527 = vadd.f32 %v2198, %v2526
  %v2528 = vpop.f32.mrf.mxu0
  %v2529 = vadd.f32 %v2200, %v2528
  %2530 = vmatmul.bf16.gmra.mxu0 %v1229
  %v2531 = vpop.f32.mrf.mxu0
  %v2532 = vadd.f32 %v2203, %v2531
  %v2533 = vpop.f32.mrf.mxu0
  %v2534 = vadd.f32 %v2205, %v2533
  %2535 = vmatmul.bf16.gmra.mxu0 %v1232
  %v2536 = vpop.f32.mrf.mxu0
  %v2537 = vadd.f32 %v2208, %v2536
  %v2538 = vpop.f32.mrf.mxu0
  %v2539 = vadd.f32 %v2210, %v2538
  %2540 = vmatmul.bf16.gmra.mxu0 %v1235
  %v2541 = vpop.f32.mrf.mxu0
  %v2542 = vadd.f32 %v2213, %v2541
  %v2543 = vpop.f32.mrf.mxu0
  %v2544 = vadd.f32 %v2215, %v2543
  %2545 = vmatmul.bf16.gmra.mxu0 %v1238
  %v2546 = vpop.f32.mrf.mxu0
  %v2547 = vadd.f32 %v2218, %v2546
  %v2548 = vpop.f32.mrf.mxu0
  %v2549 = vadd.f32 %v2220, %v2548
  %2550 = vmatmul.bf16.gmra.mxu0 %v1241
  %v2551 = vpop.f32.mrf.mxu0
  %v2552 = vadd.f32 %v2223, %v2551
  %v2553 = vpop.f32.mrf.mxu0
  %v2554 = vadd.f32 %v2225, %v2553
  %2555 = vmatmul.bf16.gmra.mxu0 %v1244
  %v2556 = vpop.f32.mrf.mxu0
  %v2557 = vadd.f32 %v2228, %v2556
  %v2558 = vpop.f32.mrf.mxu0
  %v2559 = vadd.f32 %v2230, %v2558
  %2560 = vmatmul.bf16.gmra.mxu0 %v1247
  %v2561 = vpop.f32.mrf.mxu0
  %v2562 = vadd.f32 %v2233, %v2561
  %v2563 = vpop.f32.mrf.mxu0
  %v2564 = vadd.f32 %v2235, %v2563
  %2565 = vmatmul.bf16.gmra.mxu0 %v1250
  %v2566 = vpop.f32.mrf.mxu0
  %v2567 = vadd.f32 %v2238, %v2566
  %v2568 = vpop.f32.mrf.mxu0
  %v2569 = vadd.f32 %v2240, %v2568
  %2570 = vmatmul.bf16.gmra.mxu0 %v1253
  %v2571 = vpop.f32.mrf.mxu0
  %v2572 = vadd.f32 %v2243, %v2571
  %v2573 = vpop.f32.mrf.mxu0
  %v2574 = vadd.f32 %v2245, %v2573
  %2575 = vmatmul.bf16.gmra.mxu0 %v1256
  %v2576 = vpop.f32.mrf.mxu0
  %v2577 = vadd.f32 %v2248, %v2576
  %v2578 = vpop.f32.mrf.mxu0
  %v2579 = vadd.f32 %v2250, %v2578
  %2580 = vmatmul.bf16.gmra.mxu0 %v1259
  %v2581 = vpop.f32.mrf.mxu0
  %v2582 = vadd.f32 %v2253, %v2581
  %v2583 = vpop.f32.mrf.mxu0
  %v2584 = vadd.f32 %v2255, %v2583
  %2585 = vmatmul.bf16.gmra.mxu0 %v1262
  %v2586 = vpop.f32.mrf.mxu0
  %v2587 = vadd.f32 %v2258, %v2586
  %v2588 = vpop.f32.mrf.mxu0
  %v2589 = vadd.f32 %v2260, %v2588
  %2590 = vmatmul.bf16.gmra.mxu0 %v1265
  %v2591 = vpop.f32.mrf.mxu0
  %v2592 = vadd.f32 %v2263, %v2591
  %v2593 = vpop.f32.mrf.mxu0
  %v2594 = vadd.f32 %v2265, %v2593
  %2595 = vdwg.mxu0
  %2596 = vmatpush.bf16.msra.mxu0 %v996
  %2597 = vmatpush.bf16.msra.mxu0 %v992
  %2598 = vmatpush.bf16.msra.mxu0 %v988
  %2599 = vmatpush.bf16.msra.mxu0 %v984
  %2600 = vmatpush.bf16.msra.mxu0 %v980
  %2601 = vmatpush.bf16.msra.mxu0 %v976
  %2602 = vmatpush.bf16.msra.mxu0 %v972
  %2603 = vmatpush.bf16.msra.mxu0 %v968
  %2604 = vmatmul.bf16.gmra.mxu0 %v612
  %v2605 = vpop.f32.mrf.mxu0
  %v2606 = vadd.f32 %v222, %v2605
  %v2607 = vpop.f32.mrf.mxu0
  %v2608 = vadd.f32 %v222, %v2607
  %2609 = vmatmul.bf16.gmra.mxu0 %v614
  %v2610 = vpop.f32.mrf.mxu0
  %v2611 = vadd.f32 %v222, %v2610
  %v2612 = vpop.f32.mrf.mxu0
  %v2613 = vadd.f32 %v222, %v2612
  %2614 = vmatmul.bf16.gmra.mxu0 %v616
  %v2615 = vpop.f32.mrf.mxu0
  %v2616 = vadd.f32 %v222, %v2615
  %v2617 = vpop.f32.mrf.mxu0
  %v2618 = vadd.f32 %v222, %v2617
  %2619 = vmatmul.bf16.gmra.mxu0 %v618
  %v2620 = vpop.f32.mrf.mxu0
  %v2621 = vadd.f32 %v222, %v2620
  %v2622 = vpop.f32.mrf.mxu0
  %v2623 = vadd.f32 %v222, %v2622
  %2624 = vmatmul.bf16.gmra.mxu0 %v620
  %v2625 = vpop.f32.mrf.mxu0
  %v2626 = vadd.f32 %v222, %v2625
  %v2627 = vpop.f32.mrf.mxu0
  %v2628 = vadd.f32 %v222, %v2627
  %2629 = vmatmul.bf16.gmra.mxu0 %v622
  %v2630 = vpop.f32.mrf.mxu0
  %v2631 = vadd.f32 %v222, %v2630
  %v2632 = vpop.f32.mrf.mxu0
  %v2633 = vadd.f32 %v222, %v2632
  %2634 = vmatmul.bf16.gmra.mxu0 %v624
  %v2635 = vpop.f32.mrf.mxu0
  %v2636 = vadd.f32 %v222, %v2635
  %v2637 = vpop.f32.mrf.mxu0
  %v2638 = vadd.f32 %v222, %v2637
  %2639 = vmatmul.bf16.gmra.mxu0 %v626
  %v2640 = vpop.f32.mrf.mxu0
  %v2641 = vadd.f32 %v222, %v2640
  %v2642 = vpop.f32.mrf.mxu0
  %v2643 = vadd.f32 %v222, %v2642
  %2644 = vmatmul.bf16.gmra.mxu0 %v628
  %v2645 = vpop.f32.mrf.mxu0
  %v2646 = vadd.f32 %v222, %v2645
  %v2647 = vpop.f32.mrf.mxu0
  %v2648 = vadd.f32 %v222, %v2647
  %2649 = vmatmul.bf16.gmra.mxu0 %v630
  %v2650 = vpop.f32.mrf.mxu0
  %v2651 = vadd.f32 %v222, %v2650
  %v2652 = vpop.f32.mrf.mxu0
  %v2653 = vadd.f32 %v222, %v2652
  %2654 = vmatmul.bf16.gmra.mxu0 %v632
  %v2655 = vpop.f32.mrf.mxu0
  %v2656 = vadd.f32 %v222, %v2655
  %v2657 = vpop.f32.mrf.mxu0
  %v2658 = vadd.f32 %v222, %v2657
  %2659 = vmatmul.bf16.gmra.mxu0 %v634
  %v2660 = vpop.f32.mrf.mxu0
  %v2661 = vadd.f32 %v222, %v2660
  %v2662 = vpop.f32.mrf.mxu0
  %v2663 = vadd.f32 %v222, %v2662
  %2664 = vmatmul.bf16.gmra.mxu0 %v636
  %v2665 = vpop.f32.mrf.mxu0
  %v2666 = vadd.f32 %v222, %v2665
  %v2667 = vpop.f32.mrf.mxu0
  %v2668 = vadd.f32 %v222, %v2667
  %2669 = vmatmul.bf16.gmra.mxu0 %v638
  %v2670 = vpop.f32.mrf.mxu0
  %v2671 = vadd.f32 %v222, %v2670
  %v2672 = vpop.f32.mrf.mxu0
  %v2673 = vadd.f32 %v222, %v2672
  %2674 = vmatmul.bf16.gmra.mxu0 %v640
  %v2675 = vpop.f32.mrf.mxu0
  %v2676 = vadd.f32 %v222, %v2675
  %v2677 = vpop.f32.mrf.mxu0
  %v2678 = vadd.f32 %v222, %v2677
  %2679 = vmatmul.bf16.gmra.mxu0 %v642
  %v2680 = vpop.f32.mrf.mxu0
  %v2681 = vadd.f32 %v222, %v2680
  %v2682 = vpop.f32.mrf.mxu0
  %v2683 = vadd.f32 %v222, %v2682
  %2684 = vmatmul.bf16.gmra.mxu0 %v644
  %v2685 = vpop.f32.mrf.mxu0
  %v2686 = vadd.f32 %v222, %v2685
  %v2687 = vpop.f32.mrf.mxu0
  %v2688 = vadd.f32 %v222, %v2687
  %2689 = vmatmul.bf16.gmra.mxu0 %v646
  %v2690 = vpop.f32.mrf.mxu0
  %v2691 = vadd.f32 %v222, %v2690
  %v2692 = vpop.f32.mrf.mxu0
  %v2693 = vadd.f32 %v222, %v2692
  %2694 = vmatmul.bf16.gmra.mxu0 %v648
  %v2695 = vpop.f32.mrf.mxu0
  %v2696 = vadd.f32 %v222, %v2695
  %v2697 = vpop.f32.mrf.mxu0
  %v2698 = vadd.f32 %v222, %v2697
  %2699 = vmatmul.bf16.gmra.mxu0 %v650
  %v2700 = vpop.f32.mrf.mxu0
  %v2701 = vadd.f32 %v222, %v2700
  %v2702 = vpop.f32.mrf.mxu0
  %v2703 = vadd.f32 %v222, %v2702
  %2704 = vmatmul.bf16.gmra.mxu0 %v652
  %v2705 = vpop.f32.mrf.mxu0
  %v2706 = vadd.f32 %v222, %v2705
  %v2707 = vpop.f32.mrf.mxu0
  %v2708 = vadd.f32 %v222, %v2707
  %2709 = vmatmul.bf16.gmra.mxu0 %v654
  %v2710 = vpop.f32.mrf.mxu0
  %v2711 = vadd.f32 %v222, %v2710
  %v2712 = vpop.f32.mrf.mxu0
  %v2713 = vadd.f32 %v222, %v2712
  %2714 = vmatmul.bf16.gmra.mxu0 %v656
  %v2715 = vpop.f32.mrf.mxu0
  %v2716 = vadd.f32 %v222, %v2715
  %v2717 = vpop.f32.mrf.mxu0
  %v2718 = vadd.f32 %v222, %v2717
  %2719 = vmatmul.bf16.gmra.mxu0 %v658
  %v2720 = vpop.f32.mrf.mxu0
  %v2721 = vadd.f32 %v222, %v2720
  %v2722 = vpop.f32.mrf.mxu0
  %v2723 = vadd.f32 %v222, %v2722
  %2724 = vmatmul.bf16.gmra.mxu0 %v660
  %v2725 = vpop.f32.mrf.mxu0
  %v2726 = vadd.f32 %v222, %v2725
  %v2727 = vpop.f32.mrf.mxu0
  %v2728 = vadd.f32 %v222, %v2727
  %2729 = vmatmul.bf16.gmra.mxu0 %v662
  %v2730 = vpop.f32.mrf.mxu0
  %v2731 = vadd.f32 %v222, %v2730
  %v2732 = vpop.f32.mrf.mxu0
  %v2733 = vadd.f32 %v222, %v2732
  %2734 = vmatmul.bf16.gmra.mxu0 %v664
  %v2735 = vpop.f32.mrf.mxu0
  %v2736 = vadd.f32 %v222, %v2735
  %v2737 = vpop.f32.mrf.mxu0
  %v2738 = vadd.f32 %v222, %v2737
  %2739 = vmatmul.bf16.gmra.mxu0 %v666
  %v2740 = vpop.f32.mrf.mxu0
  %v2741 = vadd.f32 %v222, %v2740
  %v2742 = vpop.f32.mrf.mxu0
  %v2743 = vadd.f32 %v222, %v2742
  %2744 = vmatmul.bf16.gmra.mxu0 %v668
  %v2745 = vpop.f32.mrf.mxu0
  %v2746 = vadd.f32 %v222, %v2745
  %v2747 = vpop.f32.mrf.mxu0
  %v2748 = vadd.f32 %v222, %v2747
  %2749 = vmatmul.bf16.gmra.mxu0 %v670
  %v2750 = vpop.f32.mrf.mxu0
  %v2751 = vadd.f32 %v222, %v2750
  %v2752 = vpop.f32.mrf.mxu0
  %v2753 = vadd.f32 %v222, %v2752
  %2754 = vmatmul.bf16.gmra.mxu0 %v672
  %v2755 = vpop.f32.mrf.mxu0
  %v2756 = vadd.f32 %v222, %v2755
  %v2757 = vpop.f32.mrf.mxu0
  %v2758 = vadd.f32 %v222, %v2757
  %2759 = vmatmul.bf16.gmra.mxu0 %v674
  %v2760 = vpop.f32.mrf.mxu0
  %v2761 = vadd.f32 %v222, %v2760
  %v2762 = vpop.f32.mrf.mxu0
  %v2763 = vadd.f32 %v222, %v2762
  %2764 = vmatmul.bf16.gmra.mxu0 %v676
  %v2765 = vpop.f32.mrf.mxu0
  %v2766 = vadd.f32 %v222, %v2765
  %v2767 = vpop.f32.mrf.mxu0
  %v2768 = vadd.f32 %v222, %v2767
  %2769 = vmatmul.bf16.gmra.mxu0 %v678
  %v2770 = vpop.f32.mrf.mxu0
  %v2771 = vadd.f32 %v222, %v2770
  %v2772 = vpop.f32.mrf.mxu0
  %v2773 = vadd.f32 %v222, %v2772
  %2774 = vmatmul.bf16.gmra.mxu0 %v680
  %v2775 = vpop.f32.mrf.mxu0
  %v2776 = vadd.f32 %v222, %v2775
  %v2777 = vpop.f32.mrf.mxu0
  %v2778 = vadd.f32 %v222, %v2777
  %2779 = vmatmul.bf16.gmra.mxu0 %v682
  %v2780 = vpop.f32.mrf.mxu0
  %v2781 = vadd.f32 %v222, %v2780
  %v2782 = vpop.f32.mrf.mxu0
  %v2783 = vadd.f32 %v222, %v2782
  %2784 = vmatmul.bf16.gmra.mxu0 %v684
  %v2785 = vpop.f32.mrf.mxu0
  %v2786 = vadd.f32 %v222, %v2785
  %v2787 = vpop.f32.mrf.mxu0
  %v2788 = vadd.f32 %v222, %v2787
  %2789 = vmatmul.bf16.gmra.mxu0 %v686
  %v2790 = vpop.f32.mrf.mxu0
  %v2791 = vadd.f32 %v222, %v2790
  %v2792 = vpop.f32.mrf.mxu0
  %v2793 = vadd.f32 %v222, %v2792
  %2794 = vmatmul.bf16.gmra.mxu0 %v688
  %v2795 = vpop.f32.mrf.mxu0
  %v2796 = vadd.f32 %v222, %v2795
  %v2797 = vpop.f32.mrf.mxu0
  %v2798 = vadd.f32 %v222, %v2797
  %2799 = vmatmul.bf16.gmra.mxu0 %v690
  %v2800 = vpop.f32.mrf.mxu0
  %v2801 = vadd.f32 %v222, %v2800
  %v2802 = vpop.f32.mrf.mxu0
  %v2803 = vadd.f32 %v222, %v2802
  %2804 = vmatmul.bf16.gmra.mxu0 %v692
  %v2805 = vpop.f32.mrf.mxu0
  %v2806 = vadd.f32 %v222, %v2805
  %v2807 = vpop.f32.mrf.mxu0
  %v2808 = vadd.f32 %v222, %v2807
  %2809 = vmatmul.bf16.gmra.mxu0 %v694
  %v2810 = vpop.f32.mrf.mxu0
  %v2811 = vadd.f32 %v222, %v2810
  %v2812 = vpop.f32.mrf.mxu0
  %v2813 = vadd.f32 %v222, %v2812
  %2814 = vmatmul.bf16.gmra.mxu0 %v696
  %v2815 = vpop.f32.mrf.mxu0
  %v2816 = vadd.f32 %v222, %v2815
  %v2817 = vpop.f32.mrf.mxu0
  %v2818 = vadd.f32 %v222, %v2817
  %2819 = vmatmul.bf16.gmra.mxu0 %v698
  %v2820 = vpop.f32.mrf.mxu0
  %v2821 = vadd.f32 %v222, %v2820
  %v2822 = vpop.f32.mrf.mxu0
  %v2823 = vadd.f32 %v222, %v2822
  %2824 = vmatmul.bf16.gmra.mxu0 %v700
  %v2825 = vpop.f32.mrf.mxu0
  %v2826 = vadd.f32 %v222, %v2825
  %v2827 = vpop.f32.mrf.mxu0
  %v2828 = vadd.f32 %v222, %v2827
  %2829 = vmatmul.bf16.gmra.mxu0 %v702
  %v2830 = vpop.f32.mrf.mxu0
  %v2831 = vadd.f32 %v222, %v2830
  %v2832 = vpop.f32.mrf.mxu0
  %v2833 = vadd.f32 %v222, %v2832
  %2834 = vmatmul.bf16.gmra.mxu0 %v704
  %v2835 = vpop.f32.mrf.mxu0
  %v2836 = vadd.f32 %v222, %v2835
  %v2837 = vpop.f32.mrf.mxu0
  %v2838 = vadd.f32 %v222, %v2837
  %2839 = vmatmul.bf16.gmra.mxu0 %v706
  %v2840 = vpop.f32.mrf.mxu0
  %v2841 = vadd.f32 %v222, %v2840
  %v2842 = vpop.f32.mrf.mxu0
  %v2843 = vadd.f32 %v222, %v2842
  %2844 = vmatmul.bf16.gmra.mxu0 %v708
  %v2845 = vpop.f32.mrf.mxu0
  %v2846 = vadd.f32 %v222, %v2845
  %v2847 = vpop.f32.mrf.mxu0
  %v2848 = vadd.f32 %v222, %v2847
  %2849 = vmatmul.bf16.gmra.mxu0 %v710
  %v2850 = vpop.f32.mrf.mxu0
  %v2851 = vadd.f32 %v222, %v2850
  %v2852 = vpop.f32.mrf.mxu0
  %v2853 = vadd.f32 %v222, %v2852
  %2854 = vmatmul.bf16.gmra.mxu0 %v712
  %v2855 = vpop.f32.mrf.mxu0
  %v2856 = vadd.f32 %v222, %v2855
  %v2857 = vpop.f32.mrf.mxu0
  %v2858 = vadd.f32 %v222, %v2857
  %2859 = vmatmul.bf16.gmra.mxu0 %v714
  %v2860 = vpop.f32.mrf.mxu0
  %v2861 = vadd.f32 %v222, %v2860
  %v2862 = vpop.f32.mrf.mxu0
  %v2863 = vadd.f32 %v222, %v2862
  %2864 = vmatmul.bf16.gmra.mxu0 %v716
  %v2865 = vpop.f32.mrf.mxu0
  %v2866 = vadd.f32 %v222, %v2865
  %v2867 = vpop.f32.mrf.mxu0
  %v2868 = vadd.f32 %v222, %v2867
  %2869 = vmatmul.bf16.gmra.mxu0 %v718
  %v2870 = vpop.f32.mrf.mxu0
  %v2871 = vadd.f32 %v222, %v2870
  %v2872 = vpop.f32.mrf.mxu0
  %v2873 = vadd.f32 %v222, %v2872
  %2874 = vmatmul.bf16.gmra.mxu0 %v720
  %v2875 = vpop.f32.mrf.mxu0
  %v2876 = vadd.f32 %v222, %v2875
  %v2877 = vpop.f32.mrf.mxu0
  %v2878 = vadd.f32 %v222, %v2877
  %2879 = vmatmul.bf16.gmra.mxu0 %v722
  %v2880 = vpop.f32.mrf.mxu0
  %v2881 = vadd.f32 %v222, %v2880
  %v2882 = vpop.f32.mrf.mxu0
  %v2883 = vadd.f32 %v222, %v2882
  %2884 = vmatmul.bf16.gmra.mxu0 %v724
  %v2885 = vpop.f32.mrf.mxu0
  %v2886 = vadd.f32 %v222, %v2885
  %v2887 = vpop.f32.mrf.mxu0
  %v2888 = vadd.f32 %v222, %v2887
  %2889 = vmatmul.bf16.gmra.mxu0 %v726
  %v2890 = vpop.f32.mrf.mxu0
  %v2891 = vadd.f32 %v222, %v2890
  %v2892 = vpop.f32.mrf.mxu0
  %v2893 = vadd.f32 %v222, %v2892
  %2894 = vmatmul.bf16.gmra.mxu0 %v728
  %v2895 = vpop.f32.mrf.mxu0
  %v2896 = vadd.f32 %v222, %v2895
  %v2897 = vpop.f32.mrf.mxu0
  %v2898 = vadd.f32 %v222, %v2897
  %2899 = vmatmul.bf16.gmra.mxu0 %v730
  %v2900 = vpop.f32.mrf.mxu0
  %v2901 = vadd.f32 %v222, %v2900
  %v2902 = vpop.f32.mrf.mxu0
  %v2903 = vadd.f32 %v222, %v2902
  %2904 = vmatmul.bf16.gmra.mxu0 %v732
  %v2905 = vpop.f32.mrf.mxu0
  %v2906 = vadd.f32 %v222, %v2905
  %v2907 = vpop.f32.mrf.mxu0
  %v2908 = vadd.f32 %v222, %v2907
  %2909 = vmatmul.bf16.gmra.mxu0 %v734
  %v2910 = vpop.f32.mrf.mxu0
  %v2911 = vadd.f32 %v222, %v2910
  %v2912 = vpop.f32.mrf.mxu0
  %v2913 = vadd.f32 %v222, %v2912
  %2914 = vmatmul.bf16.gmra.mxu0 %v736
  %v2915 = vpop.f32.mrf.mxu0
  %v2916 = vadd.f32 %v222, %v2915
  %v2917 = vpop.f32.mrf.mxu0
  %v2918 = vadd.f32 %v222, %v2917
  %2919 = vmatmul.bf16.gmra.mxu0 %v738
  %v2920 = vpop.f32.mrf.mxu0
  %v2921 = vadd.f32 %v222, %v2920
  %v2922 = vpop.f32.mrf.mxu0
  %v2923 = vadd.f32 %v222, %v2922
  %2924 = vdwg.mxu0
  %2925 = vmatpush.bf16.msra.mxu0 0
  %2926 = vmatpush.bf16.msra.mxu0 0
  %2927 = vmatpush.bf16.msra.mxu0 %v1275
  %2928 = vmatpush.bf16.msra.mxu0 %v1016
  %2929 = vmatpush.bf16.msra.mxu0 %v1012
  %2930 = vmatpush.bf16.msra.mxu0 %v1008
  %2931 = vmatpush.bf16.msra.mxu0 %v1004
  %2932 = vmatpush.bf16.msra.mxu0 %v1000
  %2933 = vmatmul.bf16.gmra.mxu0 %v1076
  %v2934 = vpop.f32.mrf.mxu0
  %v2935 = vadd.f32 %v2606, %v2934
  %v2936 = vpop.f32.mrf.mxu0
  %v2937 = vadd.f32 %v2608, %v2936
  %2938 = vmatmul.bf16.gmra.mxu0 %v1079
  %v2939 = vpop.f32.mrf.mxu0
  %v2940 = vadd.f32 %v2611, %v2939
  %v2941 = vpop.f32.mrf.mxu0
  %v2942 = vadd.f32 %v2613, %v2941
  %2943 = vmatmul.bf16.gmra.mxu0 %v1082
  %v2944 = vpop.f32.mrf.mxu0
  %v2945 = vadd.f32 %v2616, %v2944
  %v2946 = vpop.f32.mrf.mxu0
  %v2947 = vadd.f32 %v2618, %v2946
  %2948 = vmatmul.bf16.gmra.mxu0 %v1085
  %v2949 = vpop.f32.mrf.mxu0
  %v2950 = vadd.f32 %v2621, %v2949
  %v2951 = vpop.f32.mrf.mxu0
  %v2952 = vadd.f32 %v2623, %v2951
  %2953 = vmatmul.bf16.gmra.mxu0 %v1088
  %v2954 = vpop.f32.mrf.mxu0
  %v2955 = vadd.f32 %v2626, %v2954
  %v2956 = vpop.f32.mrf.mxu0
  %v2957 = vadd.f32 %v2628, %v2956
  %2958 = vmatmul.bf16.gmra.mxu0 %v1091
  %v2959 = vpop.f32.mrf.mxu0
  %v2960 = vadd.f32 %v2631, %v2959
  %v2961 = vpop.f32.mrf.mxu0
  %v2962 = vadd.f32 %v2633, %v2961
  %2963 = vmatmul.bf16.gmra.mxu0 %v1094
  %v2964 = vpop.f32.mrf.mxu0
  %v2965 = vadd.f32 %v2636, %v2964
  %v2966 = vpop.f32.mrf.mxu0
  %v2967 = vadd.f32 %v2638, %v2966
  %2968 = vmatmul.bf16.gmra.mxu0 %v1097
  %v2969 = vpop.f32.mrf.mxu0
  %v2970 = vadd.f32 %v2641, %v2969
  %v2971 = vpop.f32.mrf.mxu0
  %v2972 = vadd.f32 %v2643, %v2971
  %2973 = vmatmul.bf16.gmra.mxu0 %v1100
  %v2974 = vpop.f32.mrf.mxu0
  %v2975 = vadd.f32 %v2646, %v2974
  %v2976 = vpop.f32.mrf.mxu0
  %v2977 = vadd.f32 %v2648, %v2976
  %2978 = vmatmul.bf16.gmra.mxu0 %v1103
  %v2979 = vpop.f32.mrf.mxu0
  %v2980 = vadd.f32 %v2651, %v2979
  %v2981 = vpop.f32.mrf.mxu0
  %v2982 = vadd.f32 %v2653, %v2981
  %2983 = vmatmul.bf16.gmra.mxu0 %v1106
  %v2984 = vpop.f32.mrf.mxu0
  %v2985 = vadd.f32 %v2656, %v2984
  %v2986 = vpop.f32.mrf.mxu0
  %v2987 = vadd.f32 %v2658, %v2986
  %2988 = vmatmul.bf16.gmra.mxu0 %v1109
  %v2989 = vpop.f32.mrf.mxu0
  %v2990 = vadd.f32 %v2661, %v2989
  %v2991 = vpop.f32.mrf.mxu0
  %v2992 = vadd.f32 %v2663, %v2991
  %2993 = vmatmul.bf16.gmra.mxu0 %v1112
  %v2994 = vpop.f32.mrf.mxu0
  %v2995 = vadd.f32 %v2666, %v2994
  %v2996 = vpop.f32.mrf.mxu0
  %v2997 = vadd.f32 %v2668, %v2996
  %2998 = vmatmul.bf16.gmra.mxu0 %v1115
  %v2999 = vpop.f32.mrf.mxu0
  %v3000 = vadd.f32 %v2671, %v2999
  %v3001 = vpop.f32.mrf.mxu0
  %v3002 = vadd.f32 %v2673, %v3001
  %3003 = vmatmul.bf16.gmra.mxu0 %v1118
  %v3004 = vpop.f32.mrf.mxu0
  %v3005 = vadd.f32 %v2676, %v3004
  %v3006 = vpop.f32.mrf.mxu0
  %v3007 = vadd.f32 %v2678, %v3006
  %3008 = vmatmul.bf16.gmra.mxu0 %v1121
  %v3009 = vpop.f32.mrf.mxu0
  %v3010 = vadd.f32 %v2681, %v3009
  %v3011 = vpop.f32.mrf.mxu0
  %v3012 = vadd.f32 %v2683, %v3011
  %3013 = vmatmul.bf16.gmra.mxu0 %v1124
  %v3014 = vpop.f32.mrf.mxu0
  %v3015 = vadd.f32 %v2686, %v3014
  %v3016 = vpop.f32.mrf.mxu0
  %v3017 = vadd.f32 %v2688, %v3016
  %3018 = vmatmul.bf16.gmra.mxu0 %v1127
  %v3019 = vpop.f32.mrf.mxu0
  %v3020 = vadd.f32 %v2691, %v3019
  %v3021 = vpop.f32.mrf.mxu0
  %v3022 = vadd.f32 %v2693, %v3021
  %3023 = vmatmul.bf16.gmra.mxu0 %v1130
  %v3024 = vpop.f32.mrf.mxu0
  %v3025 = vadd.f32 %v2696, %v3024
  %v3026 = vpop.f32.mrf.mxu0
  %v3027 = vadd.f32 %v2698, %v3026
  %3028 = vmatmul.bf16.gmra.mxu0 %v1133
  %v3029 = vpop.f32.mrf.mxu0
  %v3030 = vadd.f32 %v2701, %v3029
  %v3031 = vpop.f32.mrf.mxu0
  %v3032 = vadd.f32 %v2703, %v3031
  %3033 = vmatmul.bf16.gmra.mxu0 %v1136
  %v3034 = vpop.f32.mrf.mxu0
  %v3035 = vadd.f32 %v2706, %v3034
  %v3036 = vpop.f32.mrf.mxu0
  %v3037 = vadd.f32 %v2708, %v3036
  %3038 = vmatmul.bf16.gmra.mxu0 %v1139
  %v3039 = vpop.f32.mrf.mxu0
  %v3040 = vadd.f32 %v2711, %v3039
  %v3041 = vpop.f32.mrf.mxu0
  %v3042 = vadd.f32 %v2713, %v3041
  %3043 = vmatmul.bf16.gmra.mxu0 %v1142
  %v3044 = vpop.f32.mrf.mxu0
  %v3045 = vadd.f32 %v2716, %v3044
  %v3046 = vpop.f32.mrf.mxu0
  %v3047 = vadd.f32 %v2718, %v3046
  %3048 = vmatmul.bf16.gmra.mxu0 %v1145
  %v3049 = vpop.f32.mrf.mxu0
  %v3050 = vadd.f32 %v2721, %v3049
  %v3051 = vpop.f32.mrf.mxu0
  %v3052 = vadd.f32 %v2723, %v3051
  %3053 = vmatmul.bf16.gmra.mxu0 %v1148
  %v3054 = vpop.f32.mrf.mxu0
  %v3055 = vadd.f32 %v2726, %v3054
  %v3056 = vpop.f32.mrf.mxu0
  %v3057 = vadd.f32 %v2728, %v3056
  %3058 = vmatmul.bf16.gmra.mxu0 %v1151
  %v3059 = vpop.f32.mrf.mxu0
  %v3060 = vadd.f32 %v2731, %v3059
  %v3061 = vpop.f32.mrf.mxu0
  %v3062 = vadd.f32 %v2733, %v3061
  %3063 = vmatmul.bf16.gmra.mxu0 %v1154
  %v3064 = vpop.f32.mrf.mxu0
  %v3065 = vadd.f32 %v2736, %v3064
  %v3066 = vpop.f32.mrf.mxu0
  %v3067 = vadd.f32 %v2738, %v3066
  %3068 = vmatmul.bf16.gmra.mxu0 %v1157
  %v3069 = vpop.f32.mrf.mxu0
  %v3070 = vadd.f32 %v2741, %v3069
  %v3071 = vpop.f32.mrf.mxu0
  %v3072 = vadd.f32 %v2743, %v3071
  %3073 = vmatmul.bf16.gmra.mxu0 %v1160
  %v3074 = vpop.f32.mrf.mxu0
  %v3075 = vadd.f32 %v2746, %v3074
  %v3076 = vpop.f32.mrf.mxu0
  %v3077 = vadd.f32 %v2748, %v3076
  %3078 = vmatmul.bf16.gmra.mxu0 %v1163
  %v3079 = vpop.f32.mrf.mxu0
  %v3080 = vadd.f32 %v2751, %v3079
  %v3081 = vpop.f32.mrf.mxu0
  %v3082 = vadd.f32 %v2753, %v3081
  %3083 = vmatmul.bf16.gmra.mxu0 %v1166
  %v3084 = vpop.f32.mrf.mxu0
  %v3085 = vadd.f32 %v2756, %v3084
  %v3086 = vpop.f32.mrf.mxu0
  %v3087 = vadd.f32 %v2758, %v3086
  %3088 = vmatmul.bf16.gmra.mxu0 %v1169
  %v3089 = vpop.f32.mrf.mxu0
  %v3090 = vadd.f32 %v2761, %v3089
  %v3091 = vpop.f32.mrf.mxu0
  %v3092 = vadd.f32 %v2763, %v3091
  %3093 = vmatmul.bf16.gmra.mxu0 %v1172
  %v3094 = vpop.f32.mrf.mxu0
  %v3095 = vadd.f32 %v2766, %v3094
  %v3096 = vpop.f32.mrf.mxu0
  %v3097 = vadd.f32 %v2768, %v3096
  %3098 = vmatmul.bf16.gmra.mxu0 %v1175
  %v3099 = vpop.f32.mrf.mxu0
  %v3100 = vadd.f32 %v2771, %v3099
  %v3101 = vpop.f32.mrf.mxu0
  %v3102 = vadd.f32 %v2773, %v3101
  %3103 = vmatmul.bf16.gmra.mxu0 %v1178
  %v3104 = vpop.f32.mrf.mxu0
  %v3105 = vadd.f32 %v2776, %v3104
  %v3106 = vpop.f32.mrf.mxu0
  %v3107 = vadd.f32 %v2778, %v3106
  %3108 = vmatmul.bf16.gmra.mxu0 %v1181
  %v3109 = vpop.f32.mrf.mxu0
  %v3110 = vadd.f32 %v2781, %v3109
  %v3111 = vpop.f32.mrf.mxu0
  %v3112 = vadd.f32 %v2783, %v3111
  %3113 = vmatmul.bf16.gmra.mxu0 %v1184
  %v3114 = vpop.f32.mrf.mxu0
  %v3115 = vadd.f32 %v2786, %v3114
  %v3116 = vpop.f32.mrf.mxu0
  %v3117 = vadd.f32 %v2788, %v3116
  %3118 = vmatmul.bf16.gmra.mxu0 %v1187
  %v3119 = vpop.f32.mrf.mxu0
  %v3120 = vadd.f32 %v2791, %v3119
  %v3121 = vpop.f32.mrf.mxu0
  %v3122 = vadd.f32 %v2793, %v3121
  %3123 = vmatmul.bf16.gmra.mxu0 %v1190
  %v3124 = vpop.f32.mrf.mxu0
  %v3125 = vadd.f32 %v2796, %v3124
  %v3126 = vpop.f32.mrf.mxu0
  %v3127 = vadd.f32 %v2798, %v3126
  %3128 = vmatmul.bf16.gmra.mxu0 %v1193
  %v3129 = vpop.f32.mrf.mxu0
  %v3130 = vadd.f32 %v2801, %v3129
  %v3131 = vpop.f32.mrf.mxu0
  %v3132 = vadd.f32 %v2803, %v3131
  %3133 = vmatmul.bf16.gmra.mxu0 %v1196
  %v3134 = vpop.f32.mrf.mxu0
  %v3135 = vadd.f32 %v2806, %v3134
  %v3136 = vpop.f32.mrf.mxu0
  %v3137 = vadd.f32 %v2808, %v3136
  %3138 = vmatmul.bf16.gmra.mxu0 %v1199
  %v3139 = vpop.f32.mrf.mxu0
  %v3140 = vadd.f32 %v2811, %v3139
  %v3141 = vpop.f32.mrf.mxu0
  %v3142 = vadd.f32 %v2813, %v3141
  %3143 = vmatmul.bf16.gmra.mxu0 %v1202
  %v3144 = vpop.f32.mrf.mxu0
  %v3145 = vadd.f32 %v2816, %v3144
  %v3146 = vpop.f32.mrf.mxu0
  %v3147 = vadd.f32 %v2818, %v3146
  %3148 = vmatmul.bf16.gmra.mxu0 %v1205
  %v3149 = vpop.f32.mrf.mxu0
  %v3150 = vadd.f32 %v2821, %v3149
  %v3151 = vpop.f32.mrf.mxu0
  %v3152 = vadd.f32 %v2823, %v3151
  %3153 = vmatmul.bf16.gmra.mxu0 %v1208
  %v3154 = vpop.f32.mrf.mxu0
  %v3155 = vadd.f32 %v2826, %v3154
  %v3156 = vpop.f32.mrf.mxu0
  %v3157 = vadd.f32 %v2828, %v3156
  %3158 = vmatmul.bf16.gmra.mxu0 %v1211
  %v3159 = vpop.f32.mrf.mxu0
  %v3160 = vadd.f32 %v2831, %v3159
  %v3161 = vpop.f32.mrf.mxu0
  %v3162 = vadd.f32 %v2833, %v3161
  %3163 = vmatmul.bf16.gmra.mxu0 %v1214
  %v3164 = vpop.f32.mrf.mxu0
  %v3165 = vadd.f32 %v2836, %v3164
  %v3166 = vpop.f32.mrf.mxu0
  %v3167 = vadd.f32 %v2838, %v3166
  %3168 = vmatmul.bf16.gmra.mxu0 %v1217
  %v3169 = vpop.f32.mrf.mxu0
  %v3170 = vadd.f32 %v2841, %v3169
  %v3171 = vpop.f32.mrf.mxu0
  %v3172 = vadd.f32 %v2843, %v3171
  %3173 = vmatmul.bf16.gmra.mxu0 %v1220
  %v3174 = vpop.f32.mrf.mxu0
  %v3175 = vadd.f32 %v2846, %v3174
  %v3176 = vpop.f32.mrf.mxu0
  %v3177 = vadd.f32 %v2848, %v3176
  %3178 = vmatmul.bf16.gmra.mxu0 %v1223
  %v3179 = vpop.f32.mrf.mxu0
  %v3180 = vadd.f32 %v2851, %v3179
  %v3181 = vpop.f32.mrf.mxu0
  %v3182 = vadd.f32 %v2853, %v3181
  %3183 = vmatmul.bf16.gmra.mxu0 %v1226
  %v3184 = vpop.f32.mrf.mxu0
  %v3185 = vadd.f32 %v2856, %v3184
  %v3186 = vpop.f32.mrf.mxu0
  %v3187 = vadd.f32 %v2858, %v3186
  %3188 = vmatmul.bf16.gmra.mxu0 %v1229
  %v3189 = vpop.f32.mrf.mxu0
  %v3190 = vadd.f32 %v2861, %v3189
  %v3191 = vpop.f32.mrf.mxu0
  %v3192 = vadd.f32 %v2863, %v3191
  %3193 = vmatmul.bf16.gmra.mxu0 %v1232
  %v3194 = vpop.f32.mrf.mxu0
  %v3195 = vadd.f32 %v2866, %v3194
  %v3196 = vpop.f32.mrf.mxu0
  %v3197 = vadd.f32 %v2868, %v3196
  %3198 = vmatmul.bf16.gmra.mxu0 %v1235
  %v3199 = vpop.f32.mrf.mxu0
  %v3200 = vadd.f32 %v2871, %v3199
  %v3201 = vpop.f32.mrf.mxu0
  %v3202 = vadd.f32 %v2873, %v3201
  %3203 = vmatmul.bf16.gmra.mxu0 %v1238
  %v3204 = vpop.f32.mrf.mxu0
  %v3205 = vadd.f32 %v2876, %v3204
  %v3206 = vpop.f32.mrf.mxu0
  %v3207 = vadd.f32 %v2878, %v3206
  %3208 = vmatmul.bf16.gmra.mxu0 %v1241
  %v3209 = vpop.f32.mrf.mxu0
  %v3210 = vadd.f32 %v2881, %v3209
  %v3211 = vpop.f32.mrf.mxu0
  %v3212 = vadd.f32 %v2883, %v3211
  %3213 = vmatmul.bf16.gmra.mxu0 %v1244
  %v3214 = vpop.f32.mrf.mxu0
  %v3215 = vadd.f32 %v2886, %v3214
  %v3216 = vpop.f32.mrf.mxu0
  %v3217 = vadd.f32 %v2888, %v3216
  %3218 = vmatmul.bf16.gmra.mxu0 %v1247
  %v3219 = vpop.f32.mrf.mxu0
  %v3220 = vadd.f32 %v2891, %v3219
  %v3221 = vpop.f32.mrf.mxu0
  %v3222 = vadd.f32 %v2893, %v3221
  %3223 = vmatmul.bf16.gmra.mxu0 %v1250
  %v3224 = vpop.f32.mrf.mxu0
  %v3225 = vadd.f32 %v2896, %v3224
  %v3226 = vpop.f32.mrf.mxu0
  %v3227 = vadd.f32 %v2898, %v3226
  %3228 = vmatmul.bf16.gmra.mxu0 %v1253
  %v3229 = vpop.f32.mrf.mxu0
  %v3230 = vadd.f32 %v2901, %v3229
  %v3231 = vpop.f32.mrf.mxu0
  %v3232 = vadd.f32 %v2903, %v3231
  %3233 = vmatmul.bf16.gmra.mxu0 %v1256
  %v3234 = vpop.f32.mrf.mxu0
  %v3235 = vadd.f32 %v2906, %v3234
  %v3236 = vpop.f32.mrf.mxu0
  %v3237 = vadd.f32 %v2908, %v3236
  %3238 = vmatmul.bf16.gmra.mxu0 %v1259
  %v3239 = vpop.f32.mrf.mxu0
  %v3240 = vadd.f32 %v2911, %v3239
  %v3241 = vpop.f32.mrf.mxu0
  %v3242 = vadd.f32 %v2913, %v3241
  %3243 = vmatmul.bf16.gmra.mxu0 %v1262
  %v3244 = vpop.f32.mrf.mxu0
  %v3245 = vadd.f32 %v2916, %v3244
  %v3246 = vpop.f32.mrf.mxu0
  %v3247 = vadd.f32 %v2918, %v3246
  %3248 = vmatmul.bf16.gmra.mxu0 %v1265
  %v3249 = vpop.f32.mrf.mxu0
  %v3250 = vadd.f32 %v2921, %v3249
  %v3251 = vpop.f32.mrf.mxu0
  %v3252 = vadd.f32 %v2923, %v3251
  %3253 = vdwg.mxu0
  %3254 = vmatpush.bf16.msra.mxu0 %v997
  %3255 = vmatpush.bf16.msra.mxu0 %v993
  %3256 = vmatpush.bf16.msra.mxu0 %v989
  %3257 = vmatpush.bf16.msra.mxu0 %v985
  %3258 = vmatpush.bf16.msra.mxu0 %v981
  %3259 = vmatpush.bf16.msra.mxu0 %v977
  %3260 = vmatpush.bf16.msra.mxu0 %v973
  %3261 = vmatpush.bf16.msra.mxu0 %v969
  %3262 = vmatmul.bf16.gmra.mxu0 %v612
  %v3263 = vpop.f32.mrf.mxu0
  %v3264 = vadd.f32 %v223, %v3263
  %v3265 = vpop.f32.mrf.mxu0
  %v3266 = vadd.f32 %v223, %v3265
  %3267 = vmatmul.bf16.gmra.mxu0 %v614
  %v3268 = vpop.f32.mrf.mxu0
  %v3269 = vadd.f32 %v223, %v3268
  %v3270 = vpop.f32.mrf.mxu0
  %v3271 = vadd.f32 %v223, %v3270
  %3272 = vmatmul.bf16.gmra.mxu0 %v616
  %v3273 = vpop.f32.mrf.mxu0
  %v3274 = vadd.f32 %v223, %v3273
  %v3275 = vpop.f32.mrf.mxu0
  %v3276 = vadd.f32 %v223, %v3275
  %3277 = vmatmul.bf16.gmra.mxu0 %v618
  %v3278 = vpop.f32.mrf.mxu0
  %v3279 = vadd.f32 %v223, %v3278
  %v3280 = vpop.f32.mrf.mxu0
  %v3281 = vadd.f32 %v223, %v3280
  %3282 = vmatmul.bf16.gmra.mxu0 %v620
  %v3283 = vpop.f32.mrf.mxu0
  %v3284 = vadd.f32 %v223, %v3283
  %v3285 = vpop.f32.mrf.mxu0
  %v3286 = vadd.f32 %v223, %v3285
  %3287 = vmatmul.bf16.gmra.mxu0 %v622
  %v3288 = vpop.f32.mrf.mxu0
  %v3289 = vadd.f32 %v223, %v3288
  %v3290 = vpop.f32.mrf.mxu0
  %v3291 = vadd.f32 %v223, %v3290
  %3292 = vmatmul.bf16.gmra.mxu0 %v624
  %v3293 = vpop.f32.mrf.mxu0
  %v3294 = vadd.f32 %v223, %v3293
  %v3295 = vpop.f32.mrf.mxu0
  %v3296 = vadd.f32 %v223, %v3295
  %3297 = vmatmul.bf16.gmra.mxu0 %v626
  %v3298 = vpop.f32.mrf.mxu0
  %v3299 = vadd.f32 %v223, %v3298
  %v3300 = vpop.f32.mrf.mxu0
  %v3301 = vadd.f32 %v223, %v3300
  %3302 = vmatmul.bf16.gmra.mxu0 %v628
  %v3303 = vpop.f32.mrf.mxu0
  %v3304 = vadd.f32 %v223, %v3303
  %v3305 = vpop.f32.mrf.mxu0
  %v3306 = vadd.f32 %v223, %v3305
  %3307 = vmatmul.bf16.gmra.mxu0 %v630
  %v3308 = vpop.f32.mrf.mxu0
  %v3309 = vadd.f32 %v223, %v3308
  %v3310 = vpop.f32.mrf.mxu0
  %v3311 = vadd.f32 %v223, %v3310
  %3312 = vmatmul.bf16.gmra.mxu0 %v632
  %v3313 = vpop.f32.mrf.mxu0
  %v3314 = vadd.f32 %v223, %v3313
  %v3315 = vpop.f32.mrf.mxu0
  %v3316 = vadd.f32 %v223, %v3315
  %3317 = vmatmul.bf16.gmra.mxu0 %v634
  %v3318 = vpop.f32.mrf.mxu0
  %v3319 = vadd.f32 %v223, %v3318
  %v3320 = vpop.f32.mrf.mxu0
  %v3321 = vadd.f32 %v223, %v3320
  %3322 = vmatmul.bf16.gmra.mxu0 %v636
  %v3323 = vpop.f32.mrf.mxu0
  %v3324 = vadd.f32 %v223, %v3323
  %v3325 = vpop.f32.mrf.mxu0
  %v3326 = vadd.f32 %v223, %v3325
  %3327 = vmatmul.bf16.gmra.mxu0 %v638
  %v3328 = vpop.f32.mrf.mxu0
  %v3329 = vadd.f32 %v223, %v3328
  %v3330 = vpop.f32.mrf.mxu0
  %v3331 = vadd.f32 %v223, %v3330
  %3332 = vmatmul.bf16.gmra.mxu0 %v640
  %v3333 = vpop.f32.mrf.mxu0
  %v3334 = vadd.f32 %v223, %v3333
  %v3335 = vpop.f32.mrf.mxu0
  %v3336 = vadd.f32 %v223, %v3335
  %3337 = vmatmul.bf16.gmra.mxu0 %v642
  %v3338 = vpop.f32.mrf.mxu0
  %v3339 = vadd.f32 %v223, %v3338
  %v3340 = vpop.f32.mrf.mxu0
  %v3341 = vadd.f32 %v223, %v3340
  %3342 = vmatmul.bf16.gmra.mxu0 %v644
  %v3343 = vpop.f32.mrf.mxu0
  %v3344 = vadd.f32 %v223, %v3343
  %v3345 = vpop.f32.mrf.mxu0
  %v3346 = vadd.f32 %v223, %v3345
  %3347 = vmatmul.bf16.gmra.mxu0 %v646
  %v3348 = vpop.f32.mrf.mxu0
  %v3349 = vadd.f32 %v223, %v3348
  %v3350 = vpop.f32.mrf.mxu0
  %v3351 = vadd.f32 %v223, %v3350
  %3352 = vmatmul.bf16.gmra.mxu0 %v648
  %v3353 = vpop.f32.mrf.mxu0
  %v3354 = vadd.f32 %v223, %v3353
  %v3355 = vpop.f32.mrf.mxu0
  %v3356 = vadd.f32 %v223, %v3355
  %3357 = vmatmul.bf16.gmra.mxu0 %v650
  %v3358 = vpop.f32.mrf.mxu0
  %v3359 = vadd.f32 %v223, %v3358
  %v3360 = vpop.f32.mrf.mxu0
  %v3361 = vadd.f32 %v223, %v3360
  %3362 = vmatmul.bf16.gmra.mxu0 %v652
  %v3363 = vpop.f32.mrf.mxu0
  %v3364 = vadd.f32 %v223, %v3363
  %v3365 = vpop.f32.mrf.mxu0
  %v3366 = vadd.f32 %v223, %v3365
  %3367 = vmatmul.bf16.gmra.mxu0 %v654
  %v3368 = vpop.f32.mrf.mxu0
  %v3369 = vadd.f32 %v223, %v3368
  %v3370 = vpop.f32.mrf.mxu0
  %v3371 = vadd.f32 %v223, %v3370
  %3372 = vmatmul.bf16.gmra.mxu0 %v656
  %v3373 = vpop.f32.mrf.mxu0
  %v3374 = vadd.f32 %v223, %v3373
  %v3375 = vpop.f32.mrf.mxu0
  %v3376 = vadd.f32 %v223, %v3375
  %3377 = vmatmul.bf16.gmra.mxu0 %v658
  %v3378 = vpop.f32.mrf.mxu0
  %v3379 = vadd.f32 %v223, %v3378
  %v3380 = vpop.f32.mrf.mxu0
  %v3381 = vadd.f32 %v223, %v3380
  %3382 = vmatmul.bf16.gmra.mxu0 %v660
  %v3383 = vpop.f32.mrf.mxu0
  %v3384 = vadd.f32 %v223, %v3383
  %v3385 = vpop.f32.mrf.mxu0
  %v3386 = vadd.f32 %v223, %v3385
  %3387 = vmatmul.bf16.gmra.mxu0 %v662
  %v3388 = vpop.f32.mrf.mxu0
  %v3389 = vadd.f32 %v223, %v3388
  %v3390 = vpop.f32.mrf.mxu0
  %v3391 = vadd.f32 %v223, %v3390
  %3392 = vmatmul.bf16.gmra.mxu0 %v664
  %v3393 = vpop.f32.mrf.mxu0
  %v3394 = vadd.f32 %v223, %v3393
  %v3395 = vpop.f32.mrf.mxu0
  %v3396 = vadd.f32 %v223, %v3395
  %3397 = vmatmul.bf16.gmra.mxu0 %v666
  %v3398 = vpop.f32.mrf.mxu0
  %v3399 = vadd.f32 %v223, %v3398
  %v3400 = vpop.f32.mrf.mxu0
  %v3401 = vadd.f32 %v223, %v3400
  %3402 = vmatmul.bf16.gmra.mxu0 %v668
  %v3403 = vpop.f32.mrf.mxu0
  %v3404 = vadd.f32 %v223, %v3403
  %v3405 = vpop.f32.mrf.mxu0
  %v3406 = vadd.f32 %v223, %v3405
  %3407 = vmatmul.bf16.gmra.mxu0 %v670
  %v3408 = vpop.f32.mrf.mxu0
  %v3409 = vadd.f32 %v223, %v3408
  %v3410 = vpop.f32.mrf.mxu0
  %v3411 = vadd.f32 %v223, %v3410
  %3412 = vmatmul.bf16.gmra.mxu0 %v672
  %v3413 = vpop.f32.mrf.mxu0
  %v3414 = vadd.f32 %v223, %v3413
  %v3415 = vpop.f32.mrf.mxu0
  %v3416 = vadd.f32 %v223, %v3415
  %3417 = vmatmul.bf16.gmra.mxu0 %v674
  %v3418 = vpop.f32.mrf.mxu0
  %v3419 = vadd.f32 %v223, %v3418
  %v3420 = vpop.f32.mrf.mxu0
  %v3421 = vadd.f32 %v223, %v3420
  %3422 = vmatmul.bf16.gmra.mxu0 %v676
  %v3423 = vpop.f32.mrf.mxu0
  %v3424 = vadd.f32 %v223, %v3423
  %v3425 = vpop.f32.mrf.mxu0
  %v3426 = vadd.f32 %v223, %v3425
  %3427 = vmatmul.bf16.gmra.mxu0 %v678
  %v3428 = vpop.f32.mrf.mxu0
  %v3429 = vadd.f32 %v223, %v3428
  %v3430 = vpop.f32.mrf.mxu0
  %v3431 = vadd.f32 %v223, %v3430
  %3432 = vmatmul.bf16.gmra.mxu0 %v680
  %v3433 = vpop.f32.mrf.mxu0
  %v3434 = vadd.f32 %v223, %v3433
  %v3435 = vpop.f32.mrf.mxu0
  %v3436 = vadd.f32 %v223, %v3435
  %3437 = vmatmul.bf16.gmra.mxu0 %v682
  %v3438 = vpop.f32.mrf.mxu0
  %v3439 = vadd.f32 %v223, %v3438
  %v3440 = vpop.f32.mrf.mxu0
  %v3441 = vadd.f32 %v223, %v3440
  %3442 = vmatmul.bf16.gmra.mxu0 %v684
  %v3443 = vpop.f32.mrf.mxu0
  %v3444 = vadd.f32 %v223, %v3443
  %v3445 = vpop.f32.mrf.mxu0
  %v3446 = vadd.f32 %v223, %v3445
  %3447 = vmatmul.bf16.gmra.mxu0 %v686
  %v3448 = vpop.f32.mrf.mxu0
  %v3449 = vadd.f32 %v223, %v3448
  %v3450 = vpop.f32.mrf.mxu0
  %v3451 = vadd.f32 %v223, %v3450
  %3452 = vmatmul.bf16.gmra.mxu0 %v688
  %v3453 = vpop.f32.mrf.mxu0
  %v3454 = vadd.f32 %v223, %v3453
  %v3455 = vpop.f32.mrf.mxu0
  %v3456 = vadd.f32 %v223, %v3455
  %3457 = vmatmul.bf16.gmra.mxu0 %v690
  %v3458 = vpop.f32.mrf.mxu0
  %v3459 = vadd.f32 %v223, %v3458
  %v3460 = vpop.f32.mrf.mxu0
  %v3461 = vadd.f32 %v223, %v3460
  %3462 = vmatmul.bf16.gmra.mxu0 %v692
  %v3463 = vpop.f32.mrf.mxu0
  %v3464 = vadd.f32 %v223, %v3463
  %v3465 = vpop.f32.mrf.mxu0
  %v3466 = vadd.f32 %v223, %v3465
  %3467 = vmatmul.bf16.gmra.mxu0 %v694
  %v3468 = vpop.f32.mrf.mxu0
  %v3469 = vadd.f32 %v223, %v3468
  %v3470 = vpop.f32.mrf.mxu0
  %v3471 = vadd.f32 %v223, %v3470
  %3472 = vmatmul.bf16.gmra.mxu0 %v696
  %v3473 = vpop.f32.mrf.mxu0
  %v3474 = vadd.f32 %v223, %v3473
  %v3475 = vpop.f32.mrf.mxu0
  %v3476 = vadd.f32 %v223, %v3475
  %3477 = vmatmul.bf16.gmra.mxu0 %v698
  %v3478 = vpop.f32.mrf.mxu0
  %v3479 = vadd.f32 %v223, %v3478
  %v3480 = vpop.f32.mrf.mxu0
  %v3481 = vadd.f32 %v223, %v3480
  %3482 = vmatmul.bf16.gmra.mxu0 %v700
  %v3483 = vpop.f32.mrf.mxu0
  %v3484 = vadd.f32 %v223, %v3483
  %v3485 = vpop.f32.mrf.mxu0
  %v3486 = vadd.f32 %v223, %v3485
  %3487 = vmatmul.bf16.gmra.mxu0 %v702
  %v3488 = vpop.f32.mrf.mxu0
  %v3489 = vadd.f32 %v223, %v3488
  %v3490 = vpop.f32.mrf.mxu0
  %v3491 = vadd.f32 %v223, %v3490
  %3492 = vmatmul.bf16.gmra.mxu0 %v704
  %v3493 = vpop.f32.mrf.mxu0
  %v3494 = vadd.f32 %v223, %v3493
  %v3495 = vpop.f32.mrf.mxu0
  %v3496 = vadd.f32 %v223, %v3495
  %3497 = vmatmul.bf16.gmra.mxu0 %v706
  %v3498 = vpop.f32.mrf.mxu0
  %v3499 = vadd.f32 %v223, %v3498
  %v3500 = vpop.f32.mrf.mxu0
  %v3501 = vadd.f32 %v223, %v3500
  %3502 = vmatmul.bf16.gmra.mxu0 %v708
  %v3503 = vpop.f32.mrf.mxu0
  %v3504 = vadd.f32 %v223, %v3503
  %v3505 = vpop.f32.mrf.mxu0
  %v3506 = vadd.f32 %v223, %v3505
  %3507 = vmatmul.bf16.gmra.mxu0 %v710
  %v3508 = vpop.f32.mrf.mxu0
  %v3509 = vadd.f32 %v223, %v3508
  %v3510 = vpop.f32.mrf.mxu0
  %v3511 = vadd.f32 %v223, %v3510
  %3512 = vmatmul.bf16.gmra.mxu0 %v712
  %v3513 = vpop.f32.mrf.mxu0
  %v3514 = vadd.f32 %v223, %v3513
  %v3515 = vpop.f32.mrf.mxu0
  %v3516 = vadd.f32 %v223, %v3515
  %3517 = vmatmul.bf16.gmra.mxu0 %v714
  %v3518 = vpop.f32.mrf.mxu0
  %v3519 = vadd.f32 %v223, %v3518
  %v3520 = vpop.f32.mrf.mxu0
  %v3521 = vadd.f32 %v223, %v3520
  %3522 = vmatmul.bf16.gmra.mxu0 %v716
  %v3523 = vpop.f32.mrf.mxu0
  %v3524 = vadd.f32 %v223, %v3523
  %v3525 = vpop.f32.mrf.mxu0
  %v3526 = vadd.f32 %v223, %v3525
  %3527 = vmatmul.bf16.gmra.mxu0 %v718
  %v3528 = vpop.f32.mrf.mxu0
  %v3529 = vadd.f32 %v223, %v3528
  %v3530 = vpop.f32.mrf.mxu0
  %v3531 = vadd.f32 %v223, %v3530
  %3532 = vmatmul.bf16.gmra.mxu0 %v720
  %v3533 = vpop.f32.mrf.mxu0
  %v3534 = vadd.f32 %v223, %v3533
  %v3535 = vpop.f32.mrf.mxu0
  %v3536 = vadd.f32 %v223, %v3535
  %3537 = vmatmul.bf16.gmra.mxu0 %v722
  %v3538 = vpop.f32.mrf.mxu0
  %v3539 = vadd.f32 %v223, %v3538
  %v3540 = vpop.f32.mrf.mxu0
  %v3541 = vadd.f32 %v223, %v3540
  %3542 = vmatmul.bf16.gmra.mxu0 %v724
  %v3543 = vpop.f32.mrf.mxu0
  %v3544 = vadd.f32 %v223, %v3543
  %v3545 = vpop.f32.mrf.mxu0
  %v3546 = vadd.f32 %v223, %v3545
  %3547 = vmatmul.bf16.gmra.mxu0 %v726
  %v3548 = vpop.f32.mrf.mxu0
  %v3549 = vadd.f32 %v223, %v3548
  %v3550 = vpop.f32.mrf.mxu0
  %v3551 = vadd.f32 %v223, %v3550
  %3552 = vmatmul.bf16.gmra.mxu0 %v728
  %v3553 = vpop.f32.mrf.mxu0
  %v3554 = vadd.f32 %v223, %v3553
  %v3555 = vpop.f32.mrf.mxu0
  %v3556 = vadd.f32 %v223, %v3555
  %3557 = vmatmul.bf16.gmra.mxu0 %v730
  %v3558 = vpop.f32.mrf.mxu0
  %v3559 = vadd.f32 %v223, %v3558
  %v3560 = vpop.f32.mrf.mxu0
  %v3561 = vadd.f32 %v223, %v3560
  %3562 = vmatmul.bf16.gmra.mxu0 %v732
  %v3563 = vpop.f32.mrf.mxu0
  %v3564 = vadd.f32 %v223, %v3563
  %v3565 = vpop.f32.mrf.mxu0
  %v3566 = vadd.f32 %v223, %v3565
  %3567 = vmatmul.bf16.gmra.mxu0 %v734
  %v3568 = vpop.f32.mrf.mxu0
  %v3569 = vadd.f32 %v223, %v3568
  %v3570 = vpop.f32.mrf.mxu0
  %v3571 = vadd.f32 %v223, %v3570
  %3572 = vmatmul.bf16.gmra.mxu0 %v736
  %v3573 = vpop.f32.mrf.mxu0
  %v3574 = vadd.f32 %v223, %v3573
  %v3575 = vpop.f32.mrf.mxu0
  %v3576 = vadd.f32 %v223, %v3575
  %3577 = vmatmul.bf16.gmra.mxu0 %v738
  %v3578 = vpop.f32.mrf.mxu0
  %v3579 = vadd.f32 %v223, %v3578
  %v3580 = vpop.f32.mrf.mxu0
  %v3581 = vadd.f32 %v223, %v3580
  %3582 = vdwg.mxu0
  %3583 = vmatpush.bf16.msra.mxu0 0
  %3584 = vmatpush.bf16.msra.mxu0 0
  %3585 = vmatpush.bf16.msra.mxu0 %v1278
  %3586 = vmatpush.bf16.msra.mxu0 %v1017
  %3587 = vmatpush.bf16.msra.mxu0 %v1013
  %3588 = vmatpush.bf16.msra.mxu0 %v1009
  %3589 = vmatpush.bf16.msra.mxu0 %v1005
  %3590 = vmatpush.bf16.msra.mxu0 %v1001
  %3591 = vmatmul.bf16.gmra.mxu0 %v1076
  %v3592 = vpop.f32.mrf.mxu0
  %v3593 = vadd.f32 %v3264, %v3592
  %v3594 = vpop.f32.mrf.mxu0
  %v3595 = vadd.f32 %v3266, %v3594
  %3596 = vmatmul.bf16.gmra.mxu0 %v1079
  %v3597 = vpop.f32.mrf.mxu0
  %v3598 = vadd.f32 %v3269, %v3597
  %v3599 = vpop.f32.mrf.mxu0
  %v3600 = vadd.f32 %v3271, %v3599
  %3601 = vmatmul.bf16.gmra.mxu0 %v1082
  %v3602 = vpop.f32.mrf.mxu0
  %v3603 = vadd.f32 %v3274, %v3602
  %v3604 = vpop.f32.mrf.mxu0
  %v3605 = vadd.f32 %v3276, %v3604
  %3606 = vmatmul.bf16.gmra.mxu0 %v1085
  %v3607 = vpop.f32.mrf.mxu0
  %v3608 = vadd.f32 %v3279, %v3607
  %v3609 = vpop.f32.mrf.mxu0
  %v3610 = vadd.f32 %v3281, %v3609
  %3611 = vmatmul.bf16.gmra.mxu0 %v1088
  %v3612 = vpop.f32.mrf.mxu0
  %v3613 = vadd.f32 %v3284, %v3612
  %v3614 = vpop.f32.mrf.mxu0
  %v3615 = vadd.f32 %v3286, %v3614
  %3616 = vmatmul.bf16.gmra.mxu0 %v1091
  %v3617 = vpop.f32.mrf.mxu0
  %v3618 = vadd.f32 %v3289, %v3617
  %v3619 = vpop.f32.mrf.mxu0
  %v3620 = vadd.f32 %v3291, %v3619
  %3621 = vmatmul.bf16.gmra.mxu0 %v1094
  %v3622 = vpop.f32.mrf.mxu0
  %v3623 = vadd.f32 %v3294, %v3622
  %v3624 = vpop.f32.mrf.mxu0
  %v3625 = vadd.f32 %v3296, %v3624
  %3626 = vmatmul.bf16.gmra.mxu0 %v1097
  %v3627 = vpop.f32.mrf.mxu0
  %v3628 = vadd.f32 %v3299, %v3627
  %v3629 = vpop.f32.mrf.mxu0
  %v3630 = vadd.f32 %v3301, %v3629
  %3631 = vmatmul.bf16.gmra.mxu0 %v1100
  %v3632 = vpop.f32.mrf.mxu0
  %v3633 = vadd.f32 %v3304, %v3632
  %v3634 = vpop.f32.mrf.mxu0
  %v3635 = vadd.f32 %v3306, %v3634
  %3636 = vmatmul.bf16.gmra.mxu0 %v1103
  %v3637 = vpop.f32.mrf.mxu0
  %v3638 = vadd.f32 %v3309, %v3637
  %v3639 = vpop.f32.mrf.mxu0
  %v3640 = vadd.f32 %v3311, %v3639
  %3641 = vmatmul.bf16.gmra.mxu0 %v1106
  %v3642 = vpop.f32.mrf.mxu0
  %v3643 = vadd.f32 %v3314, %v3642
  %v3644 = vpop.f32.mrf.mxu0
  %v3645 = vadd.f32 %v3316, %v3644
  %3646 = vmatmul.bf16.gmra.mxu0 %v1109
  %v3647 = vpop.f32.mrf.mxu0
  %v3648 = vadd.f32 %v3319, %v3647
  %v3649 = vpop.f32.mrf.mxu0
  %v3650 = vadd.f32 %v3321, %v3649
  %3651 = vmatmul.bf16.gmra.mxu0 %v1112
  %v3652 = vpop.f32.mrf.mxu0
  %v3653 = vadd.f32 %v3324, %v3652
  %v3654 = vpop.f32.mrf.mxu0
  %v3655 = vadd.f32 %v3326, %v3654
  %3656 = vmatmul.bf16.gmra.mxu0 %v1115
  %v3657 = vpop.f32.mrf.mxu0
  %v3658 = vadd.f32 %v3329, %v3657
  %v3659 = vpop.f32.mrf.mxu0
  %v3660 = vadd.f32 %v3331, %v3659
  %3661 = vmatmul.bf16.gmra.mxu0 %v1118
  %v3662 = vpop.f32.mrf.mxu0
  %v3663 = vadd.f32 %v3334, %v3662
  %v3664 = vpop.f32.mrf.mxu0
  %v3665 = vadd.f32 %v3336, %v3664
  %3666 = vmatmul.bf16.gmra.mxu0 %v1121
  %v3667 = vpop.f32.mrf.mxu0
  %v3668 = vadd.f32 %v3339, %v3667
  %v3669 = vpop.f32.mrf.mxu0
  %v3670 = vadd.f32 %v3341, %v3669
  %3671 = vmatmul.bf16.gmra.mxu0 %v1124
  %v3672 = vpop.f32.mrf.mxu0
  %v3673 = vadd.f32 %v3344, %v3672
  %v3674 = vpop.f32.mrf.mxu0
  %v3675 = vadd.f32 %v3346, %v3674
  %3676 = vmatmul.bf16.gmra.mxu0 %v1127
  %v3677 = vpop.f32.mrf.mxu0
  %v3678 = vadd.f32 %v3349, %v3677
  %v3679 = vpop.f32.mrf.mxu0
  %v3680 = vadd.f32 %v3351, %v3679
  %3681 = vmatmul.bf16.gmra.mxu0 %v1130
  %v3682 = vpop.f32.mrf.mxu0
  %v3683 = vadd.f32 %v3354, %v3682
  %v3684 = vpop.f32.mrf.mxu0
  %v3685 = vadd.f32 %v3356, %v3684
  %3686 = vmatmul.bf16.gmra.mxu0 %v1133
  %v3687 = vpop.f32.mrf.mxu0
  %v3688 = vadd.f32 %v3359, %v3687
  %v3689 = vpop.f32.mrf.mxu0
  %v3690 = vadd.f32 %v3361, %v3689
  %3691 = vmatmul.bf16.gmra.mxu0 %v1136
  %v3692 = vpop.f32.mrf.mxu0
  %v3693 = vadd.f32 %v3364, %v3692
  %v3694 = vpop.f32.mrf.mxu0
  %v3695 = vadd.f32 %v3366, %v3694
  %3696 = vmatmul.bf16.gmra.mxu0 %v1139
  %v3697 = vpop.f32.mrf.mxu0
  %v3698 = vadd.f32 %v3369, %v3697
  %v3699 = vpop.f32.mrf.mxu0
  %v3700 = vadd.f32 %v3371, %v3699
  %3701 = vmatmul.bf16.gmra.mxu0 %v1142
  %v3702 = vpop.f32.mrf.mxu0
  %v3703 = vadd.f32 %v3374, %v3702
  %v3704 = vpop.f32.mrf.mxu0
  %v3705 = vadd.f32 %v3376, %v3704
  %3706 = vmatmul.bf16.gmra.mxu0 %v1145
  %v3707 = vpop.f32.mrf.mxu0
  %v3708 = vadd.f32 %v3379, %v3707
  %v3709 = vpop.f32.mrf.mxu0
  %v3710 = vadd.f32 %v3381, %v3709
  %3711 = vmatmul.bf16.gmra.mxu0 %v1148
  %v3712 = vpop.f32.mrf.mxu0
  %v3713 = vadd.f32 %v3384, %v3712
  %v3714 = vpop.f32.mrf.mxu0
  %v3715 = vadd.f32 %v3386, %v3714
  %3716 = vmatmul.bf16.gmra.mxu0 %v1151
  %v3717 = vpop.f32.mrf.mxu0
  %v3718 = vadd.f32 %v3389, %v3717
  %v3719 = vpop.f32.mrf.mxu0
  %v3720 = vadd.f32 %v3391, %v3719
  %3721 = vmatmul.bf16.gmra.mxu0 %v1154
  %v3722 = vpop.f32.mrf.mxu0
  %v3723 = vadd.f32 %v3394, %v3722
  %v3724 = vpop.f32.mrf.mxu0
  %v3725 = vadd.f32 %v3396, %v3724
  %3726 = vmatmul.bf16.gmra.mxu0 %v1157
  %v3727 = vpop.f32.mrf.mxu0
  %v3728 = vadd.f32 %v3399, %v3727
  %v3729 = vpop.f32.mrf.mxu0
  %v3730 = vadd.f32 %v3401, %v3729
  %3731 = vmatmul.bf16.gmra.mxu0 %v1160
  %v3732 = vpop.f32.mrf.mxu0
  %v3733 = vadd.f32 %v3404, %v3732
  %v3734 = vpop.f32.mrf.mxu0
  %v3735 = vadd.f32 %v3406, %v3734
  %3736 = vmatmul.bf16.gmra.mxu0 %v1163
  %v3737 = vpop.f32.mrf.mxu0
  %v3738 = vadd.f32 %v3409, %v3737
  %v3739 = vpop.f32.mrf.mxu0
  %v3740 = vadd.f32 %v3411, %v3739
  %3741 = vmatmul.bf16.gmra.mxu0 %v1166
  %v3742 = vpop.f32.mrf.mxu0
  %v3743 = vadd.f32 %v3414, %v3742
  %v3744 = vpop.f32.mrf.mxu0
  %v3745 = vadd.f32 %v3416, %v3744
  %3746 = vmatmul.bf16.gmra.mxu0 %v1169
  %v3747 = vpop.f32.mrf.mxu0
  %v3748 = vadd.f32 %v3419, %v3747
  %v3749 = vpop.f32.mrf.mxu0
  %v3750 = vadd.f32 %v3421, %v3749
  %3751 = vmatmul.bf16.gmra.mxu0 %v1172
  %v3752 = vpop.f32.mrf.mxu0
  %v3753 = vadd.f32 %v3424, %v3752
  %v3754 = vpop.f32.mrf.mxu0
  %v3755 = vadd.f32 %v3426, %v3754
  %3756 = vmatmul.bf16.gmra.mxu0 %v1175
  %v3757 = vpop.f32.mrf.mxu0
  %v3758 = vadd.f32 %v3429, %v3757
  %v3759 = vpop.f32.mrf.mxu0
  %v3760 = vadd.f32 %v3431, %v3759
  %3761 = vmatmul.bf16.gmra.mxu0 %v1178
  %v3762 = vpop.f32.mrf.mxu0
  %v3763 = vadd.f32 %v3434, %v3762
  %v3764 = vpop.f32.mrf.mxu0
  %v3765 = vadd.f32 %v3436, %v3764
  %3766 = vmatmul.bf16.gmra.mxu0 %v1181
  %v3767 = vpop.f32.mrf.mxu0
  %v3768 = vadd.f32 %v3439, %v3767
  %v3769 = vpop.f32.mrf.mxu0
  %v3770 = vadd.f32 %v3441, %v3769
  %3771 = vmatmul.bf16.gmra.mxu0 %v1184
  %v3772 = vpop.f32.mrf.mxu0
  %v3773 = vadd.f32 %v3444, %v3772
  %v3774 = vpop.f32.mrf.mxu0
  %v3775 = vadd.f32 %v3446, %v3774
  %3776 = vmatmul.bf16.gmra.mxu0 %v1187
  %v3777 = vpop.f32.mrf.mxu0
  %v3778 = vadd.f32 %v3449, %v3777
  %v3779 = vpop.f32.mrf.mxu0
  %v3780 = vadd.f32 %v3451, %v3779
  %3781 = vmatmul.bf16.gmra.mxu0 %v1190
  %v3782 = vpop.f32.mrf.mxu0
  %v3783 = vadd.f32 %v3454, %v3782
  %v3784 = vpop.f32.mrf.mxu0
  %v3785 = vadd.f32 %v3456, %v3784
  %3786 = vmatmul.bf16.gmra.mxu0 %v1193
  %v3787 = vpop.f32.mrf.mxu0
  %v3788 = vadd.f32 %v3459, %v3787
  %v3789 = vpop.f32.mrf.mxu0
  %v3790 = vadd.f32 %v3461, %v3789
  %3791 = vmatmul.bf16.gmra.mxu0 %v1196
  %v3792 = vpop.f32.mrf.mxu0
  %v3793 = vadd.f32 %v3464, %v3792
  %v3794 = vpop.f32.mrf.mxu0
  %v3795 = vadd.f32 %v3466, %v3794
  %3796 = vmatmul.bf16.gmra.mxu0 %v1199
  %v3797 = vpop.f32.mrf.mxu0
  %v3798 = vadd.f32 %v3469, %v3797
  %v3799 = vpop.f32.mrf.mxu0
  %v3800 = vadd.f32 %v3471, %v3799
  %3801 = vmatmul.bf16.gmra.mxu0 %v1202
  %v3802 = vpop.f32.mrf.mxu0
  %v3803 = vadd.f32 %v3474, %v3802
  %v3804 = vpop.f32.mrf.mxu0
  %v3805 = vadd.f32 %v3476, %v3804
  %3806 = vmatmul.bf16.gmra.mxu0 %v1205
  %v3807 = vpop.f32.mrf.mxu0
  %v3808 = vadd.f32 %v3479, %v3807
  %v3809 = vpop.f32.mrf.mxu0
  %v3810 = vadd.f32 %v3481, %v3809
  %3811 = vmatmul.bf16.gmra.mxu0 %v1208
  %v3812 = vpop.f32.mrf.mxu0
  %v3813 = vadd.f32 %v3484, %v3812
  %v3814 = vpop.f32.mrf.mxu0
  %v3815 = vadd.f32 %v3486, %v3814
  %3816 = vmatmul.bf16.gmra.mxu0 %v1211
  %v3817 = vpop.f32.mrf.mxu0
  %v3818 = vadd.f32 %v3489, %v3817
  %v3819 = vpop.f32.mrf.mxu0
  %v3820 = vadd.f32 %v3491, %v3819
  %3821 = vmatmul.bf16.gmra.mxu0 %v1214
  %v3822 = vpop.f32.mrf.mxu0
  %v3823 = vadd.f32 %v3494, %v3822
  %v3824 = vpop.f32.mrf.mxu0
  %v3825 = vadd.f32 %v3496, %v3824
  %3826 = vmatmul.bf16.gmra.mxu0 %v1217
  %v3827 = vpop.f32.mrf.mxu0
  %v3828 = vadd.f32 %v3499, %v3827
  %v3829 = vpop.f32.mrf.mxu0
  %v3830 = vadd.f32 %v3501, %v3829
  %3831 = vmatmul.bf16.gmra.mxu0 %v1220
  %v3832 = vpop.f32.mrf.mxu0
  %v3833 = vadd.f32 %v3504, %v3832
  %v3834 = vpop.f32.mrf.mxu0
  %v3835 = vadd.f32 %v3506, %v3834
  %3836 = vmatmul.bf16.gmra.mxu0 %v1223
  %v3837 = vpop.f32.mrf.mxu0
  %v3838 = vadd.f32 %v3509, %v3837
  %v3839 = vpop.f32.mrf.mxu0
  %v3840 = vadd.f32 %v3511, %v3839
  %3841 = vmatmul.bf16.gmra.mxu0 %v1226
  %v3842 = vpop.f32.mrf.mxu0
  %v3843 = vadd.f32 %v3514, %v3842
  %v3844 = vpop.f32.mrf.mxu0
  %v3845 = vadd.f32 %v3516, %v3844
  %3846 = vmatmul.bf16.gmra.mxu0 %v1229
  %v3847 = vpop.f32.mrf.mxu0
  %v3848 = vadd.f32 %v3519, %v3847
  %v3849 = vpop.f32.mrf.mxu0
  %v3850 = vadd.f32 %v3521, %v3849
  %3851 = vmatmul.bf16.gmra.mxu0 %v1232
  %v3852 = vpop.f32.mrf.mxu0
  %v3853 = vadd.f32 %v3524, %v3852
  %v3854 = vpop.f32.mrf.mxu0
  %v3855 = vadd.f32 %v3526, %v3854
  %3856 = vmatmul.bf16.gmra.mxu0 %v1235
  %v3857 = vpop.f32.mrf.mxu0
  %v3858 = vadd.f32 %v3529, %v3857
  %v3859 = vpop.f32.mrf.mxu0
  %v3860 = vadd.f32 %v3531, %v3859
  %3861 = vmatmul.bf16.gmra.mxu0 %v1238
  %v3862 = vpop.f32.mrf.mxu0
  %v3863 = vadd.f32 %v3534, %v3862
  %v3864 = vpop.f32.mrf.mxu0
  %v3865 = vadd.f32 %v3536, %v3864
  %3866 = vmatmul.bf16.gmra.mxu0 %v1241
  %v3867 = vpop.f32.mrf.mxu0
  %v3868 = vadd.f32 %v3539, %v3867
  %v3869 = vpop.f32.mrf.mxu0
  %v3870 = vadd.f32 %v3541, %v3869
  %3871 = vmatmul.bf16.gmra.mxu0 %v1244
  %v3872 = vpop.f32.mrf.mxu0
  %v3873 = vadd.f32 %v3544, %v3872
  %v3874 = vpop.f32.mrf.mxu0
  %v3875 = vadd.f32 %v3546, %v3874
  %3876 = vmatmul.bf16.gmra.mxu0 %v1247
  %v3877 = vpop.f32.mrf.mxu0
  %v3878 = vadd.f32 %v3549, %v3877
  %v3879 = vpop.f32.mrf.mxu0
  %v3880 = vadd.f32 %v3551, %v3879
  %3881 = vmatmul.bf16.gmra.mxu0 %v1250
  %v3882 = vpop.f32.mrf.mxu0
  %v3883 = vadd.f32 %v3554, %v3882
  %v3884 = vpop.f32.mrf.mxu0
  %v3885 = vadd.f32 %v3556, %v3884
  %3886 = vmatmul.bf16.gmra.mxu0 %v1253
  %v3887 = vpop.f32.mrf.mxu0
  %v3888 = vadd.f32 %v3559, %v3887
  %v3889 = vpop.f32.mrf.mxu0
  %v3890 = vadd.f32 %v3561, %v3889
  %3891 = vmatmul.bf16.gmra.mxu0 %v1256
  %v3892 = vpop.f32.mrf.mxu0
  %v3893 = vadd.f32 %v3564, %v3892
  %v3894 = vpop.f32.mrf.mxu0
  %v3895 = vadd.f32 %v3566, %v3894
  %3896 = vmatmul.bf16.gmra.mxu0 %v1259
  %v3897 = vpop.f32.mrf.mxu0
  %v3898 = vadd.f32 %v3569, %v3897
  %v3899 = vpop.f32.mrf.mxu0
  %v3900 = vadd.f32 %v3571, %v3899
  %3901 = vmatmul.bf16.gmra.mxu0 %v1262
  %v3902 = vpop.f32.mrf.mxu0
  %v3903 = vadd.f32 %v3574, %v3902
  %v3904 = vpop.f32.mrf.mxu0
  %v3905 = vadd.f32 %v3576, %v3904
  %3906 = vmatmul.bf16.gmra.mxu0 %v1265
  %v3907 = vpop.f32.mrf.mxu0
  %v3908 = vadd.f32 %v3579, %v3907
  %v3909 = vpop.f32.mrf.mxu0
  %v3910 = vadd.f32 %v3581, %v3909
  %3911 = vdwg.mxu0
  %v3912 = vmax.f32 %v1619, 0.0
  %v3913 = vmax.f32 %v2277, 0.0
  %v3914 = vmax.f32 %v2935, 0.0
  %v3915 = vmax.f32 %v3593, 0.0
  %v3916 = vmax.f32 %v1621, 0.0
  %v3917 = vmax.f32 %v2279, 0.0
  %v3918 = vmax.f32 %v2937, 0.0
  %v3919 = vmax.f32 %v3595, 0.0
  %v3920 = vmax.f32 %v1624, 0.0
  %v3921 = vmax.f32 %v2282, 0.0
  %v3922 = vmax.f32 %v2940, 0.0
  %v3923 = vmax.f32 %v3598, 0.0
  %v3924 = vmax.f32 %v1626, 0.0
  %v3925 = vmax.f32 %v2284, 0.0
  %v3926 = vmax.f32 %v2942, 0.0
  %v3927 = vmax.f32 %v3600, 0.0
  %v3928 = vmax.f32 %v1629, 0.0
  %v3929 = vmax.f32 %v2287, 0.0
  %v3930 = vmax.f32 %v2945, 0.0
  %v3931 = vmax.f32 %v3603, 0.0
  %v3932 = vmax.f32 %v1631, 0.0
  %v3933 = vmax.f32 %v2289, 0.0
  %v3934 = vmax.f32 %v2947, 0.0
  %v3935 = vmax.f32 %v3605, 0.0
  %v3936 = vmax.f32 %v1634, 0.0
  %v3937 = vmax.f32 %v2292, 0.0
  %v3938 = vmax.f32 %v2950, 0.0
  %v3939 = vmax.f32 %v3608, 0.0
  %v3940 = vmax.f32 %v1636, 0.0
  %v3941 = vmax.f32 %v2294, 0.0
  %v3942 = vmax.f32 %v2952, 0.0
  %v3943 = vmax.f32 %v3610, 0.0
  %v3944 = vmax.f32 %v1639, 0.0
  %v3945 = vmax.f32 %v2297, 0.0
  %v3946 = vmax.f32 %v2955, 0.0
  %v3947 = vmax.f32 %v3613, 0.0
  %v3948 = vmax.f32 %v1641, 0.0
  %v3949 = vmax.f32 %v2299, 0.0
  %v3950 = vmax.f32 %v2957, 0.0
  %v3951 = vmax.f32 %v3615, 0.0
  %v3952 = vmax.f32 %v1644, 0.0
  %v3953 = vmax.f32 %v2302, 0.0
  %v3954 = vmax.f32 %v2960, 0.0
  %v3955 = vmax.f32 %v3618, 0.0
  %v3956 = vmax.f32 %v1646, 0.0
  %v3957 = vmax.f32 %v2304, 0.0
  %v3958 = vmax.f32 %v2962, 0.0
  %v3959 = vmax.f32 %v3620, 0.0
  %v3960 = vmax.f32 %v1649, 0.0
  %v3961 = vmax.f32 %v2307, 0.0
  %v3962 = vmax.f32 %v2965, 0.0
  %v3963 = vmax.f32 %v3623, 0.0
  %v3964 = vmax.f32 %v1651, 0.0
  %v3965 = vmax.f32 %v2309, 0.0
  %v3966 = vmax.f32 %v2967, 0.0
  %v3967 = vmax.f32 %v3625, 0.0
  %v3968 = vmax.f32 %v1654, 0.0
  %v3969 = vmax.f32 %v2312, 0.0
  %v3970 = vmax.f32 %v2970, 0.0
  %v3971 = vmax.f32 %v3628, 0.0
  %v3972 = vmax.f32 %v1656, 0.0
  %v3973 = vmax.f32 %v2314, 0.0
  %v3974 = vmax.f32 %v2972, 0.0
  %v3975 = vmax.f32 %v3630, 0.0
  %v3976 = vmax.f32 %v1659, 0.0
  %v3977 = vmax.f32 %v2317, 0.0
  %v3978 = vmax.f32 %v2975, 0.0
  %v3979 = vmax.f32 %v3633, 0.0
  %v3980 = vmax.f32 %v1661, 0.0
  %v3981 = vmax.f32 %v2319, 0.0
  %v3982 = vmax.f32 %v2977, 0.0
  %v3983 = vmax.f32 %v3635, 0.0
  %v3984 = vmax.f32 %v1664, 0.0
  %v3985 = vmax.f32 %v2322, 0.0
  %v3986 = vmax.f32 %v2980, 0.0
  %v3987 = vmax.f32 %v3638, 0.0
  %v3988 = vmax.f32 %v1666, 0.0
  %v3989 = vmax.f32 %v2324, 0.0
  %v3990 = vmax.f32 %v2982, 0.0
  %v3991 = vmax.f32 %v3640, 0.0
  %v3992 = vmax.f32 %v1669, 0.0
  %v3993 = vmax.f32 %v2327, 0.0
  %v3994 = vmax.f32 %v2985, 0.0
  %v3995 = vmax.f32 %v3643, 0.0
  %v3996 = vmax.f32 %v1671, 0.0
  %v3997 = vmax.f32 %v2329, 0.0
  %v3998 = vmax.f32 %v2987, 0.0
  %v3999 = vmax.f32 %v3645, 0.0
  %v4000 = vmax.f32 %v1674, 0.0
  %v4001 = vmax.f32 %v2332, 0.0
  %v4002 = vmax.f32 %v2990, 0.0
  %v4003 = vmax.f32 %v3648, 0.0
  %v4004 = vmax.f32 %v1676, 0.0
  %v4005 = vmax.f32 %v2334, 0.0
  %v4006 = vmax.f32 %v2992, 0.0
  %v4007 = vmax.f32 %v3650, 0.0
  %v4008 = vmax.f32 %v1679, 0.0
  %v4009 = vmax.f32 %v2337, 0.0
  %v4010 = vmax.f32 %v2995, 0.0
  %v4011 = vmax.f32 %v3653, 0.0
  %v4012 = vmax.f32 %v1681, 0.0
  %v4013 = vmax.f32 %v2339, 0.0
  %v4014 = vmax.f32 %v2997, 0.0
  %v4015 = vmax.f32 %v3655, 0.0
  %v4016 = vmax.f32 %v1684, 0.0
  %v4017 = vmax.f32 %v2342, 0.0
  %v4018 = vmax.f32 %v3000, 0.0
  %v4019 = vmax.f32 %v3658, 0.0
  %v4020 = vmax.f32 %v1686, 0.0
  %v4021 = vmax.f32 %v2344, 0.0
  %v4022 = vmax.f32 %v3002, 0.0
  %v4023 = vmax.f32 %v3660, 0.0
  %v4024 = vmax.f32 %v1689, 0.0
  %v4025 = vmax.f32 %v2347, 0.0
  %v4026 = vmax.f32 %v3005, 0.0
  %v4027 = vmax.f32 %v3663, 0.0
  %v4028 = vmax.f32 %v1691, 0.0
  %v4029 = vmax.f32 %v2349, 0.0
  %v4030 = vmax.f32 %v3007, 0.0
  %v4031 = vmax.f32 %v3665, 0.0
  %v4032 = vmax.f32 %v1694, 0.0
  %v4033 = vmax.f32 %v2352, 0.0
  %v4034 = vmax.f32 %v3010, 0.0
  %v4035 = vmax.f32 %v3668, 0.0
  %v4036 = vmax.f32 %v1696, 0.0
  %v4037 = vmax.f32 %v2354, 0.0
  %v4038 = vmax.f32 %v3012, 0.0
  %v4039 = vmax.f32 %v3670, 0.0
  %v4040 = vmax.f32 %v1699, 0.0
  %v4041 = vmax.f32 %v2357, 0.0
  %v4042 = vmax.f32 %v3015, 0.0
  %v4043 = vmax.f32 %v3673, 0.0
  %v4044 = vmax.f32 %v1701, 0.0
  %v4045 = vmax.f32 %v2359, 0.0
  %v4046 = vmax.f32 %v3017, 0.0
  %v4047 = vmax.f32 %v3675, 0.0
  %v4048 = vmax.f32 %v1704, 0.0
  %v4049 = vmax.f32 %v2362, 0.0
  %v4050 = vmax.f32 %v3020, 0.0
  %v4051 = vmax.f32 %v3678, 0.0
  %v4052 = vmax.f32 %v1706, 0.0
  %v4053 = vmax.f32 %v2364, 0.0
  %v4054 = vmax.f32 %v3022, 0.0
  %v4055 = vmax.f32 %v3680, 0.0
  %v4056 = vmax.f32 %v1709, 0.0
  %v4057 = vmax.f32 %v2367, 0.0
  %v4058 = vmax.f32 %v3025, 0.0
  %v4059 = vmax.f32 %v3683, 0.0
  %v4060 = vmax.f32 %v1711, 0.0
  %v4061 = vmax.f32 %v2369, 0.0
  %v4062 = vmax.f32 %v3027, 0.0
  %v4063 = vmax.f32 %v3685, 0.0
  %v4064 = vmax.f32 %v1714, 0.0
  %v4065 = vmax.f32 %v2372, 0.0
  %v4066 = vmax.f32 %v3030, 0.0
  %v4067 = vmax.f32 %v3688, 0.0
  %v4068 = vmax.f32 %v1716, 0.0
  %v4069 = vmax.f32 %v2374, 0.0
  %v4070 = vmax.f32 %v3032, 0.0
  %v4071 = vmax.f32 %v3690, 0.0
  %v4072 = vmax.f32 %v1719, 0.0
  %v4073 = vmax.f32 %v2377, 0.0
  %v4074 = vmax.f32 %v3035, 0.0
  %v4075 = vmax.f32 %v3693, 0.0
  %v4076 = vmax.f32 %v1721, 0.0
  %v4077 = vmax.f32 %v2379, 0.0
  %v4078 = vmax.f32 %v3037, 0.0
  %v4079 = vmax.f32 %v3695, 0.0
  %v4080 = vmax.f32 %v1724, 0.0
  %v4081 = vmax.f32 %v2382, 0.0
  %v4082 = vmax.f32 %v3040, 0.0
  %v4083 = vmax.f32 %v3698, 0.0
  %v4084 = vmax.f32 %v1726, 0.0
  %v4085 = vmax.f32 %v2384, 0.0
  %v4086 = vmax.f32 %v3042, 0.0
  %v4087 = vmax.f32 %v3700, 0.0
  %v4088 = vmax.f32 %v1729, 0.0
  %v4089 = vmax.f32 %v2387, 0.0
  %v4090 = vmax.f32 %v3045, 0.0
  %v4091 = vmax.f32 %v3703, 0.0
  %v4092 = vmax.f32 %v1731, 0.0
  %v4093 = vmax.f32 %v2389, 0.0
  %v4094 = vmax.f32 %v3047, 0.0
  %v4095 = vmax.f32 %v3705, 0.0
  %v4096 = vmax.f32 %v1734, 0.0
  %v4097 = vmax.f32 %v2392, 0.0
  %v4098 = vmax.f32 %v3050, 0.0
  %v4099 = vmax.f32 %v3708, 0.0
  %v4100 = vmax.f32 %v1736, 0.0
  %v4101 = vmax.f32 %v2394, 0.0
  %v4102 = vmax.f32 %v3052, 0.0
  %v4103 = vmax.f32 %v3710, 0.0
  %v4104 = vmax.f32 %v1739, 0.0
  %v4105 = vmax.f32 %v2397, 0.0
  %v4106 = vmax.f32 %v3055, 0.0
  %v4107 = vmax.f32 %v3713, 0.0
  %v4108 = vmax.f32 %v1741, 0.0
  %v4109 = vmax.f32 %v2399, 0.0
  %v4110 = vmax.f32 %v3057, 0.0
  %v4111 = vmax.f32 %v3715, 0.0
  %v4112 = vmax.f32 %v1744, 0.0
  %v4113 = vmax.f32 %v2402, 0.0
  %v4114 = vmax.f32 %v3060, 0.0
  %v4115 = vmax.f32 %v3718, 0.0
  %v4116 = vmax.f32 %v1746, 0.0
  %v4117 = vmax.f32 %v2404, 0.0
  %v4118 = vmax.f32 %v3062, 0.0
  %v4119 = vmax.f32 %v3720, 0.0
  %v4120 = vmax.f32 %v1749, 0.0
  %v4121 = vmax.f32 %v2407, 0.0
  %v4122 = vmax.f32 %v3065, 0.0
  %v4123 = vmax.f32 %v3723, 0.0
  %v4124 = vmax.f32 %v1751, 0.0
  %v4125 = vmax.f32 %v2409, 0.0
  %v4126 = vmax.f32 %v3067, 0.0
  %v4127 = vmax.f32 %v3725, 0.0
  %v4128 = vmax.f32 %v1754, 0.0
  %v4129 = vmax.f32 %v2412, 0.0
  %v4130 = vmax.f32 %v3070, 0.0
  %v4131 = vmax.f32 %v3728, 0.0
  %v4132 = vmax.f32 %v1756, 0.0
  %v4133 = vmax.f32 %v2414, 0.0
  %v4134 = vmax.f32 %v3072, 0.0
  %v4135 = vmax.f32 %v3730, 0.0
  %v4136 = vmax.f32 %v1759, 0.0
  %v4137 = vmax.f32 %v2417, 0.0
  %v4138 = vmax.f32 %v3075, 0.0
  %v4139 = vmax.f32 %v3733, 0.0
  %v4140 = vmax.f32 %v1761, 0.0
  %v4141 = vmax.f32 %v2419, 0.0
  %v4142 = vmax.f32 %v3077, 0.0
  %v4143 = vmax.f32 %v3735, 0.0
  %v4144 = vmax.f32 %v1764, 0.0
  %v4145 = vmax.f32 %v2422, 0.0
  %v4146 = vmax.f32 %v3080, 0.0
  %v4147 = vmax.f32 %v3738, 0.0
  %v4148 = vmax.f32 %v1766, 0.0
  %v4149 = vmax.f32 %v2424, 0.0
  %v4150 = vmax.f32 %v3082, 0.0
  %v4151 = vmax.f32 %v3740, 0.0
  %v4152 = vmax.f32 %v1769, 0.0
  %v4153 = vmax.f32 %v2427, 0.0
  %v4154 = vmax.f32 %v3085, 0.0
  %v4155 = vmax.f32 %v3743, 0.0
  %v4156 = vmax.f32 %v1771, 0.0
  %v4157 = vmax.f32 %v2429, 0.0
  %v4158 = vmax.f32 %v3087, 0.0
  %v4159 = vmax.f32 %v3745, 0.0
  %v4160 = vmax.f32 %v1774, 0.0
  %v4161 = vmax.f32 %v2432, 0.0
  %v4162 = vmax.f32 %v3090, 0.0
  %v4163 = vmax.f32 %v3748, 0.0
  %v4164 = vmax.f32 %v1776, 0.0
  %v4165 = vmax.f32 %v2434, 0.0
  %v4166 = vmax.f32 %v3092, 0.0
  %v4167 = vmax.f32 %v3750, 0.0
  %v4168 = vmax.f32 %v1779, 0.0
  %v4169 = vmax.f32 %v2437, 0.0
  %v4170 = vmax.f32 %v3095, 0.0
  %v4171 = vmax.f32 %v3753, 0.0
  %v4172 = vmax.f32 %v1781, 0.0
  %v4173 = vmax.f32 %v2439, 0.0
  %v4174 = vmax.f32 %v3097, 0.0
  %v4175 = vmax.f32 %v3755, 0.0
  %v4176 = vmax.f32 %v1784, 0.0
  %v4177 = vmax.f32 %v2442, 0.0
  %v4178 = vmax.f32 %v3100, 0.0
  %v4179 = vmax.f32 %v3758, 0.0
  %v4180 = vmax.f32 %v1786, 0.0
  %v4181 = vmax.f32 %v2444, 0.0
  %v4182 = vmax.f32 %v3102, 0.0
  %v4183 = vmax.f32 %v3760, 0.0
  %v4184 = vmax.f32 %v1789, 0.0
  %v4185 = vmax.f32 %v2447, 0.0
  %v4186 = vmax.f32 %v3105, 0.0
  %v4187 = vmax.f32 %v3763, 0.0
  %v4188 = vmax.f32 %v1791, 0.0
  %v4189 = vmax.f32 %v2449, 0.0
  %v4190 = vmax.f32 %v3107, 0.0
  %v4191 = vmax.f32 %v3765, 0.0
  %v4192 = vmax.f32 %v1794, 0.0
  %v4193 = vmax.f32 %v2452, 0.0
  %v4194 = vmax.f32 %v3110, 0.0
  %v4195 = vmax.f32 %v3768, 0.0
  %v4196 = vmax.f32 %v1796, 0.0
  %v4197 = vmax.f32 %v2454, 0.0
  %v4198 = vmax.f32 %v3112, 0.0
  %v4199 = vmax.f32 %v3770, 0.0
  %v4200 = vmax.f32 %v1799, 0.0
  %v4201 = vmax.f32 %v2457, 0.0
  %v4202 = vmax.f32 %v3115, 0.0
  %v4203 = vmax.f32 %v3773, 0.0
  %v4204 = vmax.f32 %v1801, 0.0
  %v4205 = vmax.f32 %v2459, 0.0
  %v4206 = vmax.f32 %v3117, 0.0
  %v4207 = vmax.f32 %v3775, 0.0
  %v4208 = vmax.f32 %v1804, 0.0
  %v4209 = vmax.f32 %v2462, 0.0
  %v4210 = vmax.f32 %v3120, 0.0
  %v4211 = vmax.f32 %v3778, 0.0
  %v4212 = vmax.f32 %v1806, 0.0
  %v4213 = vmax.f32 %v2464, 0.0
  %v4214 = vmax.f32 %v3122, 0.0
  %v4215 = vmax.f32 %v3780, 0.0
  %v4216 = vmax.f32 %v1809, 0.0
  %v4217 = vmax.f32 %v2467, 0.0
  %v4218 = vmax.f32 %v3125, 0.0
  %v4219 = vmax.f32 %v3783, 0.0
  %v4220 = vmax.f32 %v1811, 0.0
  %v4221 = vmax.f32 %v2469, 0.0
  %v4222 = vmax.f32 %v3127, 0.0
  %v4223 = vmax.f32 %v3785, 0.0
  %v4224 = vmax.f32 %v1814, 0.0
  %v4225 = vmax.f32 %v2472, 0.0
  %v4226 = vmax.f32 %v3130, 0.0
  %v4227 = vmax.f32 %v3788, 0.0
  %v4228 = vmax.f32 %v1816, 0.0
  %v4229 = vmax.f32 %v2474, 0.0
  %v4230 = vmax.f32 %v3132, 0.0
  %v4231 = vmax.f32 %v3790, 0.0
  %v4232 = vmax.f32 %v1819, 0.0
  %v4233 = vmax.f32 %v2477, 0.0
  %v4234 = vmax.f32 %v3135, 0.0
  %v4235 = vmax.f32 %v3793, 0.0
  %v4236 = vmax.f32 %v1821, 0.0
  %v4237 = vmax.f32 %v2479, 0.0
  %v4238 = vmax.f32 %v3137, 0.0
  %v4239 = vmax.f32 %v3795, 0.0
  %v4240 = vmax.f32 %v1824, 0.0
  %v4241 = vmax.f32 %v2482, 0.0
  %v4242 = vmax.f32 %v3140, 0.0
  %v4243 = vmax.f32 %v3798, 0.0
  %v4244 = vmax.f32 %v1826, 0.0
  %v4245 = vmax.f32 %v2484, 0.0
  %v4246 = vmax.f32 %v3142, 0.0
  %v4247 = vmax.f32 %v3800, 0.0
  %v4248 = vmax.f32 %v1829, 0.0
  %v4249 = vmax.f32 %v2487, 0.0
  %v4250 = vmax.f32 %v3145, 0.0
  %v4251 = vmax.f32 %v3803, 0.0
  %v4252 = vmax.f32 %v1831, 0.0
  %v4253 = vmax.f32 %v2489, 0.0
  %v4254 = vmax.f32 %v3147, 0.0
  %v4255 = vmax.f32 %v3805, 0.0
  %v4256 = vmax.f32 %v1834, 0.0
  %v4257 = vmax.f32 %v2492, 0.0
  %v4258 = vmax.f32 %v3150, 0.0
  %v4259 = vmax.f32 %v3808, 0.0
  %v4260 = vmax.f32 %v1836, 0.0
  %v4261 = vmax.f32 %v2494, 0.0
  %v4262 = vmax.f32 %v3152, 0.0
  %v4263 = vmax.f32 %v3810, 0.0
  %v4264 = vmax.f32 %v1839, 0.0
  %v4265 = vmax.f32 %v2497, 0.0
  %v4266 = vmax.f32 %v3155, 0.0
  %v4267 = vmax.f32 %v3813, 0.0
  %v4268 = vmax.f32 %v1841, 0.0
  %v4269 = vmax.f32 %v2499, 0.0
  %v4270 = vmax.f32 %v3157, 0.0
  %v4271 = vmax.f32 %v3815, 0.0
  %v4272 = vmax.f32 %v1844, 0.0
  %v4273 = vmax.f32 %v2502, 0.0
  %v4274 = vmax.f32 %v3160, 0.0
  %v4275 = vmax.f32 %v3818, 0.0
  %v4276 = vmax.f32 %v1846, 0.0
  %v4277 = vmax.f32 %v2504, 0.0
  %v4278 = vmax.f32 %v3162, 0.0
  %v4279 = vmax.f32 %v3820, 0.0
  %v4280 = vmax.f32 %v1849, 0.0
  %v4281 = vmax.f32 %v2507, 0.0
  %v4282 = vmax.f32 %v3165, 0.0
  %v4283 = vmax.f32 %v3823, 0.0
  %v4284 = vmax.f32 %v1851, 0.0
  %v4285 = vmax.f32 %v2509, 0.0
  %v4286 = vmax.f32 %v3167, 0.0
  %v4287 = vmax.f32 %v3825, 0.0
  %v4288 = vmax.f32 %v1854, 0.0
  %v4289 = vmax.f32 %v2512, 0.0
  %v4290 = vmax.f32 %v3170, 0.0
  %v4291 = vmax.f32 %v3828, 0.0
  %v4292 = vmax.f32 %v1856, 0.0
  %v4293 = vmax.f32 %v2514, 0.0
  %v4294 = vmax.f32 %v3172, 0.0
  %v4295 = vmax.f32 %v3830, 0.0
  %v4296 = vmax.f32 %v1859, 0.0
  %v4297 = vmax.f32 %v2517, 0.0
  %v4298 = vmax.f32 %v3175, 0.0
  %v4299 = vmax.f32 %v3833, 0.0
  %v4300 = vmax.f32 %v1861, 0.0
  %v4301 = vmax.f32 %v2519, 0.0
  %v4302 = vmax.f32 %v3177, 0.0
  %v4303 = vmax.f32 %v3835, 0.0
  %v4304 = vmax.f32 %v1864, 0.0
  %v4305 = vmax.f32 %v2522, 0.0
  %v4306 = vmax.f32 %v3180, 0.0
  %v4307 = vmax.f32 %v3838, 0.0
  %v4308 = vmax.f32 %v1866, 0.0
  %v4309 = vmax.f32 %v2524, 0.0
  %v4310 = vmax.f32 %v3182, 0.0
  %v4311 = vmax.f32 %v3840, 0.0
  %v4312 = vmax.f32 %v1869, 0.0
  %v4313 = vmax.f32 %v2527, 0.0
  %v4314 = vmax.f32 %v3185, 0.0
  %v4315 = vmax.f32 %v3843, 0.0
  %v4316 = vmax.f32 %v1871, 0.0
  %v4317 = vmax.f32 %v2529, 0.0
  %v4318 = vmax.f32 %v3187, 0.0
  %v4319 = vmax.f32 %v3845, 0.0
  %v4320 = vmax.f32 %v1874, 0.0
  %v4321 = vmax.f32 %v2532, 0.0
  %v4322 = vmax.f32 %v3190, 0.0
  %v4323 = vmax.f32 %v3848, 0.0
  %v4324 = vmax.f32 %v1876, 0.0
  %v4325 = vmax.f32 %v2534, 0.0
  %v4326 = vmax.f32 %v3192, 0.0
  %v4327 = vmax.f32 %v3850, 0.0
  %v4328 = vmax.f32 %v1879, 0.0
  %v4329 = vmax.f32 %v2537, 0.0
  %v4330 = vmax.f32 %v3195, 0.0
  %v4331 = vmax.f32 %v3853, 0.0
  %v4332 = vmax.f32 %v1881, 0.0
  %v4333 = vmax.f32 %v2539, 0.0
  %v4334 = vmax.f32 %v3197, 0.0
  %v4335 = vmax.f32 %v3855, 0.0
  %v4336 = vmax.f32 %v1884, 0.0
  %v4337 = vmax.f32 %v2542, 0.0
  %v4338 = vmax.f32 %v3200, 0.0
  %v4339 = vmax.f32 %v3858, 0.0
  %v4340 = vmax.f32 %v1886, 0.0
  %v4341 = vmax.f32 %v2544, 0.0
  %v4342 = vmax.f32 %v3202, 0.0
  %v4343 = vmax.f32 %v3860, 0.0
  %v4344 = vmax.f32 %v1889, 0.0
  %v4345 = vmax.f32 %v2547, 0.0
  %v4346 = vmax.f32 %v3205, 0.0
  %v4347 = vmax.f32 %v3863, 0.0
  %v4348 = vmax.f32 %v1891, 0.0
  %v4349 = vmax.f32 %v2549, 0.0
  %v4350 = vmax.f32 %v3207, 0.0
  %v4351 = vmax.f32 %v3865, 0.0
  %v4352 = vmax.f32 %v1894, 0.0
  %v4353 = vmax.f32 %v2552, 0.0
  %v4354 = vmax.f32 %v3210, 0.0
  %v4355 = vmax.f32 %v3868, 0.0
  %v4356 = vmax.f32 %v1896, 0.0
  %v4357 = vmax.f32 %v2554, 0.0
  %v4358 = vmax.f32 %v3212, 0.0
  %v4359 = vmax.f32 %v3870, 0.0
  %v4360 = vmax.f32 %v1899, 0.0
  %v4361 = vmax.f32 %v2557, 0.0
  %v4362 = vmax.f32 %v3215, 0.0
  %v4363 = vmax.f32 %v3873, 0.0
  %v4364 = vmax.f32 %v1901, 0.0
  %v4365 = vmax.f32 %v2559, 0.0
  %v4366 = vmax.f32 %v3217, 0.0
  %v4367 = vmax.f32 %v3875, 0.0
  %v4368 = vmax.f32 %v1904, 0.0
  %v4369 = vmax.f32 %v2562, 0.0
  %v4370 = vmax.f32 %v3220, 0.0
  %v4371 = vmax.f32 %v3878, 0.0
  %v4372 = vmax.f32 %v1906, 0.0
  %v4373 = vmax.f32 %v2564, 0.0
  %v4374 = vmax.f32 %v3222, 0.0
  %v4375 = vmax.f32 %v3880, 0.0
  %v4376 = vmax.f32 %v1909, 0.0
  %v4377 = vmax.f32 %v2567, 0.0
  %v4378 = vmax.f32 %v3225, 0.0
  %v4379 = vmax.f32 %v3883, 0.0
  %v4380 = vmax.f32 %v1911, 0.0
  %v4381 = vmax.f32 %v2569, 0.0
  %v4382 = vmax.f32 %v3227, 0.0
  %v4383 = vmax.f32 %v3885, 0.0
  %v4384 = vmax.f32 %v1914, 0.0
  %v4385 = vmax.f32 %v2572, 0.0
  %v4386 = vmax.f32 %v3230, 0.0
  %v4387 = vmax.f32 %v3888, 0.0
  %v4388 = vmax.f32 %v1916, 0.0
  %v4389 = vmax.f32 %v2574, 0.0
  %v4390 = vmax.f32 %v3232, 0.0
  %v4391 = vmax.f32 %v3890, 0.0
  %v4392 = vmax.f32 %v1919, 0.0
  %v4393 = vmax.f32 %v2577, 0.0
  %v4394 = vmax.f32 %v3235, 0.0
  %v4395 = vmax.f32 %v3893, 0.0
  %v4396 = vmax.f32 %v1921, 0.0
  %v4397 = vmax.f32 %v2579, 0.0
  %v4398 = vmax.f32 %v3237, 0.0
  %v4399 = vmax.f32 %v3895, 0.0
  %v4400 = vmax.f32 %v1924, 0.0
  %v4401 = vmax.f32 %v2582, 0.0
  %v4402 = vmax.f32 %v3240, 0.0
  %v4403 = vmax.f32 %v3898, 0.0
  %v4404 = vmax.f32 %v1926, 0.0
  %v4405 = vmax.f32 %v2584, 0.0
  %v4406 = vmax.f32 %v3242, 0.0
  %v4407 = vmax.f32 %v3900, 0.0
  %v4408 = vmax.f32 %v1929, 0.0
  %v4409 = vmax.f32 %v2587, 0.0
  %v4410 = vmax.f32 %v3245, 0.0
  %v4411 = vmax.f32 %v3903, 0.0
  %v4412 = vmax.f32 %v1931, 0.0
  %v4413 = vmax.f32 %v2589, 0.0
  %v4414 = vmax.f32 %v3247, 0.0
  %v4415 = vmax.f32 %v3905, 0.0
  %v4416 = vmax.f32 %v1934, 0.0
  %v4417 = vmax.f32 %v2592, 0.0
  %v4418 = vmax.f32 %v3250, 0.0
  %v4419 = vmax.f32 %v3908, 0.0
  %v4420 = vmax.f32 %v1936, 0.0
  %v4421 = vmax.f32 %v2594, 0.0
  %v4422 = vmax.f32 %v3252, 0.0
  %v4423 = vmax.f32 %v3910, 0.0
  %v4424 = vld [vmem:[%s3] sm:$0xff]
  %v4425 = vld [vmem:[%s3 + $0x8] sm:$0xff]
  %v4426 = vld [vmem:[%s3 + $0x10] sm:$0xff]
  %v4427 = vld [vmem:[%s3 + $0x18] sm:$0xff]
  %v4428 = vld [vmem:[%s3 + $0x20] sm:$0xff]
  %v4429 = vld [vmem:[%s3 + $0x28] sm:$0xff]
  %v4430 = vld [vmem:[%s3 + $0x30] sm:$0xff]
  %v4431 = vld [vmem:[%s3 + $0x38] sm:$0xff]
  %v4432 = vld [vmem:[%s3 + $0x40] sm:$0xff]
  %v4433 = vld [vmem:[%s3 + $0x48] sm:$0xff]
  %v4434 = vld [vmem:[%s3 + $0x50] sm:$0xff]
  %v4435 = vld [vmem:[%s3 + $0x58] sm:$0xff]
  %v4436 = vld [vmem:[%s3 + $0x60] sm:$0xff]
  %v4437 = vld [vmem:[%s3 + $0x68] sm:$0xff]
  %v4438 = vld [vmem:[%s3 + $0x70] sm:$0xff]
  %v4439 = vld [vmem:[%s3 + $0x78] sm:$0xff]
  %v4440 = vld [vmem:[%s3 + $0x80] sm:$0xff]
  %v4441 = vld [vmem:[%s3 + $0x88] sm:$0xff]
  %v4442 = vld [vmem:[%s3 + $0x90] sm:$0xff]
  %v4443 = vld [vmem:[%s3 + $0x98] sm:$0xff]
  %v4444 = vld [vmem:[%s3 + $0xa0] sm:$0xff]
  %v4445 = vld [vmem:[%s3 + $0xa8] sm:$0xff]
  %v4446 = vld [vmem:[%s3 + $0xb0] sm:$0xff]
  %v4447 = vld [vmem:[%s3 + $0xb8] sm:$0xff]
  %v4448 = vld [vmem:[%s3 + $0xc0] sm:$0xff]
  %v4449 = vld [vmem:[%s3 + $0xc8] sm:$0xff]
  %v4450 = vld [vmem:[%s3 + $0xd0] sm:$0xff]
  %v4451 = vld [vmem:[%s3 + $0xd8] sm:$0xff]
  %v4452 = vld [vmem:[%s3 + $0xe0] sm:$0xff]
  %v4453 = vld [vmem:[%s3 + $0xe8] sm:$0xff]
  %v4454 = vld [vmem:[%s3 + $0xf0] sm:$0xff]
  %v4455 = vld [vmem:[%s3 + $0xf8] sm:$0xff]
  %v4456 = vld [vmem:[%s3 + $0x100] sm:$0xff]
  %v4457 = vld [vmem:[%s3 + $0x108] sm:$0xff]
  %v4458 = vld [vmem:[%s3 + $0x110] sm:$0xff]
  %v4459 = vld [vmem:[%s3 + $0x118] sm:$0xff]
  %v4460 = vld [vmem:[%s3 + $0x120] sm:$0xff]
  %v4461 = vld [vmem:[%s3 + $0x128] sm:$0xff]
  %v4462 = vld [vmem:[%s3 + $0x130] sm:$0xff]
  %v4463 = vld [vmem:[%s3 + $0x138] sm:$0xff]
  %v4464 = vld [vmem:[%s3 + $0x140] sm:$0xff]
  %v4465 = vld [vmem:[%s3 + $0x148] sm:$0xff]
  %v4466 = vld [vmem:[%s3 + $0x150] sm:$0xff]
  %v4467 = vld [vmem:[%s3 + $0x158] sm:$0xff]
  %v4468 = vld [vmem:[%s3 + $0x160] sm:$0xff]
  %v4469 = vld [vmem:[%s3 + $0x168] sm:$0xff]
  %v4470 = vld [vmem:[%s3 + $0x170] sm:$0xff]
  %v4471 = vld [vmem:[%s3 + $0x178] sm:$0xff]
  %v4472 = vld [vmem:[%s3 + $0x180] sm:$0xff]
  %v4473 = vld [vmem:[%s3 + $0x188] sm:$0xff]
  %v4474 = vld [vmem:[%s3 + $0x190] sm:$0xff]
  %v4475 = vld [vmem:[%s3 + $0x198] sm:$0xff]
  %v4476 = vld [vmem:[%s3 + $0x1a0] sm:$0xff]
  %v4477 = vld [vmem:[%s3 + $0x1a8] sm:$0xff]
  %v4478 = vld [vmem:[%s3 + $0x1b0] sm:$0xff]
  %v4479 = vld [vmem:[%s3 + $0x1b8] sm:$0xff]
  %v4480 = vld [vmem:[%s3 + $0x1c0] sm:$0xff]
  %v4481 = vld [vmem:[%s3 + $0x1c8] sm:$0xff]
  %v4482 = vld [vmem:[%s3 + $0x1d0] sm:$0xff]
  %v4483 = vld [vmem:[%s3 + $0x1d8] sm:$0xff]
  %v4484 = vld [vmem:[%s3 + $0x1e0] sm:$0xff]
  %v4485 = vld [vmem:[%s3 + $0x1e8] sm:$0xff]
  %v4486 = vld [vmem:[%s3 + $0x1f0] sm:$0xff]
  %v4487 = vld [vmem:[%s3 + $0x1f8] sm:$0xff]
  %4488 = vmatpush.msra.mxu0 %v4439
  %4489 = vmatpush.msra.mxu0 %v4438
  %4490 = vmatpush.msra.mxu0 %v4437
  %4491 = vmatpush.msra.mxu0 %v4436
  %4492 = vmatpush.msra.mxu0 %v4435
  %4493 = vmatpush.msra.mxu0 %v4434
  %4494 = vmatpush.msra.mxu0 %v4433
  %4495 = vmatpush.msra.mxu0 %v4432
  %4496 = vmatpush.msra.mxu0 %v4431
  %4497 = vmatpush.msra.mxu0 %v4430
  %4498 = vmatpush.msra.mxu0 %v4429
  %4499 = vmatpush.msra.mxu0 %v4428
  %4500 = vmatpush.msra.mxu0 %v4427
  %4501 = vmatpush.msra.mxu0 %v4426
  %4502 = vmatpush.msra.mxu0 %v4425
  %4503 = vmatpush.msra.mxu0 %v4424
  %4504 = vmatmul.f32.gmra.mxu0 %v3912
  %v4505 = vpop.f32.mrf.mxu0
  %v4506 = vadd.f32 0.0, %v4505
  %4507 = vmatmul.f32.gmra.mxu0 %v3916
  %v4508 = vpop.f32.mrf.mxu0
  %v4509 = vadd.f32 0.0, %v4508
  %4510 = vmatmul.f32.gmra.mxu0 %v3920
  %v4511 = vpop.f32.mrf.mxu0
  %v4512 = vadd.f32 0.0, %v4511
  %4513 = vmatmul.f32.gmra.mxu0 %v3924
  %v4514 = vpop.f32.mrf.mxu0
  %v4515 = vadd.f32 0.0, %v4514
  %4516 = vmatmul.f32.gmra.mxu0 %v3928
  %v4517 = vpop.f32.mrf.mxu0
  %v4518 = vadd.f32 0.0, %v4517
  %4519 = vmatmul.f32.gmra.mxu0 %v3932
  %v4520 = vpop.f32.mrf.mxu0
  %v4521 = vadd.f32 0.0, %v4520
  %4522 = vmatmul.f32.gmra.mxu0 %v3936
  %v4523 = vpop.f32.mrf.mxu0
  %v4524 = vadd.f32 0.0, %v4523
  %4525 = vmatmul.f32.gmra.mxu0 %v3940
  %v4526 = vpop.f32.mrf.mxu0
  %v4527 = vadd.f32 0.0, %v4526
  %4528 = vmatmul.f32.gmra.mxu0 %v3944
  %v4529 = vpop.f32.mrf.mxu0
  %v4530 = vadd.f32 0.0, %v4529
  %4531 = vmatmul.f32.gmra.mxu0 %v3948
  %v4532 = vpop.f32.mrf.mxu0
  %v4533 = vadd.f32 0.0, %v4532
  %4534 = vmatmul.f32.gmra.mxu0 %v3952
  %v4535 = vpop.f32.mrf.mxu0
  %v4536 = vadd.f32 0.0, %v4535
  %4537 = vmatmul.f32.gmra.mxu0 %v3956
  %v4538 = vpop.f32.mrf.mxu0
  %v4539 = vadd.f32 0.0, %v4538
  %4540 = vmatmul.f32.gmra.mxu0 %v3960
  %v4541 = vpop.f32.mrf.mxu0
  %v4542 = vadd.f32 0.0, %v4541
  %4543 = vmatmul.f32.gmra.mxu0 %v3964
  %v4544 = vpop.f32.mrf.mxu0
  %v4545 = vadd.f32 0.0, %v4544
  %4546 = vmatmul.f32.gmra.mxu0 %v3968
  %v4547 = vpop.f32.mrf.mxu0
  %v4548 = vadd.f32 0.0, %v4547
  %4549 = vmatmul.f32.gmra.mxu0 %v3972
  %v4550 = vpop.f32.mrf.mxu0
  %v4551 = vadd.f32 0.0, %v4550
  %4552 = vmatmul.f32.gmra.mxu0 %v3976
  %v4553 = vpop.f32.mrf.mxu0
  %v4554 = vadd.f32 0.0, %v4553
  %4555 = vmatmul.f32.gmra.mxu0 %v3980
  %v4556 = vpop.f32.mrf.mxu0
  %v4557 = vadd.f32 0.0, %v4556
  %4558 = vmatmul.f32.gmra.mxu0 %v3984
  %v4559 = vpop.f32.mrf.mxu0
  %v4560 = vadd.f32 0.0, %v4559
  %4561 = vmatmul.f32.gmra.mxu0 %v3988
  %v4562 = vpop.f32.mrf.mxu0
  %v4563 = vadd.f32 0.0, %v4562
  %4564 = vmatmul.f32.gmra.mxu0 %v3992
  %v4565 = vpop.f32.mrf.mxu0
  %v4566 = vadd.f32 0.0, %v4565
  %4567 = vmatmul.f32.gmra.mxu0 %v3996
  %v4568 = vpop.f32.mrf.mxu0
  %v4569 = vadd.f32 0.0, %v4568
  %4570 = vmatmul.f32.gmra.mxu0 %v4000
  %v4571 = vpop.f32.mrf.mxu0
  %v4572 = vadd.f32 0.0, %v4571
  %4573 = vmatmul.f32.gmra.mxu0 %v4004
  %v4574 = vpop.f32.mrf.mxu0
  %v4575 = vadd.f32 0.0, %v4574
  %4576 = vmatmul.f32.gmra.mxu0 %v4008
  %v4577 = vpop.f32.mrf.mxu0
  %v4578 = vadd.f32 0.0, %v4577
  %4579 = vmatmul.f32.gmra.mxu0 %v4012
  %v4580 = vpop.f32.mrf.mxu0
  %v4581 = vadd.f32 0.0, %v4580
  %4582 = vmatmul.f32.gmra.mxu0 %v4016
  %v4583 = vpop.f32.mrf.mxu0
  %v4584 = vadd.f32 0.0, %v4583
  %4585 = vmatmul.f32.gmra.mxu0 %v4020
  %v4586 = vpop.f32.mrf.mxu0
  %v4587 = vadd.f32 0.0, %v4586
  %4588 = vmatmul.f32.gmra.mxu0 %v4024
  %v4589 = vpop.f32.mrf.mxu0
  %v4590 = vadd.f32 0.0, %v4589
  %4591 = vmatmul.f32.gmra.mxu0 %v4028
  %v4592 = vpop.f32.mrf.mxu0
  %v4593 = vadd.f32 0.0, %v4592
  %4594 = vmatmul.f32.gmra.mxu0 %v4032
  %v4595 = vpop.f32.mrf.mxu0
  %v4596 = vadd.f32 0.0, %v4595
  %4597 = vmatmul.f32.gmra.mxu0 %v4036
  %v4598 = vpop.f32.mrf.mxu0
  %v4599 = vadd.f32 0.0, %v4598
  %4600 = vmatmul.f32.gmra.mxu0 %v4040
  %v4601 = vpop.f32.mrf.mxu0
  %v4602 = vadd.f32 0.0, %v4601
  %4603 = vmatmul.f32.gmra.mxu0 %v4044
  %v4604 = vpop.f32.mrf.mxu0
  %v4605 = vadd.f32 0.0, %v4604
  %4606 = vmatmul.f32.gmra.mxu0 %v4048
  %v4607 = vpop.f32.mrf.mxu0
  %v4608 = vadd.f32 0.0, %v4607
  %4609 = vmatmul.f32.gmra.mxu0 %v4052
  %v4610 = vpop.f32.mrf.mxu0
  %v4611 = vadd.f32 0.0, %v4610
  %4612 = vmatmul.f32.gmra.mxu0 %v4056
  %v4613 = vpop.f32.mrf.mxu0
  %v4614 = vadd.f32 0.0, %v4613
  %4615 = vmatmul.f32.gmra.mxu0 %v4060
  %v4616 = vpop.f32.mrf.mxu0
  %v4617 = vadd.f32 0.0, %v4616
  %4618 = vmatmul.f32.gmra.mxu0 %v4064
  %v4619 = vpop.f32.mrf.mxu0
  %v4620 = vadd.f32 0.0, %v4619
  %4621 = vmatmul.f32.gmra.mxu0 %v4068
  %v4622 = vpop.f32.mrf.mxu0
  %v4623 = vadd.f32 0.0, %v4622
  %4624 = vmatmul.f32.gmra.mxu0 %v4072
  %v4625 = vpop.f32.mrf.mxu0
  %v4626 = vadd.f32 0.0, %v4625
  %4627 = vmatmul.f32.gmra.mxu0 %v4076
  %v4628 = vpop.f32.mrf.mxu0
  %v4629 = vadd.f32 0.0, %v4628
  %4630 = vmatmul.f32.gmra.mxu0 %v4080
  %v4631 = vpop.f32.mrf.mxu0
  %v4632 = vadd.f32 0.0, %v4631
  %4633 = vmatmul.f32.gmra.mxu0 %v4084
  %v4634 = vpop.f32.mrf.mxu0
  %v4635 = vadd.f32 0.0, %v4634
  %4636 = vmatmul.f32.gmra.mxu0 %v4088
  %v4637 = vpop.f32.mrf.mxu0
  %v4638 = vadd.f32 0.0, %v4637
  %4639 = vmatmul.f32.gmra.mxu0 %v4092
  %v4640 = vpop.f32.mrf.mxu0
  %v4641 = vadd.f32 0.0, %v4640
  %4642 = vmatmul.f32.gmra.mxu0 %v4096
  %v4643 = vpop.f32.mrf.mxu0
  %v4644 = vadd.f32 0.0, %v4643
  %4645 = vmatmul.f32.gmra.mxu0 %v4100
  %v4646 = vpop.f32.mrf.mxu0
  %v4647 = vadd.f32 0.0, %v4646
  %4648 = vmatmul.f32.gmra.mxu0 %v4104
  %v4649 = vpop.f32.mrf.mxu0
  %v4650 = vadd.f32 0.0, %v4649
  %4651 = vmatmul.f32.gmra.mxu0 %v4108
  %v4652 = vpop.f32.mrf.mxu0
  %v4653 = vadd.f32 0.0, %v4652
  %4654 = vmatmul.f32.gmra.mxu0 %v4112
  %v4655 = vpop.f32.mrf.mxu0
  %v4656 = vadd.f32 0.0, %v4655
  %4657 = vmatmul.f32.gmra.mxu0 %v4116
  %v4658 = vpop.f32.mrf.mxu0
  %v4659 = vadd.f32 0.0, %v4658
  %4660 = vmatmul.f32.gmra.mxu0 %v4120
  %v4661 = vpop.f32.mrf.mxu0
  %v4662 = vadd.f32 0.0, %v4661
  %4663 = vmatmul.f32.gmra.mxu0 %v4124
  %v4664 = vpop.f32.mrf.mxu0
  %v4665 = vadd.f32 0.0, %v4664
  %4666 = vmatmul.f32.gmra.mxu0 %v4128
  %v4667 = vpop.f32.mrf.mxu0
  %v4668 = vadd.f32 0.0, %v4667
  %4669 = vmatmul.f32.gmra.mxu0 %v4132
  %v4670 = vpop.f32.mrf.mxu0
  %v4671 = vadd.f32 0.0, %v4670
  %4672 = vmatmul.f32.gmra.mxu0 %v4136
  %v4673 = vpop.f32.mrf.mxu0
  %v4674 = vadd.f32 0.0, %v4673
  %4675 = vmatmul.f32.gmra.mxu0 %v4140
  %v4676 = vpop.f32.mrf.mxu0
  %v4677 = vadd.f32 0.0, %v4676
  %4678 = vmatmul.f32.gmra.mxu0 %v4144
  %v4679 = vpop.f32.mrf.mxu0
  %v4680 = vadd.f32 0.0, %v4679
  %4681 = vmatmul.f32.gmra.mxu0 %v4148
  %v4682 = vpop.f32.mrf.mxu0
  %v4683 = vadd.f32 0.0, %v4682
  %4684 = vmatmul.f32.gmra.mxu0 %v4152
  %v4685 = vpop.f32.mrf.mxu0
  %v4686 = vadd.f32 0.0, %v4685
  %4687 = vmatmul.f32.gmra.mxu0 %v4156
  %v4688 = vpop.f32.mrf.mxu0
  %v4689 = vadd.f32 0.0, %v4688
  %4690 = vmatmul.f32.gmra.mxu0 %v4160
  %v4691 = vpop.f32.mrf.mxu0
  %v4692 = vadd.f32 0.0, %v4691
  %4693 = vmatmul.f32.gmra.mxu0 %v4164
  %v4694 = vpop.f32.mrf.mxu0
  %v4695 = vadd.f32 0.0, %v4694
  %4696 = vmatmul.f32.gmra.mxu0 %v4168
  %v4697 = vpop.f32.mrf.mxu0
  %v4698 = vadd.f32 0.0, %v4697
  %4699 = vmatmul.f32.gmra.mxu0 %v4172
  %v4700 = vpop.f32.mrf.mxu0
  %v4701 = vadd.f32 0.0, %v4700
  %4702 = vmatmul.f32.gmra.mxu0 %v4176
  %v4703 = vpop.f32.mrf.mxu0
  %v4704 = vadd.f32 0.0, %v4703
  %4705 = vmatmul.f32.gmra.mxu0 %v4180
  %v4706 = vpop.f32.mrf.mxu0
  %v4707 = vadd.f32 0.0, %v4706
  %4708 = vmatmul.f32.gmra.mxu0 %v4184
  %v4709 = vpop.f32.mrf.mxu0
  %v4710 = vadd.f32 0.0, %v4709
  %4711 = vmatmul.f32.gmra.mxu0 %v4188
  %v4712 = vpop.f32.mrf.mxu0
  %v4713 = vadd.f32 0.0, %v4712
  %4714 = vmatmul.f32.gmra.mxu0 %v4192
  %v4715 = vpop.f32.mrf.mxu0
  %v4716 = vadd.f32 0.0, %v4715
  %4717 = vmatmul.f32.gmra.mxu0 %v4196
  %v4718 = vpop.f32.mrf.mxu0
  %v4719 = vadd.f32 0.0, %v4718
  %4720 = vmatmul.f32.gmra.mxu0 %v4200
  %v4721 = vpop.f32.mrf.mxu0
  %v4722 = vadd.f32 0.0, %v4721
  %4723 = vmatmul.f32.gmra.mxu0 %v4204
  %v4724 = vpop.f32.mrf.mxu0
  %v4725 = vadd.f32 0.0, %v4724
  %4726 = vmatmul.f32.gmra.mxu0 %v4208
  %v4727 = vpop.f32.mrf.mxu0
  %v4728 = vadd.f32 0.0, %v4727
  %4729 = vmatmul.f32.gmra.mxu0 %v4212
  %v4730 = vpop.f32.mrf.mxu0
  %v4731 = vadd.f32 0.0, %v4730
  %4732 = vmatmul.f32.gmra.mxu0 %v4216
  %v4733 = vpop.f32.mrf.mxu0
  %v4734 = vadd.f32 0.0, %v4733
  %4735 = vmatmul.f32.gmra.mxu0 %v4220
  %v4736 = vpop.f32.mrf.mxu0
  %v4737 = vadd.f32 0.0, %v4736
  %4738 = vmatmul.f32.gmra.mxu0 %v4224
  %v4739 = vpop.f32.mrf.mxu0
  %v4740 = vadd.f32 0.0, %v4739
  %4741 = vmatmul.f32.gmra.mxu0 %v4228
  %v4742 = vpop.f32.mrf.mxu0
  %v4743 = vadd.f32 0.0, %v4742
  %4744 = vmatmul.f32.gmra.mxu0 %v4232
  %v4745 = vpop.f32.mrf.mxu0
  %v4746 = vadd.f32 0.0, %v4745
  %4747 = vmatmul.f32.gmra.mxu0 %v4236
  %v4748 = vpop.f32.mrf.mxu0
  %v4749 = vadd.f32 0.0, %v4748
  %4750 = vmatmul.f32.gmra.mxu0 %v4240
  %v4751 = vpop.f32.mrf.mxu0
  %v4752 = vadd.f32 0.0, %v4751
  %4753 = vmatmul.f32.gmra.mxu0 %v4244
  %v4754 = vpop.f32.mrf.mxu0
  %v4755 = vadd.f32 0.0, %v4754
  %4756 = vmatmul.f32.gmra.mxu0 %v4248
  %v4757 = vpop.f32.mrf.mxu0
  %v4758 = vadd.f32 0.0, %v4757
  %4759 = vmatmul.f32.gmra.mxu0 %v4252
  %v4760 = vpop.f32.mrf.mxu0
  %v4761 = vadd.f32 0.0, %v4760
  %4762 = vmatmul.f32.gmra.mxu0 %v4256
  %v4763 = vpop.f32.mrf.mxu0
  %v4764 = vadd.f32 0.0, %v4763
  %4765 = vmatmul.f32.gmra.mxu0 %v4260
  %v4766 = vpop.f32.mrf.mxu0
  %v4767 = vadd.f32 0.0, %v4766
  %4768 = vmatmul.f32.gmra.mxu0 %v4264
  %v4769 = vpop.f32.mrf.mxu0
  %v4770 = vadd.f32 0.0, %v4769
  %4771 = vmatmul.f32.gmra.mxu0 %v4268
  %v4772 = vpop.f32.mrf.mxu0
  %v4773 = vadd.f32 0.0, %v4772
  %4774 = vmatmul.f32.gmra.mxu0 %v4272
  %v4775 = vpop.f32.mrf.mxu0
  %v4776 = vadd.f32 0.0, %v4775
  %4777 = vmatmul.f32.gmra.mxu0 %v4276
  %v4778 = vpop.f32.mrf.mxu0
  %v4779 = vadd.f32 0.0, %v4778
  %4780 = vmatmul.f32.gmra.mxu0 %v4280
  %v4781 = vpop.f32.mrf.mxu0
  %v4782 = vadd.f32 0.0, %v4781
  %4783 = vmatmul.f32.gmra.mxu0 %v4284
  %v4784 = vpop.f32.mrf.mxu0
  %v4785 = vadd.f32 0.0, %v4784
  %4786 = vmatmul.f32.gmra.mxu0 %v4288
  %v4787 = vpop.f32.mrf.mxu0
  %v4788 = vadd.f32 0.0, %v4787
  %4789 = vmatmul.f32.gmra.mxu0 %v4292
  %v4790 = vpop.f32.mrf.mxu0
  %v4791 = vadd.f32 0.0, %v4790
  %4792 = vmatmul.f32.gmra.mxu0 %v4296
  %v4793 = vpop.f32.mrf.mxu0
  %v4794 = vadd.f32 0.0, %v4793
  %4795 = vmatmul.f32.gmra.mxu0 %v4300
  %v4796 = vpop.f32.mrf.mxu0
  %v4797 = vadd.f32 0.0, %v4796
  %4798 = vmatmul.f32.gmra.mxu0 %v4304
  %v4799 = vpop.f32.mrf.mxu0
  %v4800 = vadd.f32 0.0, %v4799
  %4801 = vmatmul.f32.gmra.mxu0 %v4308
  %v4802 = vpop.f32.mrf.mxu0
  %v4803 = vadd.f32 0.0, %v4802
  %4804 = vmatmul.f32.gmra.mxu0 %v4312
  %v4805 = vpop.f32.mrf.mxu0
  %v4806 = vadd.f32 0.0, %v4805
  %4807 = vmatmul.f32.gmra.mxu0 %v4316
  %v4808 = vpop.f32.mrf.mxu0
  %v4809 = vadd.f32 0.0, %v4808
  %4810 = vmatmul.f32.gmra.mxu0 %v4320
  %v4811 = vpop.f32.mrf.mxu0
  %v4812 = vadd.f32 0.0, %v4811
  %4813 = vmatmul.f32.gmra.mxu0 %v4324
  %v4814 = vpop.f32.mrf.mxu0
  %v4815 = vadd.f32 0.0, %v4814
  %4816 = vmatmul.f32.gmra.mxu0 %v4328
  %v4817 = vpop.f32.mrf.mxu0
  %v4818 = vadd.f32 0.0, %v4817
  %4819 = vmatmul.f32.gmra.mxu0 %v4332
  %v4820 = vpop.f32.mrf.mxu0
  %v4821 = vadd.f32 0.0, %v4820
  %4822 = vmatmul.f32.gmra.mxu0 %v4336
  %v4823 = vpop.f32.mrf.mxu0
  %v4824 = vadd.f32 0.0, %v4823
  %4825 = vmatmul.f32.gmra.mxu0 %v4340
  %v4826 = vpop.f32.mrf.mxu0
  %v4827 = vadd.f32 0.0, %v4826
  %4828 = vmatmul.f32.gmra.mxu0 %v4344
  %v4829 = vpop.f32.mrf.mxu0
  %v4830 = vadd.f32 0.0, %v4829
  %4831 = vmatmul.f32.gmra.mxu0 %v4348
  %v4832 = vpop.f32.mrf.mxu0
  %v4833 = vadd.f32 0.0, %v4832
  %4834 = vmatmul.f32.gmra.mxu0 %v4352
  %v4835 = vpop.f32.mrf.mxu0
  %v4836 = vadd.f32 0.0, %v4835
  %4837 = vmatmul.f32.gmra.mxu0 %v4356
  %v4838 = vpop.f32.mrf.mxu0
  %v4839 = vadd.f32 0.0, %v4838
  %4840 = vmatmul.f32.gmra.mxu0 %v4360
  %v4841 = vpop.f32.mrf.mxu0
  %v4842 = vadd.f32 0.0, %v4841
  %4843 = vmatmul.f32.gmra.mxu0 %v4364
  %v4844 = vpop.f32.mrf.mxu0
  %v4845 = vadd.f32 0.0, %v4844
  %4846 = vmatmul.f32.gmra.mxu0 %v4368
  %v4847 = vpop.f32.mrf.mxu0
  %v4848 = vadd.f32 0.0, %v4847
  %4849 = vmatmul.f32.gmra.mxu0 %v4372
  %v4850 = vpop.f32.mrf.mxu0
  %v4851 = vadd.f32 0.0, %v4850
  %4852 = vmatmul.f32.gmra.mxu0 %v4376
  %v4853 = vpop.f32.mrf.mxu0
  %v4854 = vadd.f32 0.0, %v4853
  %4855 = vmatmul.f32.gmra.mxu0 %v4380
  %v4856 = vpop.f32.mrf.mxu0
  %v4857 = vadd.f32 0.0, %v4856
  %4858 = vmatmul.f32.gmra.mxu0 %v4384
  %v4859 = vpop.f32.mrf.mxu0
  %v4860 = vadd.f32 0.0, %v4859
  %4861 = vmatmul.f32.gmra.mxu0 %v4388
  %v4862 = vpop.f32.mrf.mxu0
  %v4863 = vadd.f32 0.0, %v4862
  %4864 = vmatmul.f32.gmra.mxu0 %v4392
  %v4865 = vpop.f32.mrf.mxu0
  %v4866 = vadd.f32 0.0, %v4865
  %4867 = vmatmul.f32.gmra.mxu0 %v4396
  %v4868 = vpop.f32.mrf.mxu0
  %v4869 = vadd.f32 0.0, %v4868
  %4870 = vmatmul.f32.gmra.mxu0 %v4400
  %v4871 = vpop.f32.mrf.mxu0
  %v4872 = vadd.f32 0.0, %v4871
  %4873 = vmatmul.f32.gmra.mxu0 %v4404
  %v4874 = vpop.f32.mrf.mxu0
  %v4875 = vadd.f32 0.0, %v4874
  %4876 = vmatmul.f32.gmra.mxu0 %v4408
  %v4877 = vpop.f32.mrf.mxu0
  %v4878 = vadd.f32 0.0, %v4877
  %4879 = vmatmul.f32.gmra.mxu0 %v4412
  %v4880 = vpop.f32.mrf.mxu0
  %v4881 = vadd.f32 0.0, %v4880
  %4882 = vmatmul.f32.gmra.mxu0 %v4416
  %v4883 = vpop.f32.mrf.mxu0
  %v4884 = vadd.f32 0.0, %v4883
  %4885 = vmatmul.f32.gmra.mxu0 %v4420
  %v4886 = vpop.f32.mrf.mxu0
  %v4887 = vadd.f32 0.0, %v4886
  %4888 = vdwg.mxu0
  %4889 = vmatpush.msra.mxu0 %v4455
  %4890 = vmatpush.msra.mxu0 %v4454
  %4891 = vmatpush.msra.mxu0 %v4453
  %4892 = vmatpush.msra.mxu0 %v4452
  %4893 = vmatpush.msra.mxu0 %v4451
  %4894 = vmatpush.msra.mxu0 %v4450
  %4895 = vmatpush.msra.mxu0 %v4449
  %4896 = vmatpush.msra.mxu0 %v4448
  %4897 = vmatpush.msra.mxu0 %v4447
  %4898 = vmatpush.msra.mxu0 %v4446
  %4899 = vmatpush.msra.mxu0 %v4445
  %4900 = vmatpush.msra.mxu0 %v4444
  %4901 = vmatpush.msra.mxu0 %v4443
  %4902 = vmatpush.msra.mxu0 %v4442
  %4903 = vmatpush.msra.mxu0 %v4441
  %4904 = vmatpush.msra.mxu0 %v4440
  %4905 = vmatmul.f32.gmra.mxu0 %v3913
  %v4906 = vpop.f32.mrf.mxu0
  %v4907 = vadd.f32 %v4506, %v4906
  %4908 = vmatmul.f32.gmra.mxu0 %v3917
  %v4909 = vpop.f32.mrf.mxu0
  %v4910 = vadd.f32 %v4509, %v4909
  %4911 = vmatmul.f32.gmra.mxu0 %v3921
  %v4912 = vpop.f32.mrf.mxu0
  %v4913 = vadd.f32 %v4512, %v4912
  %4914 = vmatmul.f32.gmra.mxu0 %v3925
  %v4915 = vpop.f32.mrf.mxu0
  %v4916 = vadd.f32 %v4515, %v4915
  %4917 = vmatmul.f32.gmra.mxu0 %v3929
  %v4918 = vpop.f32.mrf.mxu0
  %v4919 = vadd.f32 %v4518, %v4918
  %4920 = vmatmul.f32.gmra.mxu0 %v3933
  %v4921 = vpop.f32.mrf.mxu0
  %v4922 = vadd.f32 %v4521, %v4921
  %4923 = vmatmul.f32.gmra.mxu0 %v3937
  %v4924 = vpop.f32.mrf.mxu0
  %v4925 = vadd.f32 %v4524, %v4924
  %4926 = vmatmul.f32.gmra.mxu0 %v3941
  %v4927 = vpop.f32.mrf.mxu0
  %v4928 = vadd.f32 %v4527, %v4927
  %4929 = vmatmul.f32.gmra.mxu0 %v3945
  %v4930 = vpop.f32.mrf.mxu0
  %v4931 = vadd.f32 %v4530, %v4930
  %4932 = vmatmul.f32.gmra.mxu0 %v3949
  %v4933 = vpop.f32.mrf.mxu0
  %v4934 = vadd.f32 %v4533, %v4933
  %4935 = vmatmul.f32.gmra.mxu0 %v3953
  %v4936 = vpop.f32.mrf.mxu0
  %v4937 = vadd.f32 %v4536, %v4936
  %4938 = vmatmul.f32.gmra.mxu0 %v3957
  %v4939 = vpop.f32.mrf.mxu0
  %v4940 = vadd.f32 %v4539, %v4939
  %4941 = vmatmul.f32.gmra.mxu0 %v3961
  %v4942 = vpop.f32.mrf.mxu0
  %v4943 = vadd.f32 %v4542, %v4942
  %4944 = vmatmul.f32.gmra.mxu0 %v3965
  %v4945 = vpop.f32.mrf.mxu0
  %v4946 = vadd.f32 %v4545, %v4945
  %4947 = vmatmul.f32.gmra.mxu0 %v3969
  %v4948 = vpop.f32.mrf.mxu0
  %v4949 = vadd.f32 %v4548, %v4948
  %4950 = vmatmul.f32.gmra.mxu0 %v3973
  %v4951 = vpop.f32.mrf.mxu0
  %v4952 = vadd.f32 %v4551, %v4951
  %4953 = vmatmul.f32.gmra.mxu0 %v3977
  %v4954 = vpop.f32.mrf.mxu0
  %v4955 = vadd.f32 %v4554, %v4954
  %4956 = vmatmul.f32.gmra.mxu0 %v3981
  %v4957 = vpop.f32.mrf.mxu0
  %v4958 = vadd.f32 %v4557, %v4957
  %4959 = vmatmul.f32.gmra.mxu0 %v3985
  %v4960 = vpop.f32.mrf.mxu0
  %v4961 = vadd.f32 %v4560, %v4960
  %4962 = vmatmul.f32.gmra.mxu0 %v3989
  %v4963 = vpop.f32.mrf.mxu0
  %v4964 = vadd.f32 %v4563, %v4963
  %4965 = vmatmul.f32.gmra.mxu0 %v3993
  %v4966 = vpop.f32.mrf.mxu0
  %v4967 = vadd.f32 %v4566, %v4966
  %4968 = vmatmul.f32.gmra.mxu0 %v3997
  %v4969 = vpop.f32.mrf.mxu0
  %v4970 = vadd.f32 %v4569, %v4969
  %4971 = vmatmul.f32.gmra.mxu0 %v4001
  %v4972 = vpop.f32.mrf.mxu0
  %v4973 = vadd.f32 %v4572, %v4972
  %4974 = vmatmul.f32.gmra.mxu0 %v4005
  %v4975 = vpop.f32.mrf.mxu0
  %v4976 = vadd.f32 %v4575, %v4975
  %4977 = vmatmul.f32.gmra.mxu0 %v4009
  %v4978 = vpop.f32.mrf.mxu0
  %v4979 = vadd.f32 %v4578, %v4978
  %4980 = vmatmul.f32.gmra.mxu0 %v4013
  %v4981 = vpop.f32.mrf.mxu0
  %v4982 = vadd.f32 %v4581, %v4981
  %4983 = vmatmul.f32.gmra.mxu0 %v4017
  %v4984 = vpop.f32.mrf.mxu0
  %v4985 = vadd.f32 %v4584, %v4984
  %4986 = vmatmul.f32.gmra.mxu0 %v4021
  %v4987 = vpop.f32.mrf.mxu0
  %v4988 = vadd.f32 %v4587, %v4987
  %4989 = vmatmul.f32.gmra.mxu0 %v4025
  %v4990 = vpop.f32.mrf.mxu0
  %v4991 = vadd.f32 %v4590, %v4990
  %4992 = vmatmul.f32.gmra.mxu0 %v4029
  %v4993 = vpop.f32.mrf.mxu0
  %v4994 = vadd.f32 %v4593, %v4993
  %4995 = vmatmul.f32.gmra.mxu0 %v4033
  %v4996 = vpop.f32.mrf.mxu0
  %v4997 = vadd.f32 %v4596, %v4996
  %4998 = vmatmul.f32.gmra.mxu0 %v4037
  %v4999 = vpop.f32.mrf.mxu0
  %v5000 = vadd.f32 %v4599, %v4999
  %5001 = vmatmul.f32.gmra.mxu0 %v4041
  %v5002 = vpop.f32.mrf.mxu0
  %v5003 = vadd.f32 %v4602, %v5002
  %5004 = vmatmul.f32.gmra.mxu0 %v4045
  %v5005 = vpop.f32.mrf.mxu0
  %v5006 = vadd.f32 %v4605, %v5005
  %5007 = vmatmul.f32.gmra.mxu0 %v4049
  %v5008 = vpop.f32.mrf.mxu0
  %v5009 = vadd.f32 %v4608, %v5008
  %5010 = vmatmul.f32.gmra.mxu0 %v4053
  %v5011 = vpop.f32.mrf.mxu0
  %v5012 = vadd.f32 %v4611, %v5011
  %5013 = vmatmul.f32.gmra.mxu0 %v4057
  %v5014 = vpop.f32.mrf.mxu0
  %v5015 = vadd.f32 %v4614, %v5014
  %5016 = vmatmul.f32.gmra.mxu0 %v4061
  %v5017 = vpop.f32.mrf.mxu0
  %v5018 = vadd.f32 %v4617, %v5017
  %5019 = vmatmul.f32.gmra.mxu0 %v4065
  %v5020 = vpop.f32.mrf.mxu0
  %v5021 = vadd.f32 %v4620, %v5020
  %5022 = vmatmul.f32.gmra.mxu0 %v4069
  %v5023 = vpop.f32.mrf.mxu0
  %v5024 = vadd.f32 %v4623, %v5023
  %5025 = vmatmul.f32.gmra.mxu0 %v4073
  %v5026 = vpop.f32.mrf.mxu0
  %v5027 = vadd.f32 %v4626, %v5026
  %5028 = vmatmul.f32.gmra.mxu0 %v4077
  %v5029 = vpop.f32.mrf.mxu0
  %v5030 = vadd.f32 %v4629, %v5029
  %5031 = vmatmul.f32.gmra.mxu0 %v4081
  %v5032 = vpop.f32.mrf.mxu0
  %v5033 = vadd.f32 %v4632, %v5032
  %5034 = vmatmul.f32.gmra.mxu0 %v4085
  %v5035 = vpop.f32.mrf.mxu0
  %v5036 = vadd.f32 %v4635, %v5035
  %5037 = vmatmul.f32.gmra.mxu0 %v4089
  %v5038 = vpop.f32.mrf.mxu0
  %v5039 = vadd.f32 %v4638, %v5038
  %5040 = vmatmul.f32.gmra.mxu0 %v4093
  %v5041 = vpop.f32.mrf.mxu0
  %v5042 = vadd.f32 %v4641, %v5041
  %5043 = vmatmul.f32.gmra.mxu0 %v4097
  %v5044 = vpop.f32.mrf.mxu0
  %v5045 = vadd.f32 %v4644, %v5044
  %5046 = vmatmul.f32.gmra.mxu0 %v4101
  %v5047 = vpop.f32.mrf.mxu0
  %v5048 = vadd.f32 %v4647, %v5047
  %5049 = vmatmul.f32.gmra.mxu0 %v4105
  %v5050 = vpop.f32.mrf.mxu0
  %v5051 = vadd.f32 %v4650, %v5050
  %5052 = vmatmul.f32.gmra.mxu0 %v4109
  %v5053 = vpop.f32.mrf.mxu0
  %v5054 = vadd.f32 %v4653, %v5053
  %5055 = vmatmul.f32.gmra.mxu0 %v4113
  %v5056 = vpop.f32.mrf.mxu0
  %v5057 = vadd.f32 %v4656, %v5056
  %5058 = vmatmul.f32.gmra.mxu0 %v4117
  %v5059 = vpop.f32.mrf.mxu0
  %v5060 = vadd.f32 %v4659, %v5059
  %5061 = vmatmul.f32.gmra.mxu0 %v4121
  %v5062 = vpop.f32.mrf.mxu0
  %v5063 = vadd.f32 %v4662, %v5062
  %5064 = vmatmul.f32.gmra.mxu0 %v4125
  %v5065 = vpop.f32.mrf.mxu0
  %v5066 = vadd.f32 %v4665, %v5065
  %5067 = vmatmul.f32.gmra.mxu0 %v4129
  %v5068 = vpop.f32.mrf.mxu0
  %v5069 = vadd.f32 %v4668, %v5068
  %5070 = vmatmul.f32.gmra.mxu0 %v4133
  %v5071 = vpop.f32.mrf.mxu0
  %v5072 = vadd.f32 %v4671, %v5071
  %5073 = vmatmul.f32.gmra.mxu0 %v4137
  %v5074 = vpop.f32.mrf.mxu0
  %v5075 = vadd.f32 %v4674, %v5074
  %5076 = vmatmul.f32.gmra.mxu0 %v4141
  %v5077 = vpop.f32.mrf.mxu0
  %v5078 = vadd.f32 %v4677, %v5077
  %5079 = vmatmul.f32.gmra.mxu0 %v4145
  %v5080 = vpop.f32.mrf.mxu0
  %v5081 = vadd.f32 %v4680, %v5080
  %5082 = vmatmul.f32.gmra.mxu0 %v4149
  %v5083 = vpop.f32.mrf.mxu0
  %v5084 = vadd.f32 %v4683, %v5083
  %5085 = vmatmul.f32.gmra.mxu0 %v4153
  %v5086 = vpop.f32.mrf.mxu0
  %v5087 = vadd.f32 %v4686, %v5086
  %5088 = vmatmul.f32.gmra.mxu0 %v4157
  %v5089 = vpop.f32.mrf.mxu0
  %v5090 = vadd.f32 %v4689, %v5089
  %5091 = vmatmul.f32.gmra.mxu0 %v4161
  %v5092 = vpop.f32.mrf.mxu0
  %v5093 = vadd.f32 %v4692, %v5092
  %5094 = vmatmul.f32.gmra.mxu0 %v4165
  %v5095 = vpop.f32.mrf.mxu0
  %v5096 = vadd.f32 %v4695, %v5095
  %5097 = vmatmul.f32.gmra.mxu0 %v4169
  %v5098 = vpop.f32.mrf.mxu0
  %v5099 = vadd.f32 %v4698, %v5098
  %5100 = vmatmul.f32.gmra.mxu0 %v4173
  %v5101 = vpop.f32.mrf.mxu0
  %v5102 = vadd.f32 %v4701, %v5101
  %5103 = vmatmul.f32.gmra.mxu0 %v4177
  %v5104 = vpop.f32.mrf.mxu0
  %v5105 = vadd.f32 %v4704, %v5104
  %5106 = vmatmul.f32.gmra.mxu0 %v4181
  %v5107 = vpop.f32.mrf.mxu0
  %v5108 = vadd.f32 %v4707, %v5107
  %5109 = vmatmul.f32.gmra.mxu0 %v4185
  %v5110 = vpop.f32.mrf.mxu0
  %v5111 = vadd.f32 %v4710, %v5110
  %5112 = vmatmul.f32.gmra.mxu0 %v4189
  %v5113 = vpop.f32.mrf.mxu0
  %v5114 = vadd.f32 %v4713, %v5113
  %5115 = vmatmul.f32.gmra.mxu0 %v4193
  %v5116 = vpop.f32.mrf.mxu0
  %v5117 = vadd.f32 %v4716, %v5116
  %5118 = vmatmul.f32.gmra.mxu0 %v4197
  %v5119 = vpop.f32.mrf.mxu0
  %v5120 = vadd.f32 %v4719, %v5119
  %5121 = vmatmul.f32.gmra.mxu0 %v4201
  %v5122 = vpop.f32.mrf.mxu0
  %v5123 = vadd.f32 %v4722, %v5122
  %5124 = vmatmul.f32.gmra.mxu0 %v4205
  %v5125 = vpop.f32.mrf.mxu0
  %v5126 = vadd.f32 %v4725, %v5125
  %5127 = vmatmul.f32.gmra.mxu0 %v4209
  %v5128 = vpop.f32.mrf.mxu0
  %v5129 = vadd.f32 %v4728, %v5128
  %5130 = vmatmul.f32.gmra.mxu0 %v4213
  %v5131 = vpop.f32.mrf.mxu0
  %v5132 = vadd.f32 %v4731, %v5131
  %5133 = vmatmul.f32.gmra.mxu0 %v4217
  %v5134 = vpop.f32.mrf.mxu0
  %v5135 = vadd.f32 %v4734, %v5134
  %5136 = vmatmul.f32.gmra.mxu0 %v4221
  %v5137 = vpop.f32.mrf.mxu0
  %v5138 = vadd.f32 %v4737, %v5137
  %5139 = vmatmul.f32.gmra.mxu0 %v4225
  %v5140 = vpop.f32.mrf.mxu0
  %v5141 = vadd.f32 %v4740, %v5140
  %5142 = vmatmul.f32.gmra.mxu0 %v4229
  %v5143 = vpop.f32.mrf.mxu0
  %v5144 = vadd.f32 %v4743, %v5143
  %5145 = vmatmul.f32.gmra.mxu0 %v4233
  %v5146 = vpop.f32.mrf.mxu0
  %v5147 = vadd.f32 %v4746, %v5146
  %5148 = vmatmul.f32.gmra.mxu0 %v4237
  %v5149 = vpop.f32.mrf.mxu0
  %v5150 = vadd.f32 %v4749, %v5149
  %5151 = vmatmul.f32.gmra.mxu0 %v4241
  %v5152 = vpop.f32.mrf.mxu0
  %v5153 = vadd.f32 %v4752, %v5152
  %5154 = vmatmul.f32.gmra.mxu0 %v4245
  %v5155 = vpop.f32.mrf.mxu0
  %v5156 = vadd.f32 %v4755, %v5155
  %5157 = vmatmul.f32.gmra.mxu0 %v4249
  %v5158 = vpop.f32.mrf.mxu0
  %v5159 = vadd.f32 %v4758, %v5158
  %5160 = vmatmul.f32.gmra.mxu0 %v4253
  %v5161 = vpop.f32.mrf.mxu0
  %v5162 = vadd.f32 %v4761, %v5161
  %5163 = vmatmul.f32.gmra.mxu0 %v4257
  %v5164 = vpop.f32.mrf.mxu0
  %v5165 = vadd.f32 %v4764, %v5164
  %5166 = vmatmul.f32.gmra.mxu0 %v4261
  %v5167 = vpop.f32.mrf.mxu0
  %v5168 = vadd.f32 %v4767, %v5167
  %5169 = vmatmul.f32.gmra.mxu0 %v4265
  %v5170 = vpop.f32.mrf.mxu0
  %v5171 = vadd.f32 %v4770, %v5170
  %5172 = vmatmul.f32.gmra.mxu0 %v4269
  %v5173 = vpop.f32.mrf.mxu0
  %v5174 = vadd.f32 %v4773, %v5173
  %5175 = vmatmul.f32.gmra.mxu0 %v4273
  %v5176 = vpop.f32.mrf.mxu0
  %v5177 = vadd.f32 %v4776, %v5176
  %5178 = vmatmul.f32.gmra.mxu0 %v4277
  %v5179 = vpop.f32.mrf.mxu0
  %v5180 = vadd.f32 %v4779, %v5179
  %5181 = vmatmul.f32.gmra.mxu0 %v4281
  %v5182 = vpop.f32.mrf.mxu0
  %v5183 = vadd.f32 %v4782, %v5182
  %5184 = vmatmul.f32.gmra.mxu0 %v4285
  %v5185 = vpop.f32.mrf.mxu0
  %v5186 = vadd.f32 %v4785, %v5185
  %5187 = vmatmul.f32.gmra.mxu0 %v4289
  %v5188 = vpop.f32.mrf.mxu0
  %v5189 = vadd.f32 %v4788, %v5188
  %5190 = vmatmul.f32.gmra.mxu0 %v4293
  %v5191 = vpop.f32.mrf.mxu0
  %v5192 = vadd.f32 %v4791, %v5191
  %5193 = vmatmul.f32.gmra.mxu0 %v4297
  %v5194 = vpop.f32.mrf.mxu0
  %v5195 = vadd.f32 %v4794, %v5194
  %5196 = vmatmul.f32.gmra.mxu0 %v4301
  %v5197 = vpop.f32.mrf.mxu0
  %v5198 = vadd.f32 %v4797, %v5197
  %5199 = vmatmul.f32.gmra.mxu0 %v4305
  %v5200 = vpop.f32.mrf.mxu0
  %v5201 = vadd.f32 %v4800, %v5200
  %5202 = vmatmul.f32.gmra.mxu0 %v4309
  %v5203 = vpop.f32.mrf.mxu0
  %v5204 = vadd.f32 %v4803, %v5203
  %5205 = vmatmul.f32.gmra.mxu0 %v4313
  %v5206 = vpop.f32.mrf.mxu0
  %v5207 = vadd.f32 %v4806, %v5206
  %5208 = vmatmul.f32.gmra.mxu0 %v4317
  %v5209 = vpop.f32.mrf.mxu0
  %v5210 = vadd.f32 %v4809, %v5209
  %5211 = vmatmul.f32.gmra.mxu0 %v4321
  %v5212 = vpop.f32.mrf.mxu0
  %v5213 = vadd.f32 %v4812, %v5212
  %5214 = vmatmul.f32.gmra.mxu0 %v4325
  %v5215 = vpop.f32.mrf.mxu0
  %v5216 = vadd.f32 %v4815, %v5215
  %5217 = vmatmul.f32.gmra.mxu0 %v4329
  %v5218 = vpop.f32.mrf.mxu0
  %v5219 = vadd.f32 %v4818, %v5218
  %5220 = vmatmul.f32.gmra.mxu0 %v4333
  %v5221 = vpop.f32.mrf.mxu0
  %v5222 = vadd.f32 %v4821, %v5221
  %5223 = vmatmul.f32.gmra.mxu0 %v4337
  %v5224 = vpop.f32.mrf.mxu0
  %v5225 = vadd.f32 %v4824, %v5224
  %5226 = vmatmul.f32.gmra.mxu0 %v4341
  %v5227 = vpop.f32.mrf.mxu0
  %v5228 = vadd.f32 %v4827, %v5227
  %5229 = vmatmul.f32.gmra.mxu0 %v4345
  %v5230 = vpop.f32.mrf.mxu0
  %v5231 = vadd.f32 %v4830, %v5230
  %5232 = vmatmul.f32.gmra.mxu0 %v4349
  %v5233 = vpop.f32.mrf.mxu0
  %v5234 = vadd.f32 %v4833, %v5233
  %5235 = vmatmul.f32.gmra.mxu0 %v4353
  %v5236 = vpop.f32.mrf.mxu0
  %v5237 = vadd.f32 %v4836, %v5236
  %5238 = vmatmul.f32.gmra.mxu0 %v4357
  %v5239 = vpop.f32.mrf.mxu0
  %v5240 = vadd.f32 %v4839, %v5239
  %5241 = vmatmul.f32.gmra.mxu0 %v4361
  %v5242 = vpop.f32.mrf.mxu0
  %v5243 = vadd.f32 %v4842, %v5242
  %5244 = vmatmul.f32.gmra.mxu0 %v4365
  %v5245 = vpop.f32.mrf.mxu0
  %v5246 = vadd.f32 %v4845, %v5245
  %5247 = vmatmul.f32.gmra.mxu0 %v4369
  %v5248 = vpop.f32.mrf.mxu0
  %v5249 = vadd.f32 %v4848, %v5248
  %5250 = vmatmul.f32.gmra.mxu0 %v4373
  %v5251 = vpop.f32.mrf.mxu0
  %v5252 = vadd.f32 %v4851, %v5251
  %5253 = vmatmul.f32.gmra.mxu0 %v4377
  %v5254 = vpop.f32.mrf.mxu0
  %v5255 = vadd.f32 %v4854, %v5254
  %5256 = vmatmul.f32.gmra.mxu0 %v4381
  %v5257 = vpop.f32.mrf.mxu0
  %v5258 = vadd.f32 %v4857, %v5257
  %5259 = vmatmul.f32.gmra.mxu0 %v4385
  %v5260 = vpop.f32.mrf.mxu0
  %v5261 = vadd.f32 %v4860, %v5260
  %5262 = vmatmul.f32.gmra.mxu0 %v4389
  %v5263 = vpop.f32.mrf.mxu0
  %v5264 = vadd.f32 %v4863, %v5263
  %5265 = vmatmul.f32.gmra.mxu0 %v4393
  %v5266 = vpop.f32.mrf.mxu0
  %v5267 = vadd.f32 %v4866, %v5266
  %5268 = vmatmul.f32.gmra.mxu0 %v4397
  %v5269 = vpop.f32.mrf.mxu0
  %v5270 = vadd.f32 %v4869, %v5269
  %5271 = vmatmul.f32.gmra.mxu0 %v4401
  %v5272 = vpop.f32.mrf.mxu0
  %v5273 = vadd.f32 %v4872, %v5272
  %5274 = vmatmul.f32.gmra.mxu0 %v4405
  %v5275 = vpop.f32.mrf.mxu0
  %v5276 = vadd.f32 %v4875, %v5275
  %5277 = vmatmul.f32.gmra.mxu0 %v4409
  %v5278 = vpop.f32.mrf.mxu0
  %v5279 = vadd.f32 %v4878, %v5278
  %5280 = vmatmul.f32.gmra.mxu0 %v4413
  %v5281 = vpop.f32.mrf.mxu0
  %v5282 = vadd.f32 %v4881, %v5281
  %5283 = vmatmul.f32.gmra.mxu0 %v4417
  %v5284 = vpop.f32.mrf.mxu0
  %v5285 = vadd.f32 %v4884, %v5284
  %5286 = vmatmul.f32.gmra.mxu0 %v4421
  %v5287 = vpop.f32.mrf.mxu0
  %v5288 = vadd.f32 %v4887, %v5287
  %5289 = vdwg.mxu0
  %5290 = vmatpush.msra.mxu0 %v4471
  %5291 = vmatpush.msra.mxu0 %v4470
  %5292 = vmatpush.msra.mxu0 %v4469
  %5293 = vmatpush.msra.mxu0 %v4468
  %5294 = vmatpush.msra.mxu0 %v4467
  %5295 = vmatpush.msra.mxu0 %v4466
  %5296 = vmatpush.msra.mxu0 %v4465
  %5297 = vmatpush.msra.mxu0 %v4464
  %5298 = vmatpush.msra.mxu0 %v4463
  %5299 = vmatpush.msra.mxu0 %v4462
  %5300 = vmatpush.msra.mxu0 %v4461
  %5301 = vmatpush.msra.mxu0 %v4460
  %5302 = vmatpush.msra.mxu0 %v4459
  %5303 = vmatpush.msra.mxu0 %v4458
  %5304 = vmatpush.msra.mxu0 %v4457
  %5305 = vmatpush.msra.mxu0 %v4456
  %5306 = vmatmul.f32.gmra.mxu0 %v3914
  %v5307 = vpop.f32.mrf.mxu0
  %v5308 = vadd.f32 %v4907, %v5307
  %5309 = vmatmul.f32.gmra.mxu0 %v3918
  %v5310 = vpop.f32.mrf.mxu0
  %v5311 = vadd.f32 %v4910, %v5310
  %5312 = vmatmul.f32.gmra.mxu0 %v3922
  %v5313 = vpop.f32.mrf.mxu0
  %v5314 = vadd.f32 %v4913, %v5313
  %5315 = vmatmul.f32.gmra.mxu0 %v3926
  %v5316 = vpop.f32.mrf.mxu0
  %v5317 = vadd.f32 %v4916, %v5316
  %5318 = vmatmul.f32.gmra.mxu0 %v3930
  %v5319 = vpop.f32.mrf.mxu0
  %v5320 = vadd.f32 %v4919, %v5319
  %5321 = vmatmul.f32.gmra.mxu0 %v3934
  %v5322 = vpop.f32.mrf.mxu0
  %v5323 = vadd.f32 %v4922, %v5322
  %5324 = vmatmul.f32.gmra.mxu0 %v3938
  %v5325 = vpop.f32.mrf.mxu0
  %v5326 = vadd.f32 %v4925, %v5325
  %5327 = vmatmul.f32.gmra.mxu0 %v3942
  %v5328 = vpop.f32.mrf.mxu0
  %v5329 = vadd.f32 %v4928, %v5328
  %5330 = vmatmul.f32.gmra.mxu0 %v3946
  %v5331 = vpop.f32.mrf.mxu0
  %v5332 = vadd.f32 %v4931, %v5331
  %5333 = vmatmul.f32.gmra.mxu0 %v3950
  %v5334 = vpop.f32.mrf.mxu0
  %v5335 = vadd.f32 %v4934, %v5334
  %5336 = vmatmul.f32.gmra.mxu0 %v3954
  %v5337 = vpop.f32.mrf.mxu0
  %v5338 = vadd.f32 %v4937, %v5337
  %5339 = vmatmul.f32.gmra.mxu0 %v3958
  %v5340 = vpop.f32.mrf.mxu0
  %v5341 = vadd.f32 %v4940, %v5340
  %5342 = vmatmul.f32.gmra.mxu0 %v3962
  %v5343 = vpop.f32.mrf.mxu0
  %v5344 = vadd.f32 %v4943, %v5343
  %5345 = vmatmul.f32.gmra.mxu0 %v3966
  %v5346 = vpop.f32.mrf.mxu0
  %v5347 = vadd.f32 %v4946, %v5346
  %5348 = vmatmul.f32.gmra.mxu0 %v3970
  %v5349 = vpop.f32.mrf.mxu0
  %v5350 = vadd.f32 %v4949, %v5349
  %5351 = vmatmul.f32.gmra.mxu0 %v3974
  %v5352 = vpop.f32.mrf.mxu0
  %v5353 = vadd.f32 %v4952, %v5352
  %5354 = vmatmul.f32.gmra.mxu0 %v3978
  %v5355 = vpop.f32.mrf.mxu0
  %v5356 = vadd.f32 %v4955, %v5355
  %5357 = vmatmul.f32.gmra.mxu0 %v3982
  %v5358 = vpop.f32.mrf.mxu0
  %v5359 = vadd.f32 %v4958, %v5358
  %5360 = vmatmul.f32.gmra.mxu0 %v3986
  %v5361 = vpop.f32.mrf.mxu0
  %v5362 = vadd.f32 %v4961, %v5361
  %5363 = vmatmul.f32.gmra.mxu0 %v3990
  %v5364 = vpop.f32.mrf.mxu0
  %v5365 = vadd.f32 %v4964, %v5364
  %5366 = vmatmul.f32.gmra.mxu0 %v3994
  %v5367 = vpop.f32.mrf.mxu0
  %v5368 = vadd.f32 %v4967, %v5367
  %5369 = vmatmul.f32.gmra.mxu0 %v3998
  %v5370 = vpop.f32.mrf.mxu0
  %v5371 = vadd.f32 %v4970, %v5370
  %5372 = vmatmul.f32.gmra.mxu0 %v4002
  %v5373 = vpop.f32.mrf.mxu0
  %v5374 = vadd.f32 %v4973, %v5373
  %5375 = vmatmul.f32.gmra.mxu0 %v4006
  %v5376 = vpop.f32.mrf.mxu0
  %v5377 = vadd.f32 %v4976, %v5376
  %5378 = vmatmul.f32.gmra.mxu0 %v4010
  %v5379 = vpop.f32.mrf.mxu0
  %v5380 = vadd.f32 %v4979, %v5379
  %5381 = vmatmul.f32.gmra.mxu0 %v4014
  %v5382 = vpop.f32.mrf.mxu0
  %v5383 = vadd.f32 %v4982, %v5382
  %5384 = vmatmul.f32.gmra.mxu0 %v4018
  %v5385 = vpop.f32.mrf.mxu0
  %v5386 = vadd.f32 %v4985, %v5385
  %5387 = vmatmul.f32.gmra.mxu0 %v4022
  %v5388 = vpop.f32.mrf.mxu0
  %v5389 = vadd.f32 %v4988, %v5388
  %5390 = vmatmul.f32.gmra.mxu0 %v4026
  %v5391 = vpop.f32.mrf.mxu0
  %v5392 = vadd.f32 %v4991, %v5391
  %5393 = vmatmul.f32.gmra.mxu0 %v4030
  %v5394 = vpop.f32.mrf.mxu0
  %v5395 = vadd.f32 %v4994, %v5394
  %5396 = vmatmul.f32.gmra.mxu0 %v4034
  %v5397 = vpop.f32.mrf.mxu0
  %v5398 = vadd.f32 %v4997, %v5397
  %5399 = vmatmul.f32.gmra.mxu0 %v4038
  %v5400 = vpop.f32.mrf.mxu0
  %v5401 = vadd.f32 %v5000, %v5400
  %5402 = vmatmul.f32.gmra.mxu0 %v4042
  %v5403 = vpop.f32.mrf.mxu0
  %v5404 = vadd.f32 %v5003, %v5403
  %5405 = vmatmul.f32.gmra.mxu0 %v4046
  %v5406 = vpop.f32.mrf.mxu0
  %v5407 = vadd.f32 %v5006, %v5406
  %5408 = vmatmul.f32.gmra.mxu0 %v4050
  %v5409 = vpop.f32.mrf.mxu0
  %v5410 = vadd.f32 %v5009, %v5409
  %5411 = vmatmul.f32.gmra.mxu0 %v4054
  %v5412 = vpop.f32.mrf.mxu0
  %v5413 = vadd.f32 %v5012, %v5412
  %5414 = vmatmul.f32.gmra.mxu0 %v4058
  %v5415 = vpop.f32.mrf.mxu0
  %v5416 = vadd.f32 %v5015, %v5415
  %5417 = vmatmul.f32.gmra.mxu0 %v4062
  %v5418 = vpop.f32.mrf.mxu0
  %v5419 = vadd.f32 %v5018, %v5418
  %5420 = vmatmul.f32.gmra.mxu0 %v4066
  %v5421 = vpop.f32.mrf.mxu0
  %v5422 = vadd.f32 %v5021, %v5421
  %5423 = vmatmul.f32.gmra.mxu0 %v4070
  %v5424 = vpop.f32.mrf.mxu0
  %v5425 = vadd.f32 %v5024, %v5424
  %5426 = vmatmul.f32.gmra.mxu0 %v4074
  %v5427 = vpop.f32.mrf.mxu0
  %v5428 = vadd.f32 %v5027, %v5427
  %5429 = vmatmul.f32.gmra.mxu0 %v4078
  %v5430 = vpop.f32.mrf.mxu0
  %v5431 = vadd.f32 %v5030, %v5430
  %5432 = vmatmul.f32.gmra.mxu0 %v4082
  %v5433 = vpop.f32.mrf.mxu0
  %v5434 = vadd.f32 %v5033, %v5433
  %5435 = vmatmul.f32.gmra.mxu0 %v4086
  %v5436 = vpop.f32.mrf.mxu0
  %v5437 = vadd.f32 %v5036, %v5436
  %5438 = vmatmul.f32.gmra.mxu0 %v4090
  %v5439 = vpop.f32.mrf.mxu0
  %v5440 = vadd.f32 %v5039, %v5439
  %5441 = vmatmul.f32.gmra.mxu0 %v4094
  %v5442 = vpop.f32.mrf.mxu0
  %v5443 = vadd.f32 %v5042, %v5442
  %5444 = vmatmul.f32.gmra.mxu0 %v4098
  %v5445 = vpop.f32.mrf.mxu0
  %v5446 = vadd.f32 %v5045, %v5445
  %5447 = vmatmul.f32.gmra.mxu0 %v4102
  %v5448 = vpop.f32.mrf.mxu0
  %v5449 = vadd.f32 %v5048, %v5448
  %5450 = vmatmul.f32.gmra.mxu0 %v4106
  %v5451 = vpop.f32.mrf.mxu0
  %v5452 = vadd.f32 %v5051, %v5451
  %5453 = vmatmul.f32.gmra.mxu0 %v4110
  %v5454 = vpop.f32.mrf.mxu0
  %v5455 = vadd.f32 %v5054, %v5454
  %5456 = vmatmul.f32.gmra.mxu0 %v4114
  %v5457 = vpop.f32.mrf.mxu0
  %v5458 = vadd.f32 %v5057, %v5457
  %5459 = vmatmul.f32.gmra.mxu0 %v4118
  %v5460 = vpop.f32.mrf.mxu0
  %v5461 = vadd.f32 %v5060, %v5460
  %5462 = vmatmul.f32.gmra.mxu0 %v4122
  %v5463 = vpop.f32.mrf.mxu0
  %v5464 = vadd.f32 %v5063, %v5463
  %5465 = vmatmul.f32.gmra.mxu0 %v4126
  %v5466 = vpop.f32.mrf.mxu0
  %v5467 = vadd.f32 %v5066, %v5466
  %5468 = vmatmul.f32.gmra.mxu0 %v4130
  %v5469 = vpop.f32.mrf.mxu0
  %v5470 = vadd.f32 %v5069, %v5469
  %5471 = vmatmul.f32.gmra.mxu0 %v4134
  %v5472 = vpop.f32.mrf.mxu0
  %v5473 = vadd.f32 %v5072, %v5472
  %5474 = vmatmul.f32.gmra.mxu0 %v4138
  %v5475 = vpop.f32.mrf.mxu0
  %v5476 = vadd.f32 %v5075, %v5475
  %5477 = vmatmul.f32.gmra.mxu0 %v4142
  %v5478 = vpop.f32.mrf.mxu0
  %v5479 = vadd.f32 %v5078, %v5478
  %5480 = vmatmul.f32.gmra.mxu0 %v4146
  %v5481 = vpop.f32.mrf.mxu0
  %v5482 = vadd.f32 %v5081, %v5481
  %5483 = vmatmul.f32.gmra.mxu0 %v4150
  %v5484 = vpop.f32.mrf.mxu0
  %v5485 = vadd.f32 %v5084, %v5484
  %5486 = vmatmul.f32.gmra.mxu0 %v4154
  %v5487 = vpop.f32.mrf.mxu0
  %v5488 = vadd.f32 %v5087, %v5487
  %5489 = vmatmul.f32.gmra.mxu0 %v4158
  %v5490 = vpop.f32.mrf.mxu0
  %v5491 = vadd.f32 %v5090, %v5490
  %5492 = vmatmul.f32.gmra.mxu0 %v4162
  %v5493 = vpop.f32.mrf.mxu0
  %v5494 = vadd.f32 %v5093, %v5493
  %5495 = vmatmul.f32.gmra.mxu0 %v4166
  %v5496 = vpop.f32.mrf.mxu0
  %v5497 = vadd.f32 %v5096, %v5496
  %5498 = vmatmul.f32.gmra.mxu0 %v4170
  %v5499 = vpop.f32.mrf.mxu0
  %v5500 = vadd.f32 %v5099, %v5499
  %5501 = vmatmul.f32.gmra.mxu0 %v4174
  %v5502 = vpop.f32.mrf.mxu0
  %v5503 = vadd.f32 %v5102, %v5502
  %5504 = vmatmul.f32.gmra.mxu0 %v4178
  %v5505 = vpop.f32.mrf.mxu0
  %v5506 = vadd.f32 %v5105, %v5505
  %5507 = vmatmul.f32.gmra.mxu0 %v4182
  %v5508 = vpop.f32.mrf.mxu0
  %v5509 = vadd.f32 %v5108, %v5508
  %5510 = vmatmul.f32.gmra.mxu0 %v4186
  %v5511 = vpop.f32.mrf.mxu0
  %v5512 = vadd.f32 %v5111, %v5511
  %5513 = vmatmul.f32.gmra.mxu0 %v4190
  %v5514 = vpop.f32.mrf.mxu0
  %v5515 = vadd.f32 %v5114, %v5514
  %5516 = vmatmul.f32.gmra.mxu0 %v4194
  %v5517 = vpop.f32.mrf.mxu0
  %v5518 = vadd.f32 %v5117, %v5517
  %5519 = vmatmul.f32.gmra.mxu0 %v4198
  %v5520 = vpop.f32.mrf.mxu0
  %v5521 = vadd.f32 %v5120, %v5520
  %5522 = vmatmul.f32.gmra.mxu0 %v4202
  %v5523 = vpop.f32.mrf.mxu0
  %v5524 = vadd.f32 %v5123, %v5523
  %5525 = vmatmul.f32.gmra.mxu0 %v4206
  %v5526 = vpop.f32.mrf.mxu0
  %v5527 = vadd.f32 %v5126, %v5526
  %5528 = vmatmul.f32.gmra.mxu0 %v4210
  %v5529 = vpop.f32.mrf.mxu0
  %v5530 = vadd.f32 %v5129, %v5529
  %5531 = vmatmul.f32.gmra.mxu0 %v4214
  %v5532 = vpop.f32.mrf.mxu0
  %v5533 = vadd.f32 %v5132, %v5532
  %5534 = vmatmul.f32.gmra.mxu0 %v4218
  %v5535 = vpop.f32.mrf.mxu0
  %v5536 = vadd.f32 %v5135, %v5535
  %5537 = vmatmul.f32.gmra.mxu0 %v4222
  %v5538 = vpop.f32.mrf.mxu0
  %v5539 = vadd.f32 %v5138, %v5538
  %5540 = vmatmul.f32.gmra.mxu0 %v4226
  %v5541 = vpop.f32.mrf.mxu0
  %v5542 = vadd.f32 %v5141, %v5541
  %5543 = vmatmul.f32.gmra.mxu0 %v4230
  %v5544 = vpop.f32.mrf.mxu0
  %v5545 = vadd.f32 %v5144, %v5544
  %5546 = vmatmul.f32.gmra.mxu0 %v4234
  %v5547 = vpop.f32.mrf.mxu0
  %v5548 = vadd.f32 %v5147, %v5547
  %5549 = vmatmul.f32.gmra.mxu0 %v4238
  %v5550 = vpop.f32.mrf.mxu0
  %v5551 = vadd.f32 %v5150, %v5550
  %5552 = vmatmul.f32.gmra.mxu0 %v4242
  %v5553 = vpop.f32.mrf.mxu0
  %v5554 = vadd.f32 %v5153, %v5553
  %5555 = vmatmul.f32.gmra.mxu0 %v4246
  %v5556 = vpop.f32.mrf.mxu0
  %v5557 = vadd.f32 %v5156, %v5556
  %5558 = vmatmul.f32.gmra.mxu0 %v4250
  %v5559 = vpop.f32.mrf.mxu0
  %v5560 = vadd.f32 %v5159, %v5559
  %5561 = vmatmul.f32.gmra.mxu0 %v4254
  %v5562 = vpop.f32.mrf.mxu0
  %v5563 = vadd.f32 %v5162, %v5562
  %5564 = vmatmul.f32.gmra.mxu0 %v4258
  %v5565 = vpop.f32.mrf.mxu0
  %v5566 = vadd.f32 %v5165, %v5565
  %5567 = vmatmul.f32.gmra.mxu0 %v4262
  %v5568 = vpop.f32.mrf.mxu0
  %v5569 = vadd.f32 %v5168, %v5568
  %5570 = vmatmul.f32.gmra.mxu0 %v4266
  %v5571 = vpop.f32.mrf.mxu0
  %v5572 = vadd.f32 %v5171, %v5571
  %5573 = vmatmul.f32.gmra.mxu0 %v4270
  %v5574 = vpop.f32.mrf.mxu0
  %v5575 = vadd.f32 %v5174, %v5574
  %5576 = vmatmul.f32.gmra.mxu0 %v4274
  %v5577 = vpop.f32.mrf.mxu0
  %v5578 = vadd.f32 %v5177, %v5577
  %5579 = vmatmul.f32.gmra.mxu0 %v4278
  %v5580 = vpop.f32.mrf.mxu0
  %v5581 = vadd.f32 %v5180, %v5580
  %5582 = vmatmul.f32.gmra.mxu0 %v4282
  %v5583 = vpop.f32.mrf.mxu0
  %v5584 = vadd.f32 %v5183, %v5583
  %5585 = vmatmul.f32.gmra.mxu0 %v4286
  %v5586 = vpop.f32.mrf.mxu0
  %v5587 = vadd.f32 %v5186, %v5586
  %5588 = vmatmul.f32.gmra.mxu0 %v4290
  %v5589 = vpop.f32.mrf.mxu0
  %v5590 = vadd.f32 %v5189, %v5589
  %5591 = vmatmul.f32.gmra.mxu0 %v4294
  %v5592 = vpop.f32.mrf.mxu0
  %v5593 = vadd.f32 %v5192, %v5592
  %5594 = vmatmul.f32.gmra.mxu0 %v4298
  %v5595 = vpop.f32.mrf.mxu0
  %v5596 = vadd.f32 %v5195, %v5595
  %5597 = vmatmul.f32.gmra.mxu0 %v4302
  %v5598 = vpop.f32.mrf.mxu0
  %v5599 = vadd.f32 %v5198, %v5598
  %5600 = vmatmul.f32.gmra.mxu0 %v4306
  %v5601 = vpop.f32.mrf.mxu0
  %v5602 = vadd.f32 %v5201, %v5601
  %5603 = vmatmul.f32.gmra.mxu0 %v4310
  %v5604 = vpop.f32.mrf.mxu0
  %v5605 = vadd.f32 %v5204, %v5604
  %5606 = vmatmul.f32.gmra.mxu0 %v4314
  %v5607 = vpop.f32.mrf.mxu0
  %v5608 = vadd.f32 %v5207, %v5607
  %5609 = vmatmul.f32.gmra.mxu0 %v4318
  %v5610 = vpop.f32.mrf.mxu0
  %v5611 = vadd.f32 %v5210, %v5610
  %5612 = vmatmul.f32.gmra.mxu0 %v4322
  %v5613 = vpop.f32.mrf.mxu0
  %v5614 = vadd.f32 %v5213, %v5613
  %5615 = vmatmul.f32.gmra.mxu0 %v4326
  %v5616 = vpop.f32.mrf.mxu0
  %v5617 = vadd.f32 %v5216, %v5616
  %5618 = vmatmul.f32.gmra.mxu0 %v4330
  %v5619 = vpop.f32.mrf.mxu0
  %v5620 = vadd.f32 %v5219, %v5619
  %5621 = vmatmul.f32.gmra.mxu0 %v4334
  %v5622 = vpop.f32.mrf.mxu0
  %v5623 = vadd.f32 %v5222, %v5622
  %5624 = vmatmul.f32.gmra.mxu0 %v4338
  %v5625 = vpop.f32.mrf.mxu0
  %v5626 = vadd.f32 %v5225, %v5625
  %5627 = vmatmul.f32.gmra.mxu0 %v4342
  %v5628 = vpop.f32.mrf.mxu0
  %v5629 = vadd.f32 %v5228, %v5628
  %5630 = vmatmul.f32.gmra.mxu0 %v4346
  %v5631 = vpop.f32.mrf.mxu0
  %v5632 = vadd.f32 %v5231, %v5631
  %5633 = vmatmul.f32.gmra.mxu0 %v4350
  %v5634 = vpop.f32.mrf.mxu0
  %v5635 = vadd.f32 %v5234, %v5634
  %5636 = vmatmul.f32.gmra.mxu0 %v4354
  %v5637 = vpop.f32.mrf.mxu0
  %v5638 = vadd.f32 %v5237, %v5637
  %5639 = vmatmul.f32.gmra.mxu0 %v4358
  %v5640 = vpop.f32.mrf.mxu0
  %v5641 = vadd.f32 %v5240, %v5640
  %5642 = vmatmul.f32.gmra.mxu0 %v4362
  %v5643 = vpop.f32.mrf.mxu0
  %v5644 = vadd.f32 %v5243, %v5643
  %5645 = vmatmul.f32.gmra.mxu0 %v4366
  %v5646 = vpop.f32.mrf.mxu0
  %v5647 = vadd.f32 %v5246, %v5646
  %5648 = vmatmul.f32.gmra.mxu0 %v4370
  %v5649 = vpop.f32.mrf.mxu0
  %v5650 = vadd.f32 %v5249, %v5649
  %5651 = vmatmul.f32.gmra.mxu0 %v4374
  %v5652 = vpop.f32.mrf.mxu0
  %v5653 = vadd.f32 %v5252, %v5652
  %5654 = vmatmul.f32.gmra.mxu0 %v4378
  %v5655 = vpop.f32.mrf.mxu0
  %v5656 = vadd.f32 %v5255, %v5655
  %5657 = vmatmul.f32.gmra.mxu0 %v4382
  %v5658 = vpop.f32.mrf.mxu0
  %v5659 = vadd.f32 %v5258, %v5658
  %5660 = vmatmul.f32.gmra.mxu0 %v4386
  %v5661 = vpop.f32.mrf.mxu0
  %v5662 = vadd.f32 %v5261, %v5661
  %5663 = vmatmul.f32.gmra.mxu0 %v4390
  %v5664 = vpop.f32.mrf.mxu0
  %v5665 = vadd.f32 %v5264, %v5664
  %5666 = vmatmul.f32.gmra.mxu0 %v4394
  %v5667 = vpop.f32.mrf.mxu0
  %v5668 = vadd.f32 %v5267, %v5667
  %5669 = vmatmul.f32.gmra.mxu0 %v4398
  %v5670 = vpop.f32.mrf.mxu0
  %v5671 = vadd.f32 %v5270, %v5670
  %5672 = vmatmul.f32.gmra.mxu0 %v4402
  %v5673 = vpop.f32.mrf.mxu0
  %v5674 = vadd.f32 %v5273, %v5673
  %5675 = vmatmul.f32.gmra.mxu0 %v4406
  %v5676 = vpop.f32.mrf.mxu0
  %v5677 = vadd.f32 %v5276, %v5676
  %5678 = vmatmul.f32.gmra.mxu0 %v4410
  %v5679 = vpop.f32.mrf.mxu0
  %v5680 = vadd.f32 %v5279, %v5679
  %5681 = vmatmul.f32.gmra.mxu0 %v4414
  %v5682 = vpop.f32.mrf.mxu0
  %v5683 = vadd.f32 %v5282, %v5682
  %5684 = vmatmul.f32.gmra.mxu0 %v4418
  %v5685 = vpop.f32.mrf.mxu0
  %v5686 = vadd.f32 %v5285, %v5685
  %5687 = vmatmul.f32.gmra.mxu0 %v4422
  %v5688 = vpop.f32.mrf.mxu0
  %v5689 = vadd.f32 %v5288, %v5688
  %5690 = vdwg.mxu0
  %5691 = vmatpush.msra.mxu0 %v4487
  %5692 = vmatpush.msra.mxu0 %v4486
  %5693 = vmatpush.msra.mxu0 %v4485
  %5694 = vmatpush.msra.mxu0 %v4484
  %5695 = vmatpush.msra.mxu0 %v4483
  %5696 = vmatpush.msra.mxu0 %v4482
  %5697 = vmatpush.msra.mxu0 %v4481
  %5698 = vmatpush.msra.mxu0 %v4480
  %5699 = vmatpush.msra.mxu0 %v4479
  %5700 = vmatpush.msra.mxu0 %v4478
  %5701 = vmatpush.msra.mxu0 %v4477
  %5702 = vmatpush.msra.mxu0 %v4476
  %5703 = vmatpush.msra.mxu0 %v4475
  %5704 = vmatpush.msra.mxu0 %v4474
  %5705 = vmatpush.msra.mxu0 %v4473
  %5706 = vmatpush.msra.mxu0 %v4472
  %5707 = vmatmul.f32.gmra.mxu0 %v3915
  %v5708 = vpop.f32.mrf.mxu0
  %v5709 = vadd.f32 %v5308, %v5708
  %5710 = vmatmul.f32.gmra.mxu0 %v3919
  %v5711 = vpop.f32.mrf.mxu0
  %v5712 = vadd.f32 %v5311, %v5711
  %5713 = vmatmul.f32.gmra.mxu0 %v3923
  %v5714 = vpop.f32.mrf.mxu0
  %v5715 = vadd.f32 %v5314, %v5714
  %5716 = vmatmul.f32.gmra.mxu0 %v3927
  %v5717 = vpop.f32.mrf.mxu0
  %v5718 = vadd.f32 %v5317, %v5717
  %5719 = vmatmul.f32.gmra.mxu0 %v3931
  %v5720 = vpop.f32.mrf.mxu0
  %v5721 = vadd.f32 %v5320, %v5720
  %5722 = vmatmul.f32.gmra.mxu0 %v3935
  %v5723 = vpop.f32.mrf.mxu0
  %v5724 = vadd.f32 %v5323, %v5723
  %5725 = vmatmul.f32.gmra.mxu0 %v3939
  %v5726 = vpop.f32.mrf.mxu0
  %v5727 = vadd.f32 %v5326, %v5726
  %5728 = vmatmul.f32.gmra.mxu0 %v3943
  %v5729 = vpop.f32.mrf.mxu0
  %v5730 = vadd.f32 %v5329, %v5729
  %5731 = vmatmul.f32.gmra.mxu0 %v3947
  %v5732 = vpop.f32.mrf.mxu0
  %v5733 = vadd.f32 %v5332, %v5732
  %5734 = vmatmul.f32.gmra.mxu0 %v3951
  %v5735 = vpop.f32.mrf.mxu0
  %v5736 = vadd.f32 %v5335, %v5735
  %5737 = vmatmul.f32.gmra.mxu0 %v3955
  %v5738 = vpop.f32.mrf.mxu0
  %v5739 = vadd.f32 %v5338, %v5738
  %5740 = vmatmul.f32.gmra.mxu0 %v3959
  %v5741 = vpop.f32.mrf.mxu0
  %v5742 = vadd.f32 %v5341, %v5741
  %5743 = vmatmul.f32.gmra.mxu0 %v3963
  %v5744 = vpop.f32.mrf.mxu0
  %v5745 = vadd.f32 %v5344, %v5744
  %5746 = vmatmul.f32.gmra.mxu0 %v3967
  %v5747 = vpop.f32.mrf.mxu0
  %v5748 = vadd.f32 %v5347, %v5747
  %5749 = vmatmul.f32.gmra.mxu0 %v3971
  %v5750 = vpop.f32.mrf.mxu0
  %v5751 = vadd.f32 %v5350, %v5750
  %5752 = vmatmul.f32.gmra.mxu0 %v3975
  %v5753 = vpop.f32.mrf.mxu0
  %v5754 = vadd.f32 %v5353, %v5753
  %5755 = vmatmul.f32.gmra.mxu0 %v3979
  %v5756 = vpop.f32.mrf.mxu0
  %v5757 = vadd.f32 %v5356, %v5756
  %5758 = vmatmul.f32.gmra.mxu0 %v3983
  %v5759 = vpop.f32.mrf.mxu0
  %v5760 = vadd.f32 %v5359, %v5759
  %5761 = vmatmul.f32.gmra.mxu0 %v3987
  %v5762 = vpop.f32.mrf.mxu0
  %v5763 = vadd.f32 %v5362, %v5762
  %5764 = vmatmul.f32.gmra.mxu0 %v3991
  %v5765 = vpop.f32.mrf.mxu0
  %v5766 = vadd.f32 %v5365, %v5765
  %5767 = vmatmul.f32.gmra.mxu0 %v3995
  %v5768 = vpop.f32.mrf.mxu0
  %v5769 = vadd.f32 %v5368, %v5768
  %5770 = vmatmul.f32.gmra.mxu0 %v3999
  %v5771 = vpop.f32.mrf.mxu0
  %v5772 = vadd.f32 %v5371, %v5771
  %5773 = vmatmul.f32.gmra.mxu0 %v4003
  %v5774 = vpop.f32.mrf.mxu0
  %v5775 = vadd.f32 %v5374, %v5774
  %5776 = vmatmul.f32.gmra.mxu0 %v4007
  %v5777 = vpop.f32.mrf.mxu0
  %v5778 = vadd.f32 %v5377, %v5777
  %5779 = vmatmul.f32.gmra.mxu0 %v4011
  %v5780 = vpop.f32.mrf.mxu0
  %v5781 = vadd.f32 %v5380, %v5780
  %5782 = vmatmul.f32.gmra.mxu0 %v4015
  %v5783 = vpop.f32.mrf.mxu0
  %v5784 = vadd.f32 %v5383, %v5783
  %5785 = vmatmul.f32.gmra.mxu0 %v4019
  %v5786 = vpop.f32.mrf.mxu0
  %v5787 = vadd.f32 %v5386, %v5786
  %5788 = vmatmul.f32.gmra.mxu0 %v4023
  %v5789 = vpop.f32.mrf.mxu0
  %v5790 = vadd.f32 %v5389, %v5789
  %5791 = vmatmul.f32.gmra.mxu0 %v4027
  %v5792 = vpop.f32.mrf.mxu0
  %v5793 = vadd.f32 %v5392, %v5792
  %5794 = vmatmul.f32.gmra.mxu0 %v4031
  %v5795 = vpop.f32.mrf.mxu0
  %v5796 = vadd.f32 %v5395, %v5795
  %5797 = vmatmul.f32.gmra.mxu0 %v4035
  %v5798 = vpop.f32.mrf.mxu0
  %v5799 = vadd.f32 %v5398, %v5798
  %5800 = vmatmul.f32.gmra.mxu0 %v4039
  %v5801 = vpop.f32.mrf.mxu0
  %v5802 = vadd.f32 %v5401, %v5801
  %5803 = vmatmul.f32.gmra.mxu0 %v4043
  %v5804 = vpop.f32.mrf.mxu0
  %v5805 = vadd.f32 %v5404, %v5804
  %5806 = vmatmul.f32.gmra.mxu0 %v4047
  %v5807 = vpop.f32.mrf.mxu0
  %v5808 = vadd.f32 %v5407, %v5807
  %5809 = vmatmul.f32.gmra.mxu0 %v4051
  %v5810 = vpop.f32.mrf.mxu0
  %v5811 = vadd.f32 %v5410, %v5810
  %5812 = vmatmul.f32.gmra.mxu0 %v4055
  %v5813 = vpop.f32.mrf.mxu0
  %v5814 = vadd.f32 %v5413, %v5813
  %5815 = vmatmul.f32.gmra.mxu0 %v4059
  %v5816 = vpop.f32.mrf.mxu0
  %v5817 = vadd.f32 %v5416, %v5816
  %5818 = vmatmul.f32.gmra.mxu0 %v4063
  %v5819 = vpop.f32.mrf.mxu0
  %v5820 = vadd.f32 %v5419, %v5819
  %5821 = vmatmul.f32.gmra.mxu0 %v4067
  %v5822 = vpop.f32.mrf.mxu0
  %v5823 = vadd.f32 %v5422, %v5822
  %5824 = vmatmul.f32.gmra.mxu0 %v4071
  %v5825 = vpop.f32.mrf.mxu0
  %v5826 = vadd.f32 %v5425, %v5825
  %5827 = vmatmul.f32.gmra.mxu0 %v4075
  %v5828 = vpop.f32.mrf.mxu0
  %v5829 = vadd.f32 %v5428, %v5828
  %5830 = vmatmul.f32.gmra.mxu0 %v4079
  %v5831 = vpop.f32.mrf.mxu0
  %v5832 = vadd.f32 %v5431, %v5831
  %5833 = vmatmul.f32.gmra.mxu0 %v4083
  %v5834 = vpop.f32.mrf.mxu0
  %v5835 = vadd.f32 %v5434, %v5834
  %5836 = vmatmul.f32.gmra.mxu0 %v4087
  %v5837 = vpop.f32.mrf.mxu0
  %v5838 = vadd.f32 %v5437, %v5837
  %5839 = vmatmul.f32.gmra.mxu0 %v4091
  %v5840 = vpop.f32.mrf.mxu0
  %v5841 = vadd.f32 %v5440, %v5840
  %5842 = vmatmul.f32.gmra.mxu0 %v4095
  %v5843 = vpop.f32.mrf.mxu0
  %v5844 = vadd.f32 %v5443, %v5843
  %5845 = vmatmul.f32.gmra.mxu0 %v4099
  %v5846 = vpop.f32.mrf.mxu0
  %v5847 = vadd.f32 %v5446, %v5846
  %5848 = vmatmul.f32.gmra.mxu0 %v4103
  %v5849 = vpop.f32.mrf.mxu0
  %v5850 = vadd.f32 %v5449, %v5849
  %5851 = vmatmul.f32.gmra.mxu0 %v4107
  %v5852 = vpop.f32.mrf.mxu0
  %v5853 = vadd.f32 %v5452, %v5852
  %5854 = vmatmul.f32.gmra.mxu0 %v4111
  %v5855 = vpop.f32.mrf.mxu0
  %v5856 = vadd.f32 %v5455, %v5855
  %5857 = vmatmul.f32.gmra.mxu0 %v4115
  %v5858 = vpop.f32.mrf.mxu0
  %v5859 = vadd.f32 %v5458, %v5858
  %5860 = vmatmul.f32.gmra.mxu0 %v4119
  %v5861 = vpop.f32.mrf.mxu0
  %v5862 = vadd.f32 %v5461, %v5861
  %5863 = vmatmul.f32.gmra.mxu0 %v4123
  %v5864 = vpop.f32.mrf.mxu0
  %v5865 = vadd.f32 %v5464, %v5864
  %5866 = vmatmul.f32.gmra.mxu0 %v4127
  %v5867 = vpop.f32.mrf.mxu0
  %v5868 = vadd.f32 %v5467, %v5867
  %5869 = vmatmul.f32.gmra.mxu0 %v4131
  %v5870 = vpop.f32.mrf.mxu0
  %v5871 = vadd.f32 %v5470, %v5870
  %5872 = vmatmul.f32.gmra.mxu0 %v4135
  %v5873 = vpop.f32.mrf.mxu0
  %v5874 = vadd.f32 %v5473, %v5873
  %5875 = vmatmul.f32.gmra.mxu0 %v4139
  %v5876 = vpop.f32.mrf.mxu0
  %v5877 = vadd.f32 %v5476, %v5876
  %5878 = vmatmul.f32.gmra.mxu0 %v4143
  %v5879 = vpop.f32.mrf.mxu0
  %v5880 = vadd.f32 %v5479, %v5879
  %5881 = vmatmul.f32.gmra.mxu0 %v4147
  %v5882 = vpop.f32.mrf.mxu0
  %v5883 = vadd.f32 %v5482, %v5882
  %5884 = vmatmul.f32.gmra.mxu0 %v4151
  %v5885 = vpop.f32.mrf.mxu0
  %v5886 = vadd.f32 %v5485, %v5885
  %5887 = vmatmul.f32.gmra.mxu0 %v4155
  %v5888 = vpop.f32.mrf.mxu0
  %v5889 = vadd.f32 %v5488, %v5888
  %5890 = vmatmul.f32.gmra.mxu0 %v4159
  %v5891 = vpop.f32.mrf.mxu0
  %v5892 = vadd.f32 %v5491, %v5891
  %5893 = vmatmul.f32.gmra.mxu0 %v4163
  %v5894 = vpop.f32.mrf.mxu0
  %v5895 = vadd.f32 %v5494, %v5894
  %5896 = vmatmul.f32.gmra.mxu0 %v4167
  %v5897 = vpop.f32.mrf.mxu0
  %v5898 = vadd.f32 %v5497, %v5897
  %5899 = vmatmul.f32.gmra.mxu0 %v4171
  %v5900 = vpop.f32.mrf.mxu0
  %v5901 = vadd.f32 %v5500, %v5900
  %5902 = vmatmul.f32.gmra.mxu0 %v4175
  %v5903 = vpop.f32.mrf.mxu0
  %v5904 = vadd.f32 %v5503, %v5903
  %5905 = vmatmul.f32.gmra.mxu0 %v4179
  %v5906 = vpop.f32.mrf.mxu0
  %v5907 = vadd.f32 %v5506, %v5906
  %5908 = vmatmul.f32.gmra.mxu0 %v4183
  %v5909 = vpop.f32.mrf.mxu0
  %v5910 = vadd.f32 %v5509, %v5909
  %5911 = vmatmul.f32.gmra.mxu0 %v4187
  %v5912 = vpop.f32.mrf.mxu0
  %v5913 = vadd.f32 %v5512, %v5912
  %5914 = vmatmul.f32.gmra.mxu0 %v4191
  %v5915 = vpop.f32.mrf.mxu0
  %v5916 = vadd.f32 %v5515, %v5915
  %5917 = vmatmul.f32.gmra.mxu0 %v4195
  %v5918 = vpop.f32.mrf.mxu0
  %v5919 = vadd.f32 %v5518, %v5918
  %5920 = vmatmul.f32.gmra.mxu0 %v4199
  %v5921 = vpop.f32.mrf.mxu0
  %v5922 = vadd.f32 %v5521, %v5921
  %5923 = vmatmul.f32.gmra.mxu0 %v4203
  %v5924 = vpop.f32.mrf.mxu0
  %v5925 = vadd.f32 %v5524, %v5924
  %5926 = vmatmul.f32.gmra.mxu0 %v4207
  %v5927 = vpop.f32.mrf.mxu0
  %v5928 = vadd.f32 %v5527, %v5927
  %5929 = vmatmul.f32.gmra.mxu0 %v4211
  %v5930 = vpop.f32.mrf.mxu0
  %v5931 = vadd.f32 %v5530, %v5930
  %5932 = vmatmul.f32.gmra.mxu0 %v4215
  %v5933 = vpop.f32.mrf.mxu0
  %v5934 = vadd.f32 %v5533, %v5933
  %5935 = vmatmul.f32.gmra.mxu0 %v4219
  %v5936 = vpop.f32.mrf.mxu0
  %v5937 = vadd.f32 %v5536, %v5936
  %5938 = vmatmul.f32.gmra.mxu0 %v4223
  %v5939 = vpop.f32.mrf.mxu0
  %v5940 = vadd.f32 %v5539, %v5939
  %5941 = vmatmul.f32.gmra.mxu0 %v4227
  %v5942 = vpop.f32.mrf.mxu0
  %v5943 = vadd.f32 %v5542, %v5942
  %5944 = vmatmul.f32.gmra.mxu0 %v4231
  %v5945 = vpop.f32.mrf.mxu0
  %v5946 = vadd.f32 %v5545, %v5945
  %5947 = vmatmul.f32.gmra.mxu0 %v4235
  %v5948 = vpop.f32.mrf.mxu0
  %v5949 = vadd.f32 %v5548, %v5948
  %5950 = vmatmul.f32.gmra.mxu0 %v4239
  %v5951 = vpop.f32.mrf.mxu0
  %v5952 = vadd.f32 %v5551, %v5951
  %5953 = vmatmul.f32.gmra.mxu0 %v4243
  %v5954 = vpop.f32.mrf.mxu0
  %v5955 = vadd.f32 %v5554, %v5954
  %5956 = vmatmul.f32.gmra.mxu0 %v4247
  %v5957 = vpop.f32.mrf.mxu0
  %v5958 = vadd.f32 %v5557, %v5957
  %5959 = vmatmul.f32.gmra.mxu0 %v4251
  %v5960 = vpop.f32.mrf.mxu0
  %v5961 = vadd.f32 %v5560, %v5960
  %5962 = vmatmul.f32.gmra.mxu0 %v4255
  %v5963 = vpop.f32.mrf.mxu0
  %v5964 = vadd.f32 %v5563, %v5963
  %5965 = vmatmul.f32.gmra.mxu0 %v4259
  %v5966 = vpop.f32.mrf.mxu0
  %v5967 = vadd.f32 %v5566, %v5966
  %5968 = vmatmul.f32.gmra.mxu0 %v4263
  %v5969 = vpop.f32.mrf.mxu0
  %v5970 = vadd.f32 %v5569, %v5969
  %5971 = vmatmul.f32.gmra.mxu0 %v4267
  %v5972 = vpop.f32.mrf.mxu0
  %v5973 = vadd.f32 %v5572, %v5972
  %5974 = vmatmul.f32.gmra.mxu0 %v4271
  %v5975 = vpop.f32.mrf.mxu0
  %v5976 = vadd.f32 %v5575, %v5975
  %5977 = vmatmul.f32.gmra.mxu0 %v4275
  %v5978 = vpop.f32.mrf.mxu0
  %v5979 = vadd.f32 %v5578, %v5978
  %5980 = vmatmul.f32.gmra.mxu0 %v4279
  %v5981 = vpop.f32.mrf.mxu0
  %v5982 = vadd.f32 %v5581, %v5981
  %5983 = vmatmul.f32.gmra.mxu0 %v4283
  %v5984 = vpop.f32.mrf.mxu0
  %v5985 = vadd.f32 %v5584, %v5984
  %5986 = vmatmul.f32.gmra.mxu0 %v4287
  %v5987 = vpop.f32.mrf.mxu0
  %v5988 = vadd.f32 %v5587, %v5987
  %5989 = vmatmul.f32.gmra.mxu0 %v4291
  %v5990 = vpop.f32.mrf.mxu0
  %v5991 = vadd.f32 %v5590, %v5990
  %5992 = vmatmul.f32.gmra.mxu0 %v4295
  %v5993 = vpop.f32.mrf.mxu0
  %v5994 = vadd.f32 %v5593, %v5993
  %5995 = vmatmul.f32.gmra.mxu0 %v4299
  %v5996 = vpop.f32.mrf.mxu0
  %v5997 = vadd.f32 %v5596, %v5996
  %5998 = vmatmul.f32.gmra.mxu0 %v4303
  %v5999 = vpop.f32.mrf.mxu0
  %v6000 = vadd.f32 %v5599, %v5999
  %6001 = vmatmul.f32.gmra.mxu0 %v4307
  %v6002 = vpop.f32.mrf.mxu0
  %v6003 = vadd.f32 %v5602, %v6002
  %6004 = vmatmul.f32.gmra.mxu0 %v4311
  %v6005 = vpop.f32.mrf.mxu0
  %v6006 = vadd.f32 %v5605, %v6005
  %6007 = vmatmul.f32.gmra.mxu0 %v4315
  %v6008 = vpop.f32.mrf.mxu0
  %v6009 = vadd.f32 %v5608, %v6008
  %6010 = vmatmul.f32.gmra.mxu0 %v4319
  %v6011 = vpop.f32.mrf.mxu0
  %v6012 = vadd.f32 %v5611, %v6011
  %6013 = vmatmul.f32.gmra.mxu0 %v4323
  %v6014 = vpop.f32.mrf.mxu0
  %v6015 = vadd.f32 %v5614, %v6014
  %6016 = vmatmul.f32.gmra.mxu0 %v4327
  %v6017 = vpop.f32.mrf.mxu0
  %v6018 = vadd.f32 %v5617, %v6017
  %6019 = vmatmul.f32.gmra.mxu0 %v4331
  %v6020 = vpop.f32.mrf.mxu0
  %v6021 = vadd.f32 %v5620, %v6020
  %6022 = vmatmul.f32.gmra.mxu0 %v4335
  %v6023 = vpop.f32.mrf.mxu0
  %v6024 = vadd.f32 %v5623, %v6023
  %6025 = vmatmul.f32.gmra.mxu0 %v4339
  %v6026 = vpop.f32.mrf.mxu0
  %v6027 = vadd.f32 %v5626, %v6026
  %6028 = vmatmul.f32.gmra.mxu0 %v4343
  %v6029 = vpop.f32.mrf.mxu0
  %v6030 = vadd.f32 %v5629, %v6029
  %6031 = vmatmul.f32.gmra.mxu0 %v4347
  %v6032 = vpop.f32.mrf.mxu0
  %v6033 = vadd.f32 %v5632, %v6032
  %6034 = vmatmul.f32.gmra.mxu0 %v4351
  %v6035 = vpop.f32.mrf.mxu0
  %v6036 = vadd.f32 %v5635, %v6035
  %6037 = vmatmul.f32.gmra.mxu0 %v4355
  %v6038 = vpop.f32.mrf.mxu0
  %v6039 = vadd.f32 %v5638, %v6038
  %6040 = vmatmul.f32.gmra.mxu0 %v4359
  %v6041 = vpop.f32.mrf.mxu0
  %v6042 = vadd.f32 %v5641, %v6041
  %6043 = vmatmul.f32.gmra.mxu0 %v4363
  %v6044 = vpop.f32.mrf.mxu0
  %v6045 = vadd.f32 %v5644, %v6044
  %6046 = vmatmul.f32.gmra.mxu0 %v4367
  %v6047 = vpop.f32.mrf.mxu0
  %v6048 = vadd.f32 %v5647, %v6047
  %6049 = vmatmul.f32.gmra.mxu0 %v4371
  %v6050 = vpop.f32.mrf.mxu0
  %v6051 = vadd.f32 %v5650, %v6050
  %6052 = vmatmul.f32.gmra.mxu0 %v4375
  %v6053 = vpop.f32.mrf.mxu0
  %v6054 = vadd.f32 %v5653, %v6053
  %6055 = vmatmul.f32.gmra.mxu0 %v4379
  %v6056 = vpop.f32.mrf.mxu0
  %v6057 = vadd.f32 %v5656, %v6056
  %6058 = vmatmul.f32.gmra.mxu0 %v4383
  %v6059 = vpop.f32.mrf.mxu0
  %v6060 = vadd.f32 %v5659, %v6059
  %6061 = vmatmul.f32.gmra.mxu0 %v4387
  %v6062 = vpop.f32.mrf.mxu0
  %v6063 = vadd.f32 %v5662, %v6062
  %6064 = vmatmul.f32.gmra.mxu0 %v4391
  %v6065 = vpop.f32.mrf.mxu0
  %v6066 = vadd.f32 %v5665, %v6065
  %6067 = vmatmul.f32.gmra.mxu0 %v4395
  %v6068 = vpop.f32.mrf.mxu0
  %v6069 = vadd.f32 %v5668, %v6068
  %6070 = vmatmul.f32.gmra.mxu0 %v4399
  %v6071 = vpop.f32.mrf.mxu0
  %v6072 = vadd.f32 %v5671, %v6071
  %6073 = vmatmul.f32.gmra.mxu0 %v4403
  %v6074 = vpop.f32.mrf.mxu0
  %v6075 = vadd.f32 %v5674, %v6074
  %6076 = vmatmul.f32.gmra.mxu0 %v4407
  %v6077 = vpop.f32.mrf.mxu0
  %v6078 = vadd.f32 %v5677, %v6077
  %6079 = vmatmul.f32.gmra.mxu0 %v4411
  %v6080 = vpop.f32.mrf.mxu0
  %v6081 = vadd.f32 %v5680, %v6080
  %6082 = vmatmul.f32.gmra.mxu0 %v4415
  %v6083 = vpop.f32.mrf.mxu0
  %v6084 = vadd.f32 %v5683, %v6083
  %6085 = vmatmul.f32.gmra.mxu0 %v4419
  %v6086 = vpop.f32.mrf.mxu0
  %v6087 = vadd.f32 %v5686, %v6086
  %6088 = vmatmul.f32.gmra.mxu0 %v4423
  %v6089 = vpop.f32.mrf.mxu0
  %v6090 = vadd.f32 %v5689, %v6089
  %6091 = vdwg.mxu0
  %v6092 = vld [vmem:[%s4] sm:$0xff]
  %v6093 = vld [vmem:[%s4 + $0x8] sm:$0xff]
  %v6094 = vld [vmem:[%s4 + $0x10] sm:$0xff]
  %v6095 = vld [vmem:[%s4 + $0x18] sm:$0xff]
  %v6096 = vld [vmem:[%s4 + $0x20] sm:$0xff]
  %v6097 = vld [vmem:[%s4 + $0x28] sm:$0xff]
  %v6098 = vld [vmem:[%s4 + $0x30] sm:$0xff]
  %v6099 = vld [vmem:[%s4 + $0x38] sm:$0xff]
  %v6100 = vld [vmem:[%s4 + $0x40] sm:$0xff]
  %v6101 = vld [vmem:[%s4 + $0x48] sm:$0xff]
  %v6102 = vld [vmem:[%s4 + $0x50] sm:$0xff]
  %v6103 = vld [vmem:[%s4 + $0x58] sm:$0xff]
  %v6104 = vld [vmem:[%s4 + $0x60] sm:$0xff]
  %v6105 = vld [vmem:[%s4 + $0x68] sm:$0xff]
  %v6106 = vld [vmem:[%s4 + $0x70] sm:$0xff]
  %v6107 = vld [vmem:[%s4 + $0x78] sm:$0xff]
  %v6108 = vld [vmem:[%s4 + $0x80] sm:$0xff]
  %v6109 = vld [vmem:[%s4 + $0x88] sm:$0xff]
  %v6110 = vld [vmem:[%s4 + $0x90] sm:$0xff]
  %v6111 = vld [vmem:[%s4 + $0x98] sm:$0xff]
  %v6112 = vld [vmem:[%s4 + $0xa0] sm:$0xff]
  %v6113 = vld [vmem:[%s4 + $0xa8] sm:$0xff]
  %v6114 = vld [vmem:[%s4 + $0xb0] sm:$0xff]
  %v6115 = vld [vmem:[%s4 + $0xb8] sm:$0xff]
  %v6116 = vld [vmem:[%s4 + $0xc0] sm:$0xff]
  %v6117 = vld [vmem:[%s4 + $0xc8] sm:$0xff]
  %v6118 = vld [vmem:[%s4 + $0xd0] sm:$0xff]
  %v6119 = vld [vmem:[%s4 + $0xd8] sm:$0xff]
  %v6120 = vld [vmem:[%s4 + $0xe0] sm:$0xff]
  %v6121 = vld [vmem:[%s4 + $0xe8] sm:$0xff]
  %v6122 = vld [vmem:[%s4 + $0xf0] sm:$0xff]
  %v6123 = vld [vmem:[%s4 + $0xf8] sm:$0xff]
  %v6124 = vld [vmem:[%s4 + $0x100] sm:$0xff]
  %v6125 = vld [vmem:[%s4 + $0x108] sm:$0xff]
  %v6126 = vld [vmem:[%s4 + $0x110] sm:$0xff]
  %v6127 = vld [vmem:[%s4 + $0x118] sm:$0xff]
  %v6128 = vld [vmem:[%s4 + $0x120] sm:$0xff]
  %v6129 = vld [vmem:[%s4 + $0x128] sm:$0xff]
  %v6130 = vld [vmem:[%s4 + $0x130] sm:$0xff]
  %v6131 = vld [vmem:[%s4 + $0x138] sm:$0xff]
  %v6132 = vld [vmem:[%s4 + $0x140] sm:$0xff]
  %v6133 = vld [vmem:[%s4 + $0x148] sm:$0xff]
  %v6134 = vld [vmem:[%s4 + $0x150] sm:$0xff]
  %v6135 = vld [vmem:[%s4 + $0x158] sm:$0xff]
  %v6136 = vld [vmem:[%s4 + $0x160] sm:$0xff]
  %v6137 = vld [vmem:[%s4 + $0x168] sm:$0xff]
  %v6138 = vld [vmem:[%s4 + $0x170] sm:$0xff]
  %v6139 = vld [vmem:[%s4 + $0x178] sm:$0xff]
  %v6140 = vld [vmem:[%s4 + $0x180] sm:$0xff]
  %v6141 = vld [vmem:[%s4 + $0x188] sm:$0xff]
  %v6142 = vld [vmem:[%s4 + $0x190] sm:$0xff]
  %v6143 = vld [vmem:[%s4 + $0x198] sm:$0xff]
  %v6144 = vld [vmem:[%s4 + $0x1a0] sm:$0xff]
  %v6145 = vld [vmem:[%s4 + $0x1a8] sm:$0xff]
  %v6146 = vld [vmem:[%s4 + $0x1b0] sm:$0xff]
  %v6147 = vld [vmem:[%s4 + $0x1b8] sm:$0xff]
  %v6148 = vld [vmem:[%s4 + $0x1c0] sm:$0xff]
  %v6149 = vld [vmem:[%s4 + $0x1c8] sm:$0xff]
  %v6150 = vld [vmem:[%s4 + $0x1d0] sm:$0xff]
  %v6151 = vld [vmem:[%s4 + $0x1d8] sm:$0xff]
  %v6152 = vld [vmem:[%s4 + $0x1e0] sm:$0xff]
  %v6153 = vld [vmem:[%s4 + $0x1e8] sm:$0xff]
  %v6154 = vld [vmem:[%s4 + $0x1f0] sm:$0xff]
  %v6155 = vld [vmem:[%s4 + $0x1f8] sm:$0xff]
  %v6156 = vld [vmem:[%s5] sm:$0x1]
  %v6158 = vperm.slane %v6156, 0
  %6160 = vmatpush.msra.mxu0 %v5754
  %6161 = vmatpush.msra.mxu0 %v5751
  %6162 = vmatpush.msra.mxu0 %v5748
  %6163 = vmatpush.msra.mxu0 %v5745
  %6164 = vmatpush.msra.mxu0 %v5742
  %6165 = vmatpush.msra.mxu0 %v5739
  %6166 = vmatpush.msra.mxu0 %v5736
  %6167 = vmatpush.msra.mxu0 %v5733
  %6168 = vmatpush.msra.mxu0 %v5730
  %6169 = vmatpush.msra.mxu0 %v5727
  %6170 = vmatpush.msra.mxu0 %v5724
  %6171 = vmatpush.msra.mxu0 %v5721
  %6172 = vmatpush.msra.mxu0 %v5718
  %6173 = vmatpush.msra.mxu0 %v5715
  %6174 = vmatpush.msra.mxu0 %v5712
  %6175 = vmatpush.msra.mxu0 %v5709
  %6176 = vmatmul.f32.gmra.mxu0 %v6092
  %v6177 = vpop.f32.mrf.mxu0
  %v6178 = vadd.f32 %v6158, %v6177
  %6179 = vmatmul.f32.gmra.mxu0 %v6100
  %v6180 = vpop.f32.mrf.mxu0
  %v6181 = vadd.f32 %v6158, %v6180
  %6182 = vmatmul.f32.gmra.mxu0 %v6108
  %v6183 = vpop.f32.mrf.mxu0
  %v6184 = vadd.f32 %v6158, %v6183
  %6185 = vmatmul.f32.gmra.mxu0 %v6116
  %v6186 = vpop.f32.mrf.mxu0
  %v6187 = vadd.f32 %v6158, %v6186
  %6188 = vmatmul.f32.gmra.mxu0 %v6124
  %v6189 = vpop.f32.mrf.mxu0
  %v6190 = vadd.f32 %v6158, %v6189
  %6191 = vmatmul.f32.gmra.mxu0 %v6132
  %v6192 = vpop.f32.mrf.mxu0
  %v6193 = vadd.f32 %v6158, %v6192
  %6194 = vmatmul.f32.gmra.mxu0 %v6140
  %v6195 = vpop.f32.mrf.mxu0
  %v6196 = vadd.f32 %v6158, %v6195
  %6197 = vmatmul.f32.gmra.mxu0 %v6148
  %v6198 = vpop.f32.mrf.mxu0
  %v6199 = vadd.f32 %v6158, %v6198
  %6200 = vdwg.mxu0
  %6201 = vmatpush.msra.mxu0 %v5802
  %6202 = vmatpush.msra.mxu0 %v5799
  %6203 = vmatpush.msra.mxu0 %v5796
  %6204 = vmatpush.msra.mxu0 %v5793
  %6205 = vmatpush.msra.mxu0 %v5790
  %6206 = vmatpush.msra.mxu0 %v5787
  %6207 = vmatpush.msra.mxu0 %v5784
  %6208 = vmatpush.msra.mxu0 %v5781
  %6209 = vmatpush.msra.mxu0 %v5778
  %6210 = vmatpush.msra.mxu0 %v5775
  %6211 = vmatpush.msra.mxu0 %v5772
  %6212 = vmatpush.msra.mxu0 %v5769
  %6213 = vmatpush.msra.mxu0 %v5766
  %6214 = vmatpush.msra.mxu0 %v5763
  %6215 = vmatpush.msra.mxu0 %v5760
  %6216 = vmatpush.msra.mxu0 %v5757
  %6217 = vmatmul.f32.gmra.mxu0 %v6093
  %v6218 = vpop.f32.mrf.mxu0
  %v6219 = vadd.f32 %v6178, %v6218
  %6220 = vmatmul.f32.gmra.mxu0 %v6101
  %v6221 = vpop.f32.mrf.mxu0
  %v6222 = vadd.f32 %v6181, %v6221
  %6223 = vmatmul.f32.gmra.mxu0 %v6109
  %v6224 = vpop.f32.mrf.mxu0
  %v6225 = vadd.f32 %v6184, %v6224
  %6226 = vmatmul.f32.gmra.mxu0 %v6117
  %v6227 = vpop.f32.mrf.mxu0
  %v6228 = vadd.f32 %v6187, %v6227
  %6229 = vmatmul.f32.gmra.mxu0 %v6125
  %v6230 = vpop.f32.mrf.mxu0
  %v6231 = vadd.f32 %v6190, %v6230
  %6232 = vmatmul.f32.gmra.mxu0 %v6133
  %v6233 = vpop.f32.mrf.mxu0
  %v6234 = vadd.f32 %v6193, %v6233
  %6235 = vmatmul.f32.gmra.mxu0 %v6141
  %v6236 = vpop.f32.mrf.mxu0
  %v6237 = vadd.f32 %v6196, %v6236
  %6238 = vmatmul.f32.gmra.mxu0 %v6149
  %v6239 = vpop.f32.mrf.mxu0
  %v6240 = vadd.f32 %v6199, %v6239
  %6241 = vdwg.mxu0
  %6242 = vmatpush.msra.mxu0 %v5850
  %6243 = vmatpush.msra.mxu0 %v5847
  %6244 = vmatpush.msra.mxu0 %v5844
  %6245 = vmatpush.msra.mxu0 %v5841
  %6246 = vmatpush.msra.mxu0 %v5838
  %6247 = vmatpush.msra.mxu0 %v5835
  %6248 = vmatpush.msra.mxu0 %v5832
  %6249 = vmatpush.msra.mxu0 %v5829
  %6250 = vmatpush.msra.mxu0 %v5826
  %6251 = vmatpush.msra.mxu0 %v5823
  %6252 = vmatpush.msra.mxu0 %v5820
  %6253 = vmatpush.msra.mxu0 %v5817
  %6254 = vmatpush.msra.mxu0 %v5814
  %6255 = vmatpush.msra.mxu0 %v5811
  %6256 = vmatpush.msra.mxu0 %v5808
  %6257 = vmatpush.msra.mxu0 %v5805
  %6258 = vmatmul.f32.gmra.mxu0 %v6094
  %v6259 = vpop.f32.mrf.mxu0
  %v6260 = vadd.f32 %v6219, %v6259
  %6261 = vmatmul.f32.gmra.mxu0 %v6102
  %v6262 = vpop.f32.mrf.mxu0
  %v6263 = vadd.f32 %v6222, %v6262
  %6264 = vmatmul.f32.gmra.mxu0 %v6110
  %v6265 = vpop.f32.mrf.mxu0
  %v6266 = vadd.f32 %v6225, %v6265
  %6267 = vmatmul.f32.gmra.mxu0 %v6118
  %v6268 = vpop.f32.mrf.mxu0
  %v6269 = vadd.f32 %v6228, %v6268
  %6270 = vmatmul.f32.gmra.mxu0 %v6126
  %v6271 = vpop.f32.mrf.mxu0
  %v6272 = vadd.f32 %v6231, %v6271
  %6273 = vmatmul.f32.gmra.mxu0 %v6134
  %v6274 = vpop.f32.mrf.mxu0
  %v6275 = vadd.f32 %v6234, %v6274
  %6276 = vmatmul.f32.gmra.mxu0 %v6142
  %v6277 = vpop.f32.mrf.mxu0
  %v6278 = vadd.f32 %v6237, %v6277
  %6279 = vmatmul.f32.gmra.mxu0 %v6150
  %v6280 = vpop.f32.mrf.mxu0
  %v6281 = vadd.f32 %v6240, %v6280
  %6282 = vdwg.mxu0
  %6283 = vmatpush.msra.mxu0 %v5898
  %6284 = vmatpush.msra.mxu0 %v5895
  %6285 = vmatpush.msra.mxu0 %v5892
  %6286 = vmatpush.msra.mxu0 %v5889
  %6287 = vmatpush.msra.mxu0 %v5886
  %6288 = vmatpush.msra.mxu0 %v5883
  %6289 = vmatpush.msra.mxu0 %v5880
  %6290 = vmatpush.msra.mxu0 %v5877
  %6291 = vmatpush.msra.mxu0 %v5874
  %6292 = vmatpush.msra.mxu0 %v5871
  %6293 = vmatpush.msra.mxu0 %v5868
  %6294 = vmatpush.msra.mxu0 %v5865
  %6295 = vmatpush.msra.mxu0 %v5862
  %6296 = vmatpush.msra.mxu0 %v5859
  %6297 = vmatpush.msra.mxu0 %v5856
  %6298 = vmatpush.msra.mxu0 %v5853
  %6299 = vmatmul.f32.gmra.mxu0 %v6095
  %v6300 = vpop.f32.mrf.mxu0
  %v6301 = vadd.f32 %v6260, %v6300
  %6302 = vmatmul.f32.gmra.mxu0 %v6103
  %v6303 = vpop.f32.mrf.mxu0
  %v6304 = vadd.f32 %v6263, %v6303
  %6305 = vmatmul.f32.gmra.mxu0 %v6111
  %v6306 = vpop.f32.mrf.mxu0
  %v6307 = vadd.f32 %v6266, %v6306
  %6308 = vmatmul.f32.gmra.mxu0 %v6119
  %v6309 = vpop.f32.mrf.mxu0
  %v6310 = vadd.f32 %v6269, %v6309
  %6311 = vmatmul.f32.gmra.mxu0 %v6127
  %v6312 = vpop.f32.mrf.mxu0
  %v6313 = vadd.f32 %v6272, %v6312
  %6314 = vmatmul.f32.gmra.mxu0 %v6135
  %v6315 = vpop.f32.mrf.mxu0
  %v6316 = vadd.f32 %v6275, %v6315
  %6317 = vmatmul.f32.gmra.mxu0 %v6143
  %v6318 = vpop.f32.mrf.mxu0
  %v6319 = vadd.f32 %v6278, %v6318
  %6320 = vmatmul.f32.gmra.mxu0 %v6151
  %v6321 = vpop.f32.mrf.mxu0
  %v6322 = vadd.f32 %v6281, %v6321
  %6323 = vdwg.mxu0
  %6324 = vmatpush.msra.mxu0 %v5946
  %6325 = vmatpush.msra.mxu0 %v5943
  %6326 = vmatpush.msra.mxu0 %v5940
  %6327 = vmatpush.msra.mxu0 %v5937
  %6328 = vmatpush.msra.mxu0 %v5934
  %6329 = vmatpush.msra.mxu0 %v5931
  %6330 = vmatpush.msra.mxu0 %v5928
  %6331 = vmatpush.msra.mxu0 %v5925
  %6332 = vmatpush.msra.mxu0 %v5922
  %6333 = vmatpush.msra.mxu0 %v5919
  %6334 = vmatpush.msra.mxu0 %v5916
  %6335 = vmatpush.msra.mxu0 %v5913
  %6336 = vmatpush.msra.mxu0 %v5910
  %6337 = vmatpush.msra.mxu0 %v5907
  %6338 = vmatpush.msra.mxu0 %v5904
  %6339 = vmatpush.msra.mxu0 %v5901
  %6340 = vmatmul.f32.gmra.mxu0 %v6096
  %v6341 = vpop.f32.mrf.mxu0
  %v6342 = vadd.f32 %v6301, %v6341
  %6343 = vmatmul.f32.gmra.mxu0 %v6104
  %v6344 = vpop.f32.mrf.mxu0
  %v6345 = vadd.f32 %v6304, %v6344
  %6346 = vmatmul.f32.gmra.mxu0 %v6112
  %v6347 = vpop.f32.mrf.mxu0
  %v6348 = vadd.f32 %v6307, %v6347
  %6349 = vmatmul.f32.gmra.mxu0 %v6120
  %v6350 = vpop.f32.mrf.mxu0
  %v6351 = vadd.f32 %v6310, %v6350
  %6352 = vmatmul.f32.gmra.mxu0 %v6128
  %v6353 = vpop.f32.mrf.mxu0
  %v6354 = vadd.f32 %v6313, %v6353
  %6355 = vmatmul.f32.gmra.mxu0 %v6136
  %v6356 = vpop.f32.mrf.mxu0
  %v6357 = vadd.f32 %v6316, %v6356
  %6358 = vmatmul.f32.gmra.mxu0 %v6144
  %v6359 = vpop.f32.mrf.mxu0
  %v6360 = vadd.f32 %v6319, %v6359
  %6361 = vmatmul.f32.gmra.mxu0 %v6152
  %v6362 = vpop.f32.mrf.mxu0
  %v6363 = vadd.f32 %v6322, %v6362
  %6364 = vdwg.mxu0
  %6365 = vmatpush.msra.mxu0 %v5994
  %6366 = vmatpush.msra.mxu0 %v5991
  %6367 = vmatpush.msra.mxu0 %v5988
  %6368 = vmatpush.msra.mxu0 %v5985
  %6369 = vmatpush.msra.mxu0 %v5982
  %6370 = vmatpush.msra.mxu0 %v5979
  %6371 = vmatpush.msra.mxu0 %v5976
  %6372 = vmatpush.msra.mxu0 %v5973
  %6373 = vmatpush.msra.mxu0 %v5970
  %6374 = vmatpush.msra.mxu0 %v5967
  %6375 = vmatpush.msra.mxu0 %v5964
  %6376 = vmatpush.msra.mxu0 %v5961
  %6377 = vmatpush.msra.mxu0 %v5958
  %6378 = vmatpush.msra.mxu0 %v5955
  %6379 = vmatpush.msra.mxu0 %v5952
  %6380 = vmatpush.msra.mxu0 %v5949
  %6381 = vmatmul.f32.gmra.mxu0 %v6097
  %v6382 = vpop.f32.mrf.mxu0
  %v6383 = vadd.f32 %v6342, %v6382
  %6384 = vmatmul.f32.gmra.mxu0 %v6105
  %v6385 = vpop.f32.mrf.mxu0
  %v6386 = vadd.f32 %v6345, %v6385
  %6387 = vmatmul.f32.gmra.mxu0 %v6113
  %v6388 = vpop.f32.mrf.mxu0
  %v6389 = vadd.f32 %v6348, %v6388
  %6390 = vmatmul.f32.gmra.mxu0 %v6121
  %v6391 = vpop.f32.mrf.mxu0
  %v6392 = vadd.f32 %v6351, %v6391
  %6393 = vmatmul.f32.gmra.mxu0 %v6129
  %v6394 = vpop.f32.mrf.mxu0
  %v6395 = vadd.f32 %v6354, %v6394
  %6396 = vmatmul.f32.gmra.mxu0 %v6137
  %v6397 = vpop.f32.mrf.mxu0
  %v6398 = vadd.f32 %v6357, %v6397
  %6399 = vmatmul.f32.gmra.mxu0 %v6145
  %v6400 = vpop.f32.mrf.mxu0
  %v6401 = vadd.f32 %v6360, %v6400
  %6402 = vmatmul.f32.gmra.mxu0 %v6153
  %v6403 = vpop.f32.mrf.mxu0
  %v6404 = vadd.f32 %v6363, %v6403
  %6405 = vdwg.mxu0
  %6406 = vmatpush.msra.mxu0 %v6042
  %6407 = vmatpush.msra.mxu0 %v6039
  %6408 = vmatpush.msra.mxu0 %v6036
  %6409 = vmatpush.msra.mxu0 %v6033
  %6410 = vmatpush.msra.mxu0 %v6030
  %6411 = vmatpush.msra.mxu0 %v6027
  %6412 = vmatpush.msra.mxu0 %v6024
  %6413 = vmatpush.msra.mxu0 %v6021
  %6414 = vmatpush.msra.mxu0 %v6018
  %6415 = vmatpush.msra.mxu0 %v6015
  %6416 = vmatpush.msra.mxu0 %v6012
  %6417 = vmatpush.msra.mxu0 %v6009
  %6418 = vmatpush.msra.mxu0 %v6006
  %6419 = vmatpush.msra.mxu0 %v6003
  %6420 = vmatpush.msra.mxu0 %v6000
  %6421 = vmatpush.msra.mxu0 %v5997
  %6422 = vmatmul.f32.gmra.mxu0 %v6098
  %v6423 = vpop.f32.mrf.mxu0
  %v6424 = vadd.f32 %v6383, %v6423
  %6425 = vmatmul.f32.gmra.mxu0 %v6106
  %v6426 = vpop.f32.mrf.mxu0
  %v6427 = vadd.f32 %v6386, %v6426
  %6428 = vmatmul.f32.gmra.mxu0 %v6114
  %v6429 = vpop.f32.mrf.mxu0
  %v6430 = vadd.f32 %v6389, %v6429
  %6431 = vmatmul.f32.gmra.mxu0 %v6122
  %v6432 = vpop.f32.mrf.mxu0
  %v6433 = vadd.f32 %v6392, %v6432
  %6434 = vmatmul.f32.gmra.mxu0 %v6130
  %v6435 = vpop.f32.mrf.mxu0
  %v6436 = vadd.f32 %v6395, %v6435
  %6437 = vmatmul.f32.gmra.mxu0 %v6138
  %v6438 = vpop.f32.mrf.mxu0
  %v6439 = vadd.f32 %v6398, %v6438
  %6440 = vmatmul.f32.gmra.mxu0 %v6146
  %v6441 = vpop.f32.mrf.mxu0
  %v6442 = vadd.f32 %v6401, %v6441
  %6443 = vmatmul.f32.gmra.mxu0 %v6154
  %v6444 = vpop.f32.mrf.mxu0
  %v6445 = vadd.f32 %v6404, %v6444
  %6446 = vdwg.mxu0
  %6447 = vmatpush.msra.mxu0 %v6090
  %6448 = vmatpush.msra.mxu0 %v6087
  %6449 = vmatpush.msra.mxu0 %v6084
  %6450 = vmatpush.msra.mxu0 %v6081
  %6451 = vmatpush.msra.mxu0 %v6078
  %6452 = vmatpush.msra.mxu0 %v6075
  %6453 = vmatpush.msra.mxu0 %v6072
  %6454 = vmatpush.msra.mxu0 %v6069
  %6455 = vmatpush.msra.mxu0 %v6066
  %6456 = vmatpush.msra.mxu0 %v6063
  %6457 = vmatpush.msra.mxu0 %v6060
  %6458 = vmatpush.msra.mxu0 %v6057
  %6459 = vmatpush.msra.mxu0 %v6054
  %6460 = vmatpush.msra.mxu0 %v6051
  %6461 = vmatpush.msra.mxu0 %v6048
  %6462 = vmatpush.msra.mxu0 %v6045
  %6463 = vmatmul.f32.gmra.mxu0 %v6099
  %v6464 = vpop.f32.mrf.mxu0
  %v6465 = vadd.f32 %v6424, %v6464
  %6466 = vmatmul.f32.gmra.mxu0 %v6107
  %v6467 = vpop.f32.mrf.mxu0
  %v6468 = vadd.f32 %v6427, %v6467
  %6469 = vmatmul.f32.gmra.mxu0 %v6115
  %v6470 = vpop.f32.mrf.mxu0
  %v6471 = vadd.f32 %v6430, %v6470
  %6472 = vmatmul.f32.gmra.mxu0 %v6123
  %v6473 = vpop.f32.mrf.mxu0
  %v6474 = vadd.f32 %v6433, %v6473
  %6475 = vmatmul.f32.gmra.mxu0 %v6131
  %v6476 = vpop.f32.mrf.mxu0
  %v6477 = vadd.f32 %v6436, %v6476
  %6478 = vmatmul.f32.gmra.mxu0 %v6139
  %v6479 = vpop.f32.mrf.mxu0
  %v6480 = vadd.f32 %v6439, %v6479
  %6481 = vmatmul.f32.gmra.mxu0 %v6147
  %v6482 = vpop.f32.mrf.mxu0
  %v6483 = vadd.f32 %v6442, %v6482
  %6484 = vmatmul.f32.gmra.mxu0 %v6155
  %v6485 = vpop.f32.mrf.mxu0
  %v6486 = vadd.f32 %v6445, %v6485
  %6487 = vdwg.mxu0
  %v6488 = vmax.f32 %v6465, 0.0
  %v6489 = vmax.f32 %v6468, 0.0
  %v6490 = vmax.f32 %v6471, 0.0
  %v6491 = vmax.f32 %v6474, 0.0
  %v6492 = vmax.f32 %v6477, 0.0
  %v6493 = vmax.f32 %v6480, 0.0
  %v6494 = vmax.f32 %v6483, 0.0
  %v6495 = vmax.f32 %v6486, 0.0
  %v6496 = vld [vmem:[%s6] sm:$0xff]
  %v6497 = vld [vmem:[%s6 + $0x8] sm:$0xff]
  %v6498 = vld [vmem:[%s6 + $0x10] sm:$0xff]
  %v6499 = vld [vmem:[%s6 + $0x18] sm:$0xff]
  %v6500 = vld [vmem:[%s6 + $0x20] sm:$0xff]
  %v6501 = vld [vmem:[%s6 + $0x28] sm:$0xff]
  %v6502 = vld [vmem:[%s6 + $0x30] sm:$0xff]
  %v6503 = vld [vmem:[%s6 + $0x38] sm:$0xff]
  %vm6504 = vcmask 523264
  %v6506 = vsel %vm6504, %v6488, 0
  %v6509 = vsel %vm6504, %v6489, 0
  %v6512 = vsel %vm6504, %v6490, 0
  %v6515 = vsel %vm6504, %v6491, 0
  %v6518 = vsel %vm6504, %v6492, 0
  %v6521 = vsel %vm6504, %v6493, 0
  %v6524 = vsel %vm6504, %v6494, 0
  %v6527 = vsel %vm6504, %v6495, 0
  %6529 = vmatpush.msra.mxu0 0.0
  %6530 = vmatpush.msra.mxu0 0.0
  %6531 = vmatpush.msra.mxu0 0.0
  %6532 = vmatpush.msra.mxu0 0.0
  %6533 = vmatpush.msra.mxu0 0.0
  %6534 = vmatpush.msra.mxu0 0.0
  %6535 = vmatpush.msra.mxu0 0.0
  %6536 = vmatpush.msra.mxu0 0.0
  %6537 = vmatpush.msra.mxu0 %v6503
  %6538 = vmatpush.msra.mxu0 %v6502
  %6539 = vmatpush.msra.mxu0 %v6501
  %6540 = vmatpush.msra.mxu0 %v6500
  %6541 = vmatpush.msra.mxu0 %v6499
  %6542 = vmatpush.msra.mxu0 %v6498
  %6543 = vmatpush.msra.mxu0 %v6497
  %6544 = vmatpush.msra.mxu0 %v6496
  %6545 = vmatmul.f32.gmra.mxu0 %v6506
  %v6546 = vpop.f32.mrf.mxu0
  %v6547 = vadd.f32 0.0, %v6546
  %6548 = vmatmul.f32.gmra.mxu0 %v6509
  %v6549 = vpop.f32.mrf.mxu0
  %v6550 = vadd.f32 0.0, %v6549
  %6551 = vmatmul.f32.gmra.mxu0 %v6512
  %v6552 = vpop.f32.mrf.mxu0
  %v6553 = vadd.f32 0.0, %v6552
  %6554 = vmatmul.f32.gmra.mxu0 %v6515
  %v6555 = vpop.f32.mrf.mxu0
  %v6556 = vadd.f32 0.0, %v6555
  %6557 = vmatmul.f32.gmra.mxu0 %v6518
  %v6558 = vpop.f32.mrf.mxu0
  %v6559 = vadd.f32 0.0, %v6558
  %6560 = vmatmul.f32.gmra.mxu0 %v6521
  %v6561 = vpop.f32.mrf.mxu0
  %v6562 = vadd.f32 0.0, %v6561
  %6563 = vmatmul.f32.gmra.mxu0 %v6524
  %v6564 = vpop.f32.mrf.mxu0
  %v6565 = vadd.f32 0.0, %v6564
  %6566 = vmatmul.f32.gmra.mxu0 %v6527
  %v6567 = vpop.f32.mrf.mxu0
  %v6568 = vadd.f32 0.0, %v6567
  %6569 = vdwg.mxu0
  %v6570 = vtanh.pop %v6547
  %v6571 = vtanh.pop %v6550
  %v6572 = vtanh.pop %v6553
  %v6573 = vtanh.pop %v6556
  %v6574 = vtanh.pop %v6559
  %v6575 = vtanh.pop %v6562
  %v6576 = vtanh.pop %v6565
  %v6577 = vtanh.pop %v6568
  %v6578 = vld [vmem:[%s7] sm:$0x1]
  %v6580 = vperm.slane %v6578, 0
  %v6582 = vmul.f32 %v6570, %v6580
  %v6583 = vmul.f32 %v6571, %v6580
  %v6584 = vmul.f32 %v6572, %v6580
  %v6585 = vmul.f32 %v6573, %v6580
  %v6586 = vmul.f32 %v6574, %v6580
  %v6587 = vmul.f32 %v6575, %v6580
  %v6588 = vmul.f32 %v6576, %v6580
  %v6589 = vmul.f32 %v6577, %v6580
  %vm6590 = vcmask 261120
  %v6591 = vsel %vm6590, %v6582, 0.0
  %6592 = vadd.xlane.f32.xlu0 %v6591
  %v6593 = vpop.xlane.xlu0 %6592
  %v6594 = vsel %vm6590, %v6583, 0.0
  %6595 = vadd.xlane.f32.xlu0 %v6594
  %v6596 = vpop.xlane.xlu0 %6595
  %v6597 = vsel %vm6590, %v6584, 0.0
  %6598 = vadd.xlane.f32.xlu0 %v6597
  %v6599 = vpop.xlane.xlu0 %6598
  %v6600 = vsel %vm6590, %v6585, 0.0
  %6601 = vadd.xlane.f32.xlu0 %v6600
  %v6602 = vpop.xlane.xlu0 %6601
  %v6603 = vsel %vm6590, %v6586, 0.0
  %6604 = vadd.xlane.f32.xlu0 %v6603
  %v6605 = vpop.xlane.xlu0 %6604
  %v6606 = vsel %vm6590, %v6587, 0.0
  %6607 = vadd.xlane.f32.xlu0 %v6606
  %v6608 = vpop.xlane.xlu0 %6607
  %v6609 = vsel %vm6590, %v6588, 0.0
  %6610 = vadd.xlane.f32.xlu0 %v6609
  %v6611 = vpop.xlane.xlu0 %6610
  %v6612 = vsel %vm6590, %v6589, 0.0
  %6613 = vadd.xlane.f32.xlu0 %v6612
  %v6614 = vpop.xlane.xlu0 %6613
  %v6615 = vrot.slane %v6593, 4
  %v6616 = vmax.f32 %v6593, %v6615
  %v6617 = vrot.slane %v6616, 2
  %v6618 = vmax.f32 %v6616, %v6617
  %v6619 = vrot.slane %v6618, 1
  %v6620 = vmax.f32 %v6618, %v6619
  %v6621 = vsub.f32 %v6593, %v6620
  %v6622 = vmul.f32 %v6621, 1.442695
  %v6623 = vpow.pop %v6622
  %v6624 = vrot.slane %v6623, 4
  %v6625 = vadd.f32 %v6623, %v6624
  %v6626 = vrot.slane %v6625, 2
  %v6627 = vadd.f32 %v6625, %v6626
  %v6628 = vrot.slane %v6627, 1
  %v6629 = vadd.f32 %v6627, %v6628
  %v6630 = vrcp.pop %v6629
  %v6631 = vmul.f32 %v6629, %v6630
  %v6632 = vsub.f32 1.0, %v6631
  %v6633 = vmul.f32 %v6630, %v6632
  %v6634 = vadd.f32 %v6630, %v6633
  %vm6635 = vweird.f32 %v6629
  %vm6636 = vweird.f32 %v6630
  %vm6637 = vmor %vm6635, %vm6636
  %v6638 = vsel %vm6637, %v6630, %v6634
  %v6639 = vand.u32 2147483647, %v6629
  %vm6640 = vcmp.eq.f32.partialorder %v6639, 8.507059e+37
  %v6641 = vand.u32 %v6629, 2147483648
  %v6642 = vor.u32 1.1754944e-38, %v6641
  %v6643 = vsel %vm6640, %v6642, %v6638
  %v6644 = vmul.f32 %v6623, %v6643
  %v6645 = vmul.f32 %v6644, %v6488
  %v6646 = vsel %vm6504, %v6645, 0.0
  %v6647 = vrot.slane %v6646, 4
  %v6648 = vadd.f32 %v6646, %v6647
  %v6649 = vrot.slane %v6648, 2
  %v6650 = vadd.f32 %v6648, %v6649
  %v6651 = vrot.slane %v6650, 1
  %v6652 = vadd.f32 %v6650, %v6651
  %v6653 = vrot.slane %v6596, 4
  %v6654 = vmax.f32 %v6596, %v6653
  %v6655 = vrot.slane %v6654, 2
  %v6656 = vmax.f32 %v6654, %v6655
  %v6657 = vrot.slane %v6656, 1
  %v6658 = vmax.f32 %v6656, %v6657
  %v6659 = vsub.f32 %v6596, %v6658
  %v6660 = vmul.f32 %v6659, 1.442695
  %v6661 = vpow.pop %v6660
  %v6662 = vrot.slane %v6661, 4
  %v6663 = vadd.f32 %v6661, %v6662
  %v6664 = vrot.slane %v6663, 2
  %v6665 = vadd.f32 %v6663, %v6664
  %v6666 = vrot.slane %v6665, 1
  %v6667 = vadd.f32 %v6665, %v6666
  %v6668 = vrcp.pop %v6667
  %v6669 = vmul.f32 %v6667, %v6668
  %v6670 = vsub.f32 1.0, %v6669
  %v6671 = vmul.f32 %v6668, %v6670
  %v6672 = vadd.f32 %v6668, %v6671
  %vm6673 = vweird.f32 %v6667
  %vm6674 = vweird.f32 %v6668
  %vm6675 = vmor %vm6673, %vm6674
  %v6676 = vsel %vm6675, %v6668, %v6672
  %v6677 = vand.u32 2147483647, %v6667
  %vm6678 = vcmp.eq.f32.partialorder %v6677, 8.507059e+37
  %v6679 = vand.u32 %v6667, 2147483648
  %v6680 = vor.u32 1.1754944e-38, %v6679
  %v6681 = vsel %vm6678, %v6680, %v6676
  %v6682 = vmul.f32 %v6661, %v6681
  %v6683 = vmul.f32 %v6682, %v6489
  %v6684 = vsel %vm6504, %v6683, 0.0
  %v6685 = vrot.slane %v6684, 4
  %v6686 = vadd.f32 %v6684, %v6685
  %v6687 = vrot.slane %v6686, 2
  %v6688 = vadd.f32 %v6686, %v6687
  %v6689 = vrot.slane %v6688, 1
  %v6690 = vadd.f32 %v6688, %v6689
  %v6691 = vrot.slane %v6599, 4
  %v6692 = vmax.f32 %v6599, %v6691
  %v6693 = vrot.slane %v6692, 2
  %v6694 = vmax.f32 %v6692, %v6693
  %v6695 = vrot.slane %v6694, 1
  %v6696 = vmax.f32 %v6694, %v6695
  %v6697 = vsub.f32 %v6599, %v6696
  %v6698 = vmul.f32 %v6697, 1.442695
  %v6699 = vpow.pop %v6698
  %v6700 = vrot.slane %v6699, 4
  %v6701 = vadd.f32 %v6699, %v6700
  %v6702 = vrot.slane %v6701, 2
  %v6703 = vadd.f32 %v6701, %v6702
  %v6704 = vrot.slane %v6703, 1
  %v6705 = vadd.f32 %v6703, %v6704
  %v6706 = vrcp.pop %v6705
  %v6707 = vmul.f32 %v6705, %v6706
  %v6708 = vsub.f32 1.0, %v6707
  %v6709 = vmul.f32 %v6706, %v6708
  %v6710 = vadd.f32 %v6706, %v6709
  %vm6711 = vweird.f32 %v6705
  %vm6712 = vweird.f32 %v6706
  %vm6713 = vmor %vm6711, %vm6712
  %v6714 = vsel %vm6713, %v6706, %v6710
  %v6715 = vand.u32 2147483647, %v6705
  %vm6716 = vcmp.eq.f32.partialorder %v6715, 8.507059e+37
  %v6717 = vand.u32 %v6705, 2147483648
  %v6718 = vor.u32 1.1754944e-38, %v6717
  %v6719 = vsel %vm6716, %v6718, %v6714
  %v6720 = vmul.f32 %v6699, %v6719
  %v6721 = vmul.f32 %v6720, %v6490
  %v6722 = vsel %vm6504, %v6721, 0.0
  %v6723 = vrot.slane %v6722, 4
  %v6724 = vadd.f32 %v6722, %v6723
  %v6725 = vrot.slane %v6724, 2
  %v6726 = vadd.f32 %v6724, %v6725
  %v6727 = vrot.slane %v6726, 1
  %v6728 = vadd.f32 %v6726, %v6727
  %v6729 = vrot.slane %v6602, 4
  %v6730 = vmax.f32 %v6602, %v6729
  %v6731 = vrot.slane %v6730, 2
  %v6732 = vmax.f32 %v6730, %v6731
  %v6733 = vrot.slane %v6732, 1
  %v6734 = vmax.f32 %v6732, %v6733
  %v6735 = vsub.f32 %v6602, %v6734
  %v6736 = vmul.f32 %v6735, 1.442695
  %v6737 = vpow.pop %v6736
  %v6738 = vrot.slane %v6737, 4
  %v6739 = vadd.f32 %v6737, %v6738
  %v6740 = vrot.slane %v6739, 2
  %v6741 = vadd.f32 %v6739, %v6740
  %v6742 = vrot.slane %v6741, 1
  %v6743 = vadd.f32 %v6741, %v6742
  %v6744 = vrcp.pop %v6743
  %v6745 = vmul.f32 %v6743, %v6744
  %v6746 = vsub.f32 1.0, %v6745
  %v6747 = vmul.f32 %v6744, %v6746
  %v6748 = vadd.f32 %v6744, %v6747
  %vm6749 = vweird.f32 %v6743
  %vm6750 = vweird.f32 %v6744
  %vm6751 = vmor %vm6749, %vm6750
  %v6752 = vsel %vm6751, %v6744, %v6748
  %v6753 = vand.u32 2147483647, %v6743
  %vm6754 = vcmp.eq.f32.partialorder %v6753, 8.507059e+37
  %v6755 = vand.u32 %v6743, 2147483648
  %v6756 = vor.u32 1.1754944e-38, %v6755
  %v6757 = vsel %vm6754, %v6756, %v6752
  %v6758 = vmul.f32 %v6737, %v6757
  %v6759 = vmul.f32 %v6758, %v6491
  %v6760 = vsel %vm6504, %v6759, 0.0
  %v6761 = vrot.slane %v6760, 4
  %v6762 = vadd.f32 %v6760, %v6761
  %v6763 = vrot.slane %v6762, 2
  %v6764 = vadd.f32 %v6762, %v6763
  %v6765 = vrot.slane %v6764, 1
  %v6766 = vadd.f32 %v6764, %v6765
  %v6767 = vrot.slane %v6605, 4
  %v6768 = vmax.f32 %v6605, %v6767
  %v6769 = vrot.slane %v6768, 2
  %v6770 = vmax.f32 %v6768, %v6769
  %v6771 = vrot.slane %v6770, 1
  %v6772 = vmax.f32 %v6770, %v6771
  %v6773 = vsub.f32 %v6605, %v6772
  %v6774 = vmul.f32 %v6773, 1.442695
  %v6775 = vpow.pop %v6774
  %v6776 = vrot.slane %v6775, 4
  %v6777 = vadd.f32 %v6775, %v6776
  %v6778 = vrot.slane %v6777, 2
  %v6779 = vadd.f32 %v6777, %v6778
  %v6780 = vrot.slane %v6779, 1
  %v6781 = vadd.f32 %v6779, %v6780
  %v6782 = vrcp.pop %v6781
  %v6783 = vmul.f32 %v6781, %v6782
  %v6784 = vsub.f32 1.0, %v6783
  %v6785 = vmul.f32 %v6782, %v6784
  %v6786 = vadd.f32 %v6782, %v6785
  %vm6787 = vweird.f32 %v6781
  %vm6788 = vweird.f32 %v6782
  %vm6789 = vmor %vm6787, %vm6788
  %v6790 = vsel %vm6789, %v6782, %v6786
  %v6791 = vand.u32 2147483647, %v6781
  %vm6792 = vcmp.eq.f32.partialorder %v6791, 8.507059e+37
  %v6793 = vand.u32 %v6781, 2147483648
  %v6794 = vor.u32 1.1754944e-38, %v6793
  %v6795 = vsel %vm6792, %v6794, %v6790
  %v6796 = vmul.f32 %v6775, %v6795
  %v6797 = vmul.f32 %v6796, %v6492
  %v6798 = vsel %vm6504, %v6797, 0.0
  %v6799 = vrot.slane %v6798, 4
  %v6800 = vadd.f32 %v6798, %v6799
  %v6801 = vrot.slane %v6800, 2
  %v6802 = vadd.f32 %v6800, %v6801
  %v6803 = vrot.slane %v6802, 1
  %v6804 = vadd.f32 %v6802, %v6803
  %v6805 = vrot.slane %v6608, 4
  %v6806 = vmax.f32 %v6608, %v6805
  %v6807 = vrot.slane %v6806, 2
  %v6808 = vmax.f32 %v6806, %v6807
  %v6809 = vrot.slane %v6808, 1
  %v6810 = vmax.f32 %v6808, %v6809
  %v6811 = vsub.f32 %v6608, %v6810
  %v6812 = vmul.f32 %v6811, 1.442695
  %v6813 = vpow.pop %v6812
  %v6814 = vrot.slane %v6813, 4
  %v6815 = vadd.f32 %v6813, %v6814
  %v6816 = vrot.slane %v6815, 2
  %v6817 = vadd.f32 %v6815, %v6816
  %v6818 = vrot.slane %v6817, 1
  %v6819 = vadd.f32 %v6817, %v6818
  %v6820 = vrcp.pop %v6819
  %v6821 = vmul.f32 %v6819, %v6820
  %v6822 = vsub.f32 1.0, %v6821
  %v6823 = vmul.f32 %v6820, %v6822
  %v6824 = vadd.f32 %v6820, %v6823
  %vm6825 = vweird.f32 %v6819
  %vm6826 = vweird.f32 %v6820
  %vm6827 = vmor %vm6825, %vm6826
  %v6828 = vsel %vm6827, %v6820, %v6824
  %v6829 = vand.u32 2147483647, %v6819
  %vm6830 = vcmp.eq.f32.partialorder %v6829, 8.507059e+37
  %v6831 = vand.u32 %v6819, 2147483648
  %v6832 = vor.u32 1.1754944e-38, %v6831
  %v6833 = vsel %vm6830, %v6832, %v6828
  %v6834 = vmul.f32 %v6813, %v6833
  %v6835 = vmul.f32 %v6834, %v6493
  %v6836 = vsel %vm6504, %v6835, 0.0
  %v6837 = vrot.slane %v6836, 4
  %v6838 = vadd.f32 %v6836, %v6837
  %v6839 = vrot.slane %v6838, 2
  %v6840 = vadd.f32 %v6838, %v6839
  %v6841 = vrot.slane %v6840, 1
  %v6842 = vadd.f32 %v6840, %v6841
  %v6843 = vrot.slane %v6611, 4
  %v6844 = vmax.f32 %v6611, %v6843
  %v6845 = vrot.slane %v6844, 2
  %v6846 = vmax.f32 %v6844, %v6845
  %v6847 = vrot.slane %v6846, 1
  %v6848 = vmax.f32 %v6846, %v6847
  %v6849 = vsub.f32 %v6611, %v6848
  %v6850 = vmul.f32 %v6849, 1.442695
  %v6851 = vpow.pop %v6850
  %v6852 = vrot.slane %v6851, 4
  %v6853 = vadd.f32 %v6851, %v6852
  %v6854 = vrot.slane %v6853, 2
  %v6855 = vadd.f32 %v6853, %v6854
  %v6856 = vrot.slane %v6855, 1
  %v6857 = vadd.f32 %v6855, %v6856
  %v6858 = vrcp.pop %v6857
  %v6859 = vmul.f32 %v6857, %v6858
  %v6860 = vsub.f32 1.0, %v6859
  %v6861 = vmul.f32 %v6858, %v6860
  %v6862 = vadd.f32 %v6858, %v6861
  %vm6863 = vweird.f32 %v6857
  %vm6864 = vweird.f32 %v6858
  %vm6865 = vmor %vm6863, %vm6864
  %v6866 = vsel %vm6865, %v6858, %v6862
  %v6867 = vand.u32 2147483647, %v6857
  %vm6868 = vcmp.eq.f32.partialorder %v6867, 8.507059e+37
  %v6869 = vand.u32 %v6857, 2147483648
  %v6870 = vor.u32 1.1754944e-38, %v6869
  %v6871 = vsel %vm6868, %v6870, %v6866
  %v6872 = vmul.f32 %v6851, %v6871
  %v6873 = vmul.f32 %v6872, %v6494
  %v6874 = vsel %vm6504, %v6873, 0.0
  %v6875 = vrot.slane %v6874, 4
  %v6876 = vadd.f32 %v6874, %v6875
  %v6877 = vrot.slane %v6876, 2
  %v6878 = vadd.f32 %v6876, %v6877
  %v6879 = vrot.slane %v6878, 1
  %v6880 = vadd.f32 %v6878, %v6879
  %v6881 = vrot.slane %v6614, 4
  %v6882 = vmax.f32 %v6614, %v6881
  %v6883 = vrot.slane %v6882, 2
  %v6884 = vmax.f32 %v6882, %v6883
  %v6885 = vrot.slane %v6884, 1
  %v6886 = vmax.f32 %v6884, %v6885
  %v6887 = vsub.f32 %v6614, %v6886
  %v6888 = vmul.f32 %v6887, 1.442695
  %v6889 = vpow.pop %v6888
  %v6890 = vrot.slane %v6889, 4
  %v6891 = vadd.f32 %v6889, %v6890
  %v6892 = vrot.slane %v6891, 2
  %v6893 = vadd.f32 %v6891, %v6892
  %v6894 = vrot.slane %v6893, 1
  %v6895 = vadd.f32 %v6893, %v6894
  %v6896 = vrcp.pop %v6895
  %v6897 = vmul.f32 %v6895, %v6896
  %v6898 = vsub.f32 1.0, %v6897
  %v6899 = vmul.f32 %v6896, %v6898
  %v6900 = vadd.f32 %v6896, %v6899
  %vm6901 = vweird.f32 %v6895
  %vm6902 = vweird.f32 %v6896
  %vm6903 = vmor %vm6901, %vm6902
  %v6904 = vsel %vm6903, %v6896, %v6900
  %v6905 = vand.u32 2147483647, %v6895
  %vm6906 = vcmp.eq.f32.partialorder %v6905, 8.507059e+37
  %v6907 = vand.u32 %v6895, 2147483648
  %v6908 = vor.u32 1.1754944e-38, %v6907
  %v6909 = vsel %vm6906, %v6908, %v6904
  %v6910 = vmul.f32 %v6889, %v6909
  %v6911 = vmul.f32 %v6910, %v6495
  %v6912 = vsel %vm6504, %v6911, 0.0
  %v6913 = vrot.slane %v6912, 4
  %v6914 = vadd.f32 %v6912, %v6913
  %v6915 = vrot.slane %v6914, 2
  %v6916 = vadd.f32 %v6914, %v6915
  %v6917 = vrot.slane %v6916, 1
  %v6918 = vadd.f32 %v6916, %v6917
  %vm6919 = vcmask 1040384
  %v6920 = vsel %vm6919, %v6652, %v6690
  %vm6921 = vcmask 1041408
  %v6922 = vsel %vm6921, %v6920, %v6728
  %vm6923 = vcmask 1042432
  %v6924 = vsel %vm6923, %v6922, %v6766
  %v6925 = vsel %vm1267, %v6924, %v6804
  %vm6926 = vcmask 1044480
  %v6927 = vsel %vm6926, %v6925, %v6842
  %vm6928 = vcmask 1045504
  %v6929 = vsel %vm6928, %v6927, %v6880
  %vm6930 = vcmask 1046528
  %v6931 = vsel %vm6930, %v6929, %v6918
  %v6932 = vld [vmem:[%s8] sm:$0xff]
  %v6933 = vld [vmem:[%s8 + $0x8] sm:$0xff]
  %v6934 = vld [vmem:[%s8 + $0x10] sm:$0xff]
  %v6935 = vld [vmem:[%s8 + $0x18] sm:$0xff]
  %v6936 = vld [vmem:[%s8 + $0x20] sm:$0xff]
  %v6937 = vld [vmem:[%s8 + $0x28] sm:$0xff]
  %v6938 = vld [vmem:[%s8 + $0x30] sm:$0xff]
  %v6939 = vld [vmem:[%s8 + $0x38] sm:$0xff]
  %v6940 = vld [vmem:[%s9] sm:$0x1]
  %v6942 = vperm.slane %v6940, 0
  %v6945 = vsel %vm6504, %v6931, 0
  %6947 = vmatpush.msra.mxu0 0.0
  %6948 = vmatpush.msra.mxu0 0.0
  %6949 = vmatpush.msra.mxu0 0.0
  %6950 = vmatpush.msra.mxu0 0.0
  %6951 = vmatpush.msra.mxu0 0.0
  %6952 = vmatpush.msra.mxu0 0.0
  %6953 = vmatpush.msra.mxu0 0.0
  %6954 = vmatpush.msra.mxu0 0.0
  %6955 = vmatpush.msra.mxu0 %v6939
  %6956 = vmatpush.msra.mxu0 %v6938
  %6957 = vmatpush.msra.mxu0 %v6937
  %6958 = vmatpush.msra.mxu0 %v6936
  %6959 = vmatpush.msra.mxu0 %v6935
  %6960 = vmatpush.msra.mxu0 %v6934
  %6961 = vmatpush.msra.mxu0 %v6933
  %6962 = vmatpush.msra.mxu0 %v6932
  %6963 = vmatmul.f32.gmra.mxu0 %v6945
  %v6964 = vpop.f32.mrf.mxu0
  %v6965 = vadd.f32 %v6942, %v6964
  %6966 = vdwg.mxu0
  %6967 = vst [vmem:[%s10] sm:$0xff] %v6965
  // Predicated region
  $region42: #{leap_expert_forward.1} parent=0 // pred_check
    _
  $region43: #{leap_expert_forward.1} parent=0 // pred_check_branch
    %6969 = sbr.rel (0) target = $region45
  $region44: #{leap_expert_forward.1} parent=0 // pred_region
    _
  $region45: #{leap_expert_forward.1} parent=0 // pred_fallthru
    _
  // Predicated region
  $region46: #{leap_expert_forward.1} parent=0 // pred_check
    _
  $region47: #{leap_expert_forward.1} parent=0 // pred_check_branch
    %6971 = sbr.rel (0) target = $region49
  $region48: #{leap_expert_forward.1} parent=0 // pred_region
    _
  $region49: #{leap_expert_forward.1} parent=0 // pred_fallthru
    _

</llo_original>
